<compile_context>
chip_gen: v6e
topology: v6e:2x2x1
jax: 0.10.0
libtpu: 0.0.40
codegen_flags: <defaults>
</compile_context>

<pallas_src>
import jax
import jax.numpy as jnp
from jax import lax
from jax.experimental import pallas as pl
from jax.experimental.pallas import tpu as pltpu

# ---- model dims (small, consistent with the module's __init__) --------------
X_DIM = 16      # x_dim / embed size
H_DIM = 32      # h_dim
Z_DIM = 16      # z_dim
VOCAB = 64      # word_vocab_size
N_LAYERS = 1    # kernel implements the n_layers == 1 GRU (bias=False) case
B = 8           # batch
T = 8           # seq len
SLAB = VOCAB + 2 * Z_DIM + 2 * X_DIM   # 128-lane packed output

PARAM_NAMES = [
    "phi_x_w1", "phi_x_b1", "phi_x_w2", "phi_x_b2",
    "phi_z_w", "phi_z_b",
    "enc_w1", "enc_b1", "enc_w2", "enc_b2",
    "enc_mean_w", "enc_mean_b", "enc_std_w", "enc_std_b",
    "prior_w", "prior_b", "prior_mean_w", "prior_mean_b",
    "prior_std_w", "prior_std_b",
    "dec_w1", "dec_b1", "dec_w2", "dec_b2",
    "dec_std_w", "dec_std_b", "dec_mean_w", "dec_mean_b",
    "rnn_w_ih", "rnn_w_hh",
    "fc_w", "fc_b",
]

PARAM_SHAPES = {
    "phi_x_w1": (X_DIM, H_DIM),      "phi_x_b1": (1, H_DIM),
    "phi_x_w2": (H_DIM, H_DIM),      "phi_x_b2": (1, H_DIM),
    "phi_z_w": (Z_DIM, H_DIM),       "phi_z_b": (1, H_DIM),
    "enc_w1": (2 * H_DIM, H_DIM),    "enc_b1": (1, H_DIM),
    "enc_w2": (H_DIM, H_DIM),        "enc_b2": (1, H_DIM),
    "enc_mean_w": (H_DIM, Z_DIM),    "enc_mean_b": (1, Z_DIM),
    "enc_std_w": (H_DIM, Z_DIM),     "enc_std_b": (1, Z_DIM),
    "prior_w": (H_DIM, H_DIM),       "prior_b": (1, H_DIM),
    "prior_mean_w": (H_DIM, Z_DIM),  "prior_mean_b": (1, Z_DIM),
    "prior_std_w": (H_DIM, Z_DIM),   "prior_std_b": (1, Z_DIM),
    "dec_w1": (2 * H_DIM, H_DIM),    "dec_b1": (1, H_DIM),
    "dec_w2": (H_DIM, H_DIM),        "dec_b2": (1, H_DIM),
    "dec_std_w": (H_DIM, X_DIM),     "dec_std_b": (1, X_DIM),
    "dec_mean_w": (H_DIM, X_DIM),    "dec_mean_b": (1, X_DIM),
    "rnn_w_ih": (2 * H_DIM, 3 * H_DIM), "rnn_w_hh": (H_DIM, 3 * H_DIM),
    "fc_w": (X_DIM, VOCAB),          "fc_b": (1, VOCAB),
}


def init_params(key):
    # deterministic synthetic init (matches reset_parameters: N(0, 0.1))
    keys = jax.random.split(key, len(PARAM_NAMES))
    return {n: 0.1 * jax.random.normal(k, PARAM_SHAPES[n], jnp.float32)
            for n, k in zip(PARAM_NAMES, keys)}


def _prep_weights(p):
    """Split / fuse the raw parameters at trace time (outside the kernel)."""
    H = H_DIM
    encw1x, encw1h = p["enc_w1"][:H], p["enc_w1"][H:]
    decw1z, decw1h = p["dec_w1"][:H], p["dec_w1"][H:]
    wihx, wihz = p["rnn_w_ih"][:H], p["rnn_w_ih"][H:]
    zeros3h = jnp.zeros((1, 3 * H), jnp.float32)
    return [
        # prologue: phi_x MLP, then fused x-consumers [enc_w1_x | rnn_w_ih_x]
        p["phi_x_w1"], p["phi_x_b1"], p["phi_x_w2"], p["phi_x_b2"],
        jnp.concatenate([encw1x, wihx], axis=1),                   # (32, 128)
        jnp.concatenate([p["enc_b1"], zeros3h], axis=1),           # (1, 128) GRU bias=False
        # in-loop: single fused h_last projection [rnn_w_hh | enc_w1_h]
        jnp.concatenate([p["rnn_w_hh"], encw1h], axis=1),          # (32, 128)
        p["enc_w2"], p["enc_b2"],
        jnp.concatenate([p["enc_mean_w"], p["enc_std_w"]], axis=1),
        jnp.concatenate([p["enc_mean_b"], p["enc_std_b"]], axis=1),
        p["phi_z_w"], p["phi_z_b"],
        wihz,                                                      # (32, 96)
        # epilogue: fused h_all consumers [prior_w | dec_w1_h]
        jnp.concatenate([p["prior_w"], decw1h], axis=1),           # (32, 64)
        jnp.concatenate([p["prior_b"], p["dec_b1"]], axis=1),      # (1, 64)
        jnp.concatenate([p["prior_mean_w"], p["prior_std_w"]], axis=1),
        jnp.concatenate([p["prior_mean_b"], p["prior_std_b"]], axis=1),
        decw1z, p["dec_w2"], p["dec_b2"],
        jnp.concatenate([p["dec_mean_w"], p["dec_std_w"]], axis=1),
        jnp.concatenate([p["dec_mean_b"], p["dec_std_b"]], axis=1),
        p["fc_w"], p["fc_b"],
    ]


# ---------------------------- Pallas kernel ----------------------------------
def _vrnn_kernel(
    # data
    x_ref, ez_ref, ex_ref, h0_ref,
    # weights (pre-split / pre-fused, [in_features, out_features])
    pxw1, pxb1, pxw2, pxb2, xconsw, xconsb,
    hfw, encw2, encb2, encmsw, encmsb, pzw, pzb, wihz,
    hpostw, hpostb, prmsw, prmsb, decw1z, decw2, decb2, decmsw, decmsb,
    fcw, fcb,
    # outputs
    out_ref, h_ref, kld_ref, nll_ref,
    # scratch
    xproj_s, encms_s, phiz_s, h_s,
):
    H, Z, X = H_DIM, Z_DIM, X_DIM
    Tn, Bn = x_ref.shape[0], x_ref.shape[1]
    TB = Tn * Bn
    f32 = jnp.float32
    relu = lambda v: jnp.maximum(v, 0.0)
    sp = jax.nn.softplus
    sig = jax.nn.sigmoid

    def mm(a, w_r):
        return jnp.dot(a, w_r[...], preferred_element_type=f32)

    # ---------- prologue: no h-dependence, batched over [T*B, .] ------------
    x_all = x_ref[...].reshape(TB, X)          # dropout with drop_prob=0 is identity
    phi_x1 = relu(mm(x_all, pxw1) + pxb1[...])
    phi_x_all = relu(mm(phi_x1, pxw2) + pxb2[...])
    # one fused matmul for both h-independent consumers of phi_x:
    #   lanes [:H]  = phi_x @ enc_w1_x + enc_b1   (encoder first-layer x-term)
    #   lanes [H:]  = phi_x @ rnn_w_ih_x          (GRU gi x-term)
    xproj_all = mm(phi_x_all, xconsw) + xconsb[...]           # [TB, 4H]
    xproj_s[...] = xproj_all.reshape(Tn, Bn, 4 * H)

    # hoist bias reads + [1,n]->[B,n] broadcasts out of the unrolled loop
    encb2_b = jnp.broadcast_to(encb2[...], (Bn, H))
    encmsb_b = jnp.broadcast_to(encmsb[...], (Bn, 2 * Z))
    pzb_b = jnp.broadcast_to(pzb[...], (Bn, H))

    # ---------- serial recurrence: enc -> z -> phi_z -> GRU only ------------
    def body(t, h_last):
        xp = xproj_s[t]                                  # [B, 4H]
        # single fused h_last matmul: lanes [:3H] = GRU gh, lanes [3H:] = enc h-term
        hproj = mm(h_last, hfw)                          # [B, 4H]

        enc_h1 = relu(xp[:, :H] + hproj[:, 3 * H:])      # enc_b1 already folded in
        enc_h = relu(mm(enc_h1, encw2) + encb2_b)
        enc_ms = mm(enc_h, encmsw) + encmsb_b            # [B, 2Z] = [mean | pre-std]
        enc_std = sp(enc_ms[:, Z:])

        # reparameterized sample (sampling=False path: encoder stats)
        # TODO(synk): sampling=True branch (prior stats) not wired.
        z_t = ez_ref[t] * enc_std + enc_ms[:, :Z]
        phi_z = relu(mm(z_t, pzw) + pzb_b)

        # single-layer GRU, bias=False; gate order (r, z, n)
        gi = xp[:, H:] + mm(phi_z, wihz)                 # [B, 3H]
        gh = hproj[:, :3 * H]
        r = sig(gi[:, :H] + gh[:, :H])
        u = sig(gi[:, H:2 * H] + gh[:, H:2 * H])
        n = jnp.tanh(gi[:, 2 * H:] + r * gh[:, 2 * H:])
        h_new = (1.0 - u) * n + u * h_last

        # staging for the batched epilogue (off the h-carry critical chain)
        encms_s[t] = enc_ms
        phiz_s[t] = phi_z
        h_s[t] = h_last
        return h_new

    h_last = lax.fori_loop(0, Tn, body, h0_ref[0], unroll=True)

    # ---------- epilogue: prior / decoder / losses / fc, batched [T*B, .] ----
    h_all = h_s[...].reshape(TB, H)
    phiz_all = phiz_s[...].reshape(TB, H)
    encms_all = encms_s[...].reshape(TB, 2 * Z)
    enc_mean = encms_all[:, :Z]
    enc_std = sp(encms_all[:, Z:])

    # fused h_all matmul: lanes [:H] = prior pre-act (+prior_b),
    #                     lanes [H:] = decoder first-layer h-term (+dec_b1)
    hpost = mm(h_all, hpostw) + hpostb[...]              # [TB, 2H]
    prior_h = relu(hpost[:, :H])
    prior_ms = mm(prior_h, prmsw) + prmsb[...]
    prior_mean = prior_ms[:, :Z]
    prior_std = sp(prior_ms[:, Z:])

    dec_h1 = relu(mm(phiz_all, decw1z) + hpost[:, H:])
    dec_h = relu(mm(dec_h1, decw2) + decb2[...])
    dec_ms = mm(dec_h, decmsw) + decmsb[...]
    dec_logit = dec_ms[:, :X]
    dec_mean = sig(dec_logit)
    dec_std = sp(dec_ms[:, X:])

    pred_we = dec_mean + jnp.exp(dec_std * 0.5) * ex_ref[...].reshape(TB, X)
    res = mm(pred_we, fcw) + fcb[...]                    # [TB, VOCAB]

    # losses (single reduction each)
    kld_el = (2.0 * jnp.log(prior_std / enc_std)
              + (enc_std * enc_std + (enc_mean - prior_mean) ** 2)
              / (prior_std * prior_std) - 1.0)
    # Bernoulli NLL, single-softplus form: x*sp(-a)+(1-x)*sp(a) == sp(-a)+(1-x)*a
    nll_el = sp(-dec_logit) + (1.0 - x_ref[...].reshape(TB, X)) * dec_logit

    # Lane-dense packed output slab, assembled ONCE (off the critical chain):
    # [res 64 | enc_mean 16 | enc_std 16 | dec_mean 16 | dec_std 16]
    slab = jnp.concatenate([res, enc_mean, enc_std, dec_mean, dec_std], axis=-1)
    out_ref[...] = slab.reshape(Tn, Bn, SLAB)

    h_ref[0] = h_last
    kld_ref[...] = 0.5 * jnp.sum(kld_el, keepdims=True)
    nll_ref[...] = jnp.sum(nll_el, keepdims=True)


# ------------------------------ wrapper ---------------------------------------
def vrnn_forward(params, x_btx, initial_state, drop_prob, eps_z, eps_x):
    """x_btx: [B, T, x_dim]; initial_state: [n_layers, B, h_dim]."""
    # TODO(synk): only the deterministic drop_prob == 0.0 path is implemented
    # (F.dropout with p=0 is the identity); stochastic dropout omitted.
    assert drop_prob == 0.0
    Bn, Tn, _ = x_btx.shape
    x_tbx = jnp.transpose(x_btx, (1, 0, 2)).astype(jnp.float32)   # [T, B, x]
    h0 = initial_state.reshape(N_LAYERS, Bn, H_DIM).astype(jnp.float32)
    weights = _prep_weights(params)

    out_shape = (
        jax.ShapeDtypeStruct((Tn, Bn, SLAB), jnp.float32),          # packed slab
        jax.ShapeDtypeStruct((N_LAYERS, Bn, H_DIM), jnp.float32),   # final h
        jax.ShapeDtypeStruct((1, 1), jnp.float32),                  # kld
        jax.ShapeDtypeStruct((1, 1), jnp.float32),                  # nll
    )

    # Gridless: everything (<100 KiB) lives in VMEM as whole-array blocks; the
    # time recurrence is an unrolled in-kernel loop.
    slab, h_final, kld, nll = pl.pallas_call(
        _vrnn_kernel,
        out_shape=out_shape,
        scratch_shapes=[
            pltpu.VMEM((Tn, Bn, 4 * H_DIM), jnp.float32),   # prologue x-projections
            pltpu.VMEM((Tn, Bn, 2 * Z_DIM), jnp.float32),   # raw enc [mean|pre-std]
            pltpu.VMEM((Tn, Bn, H_DIM), jnp.float32),       # phi_z per step
            pltpu.VMEM((Tn, Bn, H_DIM), jnp.float32),       # h_last per step
        ],
    )(x_tbx, eps_z.astype(jnp.float32), eps_x.astype(jnp.float32), h0, *weights)

    o0 = VOCAB
    res_tb = slab[:, :, :o0]
    encm = slab[:, :, o0:o0 + Z_DIM]
    encs = slab[:, :, o0 + Z_DIM:o0 + 2 * Z_DIM]
    decm = slab[:, :, o0 + 2 * Z_DIM:o0 + 2 * Z_DIM + X_DIM]
    decs = slab[:, :, o0 + 2 * Z_DIM + X_DIM:]

    # replicate torch: outputs.view(-1, x_dim) -> fc -> result.view(-1, T, vocab)
    # (this interleaves time/batch exactly as the original module's .view does)
    result = res_tb.reshape(-1, VOCAB).reshape(-1, Tn, VOCAB)
    return kld[0, 0], nll[0, 0], (encm, encs), (decm, decs), result, h_final


# ---------------------- pure-JAX reference (for checking) --------------------
def vrnn_reference(params, x_btx, initial_state, eps_z, eps_x):
    p = params
    x = jnp.transpose(x_btx, (1, 0, 2))
    h = initial_state.reshape(N_LAYERS, x.shape[1], H_DIM)
    relu, sp, sig = jax.nn.relu, jax.nn.softplus, jax.nn.sigmoid
    lin = lambda a, w, b: a @ w + b
    H = H_DIM
    kld_tot = jnp.float32(0.0)
    nll_tot = jnp.float32(0.0)
    outs, ems, ess, dms, dss = [], [], [], [], []
    for t in range(x.shape[0]):
        xt, hl = x[t], h[-1]
        phi_x = relu(lin(relu(lin(xt, p["phi_x_w1"], p["phi_x_b1"])), p["phi_x_w2"], p["phi_x_b2"]))
        enc_h = relu(lin(relu(lin(jnp.concatenate([phi_x, hl], 1), p["enc_w1"], p["enc_b1"])),
                         p["enc_w2"], p["enc_b2"]))
        enc_mean = lin(enc_h, p["enc_mean_w"], p["enc_mean_b"])
        enc_std = sp(lin(enc_h, p["enc_std_w"], p["enc_std_b"]))
        prior_h = relu(lin(hl, p["prior_w"], p["prior_b"]))
        prior_mean = lin(prior_h, p["prior_mean_w"], p["prior_mean_b"])
        prior_std = sp(lin(prior_h, p["prior_std_w"], p["prior_std_b"]))
        z_t = eps_z[t] * enc_std + enc_mean
        phi_z = relu(lin(z_t, p["phi_z_w"], p["phi_z_b"]))
        dec_h = relu(lin(relu(lin(jnp.concatenate([phi_z, hl], 1), p["dec_w1"], p["dec_b1"])),
                         p["dec_w2"], p["dec_b2"]))
        dec_mean = sig(lin(dec_h, p["dec_mean_w"], p["dec_mean_b"]))
        dec_std = sp(lin(dec_h, p["dec_std_w"], p["dec_std_b"]))
        outs.append(dec_mean + jnp.exp(dec_std / 2) * eps_x[t])
        rnn_in = jnp.concatenate([phi_x, phi_z], 1)
        gi, gh = rnn_in @ p["rnn_w_ih"], hl @ p["rnn_w_hh"]
        r = sig(gi[:, :H] + gh[:, :H])
        u = sig(gi[:, H:2 * H] + gh[:, H:2 * H])
        n = jnp.tanh(gi[:, 2 * H:] + r * gh[:, 2 * H:])
        h = jnp.stack([(1 - u) * n + u * hl])
        kld_tot += 0.5 * jnp.sum(2 * jnp.log(prior_std) - 2 * jnp.log(enc_std)
                                 + (enc_std ** 2 + (enc_mean - prior_mean) ** 2) / prior_std ** 2 - 1)
        nll_tot += -jnp.sum(xt * jnp.log(dec_mean) + (1 - xt) * jnp.log(1 - dec_mean))
        ems.append(enc_mean); ess.append(enc_std); dms.append(dec_mean); dss.append(dec_std)
    outputs = jnp.stack(outs)
    result = (outputs.reshape(-1, X_DIM) @ p["fc_w"] + p["fc_b"]).reshape(-1, x.shape[0], VOCAB)
    return (kld_tot, nll_tot, (jnp.stack(ems), jnp.stack(ess)),
            (jnp.stack(dms), jnp.stack(dss)), result, h)


if __name__ == "__main__":
    key = jax.random.PRNGKey(0)
    kp, kx, kh, kez, kex = jax.random.split(key, 5)
    params = init_params(kp)

    # forward(x, z_global, drop_prob, initial_state): x is [batch, seq, embed]
    x = jax.random.uniform(kx, (B, T, X_DIM), jnp.float32)
    initial_state = 0.1 * jax.random.normal(kh, (N_LAYERS, B, H_DIM), jnp.float32)
    # noise for the two reparameterization draws (torch.randn equivalents)
    eps_z = jax.random.normal(kez, (T, B, Z_DIM), jnp.float32)
    eps_x = jax.random.normal(kex, (T, B, X_DIM), jnp.float32)

    out = vrnn_forward(params, x, initial_state, 0.0, eps_z, eps_x)
    out = jax.block_until_ready(out)
    kld, nll, (encm, encs), (decm, decs), result, h_final = out

    kld_r, nll_r, (encm_r, encs_r), (decm_r, decs_r), result_r, h_r = vrnn_reference(
        params, x, initial_state, eps_z, eps_x)

    assert jnp.allclose(kld, kld_r, rtol=1e-4, atol=1e-3), (kld, kld_r)
    assert jnp.allclose(nll, nll_r, rtol=1e-4, atol=1e-3), (nll, nll_r)
    assert jnp.allclose(result, result_r, rtol=1e-4, atol=1e-3)
    assert jnp.allclose(h_final, h_r, rtol=1e-4, atol=1e-3)
    assert jnp.allclose(encm, encm_r, rtol=1e-4, atol=1e-3)
    assert jnp.allclose(encs, encs_r, rtol=1e-4, atol=1e-3)
    assert jnp.allclose(decm, decm_r, rtol=1e-4, atol=1e-3)
    assert jnp.allclose(decs, decs_r, rtol=1e-4, atol=1e-3)

    print("KERNEL_OK")
</pallas_src>

<mosaic_0001>
module attributes {stable_mosaic.version = 11 : i64} {
  func.func @_vrnn_kernel(%arg0: memref<8x8x16xf32, #tpu.memory_space<vmem>>, %arg1: memref<8x8x16xf32, #tpu.memory_space<vmem>>, %arg2: memref<8x8x16xf32, #tpu.memory_space<vmem>>, %arg3: memref<1x8x32xf32, #tpu.memory_space<vmem>>, %arg4: memref<16x32xf32, #tpu.memory_space<vmem>>, %arg5: memref<1x32xf32, #tpu.memory_space<vmem>>, %arg6: memref<32x32xf32, #tpu.memory_space<vmem>>, %arg7: memref<1x32xf32, #tpu.memory_space<vmem>>, %arg8: memref<32x128xf32, #tpu.memory_space<vmem>>, %arg9: memref<1x128xf32, #tpu.memory_space<vmem>>, %arg10: memref<32x128xf32, #tpu.memory_space<vmem>>, %arg11: memref<32x32xf32, #tpu.memory_space<vmem>>, %arg12: memref<1x32xf32, #tpu.memory_space<vmem>>, %arg13: memref<32x32xf32, #tpu.memory_space<vmem>>, %arg14: memref<1x32xf32, #tpu.memory_space<vmem>>, %arg15: memref<16x32xf32, #tpu.memory_space<vmem>>, %arg16: memref<1x32xf32, #tpu.memory_space<vmem>>, %arg17: memref<32x96xf32, #tpu.memory_space<vmem>>, %arg18: memref<32x64xf32, #tpu.memory_space<vmem>>, %arg19: memref<1x64xf32, #tpu.memory_space<vmem>>, %arg20: memref<32x32xf32, #tpu.memory_space<vmem>>, %arg21: memref<1x32xf32, #tpu.memory_space<vmem>>, %arg22: memref<32x32xf32, #tpu.memory_space<vmem>>, %arg23: memref<32x32xf32, #tpu.memory_space<vmem>>, %arg24: memref<1x32xf32, #tpu.memory_space<vmem>>, %arg25: memref<32x32xf32, #tpu.memory_space<vmem>>, %arg26: memref<1x32xf32, #tpu.memory_space<vmem>>, %arg27: memref<16x64xf32, #tpu.memory_space<vmem>>, %arg28: memref<1x64xf32, #tpu.memory_space<vmem>>, %arg29: memref<8x8x128xf32, #tpu.memory_space<vmem>>, %arg30: memref<1x8x32xf32, #tpu.memory_space<vmem>>, %arg31: memref<1x1xf32, #tpu.memory_space<vmem>>, %arg32: memref<1x1xf32, #tpu.memory_space<vmem>>, %arg33: memref<8x8x128xf32, #tpu.memory_space<vmem>>, %arg34: memref<8x8x32xf32, #tpu.memory_space<vmem>>, %arg35: memref<8x8x32xf32, #tpu.memory_space<vmem>>, %arg36: memref<8x8x32xf32, #tpu.memory_space<vmem>>) attributes {dimension_semantics = [], scalar_prefetch = 0 : i64, scratch_operands = 4 : i64, tpu.core_type = #tpu.core_type<tc>} {
    %c0 = arith.constant 0 : index
    %c0_0 = arith.constant 0 : index
    %c0_1 = arith.constant 0 : index
    %0 = vector.load %arg0[%c0, %c0_0, %c0_1] : memref<8x8x16xf32, #tpu.memory_space<vmem>>, vector<8x8x16xf32>
    %1 = vector.shape_cast %0 : vector<8x8x16xf32> to vector<64x16xf32>
    %c0_2 = arith.constant 0 : index
    %c0_3 = arith.constant 0 : index
    %2 = vector.load %arg4[%c0_2, %c0_3] : memref<16x32xf32, #tpu.memory_space<vmem>>, vector<16x32xf32>
    %cst = arith.constant dense<0.000000e+00> : vector<64x32xf32>
    %3 = tpu.matmul %1, %2, %cst {dimension_numbers = #tpu.dot_dimension_numbers<[1], [0], [0], [1], [0, 0, 1, 1], [], []>} : vector<64x16xf32>, vector<16x32xf32>, vector<64x32xf32> -> vector<64x32xf32>
    %c0_4 = arith.constant 0 : index
    %c0_5 = arith.constant 0 : index
    %4 = vector.load %arg5[%c0_4, %c0_5] : memref<1x32xf32, #tpu.memory_space<vmem>>, vector<1x32xf32>
    %5 = vector.broadcast %4 : vector<1x32xf32> to vector<64x32xf32>
    %6 = arith.addf %3, %5 : vector<64x32xf32>
    %cst_6 = arith.constant 0.000000e+00 : f32
    %7 = vector.broadcast %cst_6 : f32 to vector<64x32xf32>
    %8 = arith.maximumf %6, %7 : vector<64x32xf32>
    %c0_7 = arith.constant 0 : index
    %c0_8 = arith.constant 0 : index
    %9 = vector.load %arg6[%c0_7, %c0_8] : memref<32x32xf32, #tpu.memory_space<vmem>>, vector<32x32xf32>
    %cst_9 = arith.constant dense<0.000000e+00> : vector<64x32xf32>
    %10 = tpu.matmul %8, %9, %cst_9 {dimension_numbers = #tpu.dot_dimension_numbers<[1], [0], [0], [1], [0, 0, 1, 1], [], []>} : vector<64x32xf32>, vector<32x32xf32>, vector<64x32xf32> -> vector<64x32xf32>
    %c0_10 = arith.constant 0 : index
    %c0_11 = arith.constant 0 : index
    %11 = vector.load %arg7[%c0_10, %c0_11] : memref<1x32xf32, #tpu.memory_space<vmem>>, vector<1x32xf32>
    %12 = vector.broadcast %11 : vector<1x32xf32> to vector<64x32xf32>
    %13 = arith.addf %10, %12 : vector<64x32xf32>
    %cst_12 = arith.constant 0.000000e+00 : f32
    %14 = vector.broadcast %cst_12 : f32 to vector<64x32xf32>
    %15 = arith.maximumf %13, %14 : vector<64x32xf32>
    %c0_13 = arith.constant 0 : index
    %c0_14 = arith.constant 0 : index
    %16 = vector.load %arg8[%c0_13, %c0_14] : memref<32x128xf32, #tpu.memory_space<vmem>>, vector<32x128xf32>
    %cst_15 = arith.constant dense<0.000000e+00> : vector<64x128xf32>
    %17 = tpu.matmul %15, %16, %cst_15 {dimension_numbers = #tpu.dot_dimension_numbers<[1], [0], [0], [1], [0, 0, 1, 1], [], []>} : vector<64x32xf32>, vector<32x128xf32>, vector<64x128xf32> -> vector<64x128xf32>
    %c0_16 = arith.constant 0 : index
    %c0_17 = arith.constant 0 : index
    %18 = vector.load %arg9[%c0_16, %c0_17] : memref<1x128xf32, #tpu.memory_space<vmem>>, vector<1x128xf32>
    %19 = vector.broadcast %18 : vector<1x128xf32> to vector<64x128xf32>
    %20 = arith.addf %17, %19 : vector<64x128xf32>
    %21 = vector.shape_cast %20 : vector<64x128xf32> to vector<8x8x128xf32>
    %c0_18 = arith.constant 0 : index
    %c0_19 = arith.constant 0 : index
    %c0_20 = arith.constant 0 : index
    %22 = vector.load %arg33[%c0_18, %c0_19, %c0_20] : memref<8x8x128xf32, #tpu.memory_space<vmem>>, vector<8x8x128xf32>
    tpu.vector_store %arg33[%c0_18, %c0_19, %c0_20], %21 {strides = array<i32>} : memref<8x8x128xf32, #tpu.memory_space<vmem>>, vector<8x8x128xf32>,
    %c0_21 = arith.constant 0 : index
    %c0_22 = arith.constant 0 : index
    %23 = vector.load %arg12[%c0_21, %c0_22] : memref<1x32xf32, #tpu.memory_space<vmem>>, vector<1x32xf32>
    %24 = vector.shape_cast %23 : vector<1x32xf32> to vector<1x32xf32>
    %25 = vector.broadcast %24 : vector<1x32xf32> to vector<8x32xf32>
    %c0_23 = arith.constant 0 : index
    %c0_24 = arith.constant 0 : index
    %26 = vector.load %arg14[%c0_23, %c0_24] : memref<1x32xf32, #tpu.memory_space<vmem>>, vector<1x32xf32>
    %27 = vector.shape_cast %26 : vector<1x32xf32> to vector<1x32xf32>
    %28 = vector.broadcast %27 : vector<1x32xf32> to vector<8x32xf32>
    %c0_25 = arith.constant 0 : index
    %c0_26 = arith.constant 0 : index
    %29 = vector.load %arg16[%c0_25, %c0_26] : memref<1x32xf32, #tpu.memory_space<vmem>>, vector<1x32xf32>
    %30 = vector.shape_cast %29 : vector<1x32xf32> to vector<1x32xf32>
    %31 = vector.broadcast %30 : vector<1x32xf32> to vector<8x32xf32>
    %c0_27 = arith.constant 0 : index
    %c0_28 = arith.constant 0 : index
    %c0_29 = arith.constant 0 : index
    %32 = vector.load %arg3[%c0_27, %c0_28, %c0_29] : memref<1x8x32xf32, #tpu.memory_space<vmem>>, vector<1x8x32xf32>
    %33 = vector.shape_cast %32 : vector<1x8x32xf32> to vector<8x32xf32>
    %c0_i32 = arith.constant 0 : i32
    %34 = arith.index_cast %c0_i32 : i32 to index
    %c0_30 = arith.constant 0 : index
    %c0_31 = arith.constant 0 : index
    %35 = vector.load %arg33[%34, %c0_30, %c0_31] : memref<8x8x128xf32, #tpu.memory_space<vmem>>, vector<1x8x128xf32>
    %36 = vector.shape_cast %35 : vector<1x8x128xf32> to vector<8x128xf32>
    %c0_32 = arith.constant 0 : index
    %c0_33 = arith.constant 0 : index
    %37 = vector.load %arg10[%c0_32, %c0_33] : memref<32x128xf32, #tpu.memory_space<vmem>>, vector<32x128xf32>
    %cst_34 = arith.constant dense<0.000000e+00> : vector<8x128xf32>
    %38 = tpu.matmul %33, %37, %cst_34 {dimension_numbers = #tpu.dot_dimension_numbers<[1], [0], [0], [1], [0, 0, 1, 1], [], []>} : vector<8x32xf32>, vector<32x128xf32>, vector<8x128xf32> -> vector<8x128xf32>
    %39 = vector.extract_strided_slice %36 {offsets = [0, 0], sizes = [8, 32], strides = [1, 1]} : vector<8x128xf32> to vector<8x32xf32>
    %40 = vector.extract_strided_slice %38 {offsets = [0, 96], sizes = [8, 32], strides = [1, 1]} : vector<8x128xf32> to vector<8x32xf32>
    %41 = arith.addf %39, %40 : vector<8x32xf32>
    %cst_35 = arith.constant 0.000000e+00 : f32
    %42 = vector.broadcast %cst_35 : f32 to vector<8x32xf32>
    %43 = arith.maximumf %41, %42 : vector<8x32xf32>
    %c0_36 = arith.constant 0 : index
    %c0_37 = arith.constant 0 : index
    %44 = vector.load %arg11[%c0_36, %c0_37] : memref<32x32xf32, #tpu.memory_space<vmem>>, vector<32x32xf32>
    %cst_38 = arith.constant dense<0.000000e+00> : vector<8x32xf32>
    %45 = tpu.matmul %43, %44, %cst_38 {dimension_numbers = #tpu.dot_dimension_numbers<[1], [0], [0], [1], [0, 0, 1, 1], [], []>} : vector<8x32xf32>, vector<32x32xf32>, vector<8x32xf32> -> vector<8x32xf32>
    %46 = arith.addf %45, %25 : vector<8x32xf32>
    %cst_39 = arith.constant 0.000000e+00 : f32
    %47 = vector.broadcast %cst_39 : f32 to vector<8x32xf32>
    %48 = arith.maximumf %46, %47 : vector<8x32xf32>
    %c0_40 = arith.constant 0 : index
    %c0_41 = arith.constant 0 : index
    %49 = vector.load %arg13[%c0_40, %c0_41] : memref<32x32xf32, #tpu.memory_space<vmem>>, vector<32x32xf32>
    %cst_42 = arith.constant dense<0.000000e+00> : vector<8x32xf32>
    %50 = tpu.matmul %48, %49, %cst_42 {dimension_numbers = #tpu.dot_dimension_numbers<[1], [0], [0], [1], [0, 0, 1, 1], [], []>} : vector<8x32xf32>, vector<32x32xf32>, vector<8x32xf32> -> vector<8x32xf32>
    %51 = arith.addf %50, %28 : vector<8x32xf32>
    %52 = vector.extract_strided_slice %51 {offsets = [0, 16], sizes = [8, 16], strides = [1, 1]} : vector<8x32xf32> to vector<8x16xf32>
    %cst_43 = arith.constant 0.000000e+00 : f32
    %53 = vector.broadcast %cst_43 : f32 to vector<8x16xf32>
    %54 = arith.maximumf %52, %53 : vector<8x16xf32>
    %55 = vector.broadcast %cst_43 : f32 to vector<8x16xf32>
    %56 = arith.subf %52, %55 : vector<8x16xf32>
    %57 = arith.cmpf one, %56, %56 : vector<8x16xf32>
    %58 = vector.broadcast %cst_43 : f32 to vector<8x16xf32>
    %59 = arith.addf %52, %58 : vector<8x16xf32>
    %60 = math.absf %56 : vector<8x16xf32>
    %cst_44 = arith.constant 0.000000e+00 : f32
    %61 = vector.broadcast %cst_44 : f32 to vector<8x16xf32>
    %62 = arith.subf %61, %60 : vector<8x16xf32>
    %63 = math.exp %62 : vector<8x16xf32>
    %64 = math.log1p %63 : vector<8x16xf32>
    %65 = arith.addf %54, %64 : vector<8x16xf32>
    %66 = arith.select %57, %59, %65 : vector<8x16xi1>, vector<8x16xf32>
    %67 = arith.index_cast %c0_i32 : i32 to index
    %c0_45 = arith.constant 0 : index
    %c0_46 = arith.constant 0 : index
    %68 = vector.load %arg1[%67, %c0_45, %c0_46] : memref<8x8x16xf32, #tpu.memory_space<vmem>>, vector<1x8x16xf32>
    %69 = vector.shape_cast %68 : vector<1x8x16xf32> to vector<8x16xf32>
    %70 = arith.mulf %69, %66 : vector<8x16xf32>
    %71 = vector.extract_strided_slice %51 {offsets = [0, 0], sizes = [8, 16], strides = [1, 1]} : vector<8x32xf32> to vector<8x16xf32>
    %72 = arith.addf %70, %71 : vector<8x16xf32>
    %c0_47 = arith.constant 0 : index
    %c0_48 = arith.constant 0 : index
    %73 = vector.load %arg15[%c0_47, %c0_48] : memref<16x32xf32, #tpu.memory_space<vmem>>, vector<16x32xf32>
    %cst_49 = arith.constant dense<0.000000e+00> : vector<8x32xf32>
    %74 = tpu.matmul %72, %73, %cst_49 {dimension_numbers = #tpu.dot_dimension_numbers<[1], [0], [0], [1], [0, 0, 1, 1], [], []>} : vector<8x16xf32>, vector<16x32xf32>, vector<8x32xf32> -> vector<8x32xf32>
    %75 = arith.addf %74, %31 : vector<8x32xf32>
    %cst_50 = arith.constant 0.000000e+00 : f32
    %76 = vector.broadcast %cst_50 : f32 to vector<8x32xf32>
    %77 = arith.maximumf %75, %76 : vector<8x32xf32>
    %78 = vector.extract_strided_slice %36 {offsets = [0, 32], sizes = [8, 96], strides = [1, 1]} : vector<8x128xf32> to vector<8x96xf32>
    %c0_51 = arith.constant 0 : index
    %c0_52 = arith.constant 0 : index
    %79 = vector.load %arg17[%c0_51, %c0_52] : memref<32x96xf32, #tpu.memory_space<vmem>>, vector<32x96xf32>
    %cst_53 = arith.constant dense<0.000000e+00> : vector<8x96xf32>
    %80 = tpu.matmul %77, %79, %cst_53 {dimension_numbers = #tpu.dot_dimension_numbers<[1], [0], [0], [1], [0, 0, 1, 1], [], []>} : vector<8x32xf32>, vector<32x96xf32>, vector<8x96xf32> -> vector<8x96xf32>
    %81 = arith.addf %78, %80 : vector<8x96xf32>
    %82 = vector.extract_strided_slice %38 {offsets = [0, 0], sizes = [8, 96], strides = [1, 1]} : vector<8x128xf32> to vector<8x96xf32>
    %83 = vector.extract_strided_slice %81 {offsets = [0, 0], sizes = [8, 32], strides = [1, 1]} : vector<8x96xf32> to vector<8x32xf32>
    %84 = vector.extract_strided_slice %82 {offsets = [0, 0], sizes = [8, 32], strides = [1, 1]} : vector<8x96xf32> to vector<8x32xf32>
    %85 = arith.addf %83, %84 : vector<8x32xf32>
    %86 = arith.negf %85 : vector<8x32xf32>
    %87 = math.exp %86 : vector<8x32xf32>
    %cst_54 = arith.constant 1.000000e+00 : f32
    %88 = vector.broadcast %cst_54 : f32 to vector<8x32xf32>
    %89 = arith.addf %88, %87 : vector<8x32xf32>
    %90 = arith.divf %88, %89 : vector<8x32xf32>
    %91 = vector.extract_strided_slice %81 {offsets = [0, 32], sizes = [8, 32], strides = [1, 1]} : vector<8x96xf32> to vector<8x32xf32>
    %92 = vector.extract_strided_slice %82 {offsets = [0, 32], sizes = [8, 32], strides = [1, 1]} : vector<8x96xf32> to vector<8x32xf32>
    %93 = arith.addf %91, %92 : vector<8x32xf32>
    %94 = arith.negf %93 : vector<8x32xf32>
    %95 = math.exp %94 : vector<8x32xf32>
    %cst_55 = arith.constant 1.000000e+00 : f32
    %96 = vector.broadcast %cst_55 : f32 to vector<8x32xf32>
    %97 = arith.addf %96, %95 : vector<8x32xf32>
    %98 = arith.divf %96, %97 : vector<8x32xf32>
    %99 = vector.extract_strided_slice %81 {offsets = [0, 64], sizes = [8, 32], strides = [1, 1]} : vector<8x96xf32> to vector<8x32xf32>
    %100 = vector.extract_strided_slice %82 {offsets = [0, 64], sizes = [8, 32], strides = [1, 1]} : vector<8x96xf32> to vector<8x32xf32>
    %101 = arith.mulf %90, %100 : vector<8x32xf32>
    %102 = arith.addf %99, %101 : vector<8x32xf32>
    %103 = math.tanh %102 : vector<8x32xf32>
    %cst_56 = arith.constant 1.000000e+00 : f32
    %104 = vector.broadcast %cst_56 : f32 to vector<8x32xf32>
    %105 = arith.subf %104, %98 : vector<8x32xf32>
    %106 = arith.mulf %105, %103 : vector<8x32xf32>
    %107 = arith.mulf %98, %33 : vector<8x32xf32>
    %108 = arith.addf %106, %107 : vector<8x32xf32>
    %109 = arith.index_cast %c0_i32 : i32 to index
    %c0_57 = arith.constant 0 : index
    %c0_58 = arith.constant 0 : index
    %110 = vector.load %arg34[%109, %c0_57, %c0_58] : memref<8x8x32xf32, #tpu.memory_space<vmem>>, vector<1x8x32xf32>
    %111 = vector.shape_cast %110 : vector<1x8x32xf32> to vector<8x32xf32>
    %112 = vector.shape_cast %51 : vector<8x32xf32> to vector<1x8x32xf32>
    tpu.vector_store %arg34[%109, %c0_57, %c0_58], %112 {strides = array<i32>} : memref<8x8x32xf32, #tpu.memory_space<vmem>>, vector<1x8x32xf32>,
    %113 = arith.index_cast %c0_i32 : i32 to index
    %c0_59 = arith.constant 0 : index
    %c0_60 = arith.constant 0 : index
    %114 = vector.load %arg35[%113, %c0_59, %c0_60] : memref<8x8x32xf32, #tpu.memory_space<vmem>>, vector<1x8x32xf32>
    %115 = vector.shape_cast %114 : vector<1x8x32xf32> to vector<8x32xf32>
    %116 = vector.shape_cast %77 : vector<8x32xf32> to vector<1x8x32xf32>
    tpu.vector_store %arg35[%113, %c0_59, %c0_60], %116 {strides = array<i32>} : memref<8x8x32xf32, #tpu.memory_space<vmem>>, vector<1x8x32xf32>,
    %117 = arith.index_cast %c0_i32 : i32 to index
    %c0_61 = arith.constant 0 : index
    %c0_62 = arith.constant 0 : index
    %118 = vector.load %arg36[%117, %c0_61, %c0_62] : memref<8x8x32xf32, #tpu.memory_space<vmem>>, vector<1x8x32xf32>
    %119 = vector.shape_cast %118 : vector<1x8x32xf32> to vector<8x32xf32>
    %120 = vector.shape_cast %33 : vector<8x32xf32> to vector<1x8x32xf32>
    tpu.vector_store %arg36[%117, %c0_61, %c0_62], %120 {strides = array<i32>} : memref<8x8x32xf32, #tpu.memory_space<vmem>>, vector<1x8x32xf32>,
    %c1_i32 = arith.constant 1 : i32
    %121 = arith.index_cast %c1_i32 : i32 to index
    %c0_63 = arith.constant 0 : index
    %c0_64 = arith.constant 0 : index
    %122 = vector.load %arg33[%121, %c0_63, %c0_64] : memref<8x8x128xf32, #tpu.memory_space<vmem>>, vector<1x8x128xf32>
    %123 = vector.shape_cast %122 : vector<1x8x128xf32> to vector<8x128xf32>
    %c0_65 = arith.constant 0 : index
    %c0_66 = arith.constant 0 : index
    %124 = vector.load %arg10[%c0_65, %c0_66] : memref<32x128xf32, #tpu.memory_space<vmem>>, vector<32x128xf32>
    %cst_67 = arith.constant dense<0.000000e+00> : vector<8x128xf32>
    %125 = tpu.matmul %108, %124, %cst_67 {dimension_numbers = #tpu.dot_dimension_numbers<[1], [0], [0], [1], [0, 0, 1, 1], [], []>} : vector<8x32xf32>, vector<32x128xf32>, vector<8x128xf32> -> vector<8x128xf32>
    %126 = vector.extract_strided_slice %123 {offsets = [0, 0], sizes = [8, 32], strides = [1, 1]} : vector<8x128xf32> to vector<8x32xf32>
    %127 = vector.extract_strided_slice %125 {offsets = [0, 96], sizes = [8, 32], strides = [1, 1]} : vector<8x128xf32> to vector<8x32xf32>
    %128 = arith.addf %126, %127 : vector<8x32xf32>
    %cst_68 = arith.constant 0.000000e+00 : f32
    %129 = vector.broadcast %cst_68 : f32 to vector<8x32xf32>
    %130 = arith.maximumf %128, %129 : vector<8x32xf32>
    %c0_69 = arith.constant 0 : index
    %c0_70 = arith.constant 0 : index
    %131 = vector.load %arg11[%c0_69, %c0_70] : memref<32x32xf32, #tpu.memory_space<vmem>>, vector<32x32xf32>
    %cst_71 = arith.constant dense<0.000000e+00> : vector<8x32xf32>
    %132 = tpu.matmul %130, %131, %cst_71 {dimension_numbers = #tpu.dot_dimension_numbers<[1], [0], [0], [1], [0, 0, 1, 1], [], []>} : vector<8x32xf32>, vector<32x32xf32>, vector<8x32xf32> -> vector<8x32xf32>
    %133 = arith.addf %132, %25 : vector<8x32xf32>
    %cst_72 = arith.constant 0.000000e+00 : f32
    %134 = vector.broadcast %cst_72 : f32 to vector<8x32xf32>
    %135 = arith.maximumf %133, %134 : vector<8x32xf32>
    %c0_73 = arith.constant 0 : index
    %c0_74 = arith.constant 0 : index
    %136 = vector.load %arg13[%c0_73, %c0_74] : memref<32x32xf32, #tpu.memory_space<vmem>>, vector<32x32xf32>
    %cst_75 = arith.constant dense<0.000000e+00> : vector<8x32xf32>
    %137 = tpu.matmul %135, %136, %cst_75 {dimension_numbers = #tpu.dot_dimension_numbers<[1], [0], [0], [1], [0, 0, 1, 1], [], []>} : vector<8x32xf32>, vector<32x32xf32>, vector<8x32xf32> -> vector<8x32xf32>
    %138 = arith.addf %137, %28 : vector<8x32xf32>
    %139 = vector.extract_strided_slice %138 {offsets = [0, 16], sizes = [8, 16], strides = [1, 1]} : vector<8x32xf32> to vector<8x16xf32>
    %cst_76 = arith.constant 0.000000e+00 : f32
    %140 = vector.broadcast %cst_76 : f32 to vector<8x16xf32>
    %141 = arith.maximumf %139, %140 : vector<8x16xf32>
    %142 = vector.broadcast %cst_76 : f32 to vector<8x16xf32>
    %143 = arith.subf %139, %142 : vector<8x16xf32>
    %144 = arith.cmpf one, %143, %143 : vector<8x16xf32>
    %145 = vector.broadcast %cst_76 : f32 to vector<8x16xf32>
    %146 = arith.addf %139, %145 : vector<8x16xf32>
    %147 = math.absf %143 : vector<8x16xf32>
    %cst_77 = arith.constant 0.000000e+00 : f32
    %148 = vector.broadcast %cst_77 : f32 to vector<8x16xf32>
    %149 = arith.subf %148, %147 : vector<8x16xf32>
    %150 = math.exp %149 : vector<8x16xf32>
    %151 = math.log1p %150 : vector<8x16xf32>
    %152 = arith.addf %141, %151 : vector<8x16xf32>
    %153 = arith.select %144, %146, %152 : vector<8x16xi1>, vector<8x16xf32>
    %154 = arith.index_cast %c1_i32 : i32 to index
    %c0_78 = arith.constant 0 : index
    %c0_79 = arith.constant 0 : index
    %155 = vector.load %arg1[%154, %c0_78, %c0_79] : memref<8x8x16xf32, #tpu.memory_space<vmem>>, vector<1x8x16xf32>
    %156 = vector.shape_cast %155 : vector<1x8x16xf32> to vector<8x16xf32>
    %157 = arith.mulf %156, %153 : vector<8x16xf32>
    %158 = vector.extract_strided_slice %138 {offsets = [0, 0], sizes = [8, 16], strides = [1, 1]} : vector<8x32xf32> to vector<8x16xf32>
    %159 = arith.addf %157, %158 : vector<8x16xf32>
    %c0_80 = arith.constant 0 : index
    %c0_81 = arith.constant 0 : index
    %160 = vector.load %arg15[%c0_80, %c0_81] : memref<16x32xf32, #tpu.memory_space<vmem>>, vector<16x32xf32>
    %cst_82 = arith.constant dense<0.000000e+00> : vector<8x32xf32>
    %161 = tpu.matmul %159, %160, %cst_82 {dimension_numbers = #tpu.dot_dimension_numbers<[1], [0], [0], [1], [0, 0, 1, 1], [], []>} : vector<8x16xf32>, vector<16x32xf32>, vector<8x32xf32> -> vector<8x32xf32>
    %162 = arith.addf %161, %31 : vector<8x32xf32>
    %cst_83 = arith.constant 0.000000e+00 : f32
    %163 = vector.broadcast %cst_83 : f32 to vector<8x32xf32>
    %164 = arith.maximumf %162, %163 : vector<8x32xf32>
    %165 = vector.extract_strided_slice %123 {offsets = [0, 32], sizes = [8, 96], strides = [1, 1]} : vector<8x128xf32> to vector<8x96xf32>
    %c0_84 = arith.constant 0 : index
    %c0_85 = arith.constant 0 : index
    %166 = vector.load %arg17[%c0_84, %c0_85] : memref<32x96xf32, #tpu.memory_space<vmem>>, vector<32x96xf32>
    %cst_86 = arith.constant dense<0.000000e+00> : vector<8x96xf32>
    %167 = tpu.matmul %164, %166, %cst_86 {dimension_numbers = #tpu.dot_dimension_numbers<[1], [0], [0], [1], [0, 0, 1, 1], [], []>} : vector<8x32xf32>, vector<32x96xf32>, vector<8x96xf32> -> vector<8x96xf32>
    %168 = arith.addf %165, %167 : vector<8x96xf32>
    %169 = vector.extract_strided_slice %125 {offsets = [0, 0], sizes = [8, 96], strides = [1, 1]} : vector<8x128xf32> to vector<8x96xf32>
    %170 = vector.extract_strided_slice %168 {offsets = [0, 0], sizes = [8, 32], strides = [1, 1]} : vector<8x96xf32> to vector<8x32xf32>
    %171 = vector.extract_strided_slice %169 {offsets = [0, 0], sizes = [8, 32], strides = [1, 1]} : vector<8x96xf32> to vector<8x32xf32>
    %172 = arith.addf %170, %171 : vector<8x32xf32>
    %173 = arith.negf %172 : vector<8x32xf32>
    %174 = math.exp %173 : vector<8x32xf32>
    %cst_87 = arith.constant 1.000000e+00 : f32
    %175 = vector.broadcast %cst_87 : f32 to vector<8x32xf32>
    %176 = arith.addf %175, %174 : vector<8x32xf32>
    %177 = arith.divf %175, %176 : vector<8x32xf32>
    %178 = vector.extract_strided_slice %168 {offsets = [0, 32], sizes = [8, 32], strides = [1, 1]} : vector<8x96xf32> to vector<8x32xf32>
    %179 = vector.extract_strided_slice %169 {offsets = [0, 32], sizes = [8, 32], strides = [1, 1]} : vector<8x96xf32> to vector<8x32xf32>
    %180 = arith.addf %178, %179 : vector<8x32xf32>
    %181 = arith.negf %180 : vector<8x32xf32>
    %182 = math.exp %181 : vector<8x32xf32>
    %cst_88 = arith.constant 1.000000e+00 : f32
    %183 = vector.broadcast %cst_88 : f32 to vector<8x32xf32>
    %184 = arith.addf %183, %182 : vector<8x32xf32>
    %185 = arith.divf %183, %184 : vector<8x32xf32>
    %186 = vector.extract_strided_slice %168 {offsets = [0, 64], sizes = [8, 32], strides = [1, 1]} : vector<8x96xf32> to vector<8x32xf32>
    %187 = vector.extract_strided_slice %169 {offsets = [0, 64], sizes = [8, 32], strides = [1, 1]} : vector<8x96xf32> to vector<8x32xf32>
    %188 = arith.mulf %177, %187 : vector<8x32xf32>
    %189 = arith.addf %186, %188 : vector<8x32xf32>
    %190 = math.tanh %189 : vector<8x32xf32>
    %cst_89 = arith.constant 1.000000e+00 : f32
    %191 = vector.broadcast %cst_89 : f32 to vector<8x32xf32>
    %192 = arith.subf %191, %185 : vector<8x32xf32>
    %193 = arith.mulf %192, %190 : vector<8x32xf32>
    %194 = arith.mulf %185, %108 : vector<8x32xf32>
    %195 = arith.addf %193, %194 : vector<8x32xf32>
    %196 = arith.index_cast %c1_i32 : i32 to index
    %c0_90 = arith.constant 0 : index
    %c0_91 = arith.constant 0 : index
    %197 = vector.load %arg34[%196, %c0_90, %c0_91] : memref<8x8x32xf32, #tpu.memory_space<vmem>>, vector<1x8x32xf32>
    %198 = vector.shape_cast %197 : vector<1x8x32xf32> to vector<8x32xf32>
    %199 = vector.shape_cast %138 : vector<8x32xf32> to vector<1x8x32xf32>
    tpu.vector_store %arg34[%196, %c0_90, %c0_91], %199 {strides = array<i32>} : memref<8x8x32xf32, #tpu.memory_space<vmem>>, vector<1x8x32xf32>,
    %200 = arith.index_cast %c1_i32 : i32 to index
    %c0_92 = arith.constant 0 : index
    %c0_93 = arith.constant 0 : index
    %201 = vector.load %arg35[%200, %c0_92, %c0_93] : memref<8x8x32xf32, #tpu.memory_space<vmem>>, vector<1x8x32xf32>
    %202 = vector.shape_cast %201 : vector<1x8x32xf32> to vector<8x32xf32>
    %203 = vector.shape_cast %164 : vector<8x32xf32> to vector<1x8x32xf32>
    tpu.vector_store %arg35[%200, %c0_92, %c0_93], %203 {strides = array<i32>} : memref<8x8x32xf32, #tpu.memory_space<vmem>>, vector<1x8x32xf32>,
    %204 = arith.index_cast %c1_i32 : i32 to index
    %c0_94 = arith.constant 0 : index
    %c0_95 = arith.constant 0 : index
    %205 = vector.load %arg36[%204, %c0_94, %c0_95] : memref<8x8x32xf32, #tpu.memory_space<vmem>>, vector<1x8x32xf32>
    %206 = vector.shape_cast %205 : vector<1x8x32xf32> to vector<8x32xf32>
    %207 = vector.shape_cast %108 : vector<8x32xf32> to vector<1x8x32xf32>
    tpu.vector_store %arg36[%204, %c0_94, %c0_95], %207 {strides = array<i32>} : memref<8x8x32xf32, #tpu.memory_space<vmem>>, vector<1x8x32xf32>,
    %c2_i32 = arith.constant 2 : i32
    %208 = arith.index_cast %c2_i32 : i32 to index
    %c0_96 = arith.constant 0 : index
    %c0_97 = arith.constant 0 : index
    %209 = vector.load %arg33[%208, %c0_96, %c0_97] : memref<8x8x128xf32, #tpu.memory_space<vmem>>, vector<1x8x128xf32>
    %210 = vector.shape_cast %209 : vector<1x8x128xf32> to vector<8x128xf32>
    %c0_98 = arith.constant 0 : index
    %c0_99 = arith.constant 0 : index
    %211 = vector.load %arg10[%c0_98, %c0_99] : memref<32x128xf32, #tpu.memory_space<vmem>>, vector<32x128xf32>
    %cst_100 = arith.constant dense<0.000000e+00> : vector<8x128xf32>
    %212 = tpu.matmul %195, %211, %cst_100 {dimension_numbers = #tpu.dot_dimension_numbers<[1], [0], [0], [1], [0, 0, 1, 1], [], []>} : vector<8x32xf32>, vector<32x128xf32>, vector<8x128xf32> -> vector<8x128xf32>
    %213 = vector.extract_strided_slice %210 {offsets = [0, 0], sizes = [8, 32], strides = [1, 1]} : vector<8x128xf32> to vector<8x32xf32>
    %214 = vector.extract_strided_slice %212 {offsets = [0, 96], sizes = [8, 32], strides = [1, 1]} : vector<8x128xf32> to vector<8x32xf32>
    %215 = arith.addf %213, %214 : vector<8x32xf32>
    %cst_101 = arith.constant 0.000000e+00 : f32
    %216 = vector.broadcast %cst_101 : f32 to vector<8x32xf32>
    %217 = arith.maximumf %215, %216 : vector<8x32xf32>
    %c0_102 = arith.constant 0 : index
    %c0_103 = arith.constant 0 : index
    %218 = vector.load %arg11[%c0_102, %c0_103] : memref<32x32xf32, #tpu.memory_space<vmem>>, vector<32x32xf32>
    %cst_104 = arith.constant dense<0.000000e+00> : vector<8x32xf32>
    %219 = tpu.matmul %217, %218, %cst_104 {dimension_numbers = #tpu.dot_dimension_numbers<[1], [0], [0], [1], [0, 0, 1, 1], [], []>} : vector<8x32xf32>, vector<32x32xf32>, vector<8x32xf32> -> vector<8x32xf32>
    %220 = arith.addf %219, %25 : vector<8x32xf32>
    %cst_105 = arith.constant 0.000000e+00 : f32
    %221 = vector.broadcast %cst_105 : f32 to vector<8x32xf32>
    %222 = arith.maximumf %220, %221 : vector<8x32xf32>
    %c0_106 = arith.constant 0 : index
    %c0_107 = arith.constant 0 : index
    %223 = vector.load %arg13[%c0_106, %c0_107] : memref<32x32xf32, #tpu.memory_space<vmem>>, vector<32x32xf32>
    %cst_108 = arith.constant dense<0.000000e+00> : vector<8x32xf32>
    %224 = tpu.matmul %222, %223, %cst_108 {dimension_numbers = #tpu.dot_dimension_numbers<[1], [0], [0], [1], [0, 0, 1, 1], [], []>} : vector<8x32xf32>, vector<32x32xf32>, vector<8x32xf32> -> vector<8x32xf32>
    %225 = arith.addf %224, %28 : vector<8x32xf32>
    %226 = vector.extract_strided_slice %225 {offsets = [0, 16], sizes = [8, 16], strides = [1, 1]} : vector<8x32xf32> to vector<8x16xf32>
    %cst_109 = arith.constant 0.000000e+00 : f32
    %227 = vector.broadcast %cst_109 : f32 to vector<8x16xf32>
    %228 = arith.maximumf %226, %227 : vector<8x16xf32>
    %229 = vector.broadcast %cst_109 : f32 to vector<8x16xf32>
    %230 = arith.subf %226, %229 : vector<8x16xf32>
    %231 = arith.cmpf one, %230, %230 : vector<8x16xf32>
    %232 = vector.broadcast %cst_109 : f32 to vector<8x16xf32>
    %233 = arith.addf %226, %232 : vector<8x16xf32>
    %234 = math.absf %230 : vector<8x16xf32>
    %cst_110 = arith.constant 0.000000e+00 : f32
    %235 = vector.broadcast %cst_110 : f32 to vector<8x16xf32>
    %236 = arith.subf %235, %234 : vector<8x16xf32>
    %237 = math.exp %236 : vector<8x16xf32>
    %238 = math.log1p %237 : vector<8x16xf32>
    %239 = arith.addf %228, %238 : vector<8x16xf32>
    %240 = arith.select %231, %233, %239 : vector<8x16xi1>, vector<8x16xf32>
    %241 = arith.index_cast %c2_i32 : i32 to index
    %c0_111 = arith.constant 0 : index
    %c0_112 = arith.constant 0 : index
    %242 = vector.load %arg1[%241, %c0_111, %c0_112] : memref<8x8x16xf32, #tpu.memory_space<vmem>>, vector<1x8x16xf32>
    %243 = vector.shape_cast %242 : vector<1x8x16xf32> to vector<8x16xf32>
    %244 = arith.mulf %243, %240 : vector<8x16xf32>
    %245 = vector.extract_strided_slice %225 {offsets = [0, 0], sizes = [8, 16], strides = [1, 1]} : vector<8x32xf32> to vector<8x16xf32>
    %246 = arith.addf %244, %245 : vector<8x16xf32>
    %c0_113 = arith.constant 0 : index
    %c0_114 = arith.constant 0 : index
    %247 = vector.load %arg15[%c0_113, %c0_114] : memref<16x32xf32, #tpu.memory_space<vmem>>, vector<16x32xf32>
    %cst_115 = arith.constant dense<0.000000e+00> : vector<8x32xf32>
    %248 = tpu.matmul %246, %247, %cst_115 {dimension_numbers = #tpu.dot_dimension_numbers<[1], [0], [0], [1], [0, 0, 1, 1], [], []>} : vector<8x16xf32>, vector<16x32xf32>, vector<8x32xf32> -> vector<8x32xf32>
    %249 = arith.addf %248, %31 : vector<8x32xf32>
    %cst_116 = arith.constant 0.000000e+00 : f32
    %250 = vector.broadcast %cst_116 : f32 to vector<8x32xf32>
    %251 = arith.maximumf %249, %250 : vector<8x32xf32>
    %252 = vector.extract_strided_slice %210 {offsets = [0, 32], sizes = [8, 96], strides = [1, 1]} : vector<8x128xf32> to vector<8x96xf32>
    %c0_117 = arith.constant 0 : index
    %c0_118 = arith.constant 0 : index
    %253 = vector.load %arg17[%c0_117, %c0_118] : memref<32x96xf32, #tpu.memory_space<vmem>>, vector<32x96xf32>
    %cst_119 = arith.constant dense<0.000000e+00> : vector<8x96xf32>
    %254 = tpu.matmul %251, %253, %cst_119 {dimension_numbers = #tpu.dot_dimension_numbers<[1], [0], [0], [1], [0, 0, 1, 1], [], []>} : vector<8x32xf32>, vector<32x96xf32>, vector<8x96xf32> -> vector<8x96xf32>
    %255 = arith.addf %252, %254 : vector<8x96xf32>
    %256 = vector.extract_strided_slice %212 {offsets = [0, 0], sizes = [8, 96], strides = [1, 1]} : vector<8x128xf32> to vector<8x96xf32>
    %257 = vector.extract_strided_slice %255 {offsets = [0, 0], sizes = [8, 32], strides = [1, 1]} : vector<8x96xf32> to vector<8x32xf32>
    %258 = vector.extract_strided_slice %256 {offsets = [0, 0], sizes = [8, 32], strides = [1, 1]} : vector<8x96xf32> to vector<8x32xf32>
    %259 = arith.addf %257, %258 : vector<8x32xf32>
    %260 = arith.negf %259 : vector<8x32xf32>
    %261 = math.exp %260 : vector<8x32xf32>
    %cst_120 = arith.constant 1.000000e+00 : f32
    %262 = vector.broadcast %cst_120 : f32 to vector<8x32xf32>
    %263 = arith.addf %262, %261 : vector<8x32xf32>
    %264 = arith.divf %262, %263 : vector<8x32xf32>
    %265 = vector.extract_strided_slice %255 {offsets = [0, 32], sizes = [8, 32], strides = [1, 1]} : vector<8x96xf32> to vector<8x32xf32>
    %266 = vector.extract_strided_slice %256 {offsets = [0, 32], sizes = [8, 32], strides = [1, 1]} : vector<8x96xf32> to vector<8x32xf32>
    %267 = arith.addf %265, %266 : vector<8x32xf32>
    %268 = arith.negf %267 : vector<8x32xf32>
    %269 = math.exp %268 : vector<8x32xf32>
    %cst_121 = arith.constant 1.000000e+00 : f32
    %270 = vector.broadcast %cst_121 : f32 to vector<8x32xf32>
    %271 = arith.addf %270, %269 : vector<8x32xf32>
    %272 = arith.divf %270, %271 : vector<8x32xf32>
    %273 = vector.extract_strided_slice %255 {offsets = [0, 64], sizes = [8, 32], strides = [1, 1]} : vector<8x96xf32> to vector<8x32xf32>
    %274 = vector.extract_strided_slice %256 {offsets = [0, 64], sizes = [8, 32], strides = [1, 1]} : vector<8x96xf32> to vector<8x32xf32>
    %275 = arith.mulf %264, %274 : vector<8x32xf32>
    %276 = arith.addf %273, %275 : vector<8x32xf32>
    %277 = math.tanh %276 : vector<8x32xf32>
    %cst_122 = arith.constant 1.000000e+00 : f32
    %278 = vector.broadcast %cst_122 : f32 to vector<8x32xf32>
    %279 = arith.subf %278, %272 : vector<8x32xf32>
    %280 = arith.mulf %279, %277 : vector<8x32xf32>
    %281 = arith.mulf %272, %195 : vector<8x32xf32>
    %282 = arith.addf %280, %281 : vector<8x32xf32>
    %283 = arith.index_cast %c2_i32 : i32 to index
    %c0_123 = arith.constant 0 : index
    %c0_124 = arith.constant 0 : index
    %284 = vector.load %arg34[%283, %c0_123, %c0_124] : memref<8x8x32xf32, #tpu.memory_space<vmem>>, vector<1x8x32xf32>
    %285 = vector.shape_cast %284 : vector<1x8x32xf32> to vector<8x32xf32>
    %286 = vector.shape_cast %225 : vector<8x32xf32> to vector<1x8x32xf32>
    tpu.vector_store %arg34[%283, %c0_123, %c0_124], %286 {strides = array<i32>} : memref<8x8x32xf32, #tpu.memory_space<vmem>>, vector<1x8x32xf32>,
    %287 = arith.index_cast %c2_i32 : i32 to index
    %c0_125 = arith.constant 0 : index
    %c0_126 = arith.constant 0 : index
    %288 = vector.load %arg35[%287, %c0_125, %c0_126] : memref<8x8x32xf32, #tpu.memory_space<vmem>>, vector<1x8x32xf32>
    %289 = vector.shape_cast %288 : vector<1x8x32xf32> to vector<8x32xf32>
    %290 = vector.shape_cast %251 : vector<8x32xf32> to vector<1x8x32xf32>
    tpu.vector_store %arg35[%287, %c0_125, %c0_126], %290 {strides = array<i32>} : memref<8x8x32xf32, #tpu.memory_space<vmem>>, vector<1x8x32xf32>,
    %291 = arith.index_cast %c2_i32 : i32 to index
    %c0_127 = arith.constant 0 : index
    %c0_128 = arith.constant 0 : index
    %292 = vector.load %arg36[%291, %c0_127, %c0_128] : memref<8x8x32xf32, #tpu.memory_space<vmem>>, vector<1x8x32xf32>
    %293 = vector.shape_cast %292 : vector<1x8x32xf32> to vector<8x32xf32>
    %294 = vector.shape_cast %195 : vector<8x32xf32> to vector<1x8x32xf32>
    tpu.vector_store %arg36[%291, %c0_127, %c0_128], %294 {strides = array<i32>} : memref<8x8x32xf32, #tpu.memory_space<vmem>>, vector<1x8x32xf32>,
    %c3_i32 = arith.constant 3 : i32
    %295 = arith.index_cast %c3_i32 : i32 to index
    %c0_129 = arith.constant 0 : index
    %c0_130 = arith.constant 0 : index
    %296 = vector.load %arg33[%295, %c0_129, %c0_130] : memref<8x8x128xf32, #tpu.memory_space<vmem>>, vector<1x8x128xf32>
    %297 = vector.shape_cast %296 : vector<1x8x128xf32> to vector<8x128xf32>
    %c0_131 = arith.constant 0 : index
    %c0_132 = arith.constant 0 : index
    %298 = vector.load %arg10[%c0_131, %c0_132] : memref<32x128xf32, #tpu.memory_space<vmem>>, vector<32x128xf32>
    %cst_133 = arith.constant dense<0.000000e+00> : vector<8x128xf32>
    %299 = tpu.matmul %282, %298, %cst_133 {dimension_numbers = #tpu.dot_dimension_numbers<[1], [0], [0], [1], [0, 0, 1, 1], [], []>} : vector<8x32xf32>, vector<32x128xf32>, vector<8x128xf32> -> vector<8x128xf32>
    %300 = vector.extract_strided_slice %297 {offsets = [0, 0], sizes = [8, 32], strides = [1, 1]} : vector<8x128xf32> to vector<8x32xf32>
    %301 = vector.extract_strided_slice %299 {offsets = [0, 96], sizes = [8, 32], strides = [1, 1]} : vector<8x128xf32> to vector<8x32xf32>
    %302 = arith.addf %300, %301 : vector<8x32xf32>
    %cst_134 = arith.constant 0.000000e+00 : f32
    %303 = vector.broadcast %cst_134 : f32 to vector<8x32xf32>
    %304 = arith.maximumf %302, %303 : vector<8x32xf32>
    %c0_135 = arith.constant 0 : index
    %c0_136 = arith.constant 0 : index
    %305 = vector.load %arg11[%c0_135, %c0_136] : memref<32x32xf32, #tpu.memory_space<vmem>>, vector<32x32xf32>
    %cst_137 = arith.constant dense<0.000000e+00> : vector<8x32xf32>
    %306 = tpu.matmul %304, %305, %cst_137 {dimension_numbers = #tpu.dot_dimension_numbers<[1], [0], [0], [1], [0, 0, 1, 1], [], []>} : vector<8x32xf32>, vector<32x32xf32>, vector<8x32xf32> -> vector<8x32xf32>
    %307 = arith.addf %306, %25 : vector<8x32xf32>
    %cst_138 = arith.constant 0.000000e+00 : f32
    %308 = vector.broadcast %cst_138 : f32 to vector<8x32xf32>
    %309 = arith.maximumf %307, %308 : vector<8x32xf32>
    %c0_139 = arith.constant 0 : index
    %c0_140 = arith.constant 0 : index
    %310 = vector.load %arg13[%c0_139, %c0_140] : memref<32x32xf32, #tpu.memory_space<vmem>>, vector<32x32xf32>
    %cst_141 = arith.constant dense<0.000000e+00> : vector<8x32xf32>
    %311 = tpu.matmul %309, %310, %cst_141 {dimension_numbers = #tpu.dot_dimension_numbers<[1], [0], [0], [1], [0, 0, 1, 1], [], []>} : vector<8x32xf32>, vector<32x32xf32>, vector<8x32xf32> -> vector<8x32xf32>
    %312 = arith.addf %311, %28 : vector<8x32xf32>
    %313 = vector.extract_strided_slice %312 {offsets = [0, 16], sizes = [8, 16], strides = [1, 1]} : vector<8x32xf32> to vector<8x16xf32>
    %cst_142 = arith.constant 0.000000e+00 : f32
    %314 = vector.broadcast %cst_142 : f32 to vector<8x16xf32>
    %315 = arith.maximumf %313, %314 : vector<8x16xf32>
    %316 = vector.broadcast %cst_142 : f32 to vector<8x16xf32>
    %317 = arith.subf %313, %316 : vector<8x16xf32>
    %318 = arith.cmpf one, %317, %317 : vector<8x16xf32>
    %319 = vector.broadcast %cst_142 : f32 to vector<8x16xf32>
    %320 = arith.addf %313, %319 : vector<8x16xf32>
    %321 = math.absf %317 : vector<8x16xf32>
    %cst_143 = arith.constant 0.000000e+00 : f32
    %322 = vector.broadcast %cst_143 : f32 to vector<8x16xf32>
    %323 = arith.subf %322, %321 : vector<8x16xf32>
    %324 = math.exp %323 : vector<8x16xf32>
    %325 = math.log1p %324 : vector<8x16xf32>
    %326 = arith.addf %315, %325 : vector<8x16xf32>
    %327 = arith.select %318, %320, %326 : vector<8x16xi1>, vector<8x16xf32>
    %328 = arith.index_cast %c3_i32 : i32 to index
    %c0_144 = arith.constant 0 : index
    %c0_145 = arith.constant 0 : index
    %329 = vector.load %arg1[%328, %c0_144, %c0_145] : memref<8x8x16xf32, #tpu.memory_space<vmem>>, vector<1x8x16xf32>
    %330 = vector.shape_cast %329 : vector<1x8x16xf32> to vector<8x16xf32>
    %331 = arith.mulf %330, %327 : vector<8x16xf32>
    %332 = vector.extract_strided_slice %312 {offsets = [0, 0], sizes = [8, 16], strides = [1, 1]} : vector<8x32xf32> to vector<8x16xf32>
    %333 = arith.addf %331, %332 : vector<8x16xf32>
    %c0_146 = arith.constant 0 : index
    %c0_147 = arith.constant 0 : index
    %334 = vector.load %arg15[%c0_146, %c0_147] : memref<16x32xf32, #tpu.memory_space<vmem>>, vector<16x32xf32>
    %cst_148 = arith.constant dense<0.000000e+00> : vector<8x32xf32>
    %335 = tpu.matmul %333, %334, %cst_148 {dimension_numbers = #tpu.dot_dimension_numbers<[1], [0], [0], [1], [0, 0, 1, 1], [], []>} : vector<8x16xf32>, vector<16x32xf32>, vector<8x32xf32> -> vector<8x32xf32>
    %336 = arith.addf %335, %31 : vector<8x32xf32>
    %cst_149 = arith.constant 0.000000e+00 : f32
    %337 = vector.broadcast %cst_149 : f32 to vector<8x32xf32>
    %338 = arith.maximumf %336, %337 : vector<8x32xf32>
    %339 = vector.extract_strided_slice %297 {offsets = [0, 32], sizes = [8, 96], strides = [1, 1]} : vector<8x128xf32> to vector<8x96xf32>
    %c0_150 = arith.constant 0 : index
    %c0_151 = arith.constant 0 : index
    %340 = vector.load %arg17[%c0_150, %c0_151] : memref<32x96xf32, #tpu.memory_space<vmem>>, vector<32x96xf32>
    %cst_152 = arith.constant dense<0.000000e+00> : vector<8x96xf32>
    %341 = tpu.matmul %338, %340, %cst_152 {dimension_numbers = #tpu.dot_dimension_numbers<[1], [0], [0], [1], [0, 0, 1, 1], [], []>} : vector<8x32xf32>, vector<32x96xf32>, vector<8x96xf32> -> vector<8x96xf32>
    %342 = arith.addf %339, %341 : vector<8x96xf32>
    %343 = vector.extract_strided_slice %299 {offsets = [0, 0], sizes = [8, 96], strides = [1, 1]} : vector<8x128xf32> to vector<8x96xf32>
    %344 = vector.extract_strided_slice %342 {offsets = [0, 0], sizes = [8, 32], strides = [1, 1]} : vector<8x96xf32> to vector<8x32xf32>
    %345 = vector.extract_strided_slice %343 {offsets = [0, 0], sizes = [8, 32], strides = [1, 1]} : vector<8x96xf32> to vector<8x32xf32>
    %346 = arith.addf %344, %345 : vector<8x32xf32>
    %347 = arith.negf %346 : vector<8x32xf32>
    %348 = math.exp %347 : vector<8x32xf32>
    %cst_153 = arith.constant 1.000000e+00 : f32
    %349 = vector.broadcast %cst_153 : f32 to vector<8x32xf32>
    %350 = arith.addf %349, %348 : vector<8x32xf32>
    %351 = arith.divf %349, %350 : vector<8x32xf32>
    %352 = vector.extract_strided_slice %342 {offsets = [0, 32], sizes = [8, 32], strides = [1, 1]} : vector<8x96xf32> to vector<8x32xf32>
    %353 = vector.extract_strided_slice %343 {offsets = [0, 32], sizes = [8, 32], strides = [1, 1]} : vector<8x96xf32> to vector<8x32xf32>
    %354 = arith.addf %352, %353 : vector<8x32xf32>
    %355 = arith.negf %354 : vector<8x32xf32>
    %356 = math.exp %355 : vector<8x32xf32>
    %cst_154 = arith.constant 1.000000e+00 : f32
    %357 = vector.broadcast %cst_154 : f32 to vector<8x32xf32>
    %358 = arith.addf %357, %356 : vector<8x32xf32>
    %359 = arith.divf %357, %358 : vector<8x32xf32>
    %360 = vector.extract_strided_slice %342 {offsets = [0, 64], sizes = [8, 32], strides = [1, 1]} : vector<8x96xf32> to vector<8x32xf32>
    %361 = vector.extract_strided_slice %343 {offsets = [0, 64], sizes = [8, 32], strides = [1, 1]} : vector<8x96xf32> to vector<8x32xf32>
    %362 = arith.mulf %351, %361 : vector<8x32xf32>
    %363 = arith.addf %360, %362 : vector<8x32xf32>
    %364 = math.tanh %363 : vector<8x32xf32>
    %cst_155 = arith.constant 1.000000e+00 : f32
    %365 = vector.broadcast %cst_155 : f32 to vector<8x32xf32>
    %366 = arith.subf %365, %359 : vector<8x32xf32>
    %367 = arith.mulf %366, %364 : vector<8x32xf32>
    %368 = arith.mulf %359, %282 : vector<8x32xf32>
    %369 = arith.addf %367, %368 : vector<8x32xf32>
    %370 = arith.index_cast %c3_i32 : i32 to index
    %c0_156 = arith.constant 0 : index
    %c0_157 = arith.constant 0 : index
    %371 = vector.load %arg34[%370, %c0_156, %c0_157] : memref<8x8x32xf32, #tpu.memory_space<vmem>>, vector<1x8x32xf32>
    %372 = vector.shape_cast %371 : vector<1x8x32xf32> to vector<8x32xf32>
    %373 = vector.shape_cast %312 : vector<8x32xf32> to vector<1x8x32xf32>
    tpu.vector_store %arg34[%370, %c0_156, %c0_157], %373 {strides = array<i32>} : memref<8x8x32xf32, #tpu.memory_space<vmem>>, vector<1x8x32xf32>,
    %374 = arith.index_cast %c3_i32 : i32 to index
    %c0_158 = arith.constant 0 : index
    %c0_159 = arith.constant 0 : index
    %375 = vector.load %arg35[%374, %c0_158, %c0_159] : memref<8x8x32xf32, #tpu.memory_space<vmem>>, vector<1x8x32xf32>
    %376 = vector.shape_cast %375 : vector<1x8x32xf32> to vector<8x32xf32>
    %377 = vector.shape_cast %338 : vector<8x32xf32> to vector<1x8x32xf32>
    tpu.vector_store %arg35[%374, %c0_158, %c0_159], %377 {strides = array<i32>} : memref<8x8x32xf32, #tpu.memory_space<vmem>>, vector<1x8x32xf32>,
    %378 = arith.index_cast %c3_i32 : i32 to index
    %c0_160 = arith.constant 0 : index
    %c0_161 = arith.constant 0 : index
    %379 = vector.load %arg36[%378, %c0_160, %c0_161] : memref<8x8x32xf32, #tpu.memory_space<vmem>>, vector<1x8x32xf32>
    %380 = vector.shape_cast %379 : vector<1x8x32xf32> to vector<8x32xf32>
    %381 = vector.shape_cast %282 : vector<8x32xf32> to vector<1x8x32xf32>
    tpu.vector_store %arg36[%378, %c0_160, %c0_161], %381 {strides = array<i32>} : memref<8x8x32xf32, #tpu.memory_space<vmem>>, vector<1x8x32xf32>,
    %c4_i32 = arith.constant 4 : i32
    %382 = arith.index_cast %c4_i32 : i32 to index
    %c0_162 = arith.constant 0 : index
    %c0_163 = arith.constant 0 : index
    %383 = vector.load %arg33[%382, %c0_162, %c0_163] : memref<8x8x128xf32, #tpu.memory_space<vmem>>, vector<1x8x128xf32>
    %384 = vector.shape_cast %383 : vector<1x8x128xf32> to vector<8x128xf32>
    %c0_164 = arith.constant 0 : index
    %c0_165 = arith.constant 0 : index
    %385 = vector.load %arg10[%c0_164, %c0_165] : memref<32x128xf32, #tpu.memory_space<vmem>>, vector<32x128xf32>
    %cst_166 = arith.constant dense<0.000000e+00> : vector<8x128xf32>
    %386 = tpu.matmul %369, %385, %cst_166 {dimension_numbers = #tpu.dot_dimension_numbers<[1], [0], [0], [1], [0, 0, 1, 1], [], []>} : vector<8x32xf32>, vector<32x128xf32>, vector<8x128xf32> -> vector<8x128xf32>
    %387 = vector.extract_strided_slice %384 {offsets = [0, 0], sizes = [8, 32], strides = [1, 1]} : vector<8x128xf32> to vector<8x32xf32>
    %388 = vector.extract_strided_slice %386 {offsets = [0, 96], sizes = [8, 32], strides = [1, 1]} : vector<8x128xf32> to vector<8x32xf32>
    %389 = arith.addf %387, %388 : vector<8x32xf32>
    %cst_167 = arith.constant 0.000000e+00 : f32
    %390 = vector.broadcast %cst_167 : f32 to vector<8x32xf32>
    %391 = arith.maximumf %389, %390 : vector<8x32xf32>
    %c0_168 = arith.constant 0 : index
    %c0_169 = arith.constant 0 : index
    %392 = vector.load %arg11[%c0_168, %c0_169] : memref<32x32xf32, #tpu.memory_space<vmem>>, vector<32x32xf32>
    %cst_170 = arith.constant dense<0.000000e+00> : vector<8x32xf32>
    %393 = tpu.matmul %391, %392, %cst_170 {dimension_numbers = #tpu.dot_dimension_numbers<[1], [0], [0], [1], [0, 0, 1, 1], [], []>} : vector<8x32xf32>, vector<32x32xf32>, vector<8x32xf32> -> vector<8x32xf32>
    %394 = arith.addf %393, %25 : vector<8x32xf32>
    %cst_171 = arith.constant 0.000000e+00 : f32
    %395 = vector.broadcast %cst_171 : f32 to vector<8x32xf32>
    %396 = arith.maximumf %394, %395 : vector<8x32xf32>
    %c0_172 = arith.constant 0 : index
    %c0_173 = arith.constant 0 : index
    %397 = vector.load %arg13[%c0_172, %c0_173] : memref<32x32xf32, #tpu.memory_space<vmem>>, vector<32x32xf32>
    %cst_174 = arith.constant dense<0.000000e+00> : vector<8x32xf32>
    %398 = tpu.matmul %396, %397, %cst_174 {dimension_numbers = #tpu.dot_dimension_numbers<[1], [0], [0], [1], [0, 0, 1, 1], [], []>} : vector<8x32xf32>, vector<32x32xf32>, vector<8x32xf32> -> vector<8x32xf32>
    %399 = arith.addf %398, %28 : vector<8x32xf32>
    %400 = vector.extract_strided_slice %399 {offsets = [0, 16], sizes = [8, 16], strides = [1, 1]} : vector<8x32xf32> to vector<8x16xf32>
    %cst_175 = arith.constant 0.000000e+00 : f32
    %401 = vector.broadcast %cst_175 : f32 to vector<8x16xf32>
    %402 = arith.maximumf %400, %401 : vector<8x16xf32>
    %403 = vector.broadcast %cst_175 : f32 to vector<8x16xf32>
    %404 = arith.subf %400, %403 : vector<8x16xf32>
    %405 = arith.cmpf one, %404, %404 : vector<8x16xf32>
    %406 = vector.broadcast %cst_175 : f32 to vector<8x16xf32>
    %407 = arith.addf %400, %406 : vector<8x16xf32>
    %408 = math.absf %404 : vector<8x16xf32>
    %cst_176 = arith.constant 0.000000e+00 : f32
    %409 = vector.broadcast %cst_176 : f32 to vector<8x16xf32>
    %410 = arith.subf %409, %408 : vector<8x16xf32>
    %411 = math.exp %410 : vector<8x16xf32>
    %412 = math.log1p %411 : vector<8x16xf32>
    %413 = arith.addf %402, %412 : vector<8x16xf32>
    %414 = arith.select %405, %407, %413 : vector<8x16xi1>, vector<8x16xf32>
    %415 = arith.index_cast %c4_i32 : i32 to index
    %c0_177 = arith.constant 0 : index
    %c0_178 = arith.constant 0 : index
    %416 = vector.load %arg1[%415, %c0_177, %c0_178] : memref<8x8x16xf32, #tpu.memory_space<vmem>>, vector<1x8x16xf32>
    %417 = vector.shape_cast %416 : vector<1x8x16xf32> to vector<8x16xf32>
    %418 = arith.mulf %417, %414 : vector<8x16xf32>
    %419 = vector.extract_strided_slice %399 {offsets = [0, 0], sizes = [8, 16], strides = [1, 1]} : vector<8x32xf32> to vector<8x16xf32>
    %420 = arith.addf %418, %419 : vector<8x16xf32>
    %c0_179 = arith.constant 0 : index
    %c0_180 = arith.constant 0 : index
    %421 = vector.load %arg15[%c0_179, %c0_180] : memref<16x32xf32, #tpu.memory_space<vmem>>, vector<16x32xf32>
    %cst_181 = arith.constant dense<0.000000e+00> : vector<8x32xf32>
    %422 = tpu.matmul %420, %421, %cst_181 {dimension_numbers = #tpu.dot_dimension_numbers<[1], [0], [0], [1], [0, 0, 1, 1], [], []>} : vector<8x16xf32>, vector<16x32xf32>, vector<8x32xf32> -> vector<8x32xf32>
    %423 = arith.addf %422, %31 : vector<8x32xf32>
    %cst_182 = arith.constant 0.000000e+00 : f32
    %424 = vector.broadcast %cst_182 : f32 to vector<8x32xf32>
    %425 = arith.maximumf %423, %424 : vector<8x32xf32>
    %426 = vector.extract_strided_slice %384 {offsets = [0, 32], sizes = [8, 96], strides = [1, 1]} : vector<8x128xf32> to vector<8x96xf32>
    %c0_183 = arith.constant 0 : index
    %c0_184 = arith.constant 0 : index
    %427 = vector.load %arg17[%c0_183, %c0_184] : memref<32x96xf32, #tpu.memory_space<vmem>>, vector<32x96xf32>
    %cst_185 = arith.constant dense<0.000000e+00> : vector<8x96xf32>
    %428 = tpu.matmul %425, %427, %cst_185 {dimension_numbers = #tpu.dot_dimension_numbers<[1], [0], [0], [1], [0, 0, 1, 1], [], []>} : vector<8x32xf32>, vector<32x96xf32>, vector<8x96xf32> -> vector<8x96xf32>
    %429 = arith.addf %426, %428 : vector<8x96xf32>
    %430 = vector.extract_strided_slice %386 {offsets = [0, 0], sizes = [8, 96], strides = [1, 1]} : vector<8x128xf32> to vector<8x96xf32>
    %431 = vector.extract_strided_slice %429 {offsets = [0, 0], sizes = [8, 32], strides = [1, 1]} : vector<8x96xf32> to vector<8x32xf32>
    %432 = vector.extract_strided_slice %430 {offsets = [0, 0], sizes = [8, 32], strides = [1, 1]} : vector<8x96xf32> to vector<8x32xf32>
    %433 = arith.addf %431, %432 : vector<8x32xf32>
    %434 = arith.negf %433 : vector<8x32xf32>
    %435 = math.exp %434 : vector<8x32xf32>
    %cst_186 = arith.constant 1.000000e+00 : f32
    %436 = vector.broadcast %cst_186 : f32 to vector<8x32xf32>
    %437 = arith.addf %436, %435 : vector<8x32xf32>
    %438 = arith.divf %436, %437 : vector<8x32xf32>
    %439 = vector.extract_strided_slice %429 {offsets = [0, 32], sizes = [8, 32], strides = [1, 1]} : vector<8x96xf32> to vector<8x32xf32>
    %440 = vector.extract_strided_slice %430 {offsets = [0, 32], sizes = [8, 32], strides = [1, 1]} : vector<8x96xf32> to vector<8x32xf32>
    %441 = arith.addf %439, %440 : vector<8x32xf32>
    %442 = arith.negf %441 : vector<8x32xf32>
    %443 = math.exp %442 : vector<8x32xf32>
    %cst_187 = arith.constant 1.000000e+00 : f32
    %444 = vector.broadcast %cst_187 : f32 to vector<8x32xf32>
    %445 = arith.addf %444, %443 : vector<8x32xf32>
    %446 = arith.divf %444, %445 : vector<8x32xf32>
    %447 = vector.extract_strided_slice %429 {offsets = [0, 64], sizes = [8, 32], strides = [1, 1]} : vector<8x96xf32> to vector<8x32xf32>
    %448 = vector.extract_strided_slice %430 {offsets = [0, 64], sizes = [8, 32], strides = [1, 1]} : vector<8x96xf32> to vector<8x32xf32>
    %449 = arith.mulf %438, %448 : vector<8x32xf32>
    %450 = arith.addf %447, %449 : vector<8x32xf32>
    %451 = math.tanh %450 : vector<8x32xf32>
    %cst_188 = arith.constant 1.000000e+00 : f32
    %452 = vector.broadcast %cst_188 : f32 to vector<8x32xf32>
    %453 = arith.subf %452, %446 : vector<8x32xf32>
    %454 = arith.mulf %453, %451 : vector<8x32xf32>
    %455 = arith.mulf %446, %369 : vector<8x32xf32>
    %456 = arith.addf %454, %455 : vector<8x32xf32>
    %457 = arith.index_cast %c4_i32 : i32 to index
    %c0_189 = arith.constant 0 : index
    %c0_190 = arith.constant 0 : index
    %458 = vector.load %arg34[%457, %c0_189, %c0_190] : memref<8x8x32xf32, #tpu.memory_space<vmem>>, vector<1x8x32xf32>
    %459 = vector.shape_cast %458 : vector<1x8x32xf32> to vector<8x32xf32>
    %460 = vector.shape_cast %399 : vector<8x32xf32> to vector<1x8x32xf32>
    tpu.vector_store %arg34[%457, %c0_189, %c0_190], %460 {strides = array<i32>} : memref<8x8x32xf32, #tpu.memory_space<vmem>>, vector<1x8x32xf32>,
    %461 = arith.index_cast %c4_i32 : i32 to index
    %c0_191 = arith.constant 0 : index
    %c0_192 = arith.constant 0 : index
    %462 = vector.load %arg35[%461, %c0_191, %c0_192] : memref<8x8x32xf32, #tpu.memory_space<vmem>>, vector<1x8x32xf32>
    %463 = vector.shape_cast %462 : vector<1x8x32xf32> to vector<8x32xf32>
    %464 = vector.shape_cast %425 : vector<8x32xf32> to vector<1x8x32xf32>
    tpu.vector_store %arg35[%461, %c0_191, %c0_192], %464 {strides = array<i32>} : memref<8x8x32xf32, #tpu.memory_space<vmem>>, vector<1x8x32xf32>,
    %465 = arith.index_cast %c4_i32 : i32 to index
    %c0_193 = arith.constant 0 : index
    %c0_194 = arith.constant 0 : index
    %466 = vector.load %arg36[%465, %c0_193, %c0_194] : memref<8x8x32xf32, #tpu.memory_space<vmem>>, vector<1x8x32xf32>
    %467 = vector.shape_cast %466 : vector<1x8x32xf32> to vector<8x32xf32>
    %468 = vector.shape_cast %369 : vector<8x32xf32> to vector<1x8x32xf32>
    tpu.vector_store %arg36[%465, %c0_193, %c0_194], %468 {strides = array<i32>} : memref<8x8x32xf32, #tpu.memory_space<vmem>>, vector<1x8x32xf32>,
    %c5_i32 = arith.constant 5 : i32
    %469 = arith.index_cast %c5_i32 : i32 to index
    %c0_195 = arith.constant 0 : index
    %c0_196 = arith.constant 0 : index
    %470 = vector.load %arg33[%469, %c0_195, %c0_196] : memref<8x8x128xf32, #tpu.memory_space<vmem>>, vector<1x8x128xf32>
    %471 = vector.shape_cast %470 : vector<1x8x128xf32> to vector<8x128xf32>
    %c0_197 = arith.constant 0 : index
    %c0_198 = arith.constant 0 : index
    %472 = vector.load %arg10[%c0_197, %c0_198] : memref<32x128xf32, #tpu.memory_space<vmem>>, vector<32x128xf32>
    %cst_199 = arith.constant dense<0.000000e+00> : vector<8x128xf32>
    %473 = tpu.matmul %456, %472, %cst_199 {dimension_numbers = #tpu.dot_dimension_numbers<[1], [0], [0], [1], [0, 0, 1, 1], [], []>} : vector<8x32xf32>, vector<32x128xf32>, vector<8x128xf32> -> vector<8x128xf32>
    %474 = vector.extract_strided_slice %471 {offsets = [0, 0], sizes = [8, 32], strides = [1, 1]} : vector<8x128xf32> to vector<8x32xf32>
    %475 = vector.extract_strided_slice %473 {offsets = [0, 96], sizes = [8, 32], strides = [1, 1]} : vector<8x128xf32> to vector<8x32xf32>
    %476 = arith.addf %474, %475 : vector<8x32xf32>
    %cst_200 = arith.constant 0.000000e+00 : f32
    %477 = vector.broadcast %cst_200 : f32 to vector<8x32xf32>
    %478 = arith.maximumf %476, %477 : vector<8x32xf32>
    %c0_201 = arith.constant 0 : index
    %c0_202 = arith.constant 0 : index
    %479 = vector.load %arg11[%c0_201, %c0_202] : memref<32x32xf32, #tpu.memory_space<vmem>>, vector<32x32xf32>
    %cst_203 = arith.constant dense<0.000000e+00> : vector<8x32xf32>
    %480 = tpu.matmul %478, %479, %cst_203 {dimension_numbers = #tpu.dot_dimension_numbers<[1], [0], [0], [1], [0, 0, 1, 1], [], []>} : vector<8x32xf32>, vector<32x32xf32>, vector<8x32xf32> -> vector<8x32xf32>
    %481 = arith.addf %480, %25 : vector<8x32xf32>
    %cst_204 = arith.constant 0.000000e+00 : f32
    %482 = vector.broadcast %cst_204 : f32 to vector<8x32xf32>
    %483 = arith.maximumf %481, %482 : vector<8x32xf32>
    %c0_205 = arith.constant 0 : index
    %c0_206 = arith.constant 0 : index
    %484 = vector.load %arg13[%c0_205, %c0_206] : memref<32x32xf32, #tpu.memory_space<vmem>>, vector<32x32xf32>
    %cst_207 = arith.constant dense<0.000000e+00> : vector<8x32xf32>
    %485 = tpu.matmul %483, %484, %cst_207 {dimension_numbers = #tpu.dot_dimension_numbers<[1], [0], [0], [1], [0, 0, 1, 1], [], []>} : vector<8x32xf32>, vector<32x32xf32>, vector<8x32xf32> -> vector<8x32xf32>
    %486 = arith.addf %485, %28 : vector<8x32xf32>
    %487 = vector.extract_strided_slice %486 {offsets = [0, 16], sizes = [8, 16], strides = [1, 1]} : vector<8x32xf32> to vector<8x16xf32>
    %cst_208 = arith.constant 0.000000e+00 : f32
    %488 = vector.broadcast %cst_208 : f32 to vector<8x16xf32>
    %489 = arith.maximumf %487, %488 : vector<8x16xf32>
    %490 = vector.broadcast %cst_208 : f32 to vector<8x16xf32>
    %491 = arith.subf %487, %490 : vector<8x16xf32>
    %492 = arith.cmpf one, %491, %491 : vector<8x16xf32>
    %493 = vector.broadcast %cst_208 : f32 to vector<8x16xf32>
    %494 = arith.addf %487, %493 : vector<8x16xf32>
    %495 = math.absf %491 : vector<8x16xf32>
    %cst_209 = arith.constant 0.000000e+00 : f32
    %496 = vector.broadcast %cst_209 : f32 to vector<8x16xf32>
    %497 = arith.subf %496, %495 : vector<8x16xf32>
    %498 = math.exp %497 : vector<8x16xf32>
    %499 = math.log1p %498 : vector<8x16xf32>
    %500 = arith.addf %489, %499 : vector<8x16xf32>
    %501 = arith.select %492, %494, %500 : vector<8x16xi1>, vector<8x16xf32>
    %502 = arith.index_cast %c5_i32 : i32 to index
    %c0_210 = arith.constant 0 : index
    %c0_211 = arith.constant 0 : index
    %503 = vector.load %arg1[%502, %c0_210, %c0_211] : memref<8x8x16xf32, #tpu.memory_space<vmem>>, vector<1x8x16xf32>
    %504 = vector.shape_cast %503 : vector<1x8x16xf32> to vector<8x16xf32>
    %505 = arith.mulf %504, %501 : vector<8x16xf32>
    %506 = vector.extract_strided_slice %486 {offsets = [0, 0], sizes = [8, 16], strides = [1, 1]} : vector<8x32xf32> to vector<8x16xf32>
    %507 = arith.addf %505, %506 : vector<8x16xf32>
    %c0_212 = arith.constant 0 : index
    %c0_213 = arith.constant 0 : index
    %508 = vector.load %arg15[%c0_212, %c0_213] : memref<16x32xf32, #tpu.memory_space<vmem>>, vector<16x32xf32>
    %cst_214 = arith.constant dense<0.000000e+00> : vector<8x32xf32>
    %509 = tpu.matmul %507, %508, %cst_214 {dimension_numbers = #tpu.dot_dimension_numbers<[1], [0], [0], [1], [0, 0, 1, 1], [], []>} : vector<8x16xf32>, vector<16x32xf32>, vector<8x32xf32> -> vector<8x32xf32>
    %510 = arith.addf %509, %31 : vector<8x32xf32>
    %cst_215 = arith.constant 0.000000e+00 : f32
    %511 = vector.broadcast %cst_215 : f32 to vector<8x32xf32>
    %512 = arith.maximumf %510, %511 : vector<8x32xf32>
    %513 = vector.extract_strided_slice %471 {offsets = [0, 32], sizes = [8, 96], strides = [1, 1]} : vector<8x128xf32> to vector<8x96xf32>
    %c0_216 = arith.constant 0 : index
    %c0_217 = arith.constant 0 : index
    %514 = vector.load %arg17[%c0_216, %c0_217] : memref<32x96xf32, #tpu.memory_space<vmem>>, vector<32x96xf32>
    %cst_218 = arith.constant dense<0.000000e+00> : vector<8x96xf32>
    %515 = tpu.matmul %512, %514, %cst_218 {dimension_numbers = #tpu.dot_dimension_numbers<[1], [0], [0], [1], [0, 0, 1, 1], [], []>} : vector<8x32xf32>, vector<32x96xf32>, vector<8x96xf32> -> vector<8x96xf32>
    %516 = arith.addf %513, %515 : vector<8x96xf32>
    %517 = vector.extract_strided_slice %473 {offsets = [0, 0], sizes = [8, 96], strides = [1, 1]} : vector<8x128xf32> to vector<8x96xf32>
    %518 = vector.extract_strided_slice %516 {offsets = [0, 0], sizes = [8, 32], strides = [1, 1]} : vector<8x96xf32> to vector<8x32xf32>
    %519 = vector.extract_strided_slice %517 {offsets = [0, 0], sizes = [8, 32], strides = [1, 1]} : vector<8x96xf32> to vector<8x32xf32>
    %520 = arith.addf %518, %519 : vector<8x32xf32>
    %521 = arith.negf %520 : vector<8x32xf32>
    %522 = math.exp %521 : vector<8x32xf32>
    %cst_219 = arith.constant 1.000000e+00 : f32
    %523 = vector.broadcast %cst_219 : f32 to vector<8x32xf32>
    %524 = arith.addf %523, %522 : vector<8x32xf32>
    %525 = arith.divf %523, %524 : vector<8x32xf32>
    %526 = vector.extract_strided_slice %516 {offsets = [0, 32], sizes = [8, 32], strides = [1, 1]} : vector<8x96xf32> to vector<8x32xf32>
    %527 = vector.extract_strided_slice %517 {offsets = [0, 32], sizes = [8, 32], strides = [1, 1]} : vector<8x96xf32> to vector<8x32xf32>
    %528 = arith.addf %526, %527 : vector<8x32xf32>
    %529 = arith.negf %528 : vector<8x32xf32>
    %530 = math.exp %529 : vector<8x32xf32>
    %cst_220 = arith.constant 1.000000e+00 : f32
    %531 = vector.broadcast %cst_220 : f32 to vector<8x32xf32>
    %532 = arith.addf %531, %530 : vector<8x32xf32>
    %533 = arith.divf %531, %532 : vector<8x32xf32>
    %534 = vector.extract_strided_slice %516 {offsets = [0, 64], sizes = [8, 32], strides = [1, 1]} : vector<8x96xf32> to vector<8x32xf32>
    %535 = vector.extract_strided_slice %517 {offsets = [0, 64], sizes = [8, 32], strides = [1, 1]} : vector<8x96xf32> to vector<8x32xf32>
    %536 = arith.mulf %525, %535 : vector<8x32xf32>
    %537 = arith.addf %534, %536 : vector<8x32xf32>
    %538 = math.tanh %537 : vector<8x32xf32>
    %cst_221 = arith.constant 1.000000e+00 : f32
    %539 = vector.broadcast %cst_221 : f32 to vector<8x32xf32>
    %540 = arith.subf %539, %533 : vector<8x32xf32>
    %541 = arith.mulf %540, %538 : vector<8x32xf32>
    %542 = arith.mulf %533, %456 : vector<8x32xf32>
    %543 = arith.addf %541, %542 : vector<8x32xf32>
    %544 = arith.index_cast %c5_i32 : i32 to index
    %c0_222 = arith.constant 0 : index
    %c0_223 = arith.constant 0 : index
    %545 = vector.load %arg34[%544, %c0_222, %c0_223] : memref<8x8x32xf32, #tpu.memory_space<vmem>>, vector<1x8x32xf32>
    %546 = vector.shape_cast %545 : vector<1x8x32xf32> to vector<8x32xf32>
    %547 = vector.shape_cast %486 : vector<8x32xf32> to vector<1x8x32xf32>
    tpu.vector_store %arg34[%544, %c0_222, %c0_223], %547 {strides = array<i32>} : memref<8x8x32xf32, #tpu.memory_space<vmem>>, vector<1x8x32xf32>,
    %548 = arith.index_cast %c5_i32 : i32 to index
    %c0_224 = arith.constant 0 : index
    %c0_225 = arith.constant 0 : index
    %549 = vector.load %arg35[%548, %c0_224, %c0_225] : memref<8x8x32xf32, #tpu.memory_space<vmem>>, vector<1x8x32xf32>
    %550 = vector.shape_cast %549 : vector<1x8x32xf32> to vector<8x32xf32>
    %551 = vector.shape_cast %512 : vector<8x32xf32> to vector<1x8x32xf32>
    tpu.vector_store %arg35[%548, %c0_224, %c0_225], %551 {strides = array<i32>} : memref<8x8x32xf32, #tpu.memory_space<vmem>>, vector<1x8x32xf32>,
    %552 = arith.index_cast %c5_i32 : i32 to index
    %c0_226 = arith.constant 0 : index
    %c0_227 = arith.constant 0 : index
    %553 = vector.load %arg36[%552, %c0_226, %c0_227] : memref<8x8x32xf32, #tpu.memory_space<vmem>>, vector<1x8x32xf32>
    %554 = vector.shape_cast %553 : vector<1x8x32xf32> to vector<8x32xf32>
    %555 = vector.shape_cast %456 : vector<8x32xf32> to vector<1x8x32xf32>
    tpu.vector_store %arg36[%552, %c0_226, %c0_227], %555 {strides = array<i32>} : memref<8x8x32xf32, #tpu.memory_space<vmem>>, vector<1x8x32xf32>,
    %c6_i32 = arith.constant 6 : i32
    %556 = arith.index_cast %c6_i32 : i32 to index
    %c0_228 = arith.constant 0 : index
    %c0_229 = arith.constant 0 : index
    %557 = vector.load %arg33[%556, %c0_228, %c0_229] : memref<8x8x128xf32, #tpu.memory_space<vmem>>, vector<1x8x128xf32>
    %558 = vector.shape_cast %557 : vector<1x8x128xf32> to vector<8x128xf32>
    %c0_230 = arith.constant 0 : index
    %c0_231 = arith.constant 0 : index
    %559 = vector.load %arg10[%c0_230, %c0_231] : memref<32x128xf32, #tpu.memory_space<vmem>>, vector<32x128xf32>
    %cst_232 = arith.constant dense<0.000000e+00> : vector<8x128xf32>
    %560 = tpu.matmul %543, %559, %cst_232 {dimension_numbers = #tpu.dot_dimension_numbers<[1], [0], [0], [1], [0, 0, 1, 1], [], []>} : vector<8x32xf32>, vector<32x128xf32>, vector<8x128xf32> -> vector<8x128xf32>
    %561 = vector.extract_strided_slice %558 {offsets = [0, 0], sizes = [8, 32], strides = [1, 1]} : vector<8x128xf32> to vector<8x32xf32>
    %562 = vector.extract_strided_slice %560 {offsets = [0, 96], sizes = [8, 32], strides = [1, 1]} : vector<8x128xf32> to vector<8x32xf32>
    %563 = arith.addf %561, %562 : vector<8x32xf32>
    %cst_233 = arith.constant 0.000000e+00 : f32
    %564 = vector.broadcast %cst_233 : f32 to vector<8x32xf32>
    %565 = arith.maximumf %563, %564 : vector<8x32xf32>
    %c0_234 = arith.constant 0 : index
    %c0_235 = arith.constant 0 : index
    %566 = vector.load %arg11[%c0_234, %c0_235] : memref<32x32xf32, #tpu.memory_space<vmem>>, vector<32x32xf32>
    %cst_236 = arith.constant dense<0.000000e+00> : vector<8x32xf32>
    %567 = tpu.matmul %565, %566, %cst_236 {dimension_numbers = #tpu.dot_dimension_numbers<[1], [0], [0], [1], [0, 0, 1, 1], [], []>} : vector<8x32xf32>, vector<32x32xf32>, vector<8x32xf32> -> vector<8x32xf32>
    %568 = arith.addf %567, %25 : vector<8x32xf32>
    %cst_237 = arith.constant 0.000000e+00 : f32
    %569 = vector.broadcast %cst_237 : f32 to vector<8x32xf32>
    %570 = arith.maximumf %568, %569 : vector<8x32xf32>
    %c0_238 = arith.constant 0 : index
    %c0_239 = arith.constant 0 : index
    %571 = vector.load %arg13[%c0_238, %c0_239] : memref<32x32xf32, #tpu.memory_space<vmem>>, vector<32x32xf32>
    %cst_240 = arith.constant dense<0.000000e+00> : vector<8x32xf32>
    %572 = tpu.matmul %570, %571, %cst_240 {dimension_numbers = #tpu.dot_dimension_numbers<[1], [0], [0], [1], [0, 0, 1, 1], [], []>} : vector<8x32xf32>, vector<32x32xf32>, vector<8x32xf32> -> vector<8x32xf32>
    %573 = arith.addf %572, %28 : vector<8x32xf32>
    %574 = vector.extract_strided_slice %573 {offsets = [0, 16], sizes = [8, 16], strides = [1, 1]} : vector<8x32xf32> to vector<8x16xf32>
    %cst_241 = arith.constant 0.000000e+00 : f32
    %575 = vector.broadcast %cst_241 : f32 to vector<8x16xf32>
    %576 = arith.maximumf %574, %575 : vector<8x16xf32>
    %577 = vector.broadcast %cst_241 : f32 to vector<8x16xf32>
    %578 = arith.subf %574, %577 : vector<8x16xf32>
    %579 = arith.cmpf one, %578, %578 : vector<8x16xf32>
    %580 = vector.broadcast %cst_241 : f32 to vector<8x16xf32>
    %581 = arith.addf %574, %580 : vector<8x16xf32>
    %582 = math.absf %578 : vector<8x16xf32>
    %cst_242 = arith.constant 0.000000e+00 : f32
    %583 = vector.broadcast %cst_242 : f32 to vector<8x16xf32>
    %584 = arith.subf %583, %582 : vector<8x16xf32>
    %585 = math.exp %584 : vector<8x16xf32>
    %586 = math.log1p %585 : vector<8x16xf32>
    %587 = arith.addf %576, %586 : vector<8x16xf32>
    %588 = arith.select %579, %581, %587 : vector<8x16xi1>, vector<8x16xf32>
    %589 = arith.index_cast %c6_i32 : i32 to index
    %c0_243 = arith.constant 0 : index
    %c0_244 = arith.constant 0 : index
    %590 = vector.load %arg1[%589, %c0_243, %c0_244] : memref<8x8x16xf32, #tpu.memory_space<vmem>>, vector<1x8x16xf32>
    %591 = vector.shape_cast %590 : vector<1x8x16xf32> to vector<8x16xf32>
    %592 = arith.mulf %591, %588 : vector<8x16xf32>
    %593 = vector.extract_strided_slice %573 {offsets = [0, 0], sizes = [8, 16], strides = [1, 1]} : vector<8x32xf32> to vector<8x16xf32>
    %594 = arith.addf %592, %593 : vector<8x16xf32>
    %c0_245 = arith.constant 0 : index
    %c0_246 = arith.constant 0 : index
    %595 = vector.load %arg15[%c0_245, %c0_246] : memref<16x32xf32, #tpu.memory_space<vmem>>, vector<16x32xf32>
    %cst_247 = arith.constant dense<0.000000e+00> : vector<8x32xf32>
    %596 = tpu.matmul %594, %595, %cst_247 {dimension_numbers = #tpu.dot_dimension_numbers<[1], [0], [0], [1], [0, 0, 1, 1], [], []>} : vector<8x16xf32>, vector<16x32xf32>, vector<8x32xf32> -> vector<8x32xf32>
    %597 = arith.addf %596, %31 : vector<8x32xf32>
    %cst_248 = arith.constant 0.000000e+00 : f32
    %598 = vector.broadcast %cst_248 : f32 to vector<8x32xf32>
    %599 = arith.maximumf %597, %598 : vector<8x32xf32>
    %600 = vector.extract_strided_slice %558 {offsets = [0, 32], sizes = [8, 96], strides = [1, 1]} : vector<8x128xf32> to vector<8x96xf32>
    %c0_249 = arith.constant 0 : index
    %c0_250 = arith.constant 0 : index
    %601 = vector.load %arg17[%c0_249, %c0_250] : memref<32x96xf32, #tpu.memory_space<vmem>>, vector<32x96xf32>
    %cst_251 = arith.constant dense<0.000000e+00> : vector<8x96xf32>
    %602 = tpu.matmul %599, %601, %cst_251 {dimension_numbers = #tpu.dot_dimension_numbers<[1], [0], [0], [1], [0, 0, 1, 1], [], []>} : vector<8x32xf32>, vector<32x96xf32>, vector<8x96xf32> -> vector<8x96xf32>
    %603 = arith.addf %600, %602 : vector<8x96xf32>
    %604 = vector.extract_strided_slice %560 {offsets = [0, 0], sizes = [8, 96], strides = [1, 1]} : vector<8x128xf32> to vector<8x96xf32>
    %605 = vector.extract_strided_slice %603 {offsets = [0, 0], sizes = [8, 32], strides = [1, 1]} : vector<8x96xf32> to vector<8x32xf32>
    %606 = vector.extract_strided_slice %604 {offsets = [0, 0], sizes = [8, 32], strides = [1, 1]} : vector<8x96xf32> to vector<8x32xf32>
    %607 = arith.addf %605, %606 : vector<8x32xf32>
    %608 = arith.negf %607 : vector<8x32xf32>
    %609 = math.exp %608 : vector<8x32xf32>
    %cst_252 = arith.constant 1.000000e+00 : f32
    %610 = vector.broadcast %cst_252 : f32 to vector<8x32xf32>
    %611 = arith.addf %610, %609 : vector<8x32xf32>
    %612 = arith.divf %610, %611 : vector<8x32xf32>
    %613 = vector.extract_strided_slice %603 {offsets = [0, 32], sizes = [8, 32], strides = [1, 1]} : vector<8x96xf32> to vector<8x32xf32>
    %614 = vector.extract_strided_slice %604 {offsets = [0, 32], sizes = [8, 32], strides = [1, 1]} : vector<8x96xf32> to vector<8x32xf32>
    %615 = arith.addf %613, %614 : vector<8x32xf32>
    %616 = arith.negf %615 : vector<8x32xf32>
    %617 = math.exp %616 : vector<8x32xf32>
    %cst_253 = arith.constant 1.000000e+00 : f32
    %618 = vector.broadcast %cst_253 : f32 to vector<8x32xf32>
    %619 = arith.addf %618, %617 : vector<8x32xf32>
    %620 = arith.divf %618, %619 : vector<8x32xf32>
    %621 = vector.extract_strided_slice %603 {offsets = [0, 64], sizes = [8, 32], strides = [1, 1]} : vector<8x96xf32> to vector<8x32xf32>
    %622 = vector.extract_strided_slice %604 {offsets = [0, 64], sizes = [8, 32], strides = [1, 1]} : vector<8x96xf32> to vector<8x32xf32>
    %623 = arith.mulf %612, %622 : vector<8x32xf32>
    %624 = arith.addf %621, %623 : vector<8x32xf32>
    %625 = math.tanh %624 : vector<8x32xf32>
    %cst_254 = arith.constant 1.000000e+00 : f32
    %626 = vector.broadcast %cst_254 : f32 to vector<8x32xf32>
    %627 = arith.subf %626, %620 : vector<8x32xf32>
    %628 = arith.mulf %627, %625 : vector<8x32xf32>
    %629 = arith.mulf %620, %543 : vector<8x32xf32>
    %630 = arith.addf %628, %629 : vector<8x32xf32>
    %631 = arith.index_cast %c6_i32 : i32 to index
    %c0_255 = arith.constant 0 : index
    %c0_256 = arith.constant 0 : index
    %632 = vector.load %arg34[%631, %c0_255, %c0_256] : memref<8x8x32xf32, #tpu.memory_space<vmem>>, vector<1x8x32xf32>
    %633 = vector.shape_cast %632 : vector<1x8x32xf32> to vector<8x32xf32>
    %634 = vector.shape_cast %573 : vector<8x32xf32> to vector<1x8x32xf32>
    tpu.vector_store %arg34[%631, %c0_255, %c0_256], %634 {strides = array<i32>} : memref<8x8x32xf32, #tpu.memory_space<vmem>>, vector<1x8x32xf32>,
    %635 = arith.index_cast %c6_i32 : i32 to index
    %c0_257 = arith.constant 0 : index
    %c0_258 = arith.constant 0 : index
    %636 = vector.load %arg35[%635, %c0_257, %c0_258] : memref<8x8x32xf32, #tpu.memory_space<vmem>>, vector<1x8x32xf32>
    %637 = vector.shape_cast %636 : vector<1x8x32xf32> to vector<8x32xf32>
    %638 = vector.shape_cast %599 : vector<8x32xf32> to vector<1x8x32xf32>
    tpu.vector_store %arg35[%635, %c0_257, %c0_258], %638 {strides = array<i32>} : memref<8x8x32xf32, #tpu.memory_space<vmem>>, vector<1x8x32xf32>,
    %639 = arith.index_cast %c6_i32 : i32 to index
    %c0_259 = arith.constant 0 : index
    %c0_260 = arith.constant 0 : index
    %640 = vector.load %arg36[%639, %c0_259, %c0_260] : memref<8x8x32xf32, #tpu.memory_space<vmem>>, vector<1x8x32xf32>
    %641 = vector.shape_cast %640 : vector<1x8x32xf32> to vector<8x32xf32>
    %642 = vector.shape_cast %543 : vector<8x32xf32> to vector<1x8x32xf32>
    tpu.vector_store %arg36[%639, %c0_259, %c0_260], %642 {strides = array<i32>} : memref<8x8x32xf32, #tpu.memory_space<vmem>>, vector<1x8x32xf32>,
    %c7_i32 = arith.constant 7 : i32
    %643 = arith.index_cast %c7_i32 : i32 to index
    %c0_261 = arith.constant 0 : index
    %c0_262 = arith.constant 0 : index
    %644 = vector.load %arg33[%643, %c0_261, %c0_262] : memref<8x8x128xf32, #tpu.memory_space<vmem>>, vector<1x8x128xf32>
    %645 = vector.shape_cast %644 : vector<1x8x128xf32> to vector<8x128xf32>
    %c0_263 = arith.constant 0 : index
    %c0_264 = arith.constant 0 : index
    %646 = vector.load %arg10[%c0_263, %c0_264] : memref<32x128xf32, #tpu.memory_space<vmem>>, vector<32x128xf32>
    %cst_265 = arith.constant dense<0.000000e+00> : vector<8x128xf32>
    %647 = tpu.matmul %630, %646, %cst_265 {dimension_numbers = #tpu.dot_dimension_numbers<[1], [0], [0], [1], [0, 0, 1, 1], [], []>} : vector<8x32xf32>, vector<32x128xf32>, vector<8x128xf32> -> vector<8x128xf32>
    %648 = vector.extract_strided_slice %645 {offsets = [0, 0], sizes = [8, 32], strides = [1, 1]} : vector<8x128xf32> to vector<8x32xf32>
    %649 = vector.extract_strided_slice %647 {offsets = [0, 96], sizes = [8, 32], strides = [1, 1]} : vector<8x128xf32> to vector<8x32xf32>
    %650 = arith.addf %648, %649 : vector<8x32xf32>
    %cst_266 = arith.constant 0.000000e+00 : f32
    %651 = vector.broadcast %cst_266 : f32 to vector<8x32xf32>
    %652 = arith.maximumf %650, %651 : vector<8x32xf32>
    %c0_267 = arith.constant 0 : index
    %c0_268 = arith.constant 0 : index
    %653 = vector.load %arg11[%c0_267, %c0_268] : memref<32x32xf32, #tpu.memory_space<vmem>>, vector<32x32xf32>
    %cst_269 = arith.constant dense<0.000000e+00> : vector<8x32xf32>
    %654 = tpu.matmul %652, %653, %cst_269 {dimension_numbers = #tpu.dot_dimension_numbers<[1], [0], [0], [1], [0, 0, 1, 1], [], []>} : vector<8x32xf32>, vector<32x32xf32>, vector<8x32xf32> -> vector<8x32xf32>
    %655 = arith.addf %654, %25 : vector<8x32xf32>
    %cst_270 = arith.constant 0.000000e+00 : f32
    %656 = vector.broadcast %cst_270 : f32 to vector<8x32xf32>
    %657 = arith.maximumf %655, %656 : vector<8x32xf32>
    %c0_271 = arith.constant 0 : index
    %c0_272 = arith.constant 0 : index
    %658 = vector.load %arg13[%c0_271, %c0_272] : memref<32x32xf32, #tpu.memory_space<vmem>>, vector<32x32xf32>
    %cst_273 = arith.constant dense<0.000000e+00> : vector<8x32xf32>
    %659 = tpu.matmul %657, %658, %cst_273 {dimension_numbers = #tpu.dot_dimension_numbers<[1], [0], [0], [1], [0, 0, 1, 1], [], []>} : vector<8x32xf32>, vector<32x32xf32>, vector<8x32xf32> -> vector<8x32xf32>
    %660 = arith.addf %659, %28 : vector<8x32xf32>
    %661 = vector.extract_strided_slice %660 {offsets = [0, 16], sizes = [8, 16], strides = [1, 1]} : vector<8x32xf32> to vector<8x16xf32>
    %cst_274 = arith.constant 0.000000e+00 : f32
    %662 = vector.broadcast %cst_274 : f32 to vector<8x16xf32>
    %663 = arith.maximumf %661, %662 : vector<8x16xf32>
    %664 = vector.broadcast %cst_274 : f32 to vector<8x16xf32>
    %665 = arith.subf %661, %664 : vector<8x16xf32>
    %666 = arith.cmpf one, %665, %665 : vector<8x16xf32>
    %667 = vector.broadcast %cst_274 : f32 to vector<8x16xf32>
    %668 = arith.addf %661, %667 : vector<8x16xf32>
    %669 = math.absf %665 : vector<8x16xf32>
    %cst_275 = arith.constant 0.000000e+00 : f32
    %670 = vector.broadcast %cst_275 : f32 to vector<8x16xf32>
    %671 = arith.subf %670, %669 : vector<8x16xf32>
    %672 = math.exp %671 : vector<8x16xf32>
    %673 = math.log1p %672 : vector<8x16xf32>
    %674 = arith.addf %663, %673 : vector<8x16xf32>
    %675 = arith.select %666, %668, %674 : vector<8x16xi1>, vector<8x16xf32>
    %676 = arith.index_cast %c7_i32 : i32 to index
    %c0_276 = arith.constant 0 : index
    %c0_277 = arith.constant 0 : index
    %677 = vector.load %arg1[%676, %c0_276, %c0_277] : memref<8x8x16xf32, #tpu.memory_space<vmem>>, vector<1x8x16xf32>
    %678 = vector.shape_cast %677 : vector<1x8x16xf32> to vector<8x16xf32>
    %679 = arith.mulf %678, %675 : vector<8x16xf32>
    %680 = vector.extract_strided_slice %660 {offsets = [0, 0], sizes = [8, 16], strides = [1, 1]} : vector<8x32xf32> to vector<8x16xf32>
    %681 = arith.addf %679, %680 : vector<8x16xf32>
    %c0_278 = arith.constant 0 : index
    %c0_279 = arith.constant 0 : index
    %682 = vector.load %arg15[%c0_278, %c0_279] : memref<16x32xf32, #tpu.memory_space<vmem>>, vector<16x32xf32>
    %cst_280 = arith.constant dense<0.000000e+00> : vector<8x32xf32>
    %683 = tpu.matmul %681, %682, %cst_280 {dimension_numbers = #tpu.dot_dimension_numbers<[1], [0], [0], [1], [0, 0, 1, 1], [], []>} : vector<8x16xf32>, vector<16x32xf32>, vector<8x32xf32> -> vector<8x32xf32>
    %684 = arith.addf %683, %31 : vector<8x32xf32>
    %cst_281 = arith.constant 0.000000e+00 : f32
    %685 = vector.broadcast %cst_281 : f32 to vector<8x32xf32>
    %686 = arith.maximumf %684, %685 : vector<8x32xf32>
    %687 = vector.extract_strided_slice %645 {offsets = [0, 32], sizes = [8, 96], strides = [1, 1]} : vector<8x128xf32> to vector<8x96xf32>
    %c0_282 = arith.constant 0 : index
    %c0_283 = arith.constant 0 : index
    %688 = vector.load %arg17[%c0_282, %c0_283] : memref<32x96xf32, #tpu.memory_space<vmem>>, vector<32x96xf32>
    %cst_284 = arith.constant dense<0.000000e+00> : vector<8x96xf32>
    %689 = tpu.matmul %686, %688, %cst_284 {dimension_numbers = #tpu.dot_dimension_numbers<[1], [0], [0], [1], [0, 0, 1, 1], [], []>} : vector<8x32xf32>, vector<32x96xf32>, vector<8x96xf32> -> vector<8x96xf32>
    %690 = arith.addf %687, %689 : vector<8x96xf32>
    %691 = vector.extract_strided_slice %647 {offsets = [0, 0], sizes = [8, 96], strides = [1, 1]} : vector<8x128xf32> to vector<8x96xf32>
    %692 = vector.extract_strided_slice %690 {offsets = [0, 0], sizes = [8, 32], strides = [1, 1]} : vector<8x96xf32> to vector<8x32xf32>
    %693 = vector.extract_strided_slice %691 {offsets = [0, 0], sizes = [8, 32], strides = [1, 1]} : vector<8x96xf32> to vector<8x32xf32>
    %694 = arith.addf %692, %693 : vector<8x32xf32>
    %695 = arith.negf %694 : vector<8x32xf32>
    %696 = math.exp %695 : vector<8x32xf32>
    %cst_285 = arith.constant 1.000000e+00 : f32
    %697 = vector.broadcast %cst_285 : f32 to vector<8x32xf32>
    %698 = arith.addf %697, %696 : vector<8x32xf32>
    %699 = arith.divf %697, %698 : vector<8x32xf32>
    %700 = vector.extract_strided_slice %690 {offsets = [0, 32], sizes = [8, 32], strides = [1, 1]} : vector<8x96xf32> to vector<8x32xf32>
    %701 = vector.extract_strided_slice %691 {offsets = [0, 32], sizes = [8, 32], strides = [1, 1]} : vector<8x96xf32> to vector<8x32xf32>
    %702 = arith.addf %700, %701 : vector<8x32xf32>
    %703 = arith.negf %702 : vector<8x32xf32>
    %704 = math.exp %703 : vector<8x32xf32>
    %cst_286 = arith.constant 1.000000e+00 : f32
    %705 = vector.broadcast %cst_286 : f32 to vector<8x32xf32>
    %706 = arith.addf %705, %704 : vector<8x32xf32>
    %707 = arith.divf %705, %706 : vector<8x32xf32>
    %708 = vector.extract_strided_slice %690 {offsets = [0, 64], sizes = [8, 32], strides = [1, 1]} : vector<8x96xf32> to vector<8x32xf32>
    %709 = vector.extract_strided_slice %691 {offsets = [0, 64], sizes = [8, 32], strides = [1, 1]} : vector<8x96xf32> to vector<8x32xf32>
    %710 = arith.mulf %699, %709 : vector<8x32xf32>
    %711 = arith.addf %708, %710 : vector<8x32xf32>
    %712 = math.tanh %711 : vector<8x32xf32>
    %cst_287 = arith.constant 1.000000e+00 : f32
    %713 = vector.broadcast %cst_287 : f32 to vector<8x32xf32>
    %714 = arith.subf %713, %707 : vector<8x32xf32>
    %715 = arith.mulf %714, %712 : vector<8x32xf32>
    %716 = arith.mulf %707, %630 : vector<8x32xf32>
    %717 = arith.addf %715, %716 : vector<8x32xf32>
    %718 = arith.index_cast %c7_i32 : i32 to index
    %c0_288 = arith.constant 0 : index
    %c0_289 = arith.constant 0 : index
    %719 = vector.load %arg34[%718, %c0_288, %c0_289] : memref<8x8x32xf32, #tpu.memory_space<vmem>>, vector<1x8x32xf32>
    %720 = vector.shape_cast %719 : vector<1x8x32xf32> to vector<8x32xf32>
    %721 = vector.shape_cast %660 : vector<8x32xf32> to vector<1x8x32xf32>
    tpu.vector_store %arg34[%718, %c0_288, %c0_289], %721 {strides = array<i32>} : memref<8x8x32xf32, #tpu.memory_space<vmem>>, vector<1x8x32xf32>,
    %722 = arith.index_cast %c7_i32 : i32 to index
    %c0_290 = arith.constant 0 : index
    %c0_291 = arith.constant 0 : index
    %723 = vector.load %arg35[%722, %c0_290, %c0_291] : memref<8x8x32xf32, #tpu.memory_space<vmem>>, vector<1x8x32xf32>
    %724 = vector.shape_cast %723 : vector<1x8x32xf32> to vector<8x32xf32>
    %725 = vector.shape_cast %686 : vector<8x32xf32> to vector<1x8x32xf32>
    tpu.vector_store %arg35[%722, %c0_290, %c0_291], %725 {strides = array<i32>} : memref<8x8x32xf32, #tpu.memory_space<vmem>>, vector<1x8x32xf32>,
    %726 = arith.index_cast %c7_i32 : i32 to index
    %c0_292 = arith.constant 0 : index
    %c0_293 = arith.constant 0 : index
    %727 = vector.load %arg36[%726, %c0_292, %c0_293] : memref<8x8x32xf32, #tpu.memory_space<vmem>>, vector<1x8x32xf32>
    %728 = vector.shape_cast %727 : vector<1x8x32xf32> to vector<8x32xf32>
    %729 = vector.shape_cast %630 : vector<8x32xf32> to vector<1x8x32xf32>
    tpu.vector_store %arg36[%726, %c0_292, %c0_293], %729 {strides = array<i32>} : memref<8x8x32xf32, #tpu.memory_space<vmem>>, vector<1x8x32xf32>,
    %c8_i32 = arith.constant 8 : i32
    %c0_294 = arith.constant 0 : index
    %c0_295 = arith.constant 0 : index
    %c0_296 = arith.constant 0 : index
    %730 = vector.load %arg36[%c0_294, %c0_295, %c0_296] : memref<8x8x32xf32, #tpu.memory_space<vmem>>, vector<8x8x32xf32>
    %731 = vector.shape_cast %730 : vector<8x8x32xf32> to vector<64x32xf32>
    %c0_297 = arith.constant 0 : index
    %c0_298 = arith.constant 0 : index
    %c0_299 = arith.constant 0 : index
    %732 = vector.load %arg35[%c0_297, %c0_298, %c0_299] : memref<8x8x32xf32, #tpu.memory_space<vmem>>, vector<8x8x32xf32>
    %733 = vector.shape_cast %732 : vector<8x8x32xf32> to vector<64x32xf32>
    %c0_300 = arith.constant 0 : index
    %c0_301 = arith.constant 0 : index
    %c0_302 = arith.constant 0 : index
    %734 = vector.load %arg34[%c0_300, %c0_301, %c0_302] : memref<8x8x32xf32, #tpu.memory_space<vmem>>, vector<8x8x32xf32>
    %735 = vector.shape_cast %734 : vector<8x8x32xf32> to vector<64x32xf32>
    %736 = vector.extract_strided_slice %735 {offsets = [0, 0], sizes = [64, 16], strides = [1, 1]} : vector<64x32xf32> to vector<64x16xf32>
    %737 = vector.extract_strided_slice %735 {offsets = [0, 16], sizes = [64, 16], strides = [1, 1]} : vector<64x32xf32> to vector<64x16xf32>
    %cst_303 = arith.constant 0.000000e+00 : f32
    %738 = vector.broadcast %cst_303 : f32 to vector<64x16xf32>
    %739 = arith.maximumf %737, %738 : vector<64x16xf32>
    %740 = vector.broadcast %cst_303 : f32 to vector<64x16xf32>
    %741 = arith.subf %737, %740 : vector<64x16xf32>
    %742 = arith.cmpf one, %741, %741 : vector<64x16xf32>
    %743 = vector.broadcast %cst_303 : f32 to vector<64x16xf32>
    %744 = arith.addf %737, %743 : vector<64x16xf32>
    %745 = math.absf %741 : vector<64x16xf32>
    %cst_304 = arith.constant 0.000000e+00 : f32
    %746 = vector.broadcast %cst_304 : f32 to vector<64x16xf32>
    %747 = arith.subf %746, %745 : vector<64x16xf32>
    %748 = math.exp %747 : vector<64x16xf32>
    %749 = math.log1p %748 : vector<64x16xf32>
    %750 = arith.addf %739, %749 : vector<64x16xf32>
    %751 = arith.select %742, %744, %750 : vector<64x16xi1>, vector<64x16xf32>
    %c0_305 = arith.constant 0 : index
    %c0_306 = arith.constant 0 : index
    %752 = vector.load %arg18[%c0_305, %c0_306] : memref<32x64xf32, #tpu.memory_space<vmem>>, vector<32x64xf32>
    %cst_307 = arith.constant dense<0.000000e+00> : vector<64x64xf32>
    %753 = tpu.matmul %731, %752, %cst_307 {dimension_numbers = #tpu.dot_dimension_numbers<[1], [0], [0], [1], [0, 0, 1, 1], [], []>} : vector<64x32xf32>, vector<32x64xf32>, vector<64x64xf32> -> vector<64x64xf32>
    %c0_308 = arith.constant 0 : index
    %c0_309 = arith.constant 0 : index
    %754 = vector.load %arg19[%c0_308, %c0_309] : memref<1x64xf32, #tpu.memory_space<vmem>>, vector<1x64xf32>
    %755 = vector.broadcast %754 : vector<1x64xf32> to vector<64x64xf32>
    %756 = arith.addf %753, %755 : vector<64x64xf32>
    %757 = vector.extract_strided_slice %756 {offsets = [0, 0], sizes = [64, 32], strides = [1, 1]} : vector<64x64xf32> to vector<64x32xf32>
    %cst_310 = arith.constant 0.000000e+00 : f32
    %758 = vector.broadcast %cst_310 : f32 to vector<64x32xf32>
    %759 = arith.maximumf %757, %758 : vector<64x32xf32>
    %c0_311 = arith.constant 0 : index
    %c0_312 = arith.constant 0 : index
    %760 = vector.load %arg20[%c0_311, %c0_312] : memref<32x32xf32, #tpu.memory_space<vmem>>, vector<32x32xf32>
    %cst_313 = arith.constant dense<0.000000e+00> : vector<64x32xf32>
    %761 = tpu.matmul %759, %760, %cst_313 {dimension_numbers = #tpu.dot_dimension_numbers<[1], [0], [0], [1], [0, 0, 1, 1], [], []>} : vector<64x32xf32>, vector<32x32xf32>, vector<64x32xf32> -> vector<64x32xf32>
    %c0_314 = arith.constant 0 : index
    %c0_315 = arith.constant 0 : index
    %762 = vector.load %arg21[%c0_314, %c0_315] : memref<1x32xf32, #tpu.memory_space<vmem>>, vector<1x32xf32>
    %763 = vector.broadcast %762 : vector<1x32xf32> to vector<64x32xf32>
    %764 = arith.addf %761, %763 : vector<64x32xf32>
    %765 = vector.extract_strided_slice %764 {offsets = [0, 0], sizes = [64, 16], strides = [1, 1]} : vector<64x32xf32> to vector<64x16xf32>
    %766 = vector.extract_strided_slice %764 {offsets = [0, 16], sizes = [64, 16], strides = [1, 1]} : vector<64x32xf32> to vector<64x16xf32>
    %cst_316 = arith.constant 0.000000e+00 : f32
    %767 = vector.broadcast %cst_316 : f32 to vector<64x16xf32>
    %768 = arith.maximumf %766, %767 : vector<64x16xf32>
    %769 = vector.broadcast %cst_316 : f32 to vector<64x16xf32>
    %770 = arith.subf %766, %769 : vector<64x16xf32>
    %771 = arith.cmpf one, %770, %770 : vector<64x16xf32>
    %772 = vector.broadcast %cst_316 : f32 to vector<64x16xf32>
    %773 = arith.addf %766, %772 : vector<64x16xf32>
    %774 = math.absf %770 : vector<64x16xf32>
    %cst_317 = arith.constant 0.000000e+00 : f32
    %775 = vector.broadcast %cst_317 : f32 to vector<64x16xf32>
    %776 = arith.subf %775, %774 : vector<64x16xf32>
    %777 = math.exp %776 : vector<64x16xf32>
    %778 = math.log1p %777 : vector<64x16xf32>
    %779 = arith.addf %768, %778 : vector<64x16xf32>
    %780 = arith.select %771, %773, %779 : vector<64x16xi1>, vector<64x16xf32>
    %c0_318 = arith.constant 0 : index
    %c0_319 = arith.constant 0 : index
    %781 = vector.load %arg22[%c0_318, %c0_319] : memref<32x32xf32, #tpu.memory_space<vmem>>, vector<32x32xf32>
    %cst_320 = arith.constant dense<0.000000e+00> : vector<64x32xf32>
    %782 = tpu.matmul %733, %781, %cst_320 {dimension_numbers = #tpu.dot_dimension_numbers<[1], [0], [0], [1], [0, 0, 1, 1], [], []>} : vector<64x32xf32>, vector<32x32xf32>, vector<64x32xf32> -> vector<64x32xf32>
    %783 = vector.extract_strided_slice %756 {offsets = [0, 32], sizes = [64, 32], strides = [1, 1]} : vector<64x64xf32> to vector<64x32xf32>
    %784 = arith.addf %782, %783 : vector<64x32xf32>
    %cst_321 = arith.constant 0.000000e+00 : f32
    %785 = vector.broadcast %cst_321 : f32 to vector<64x32xf32>
    %786 = arith.maximumf %784, %785 : vector<64x32xf32>
    %c0_322 = arith.constant 0 : index
    %c0_323 = arith.constant 0 : index
    %787 = vector.load %arg23[%c0_322, %c0_323] : memref<32x32xf32, #tpu.memory_space<vmem>>, vector<32x32xf32>
    %cst_324 = arith.constant dense<0.000000e+00> : vector<64x32xf32>
    %788 = tpu.matmul %786, %787, %cst_324 {dimension_numbers = #tpu.dot_dimension_numbers<[1], [0], [0], [1], [0, 0, 1, 1], [], []>} : vector<64x32xf32>, vector<32x32xf32>, vector<64x32xf32> -> vector<64x32xf32>
    %c0_325 = arith.constant 0 : index
    %c0_326 = arith.constant 0 : index
    %789 = vector.load %arg24[%c0_325, %c0_326] : memref<1x32xf32, #tpu.memory_space<vmem>>, vector<1x32xf32>
    %790 = vector.broadcast %789 : vector<1x32xf32> to vector<64x32xf32>
    %791 = arith.addf %788, %790 : vector<64x32xf32>
    %cst_327 = arith.constant 0.000000e+00 : f32
    %792 = vector.broadcast %cst_327 : f32 to vector<64x32xf32>
    %793 = arith.maximumf %791, %792 : vector<64x32xf32>
    %c0_328 = arith.constant 0 : index
    %c0_329 = arith.constant 0 : index
    %794 = vector.load %arg25[%c0_328, %c0_329] : memref<32x32xf32, #tpu.memory_space<vmem>>, vector<32x32xf32>
    %cst_330 = arith.constant dense<0.000000e+00> : vector<64x32xf32>
    %795 = tpu.matmul %793, %794, %cst_330 {dimension_numbers = #tpu.dot_dimension_numbers<[1], [0], [0], [1], [0, 0, 1, 1], [], []>} : vector<64x32xf32>, vector<32x32xf32>, vector<64x32xf32> -> vector<64x32xf32>
    %c0_331 = arith.constant 0 : index
    %c0_332 = arith.constant 0 : index
    %796 = vector.load %arg26[%c0_331, %c0_332] : memref<1x32xf32, #tpu.memory_space<vmem>>, vector<1x32xf32>
    %797 = vector.broadcast %796 : vector<1x32xf32> to vector<64x32xf32>
    %798 = arith.addf %795, %797 : vector<64x32xf32>
    %799 = vector.extract_strided_slice %798 {offsets = [0, 0], sizes = [64, 16], strides = [1, 1]} : vector<64x32xf32> to vector<64x16xf32>
    %800 = arith.negf %799 : vector<64x16xf32>
    %801 = math.exp %800 : vector<64x16xf32>
    %cst_333 = arith.constant 1.000000e+00 : f32
    %802 = vector.broadcast %cst_333 : f32 to vector<64x16xf32>
    %803 = arith.addf %802, %801 : vector<64x16xf32>
    %804 = arith.divf %802, %803 : vector<64x16xf32>
    %805 = vector.extract_strided_slice %798 {offsets = [0, 16], sizes = [64, 16], strides = [1, 1]} : vector<64x32xf32> to vector<64x16xf32>
    %cst_334 = arith.constant 0.000000e+00 : f32
    %806 = vector.broadcast %cst_334 : f32 to vector<64x16xf32>
    %807 = arith.maximumf %805, %806 : vector<64x16xf32>
    %808 = vector.broadcast %cst_334 : f32 to vector<64x16xf32>
    %809 = arith.subf %805, %808 : vector<64x16xf32>
    %810 = arith.cmpf one, %809, %809 : vector<64x16xf32>
    %811 = vector.broadcast %cst_334 : f32 to vector<64x16xf32>
    %812 = arith.addf %805, %811 : vector<64x16xf32>
    %813 = math.absf %809 : vector<64x16xf32>
    %cst_335 = arith.constant 0.000000e+00 : f32
    %814 = vector.broadcast %cst_335 : f32 to vector<64x16xf32>
    %815 = arith.subf %814, %813 : vector<64x16xf32>
    %816 = math.exp %815 : vector<64x16xf32>
    %817 = math.log1p %816 : vector<64x16xf32>
    %818 = arith.addf %807, %817 : vector<64x16xf32>
    %819 = arith.select %810, %812, %818 : vector<64x16xi1>, vector<64x16xf32>
    %cst_336 = arith.constant 5.000000e-01 : f32
    %820 = vector.broadcast %cst_336 : f32 to vector<64x16xf32>
    %821 = arith.mulf %819, %820 : vector<64x16xf32>
    %822 = math.exp %821 : vector<64x16xf32>
    %c0_337 = arith.constant 0 : index
    %c0_338 = arith.constant 0 : index
    %c0_339 = arith.constant 0 : index
    %823 = vector.load %arg2[%c0_337, %c0_338, %c0_339] : memref<8x8x16xf32, #tpu.memory_space<vmem>>, vector<8x8x16xf32>
    %824 = vector.shape_cast %823 : vector<8x8x16xf32> to vector<64x16xf32>
    %825 = arith.mulf %822, %824 : vector<64x16xf32>
    %826 = arith.addf %804, %825 : vector<64x16xf32>
    %c0_340 = arith.constant 0 : index
    %c0_341 = arith.constant 0 : index
    %827 = vector.load %arg27[%c0_340, %c0_341] : memref<16x64xf32, #tpu.memory_space<vmem>>, vector<16x64xf32>
    %cst_342 = arith.constant dense<0.000000e+00> : vector<64x64xf32>
    %828 = tpu.matmul %826, %827, %cst_342 {dimension_numbers = #tpu.dot_dimension_numbers<[1], [0], [0], [1], [0, 0, 1, 1], [], []>} : vector<64x16xf32>, vector<16x64xf32>, vector<64x64xf32> -> vector<64x64xf32>
    %c0_343 = arith.constant 0 : index
    %c0_344 = arith.constant 0 : index
    %829 = vector.load %arg28[%c0_343, %c0_344] : memref<1x64xf32, #tpu.memory_space<vmem>>, vector<1x64xf32>
    %830 = vector.broadcast %829 : vector<1x64xf32> to vector<64x64xf32>
    %831 = arith.addf %828, %830 : vector<64x64xf32>
    %832 = arith.divf %780, %751 : vector<64x16xf32>
    %833 = math.log %832 : vector<64x16xf32>
    %cst_345 = arith.constant 2.000000e+00 : f32
    %834 = vector.broadcast %cst_345 : f32 to vector<64x16xf32>
    %835 = arith.mulf %834, %833 : vector<64x16xf32>
    %836 = arith.mulf %751, %751 : vector<64x16xf32>
    %837 = arith.subf %736, %765 : vector<64x16xf32>
    %838 = arith.mulf %837, %837 : vector<64x16xf32>
    %839 = arith.addf %836, %838 : vector<64x16xf32>
    %840 = arith.mulf %780, %780 : vector<64x16xf32>
    %841 = arith.divf %839, %840 : vector<64x16xf32>
    %842 = arith.addf %835, %841 : vector<64x16xf32>
    %cst_346 = arith.constant 1.000000e+00 : f32
    %843 = vector.broadcast %cst_346 : f32 to vector<64x16xf32>
    %844 = arith.subf %842, %843 : vector<64x16xf32>
    %cst_347 = arith.constant 0.000000e+00 : f32
    %845 = vector.broadcast %cst_347 : f32 to vector<64x16xf32>
    %846 = arith.subf %845, %799 : vector<64x16xf32>
    %cst_348 = arith.constant 0.000000e+00 : f32
    %847 = vector.broadcast %cst_348 : f32 to vector<64x16xf32>
    %848 = arith.maximumf %846, %847 : vector<64x16xf32>
    %849 = vector.broadcast %cst_348 : f32 to vector<64x16xf32>
    %850 = arith.subf %846, %849 : vector<64x16xf32>
    %851 = arith.cmpf one, %850, %850 : vector<64x16xf32>
    %852 = vector.broadcast %cst_348 : f32 to vector<64x16xf32>
    %853 = arith.addf %846, %852 : vector<64x16xf32>
    %854 = math.absf %850 : vector<64x16xf32>
    %cst_349 = arith.constant 0.000000e+00 : f32
    %855 = vector.broadcast %cst_349 : f32 to vector<64x16xf32>
    %856 = arith.subf %855, %854 : vector<64x16xf32>
    %857 = math.exp %856 : vector<64x16xf32>
    %858 = math.log1p %857 : vector<64x16xf32>
    %859 = arith.addf %848, %858 : vector<64x16xf32>
    %860 = arith.select %851, %853, %859 : vector<64x16xi1>, vector<64x16xf32>
    %c0_350 = arith.constant 0 : index
    %c0_351 = arith.constant 0 : index
    %c0_352 = arith.constant 0 : index
    %861 = vector.load %arg0[%c0_350, %c0_351, %c0_352] : memref<8x8x16xf32, #tpu.memory_space<vmem>>, vector<8x8x16xf32>
    %862 = vector.shape_cast %861 : vector<8x8x16xf32> to vector<64x16xf32>
    %cst_353 = arith.constant 1.000000e+00 : f32
    %863 = vector.broadcast %cst_353 : f32 to vector<64x16xf32>
    %864 = arith.subf %863, %862 : vector<64x16xf32>
    %865 = arith.mulf %864, %799 : vector<64x16xf32>
    %866 = arith.addf %860, %865 : vector<64x16xf32>
    %867 = tpu.concatenate %831, %736, %751, %804, %819 in 1 : vector<64x64xf32>, vector<64x16xf32>, vector<64x16xf32>, vector<64x16xf32>, vector<64x16xf32> -> vector<64x128xf32>
    %868 = vector.shape_cast %867 : vector<64x128xf32> to vector<8x8x128xf32>
    %c0_354 = arith.constant 0 : index
    %c0_355 = arith.constant 0 : index
    %c0_356 = arith.constant 0 : index
    %869 = vector.load %arg29[%c0_354, %c0_355, %c0_356] : memref<8x8x128xf32, #tpu.memory_space<vmem>>, vector<8x8x128xf32>
    tpu.vector_store %arg29[%c0_354, %c0_355, %c0_356], %868 {strides = array<i32>} : memref<8x8x128xf32, #tpu.memory_space<vmem>>, vector<8x8x128xf32>,
    %c0_357 = arith.constant 0 : index
    %c0_358 = arith.constant 0 : index
    %c0_359 = arith.constant 0 : index
    %870 = vector.load %arg30[%c0_357, %c0_358, %c0_359] : memref<1x8x32xf32, #tpu.memory_space<vmem>>, vector<1x8x32xf32>
    %871 = vector.shape_cast %870 : vector<1x8x32xf32> to vector<8x32xf32>
    %872 = vector.shape_cast %717 : vector<8x32xf32> to vector<1x8x32xf32>
    tpu.vector_store %arg30[%c0_357, %c0_358, %c0_359], %872 {strides = array<i32>} : memref<1x8x32xf32, #tpu.memory_space<vmem>>, vector<1x8x32xf32>,
    %873 = vector.shape_cast %844 : vector<64x16xf32> to vector<1x64x16xf32>
    %cst_360 = arith.constant dense<0.000000e+00> : vector<1xf32>
    %874 = vector.multi_reduction <add>, %873, %cst_360 [1, 2] : vector<1x64x16xf32> to vector<1xf32>
    %875 = vector.shape_cast %874 : vector<1xf32> to vector<1x1x1xf32>
    %876 = vector.extract %875[0, 0, 0] : f32 from vector<1x1x1xf32>
    %877 = vector.broadcast %876 : f32 to vector<1x1xf32>
    %cst_361 = arith.constant 5.000000e-01 : f32
    %878 = vector.broadcast %cst_361 : f32 to vector<1x1xf32>
    %879 = arith.mulf %878, %877 : vector<1x1xf32>
    %c0_362 = arith.constant 0 : index
    %c0_363 = arith.constant 0 : index
    %880 = vector.load %arg31[%c0_362, %c0_363] : memref<1x1xf32, #tpu.memory_space<vmem>>, vector<1x1xf32>
    tpu.vector_store %arg31[%c0_362, %c0_363], %879 {strides = array<i32>} : memref<1x1xf32, #tpu.memory_space<vmem>>, vector<1x1xf32>,
    %881 = vector.shape_cast %866 : vector<64x16xf32> to vector<1x64x16xf32>
    %cst_364 = arith.constant dense<0.000000e+00> : vector<1xf32>
    %882 = vector.multi_reduction <add>, %881, %cst_364 [1, 2] : vector<1x64x16xf32> to vector<1xf32>
    %883 = vector.shape_cast %882 : vector<1xf32> to vector<1x1x1xf32>
    %884 = vector.extract %883[0, 0, 0] : f32 from vector<1x1x1xf32>
    %885 = vector.broadcast %884 : f32 to vector<1x1xf32>
    %c0_365 = arith.constant 0 : index
    %c0_366 = arith.constant 0 : index
    %886 = vector.load %arg32[%c0_365, %c0_366] : memref<1x1xf32, #tpu.memory_space<vmem>>, vector<1x1xf32>
    tpu.vector_store %arg32[%c0_365, %c0_366], %885 {strides = array<i32>} : memref<1x1xf32, #tpu.memory_space<vmem>>, vector<1x1xf32>,
    return
  }
}

</mosaic_0001>

<llo_original>
// kernel: tpu_custom_call.1
$region0: #{tpu_custom_call.1}
  #allocation0 [shape = 'u32[]', space=smem, size = 0x4, offset = 0x4, fixed_abs, tag = 'smem constant byte address 0x4 - core index']
  #allocation1 [shape = 'u32[144,128]{1,0:T(1,128)}', space=vmem, size = 0x12000, scoped, tag = 'internal scratch']
  #allocation2 [shape = 'f32[8,8,128]{2,1,0:T(8,128)}', space=vmem, size = 0x8000, scoped, tag = 'scratch operand']
  #allocation3 [shape = 'f32[8,8,32]{2,1,0:T(8,128)}', space=vmem, size = 0x8000, scoped, tag = 'scratch operand']
  #allocation4 [shape = 'f32[8,8,32]{2,1,0:T(8,128)}', space=vmem, size = 0x8000, scoped, tag = 'scratch operand']
  #allocation5 [shape = 'f32[8,8,32]{2,1,0:T(8,128)}', space=vmem, size = 0x8000, scoped, tag = 'scratch operand']
  %s0 = inlined_call_operand.smem [shape: u32[33], index: -1, kind: input, shape index: {}]
  %s1 = sld [smem:[%s0]]
  %s2 = scalar_lea.smem %s0, 1
  %s3 = sld [smem:[%s2]]
  %s4 = scalar_lea.smem %s0, 2
  %s5 = sld [smem:[%s4]]
  %s6 = scalar_lea.smem %s0, 3
  %s7 = sld [smem:[%s6]]
  %s8 = scalar_lea.smem %s0, 4
  %s9 = sld [smem:[%s8]]
  %s10 = scalar_lea.smem %s0, 5
  %s11 = sld [smem:[%s10]]
  %s12 = scalar_lea.smem %s0, 6
  %s13 = sld [smem:[%s12]]
  %s14 = scalar_lea.smem %s0, 7
  %s15 = sld [smem:[%s14]]
  %s16 = scalar_lea.smem %s0, 8
  %s17 = sld [smem:[%s16]]
  %s18 = scalar_lea.smem %s0, 9
  %s19 = sld [smem:[%s18]]
  %s20 = scalar_lea.smem %s0, 10
  %s21 = sld [smem:[%s20]]
  %s22 = scalar_lea.smem %s0, 11
  %s23 = sld [smem:[%s22]]
  %s24 = scalar_lea.smem %s0, 12
  %s25 = sld [smem:[%s24]]
  %s26 = scalar_lea.smem %s0, 13
  %s27 = sld [smem:[%s26]]
  %s28 = scalar_lea.smem %s0, 14
  %s29 = sld [smem:[%s28]]
  %s30 = scalar_lea.smem %s0, 15
  %s31 = sld [smem:[%s30]]
  %s32 = scalar_lea.smem %s0, 16
  %s33 = sld [smem:[%s32]]
  %s34 = scalar_lea.smem %s0, 17
  %s35 = sld [smem:[%s34]]
  %s36 = scalar_lea.smem %s0, 18
  %s37 = sld [smem:[%s36]]
  %s38 = scalar_lea.smem %s0, 19
  %s39 = sld [smem:[%s38]]
  %s40 = scalar_lea.smem %s0, 20
  %s41 = sld [smem:[%s40]]
  %s42 = scalar_lea.smem %s0, 21
  %s43 = sld [smem:[%s42]]
  %s44 = scalar_lea.smem %s0, 22
  %s45 = sld [smem:[%s44]]
  %s46 = scalar_lea.smem %s0, 23
  %s47 = sld [smem:[%s46]]
  %s48 = scalar_lea.smem %s0, 24
  %s49 = sld [smem:[%s48]]
  %s50 = scalar_lea.smem %s0, 25
  %s51 = sld [smem:[%s50]]
  %s52 = scalar_lea.smem %s0, 26
  %s53 = sld [smem:[%s52]]
  %s54 = scalar_lea.smem %s0, 27
  %s55 = sld [smem:[%s54]]
  %s56 = scalar_lea.smem %s0, 28
  %s57 = sld [smem:[%s56]]
  %s58 = scalar_lea.smem %s0, 29
  %s59 = sld [smem:[%s58]]
  %s60 = scalar_lea.smem %s0, 30
  %s61 = sld [smem:[%s60]]
  %s62 = scalar_lea.smem %s0, 31
  %s63 = sld [smem:[%s62]]
  %s64 = scalar_lea.smem %s0, 32
  %s65 = sld [smem:[%s64]]
  %66 = xla_tuple %s59, %s61, %s63, %s65
  %s67 = sld [smem:[#allocation0]]
  $region250: #{tpu_custom_call.1} parent=0
    _
  %s69 = ssub.s32 1, %s67
  %s70 = scalar_select 0, %s69, %s67
  $region1: #{tpu_custom_call.1} parent=0
    #allocation6 [shape = 'u8[32768]{0}', space=vmem, size = 0x8000, scoped, tag = 'input window, operand 0, single buffered']
    #allocation7 [shape = 's32[1]{0}', space=sflag, size = 0x4, scoped, tag = 'scoped memory for tpu_custom_call.1']
    #allocation8 [shape = 's32[1]{0}', space=sflag, size = 0x4, scoped, tag = 'scoped memory for tpu_custom_call.1']
    #allocation9 [shape = 'u8[32768]{0}', space=vmem, size = 0x8000, scoped, tag = 'input window, operand 1, single buffered']
    #allocation10 [shape = 's32[1]{0}', space=sflag, size = 0x4, scoped, tag = 'scoped memory for tpu_custom_call.1']
    #allocation11 [shape = 'u8[32768]{0}', space=vmem, size = 0x8000, scoped, tag = 'input window, operand 2, single buffered']
    #allocation12 [shape = 'u8[4096]{0}', space=vmem, size = 0x1000, scoped, tag = 'input window, operand 3, single buffered']
    #allocation13 [shape = 's32[1]{0}', space=sflag, size = 0x4, scoped, tag = 'scoped memory for tpu_custom_call.1']
    #allocation14 [shape = 'u8[8192]{0}', space=vmem, size = 0x2000, scoped, tag = 'input window, operand 4, single buffered']
    #allocation15 [shape = 'u8[512]{0}', space=vmem, size = 0x400, scoped, tag = 'input window, operand 5, single buffered']
    #allocation16 [shape = 's32[1]{0}', space=sflag, size = 0x4, scoped, tag = 'scoped memory for tpu_custom_call.1']
    #allocation17 [shape = 'u8[16384]{0}', space=vmem, size = 0x4000, scoped, tag = 'input window, operand 6, single buffered']
    #allocation18 [shape = 'u8[512]{0}', space=vmem, size = 0x400, scoped, tag = 'input window, operand 7, single buffered']
    #allocation19 [shape = 's32[1]{0}', space=sflag, size = 0x4, scoped, tag = 'scoped memory for tpu_custom_call.1']
    #allocation20 [shape = 'u8[16384]{0}', space=vmem, size = 0x4000, scoped, tag = 'input window, operand 8, single buffered']
    #allocation21 [shape = 'u8[512]{0}', space=vmem, size = 0x400, scoped, tag = 'input window, operand 9, single buffered']
    #allocation22 [shape = 's32[1]{0}', space=sflag, size = 0x4, scoped, tag = 'scoped memory for tpu_custom_call.1']
    #allocation23 [shape = 'u8[16384]{0}', space=vmem, size = 0x4000, scoped, tag = 'input window, operand 10, single buffered']
    #allocation24 [shape = 'u8[16384]{0}', space=vmem, size = 0x4000, scoped, tag = 'input window, operand 11, single buffered']
    #allocation25 [shape = 's32[1]{0}', space=sflag, size = 0x4, scoped, tag = 'scoped memory for tpu_custom_call.1']
    #allocation26 [shape = 'u8[512]{0}', space=vmem, size = 0x400, scoped, tag = 'input window, operand 12, single buffered']
    #allocation27 [shape = 'u8[16384]{0}', space=vmem, size = 0x4000, scoped, tag = 'input window, operand 13, single buffered']
    #allocation28 [shape = 's32[1]{0}', space=sflag, size = 0x4, scoped, tag = 'scoped memory for tpu_custom_call.1']
    #allocation29 [shape = 'u8[512]{0}', space=vmem, size = 0x400, scoped, tag = 'input window, operand 14, single buffered']
    #allocation30 [shape = 'u8[8192]{0}', space=vmem, size = 0x2000, scoped, tag = 'input window, operand 15, single buffered']
    #allocation31 [shape = 's32[1]{0}', space=sflag, size = 0x4, scoped, tag = 'scoped memory for tpu_custom_call.1']
    #allocation32 [shape = 'u8[512]{0}', space=vmem, size = 0x400, scoped, tag = 'input window, operand 16, single buffered']
    #allocation33 [shape = 'u8[16384]{0}', space=vmem, size = 0x4000, scoped, tag = 'input window, operand 17, single buffered']
    #allocation34 [shape = 's32[1]{0}', space=sflag, size = 0x4, scoped, tag = 'scoped memory for tpu_custom_call.1']
    #allocation35 [shape = 'u8[16384]{0}', space=vmem, size = 0x4000, scoped, tag = 'input window, operand 20, single buffered']
    #allocation36 [shape = 'u8[512]{0}', space=vmem, size = 0x400, scoped, tag = 'input window, operand 21, single buffered']
    #allocation37 [shape = 's32[1]{0}', space=sflag, size = 0x4, scoped, tag = 'scoped memory for tpu_custom_call.1']
    #allocation38 [shape = 'u8[16384]{0}', space=vmem, size = 0x4000, scoped, tag = 'input window, operand 22, single buffered']
    #allocation39 [shape = 'u8[16384]{0}', space=vmem, size = 0x4000, scoped, tag = 'input window, operand 23, single buffered']
    #allocation40 [shape = 's32[1]{0}', space=sflag, size = 0x4, scoped, tag = 'scoped memory for tpu_custom_call.1']
    #allocation41 [shape = 'u8[512]{0}', space=vmem, size = 0x400, scoped, tag = 'input window, operand 24, single buffered']
    #allocation42 [shape = 'u8[16384]{0}', space=vmem, size = 0x4000, scoped, tag = 'input window, operand 25, single buffered']
    #allocation43 [shape = 's32[1]{0}', space=sflag, size = 0x4, scoped, tag = 'scoped memory for tpu_custom_call.1']
    #allocation44 [shape = 'u8[512]{0}', space=vmem, size = 0x400, scoped, tag = 'input window, operand 26, single buffered']
    #allocation45 [shape = 'u8[32768]{0}', space=vmem, size = 0x8000, scoped, tag = 'output window, operand 0, single buffered']
    #allocation46 [shape = 'u8[4096]{0}', space=vmem, size = 0x1000, scoped, tag = 'output window, operand 1, single buffered']
    #allocation47 [shape = 's32[1]{0}', space=sflag, size = 0x4, scoped, tag = 'scoped memory for tpu_custom_call.1']
    #allocation48 [shape = 'u8[512]{0}', space=vmem, size = 0x400, scoped, tag = 'output window, operand 2, single buffered']
    #allocation49 [shape = 'u8[512]{0}', space=vmem, size = 0x400, scoped, tag = 'output window, operand 3, single buffered']
    #allocation50 [shape = 's32[1]{0}', space=sflag, size = 0x4, scoped, tag = 'scoped memory for tpu_custom_call.1']
    %71 = vsyncpa [#allocation7], 0
    %72 = vsyncpa [#allocation10], 0
    %73 = vsyncpa [#allocation13], 0
    %74 = vsyncpa [#allocation16], 0
    %75 = vsyncpa [#allocation19], 0
    %76 = vsyncpa [#allocation22], 0
    %77 = vsyncpa [#allocation25], 0
    %78 = vsyncpa [#allocation28], 0
    %79 = vsyncpa [#allocation31], 0
    %80 = vsyncpa [#allocation34], 0
    %81 = vsyncpa [#allocation37], 0
    %82 = vsyncpa [#allocation40], 0
    %83 = vsyncpa [#allocation43], 0
    %84 = vsyncpa [#allocation8], 0
    %85 = vsyncpa [#allocation47], 0
    %86 = vsyncpa [#allocation50], 0
    // Predicated region
    $region2: #{tpu_custom_call.1} parent=1 // pred_check
      _
    $region3: #{tpu_custom_call.1} parent=1 // pred_check_branch
      %88 = sbr.rel (0) target = $region5
    $region4: #{tpu_custom_call.1} parent=1 // pred_region
      %s90 = ssub.s32 1024, 1024
      %91 = vsyncadd [#allocation7], %s90
      %s92 = sshll.u32 [#allocation6], 4
      %s93 = int_to_ptr.vmem [resolvable:$true] %s92
      %98 = dma.hbm_to_vmem [thread:$0]  %s1, 1024, %s93, [#allocation7], 128, 128, 8
    $region5: #{tpu_custom_call.1} parent=1 // pred_fallthru
      _
    // Predicated region
    $region6: #{tpu_custom_call.1} parent=1 // pred_check
      _
    $region7: #{tpu_custom_call.1} parent=1 // pred_check_branch
      %100 = sbr.rel (0) target = $region9
    $region8: #{tpu_custom_call.1} parent=1 // pred_region
      %s102 = ssub.s32 1024, 1024
      %103 = vsyncadd [#allocation10], %s102
      %s104 = sshll.u32 [#allocation9], 4
      %s105 = int_to_ptr.vmem [resolvable:$true] %s104
      %110 = dma.hbm_to_vmem [thread:$0]  %s3, 1024, %s105, [#allocation10], 128, 128, 8
    $region9: #{tpu_custom_call.1} parent=1 // pred_fallthru
      _
    // Predicated region
    $region10: #{tpu_custom_call.1} parent=1 // pred_check
      _
    $region11: #{tpu_custom_call.1} parent=1 // pred_check_branch
      %112 = sbr.rel (0) target = $region13
    $region12: #{tpu_custom_call.1} parent=1 // pred_region
      %s114 = ssub.s32 1024, 1024
      %115 = vsyncadd [#allocation10], %s114
      %s116 = sshll.u32 [#allocation11], 4
      %s117 = int_to_ptr.vmem [resolvable:$true] %s116
      %122 = dma.hbm_to_vmem [thread:$0]  %s5, 1024, %s117, [#allocation10], 128, 128, 8
    $region13: #{tpu_custom_call.1} parent=1 // pred_fallthru
      _
    // Predicated region
    $region14: #{tpu_custom_call.1} parent=1 // pred_check
      _
    $region15: #{tpu_custom_call.1} parent=1 // pred_check_branch
      %124 = sbr.rel (0) target = $region17
    $region16: #{tpu_custom_call.1} parent=1 // pred_region
      %s126 = ssub.s32 128, 128
      %127 = vsyncadd [#allocation13], %s126
      %s129 = sshll.u32 [#allocation12], 4
      %s130 = int_to_ptr.vmem [resolvable:$true] %s129
      %132 = dma.hbm_to_vmem [thread:$0]  %s7, 128, %s130, [#allocation13]
    $region17: #{tpu_custom_call.1} parent=1 // pred_fallthru
      _
    // Predicated region
    $region18: #{tpu_custom_call.1} parent=1 // pred_check
      _
    $region19: #{tpu_custom_call.1} parent=1 // pred_check_branch
      %134 = sbr.rel (0) target = $region21
    $region20: #{tpu_custom_call.1} parent=1 // pred_region
      %s136 = ssub.s32 256, 256
      %137 = vsyncadd [#allocation13], %s136
      %s138 = sshll.u32 [#allocation14], 4
      %s139 = int_to_ptr.vmem [resolvable:$true] %s138
      %144 = dma.hbm_to_vmem [thread:$0]  %s9, 256, %s139, [#allocation13], 128, 128, 8
    $region21: #{tpu_custom_call.1} parent=1 // pred_fallthru
      _
    // Predicated region
    $region22: #{tpu_custom_call.1} parent=1 // pred_check
      _
    $region23: #{tpu_custom_call.1} parent=1 // pred_check_branch
      %146 = sbr.rel (0) target = $region25
    $region24: #{tpu_custom_call.1} parent=1 // pred_region
      %s148 = ssub.s32 16, 16
      %149 = vsyncadd [#allocation16], %s148
      %s151 = sshll.u32 [#allocation15], 4
      %s152 = int_to_ptr.vmem [resolvable:$true] %s151
      %154 = dma.hbm_to_vmem [thread:$0]  %s11, 16, %s152, [#allocation16]
    $region25: #{tpu_custom_call.1} parent=1 // pred_fallthru
      _
    // Predicated region
    $region26: #{tpu_custom_call.1} parent=1 // pred_check
      _
    $region27: #{tpu_custom_call.1} parent=1 // pred_check_branch
      %156 = sbr.rel (0) target = $region29
    $region28: #{tpu_custom_call.1} parent=1 // pred_region
      %s158 = ssub.s32 512, 512
      %159 = vsyncadd [#allocation16], %s158
      %s160 = sshll.u32 [#allocation17], 4
      %s161 = int_to_ptr.vmem [resolvable:$true] %s160
      %166 = dma.hbm_to_vmem [thread:$0]  %s13, 512, %s161, [#allocation16], 128, 128, 8
    $region29: #{tpu_custom_call.1} parent=1 // pred_fallthru
      _
    // Predicated region
    $region30: #{tpu_custom_call.1} parent=1 // pred_check
      _
    $region31: #{tpu_custom_call.1} parent=1 // pred_check_branch
      %168 = sbr.rel (0) target = $region33
    $region32: #{tpu_custom_call.1} parent=1 // pred_region
      %s170 = ssub.s32 16, 16
      %171 = vsyncadd [#allocation19], %s170
      %s173 = sshll.u32 [#allocation18], 4
      %s174 = int_to_ptr.vmem [resolvable:$true] %s173
      %176 = dma.hbm_to_vmem [thread:$0]  %s15, 16, %s174, [#allocation19]
    $region33: #{tpu_custom_call.1} parent=1 // pred_fallthru
      _
    // Predicated region
    $region34: #{tpu_custom_call.1} parent=1 // pred_check
      _
    $region35: #{tpu_custom_call.1} parent=1 // pred_check_branch
      %178 = sbr.rel (0) target = $region37
    $region36: #{tpu_custom_call.1} parent=1 // pred_region
      %s180 = ssub.s32 512, 512
      %181 = vsyncadd [#allocation19], %s180
      %s182 = sshll.u32 [#allocation20], 4
      %s183 = int_to_ptr.vmem [resolvable:$true] %s182
      %188 = dma.hbm_to_vmem [thread:$0]  %s17, 512, %s183, [#allocation19], 128, 128, 8
    $region37: #{tpu_custom_call.1} parent=1 // pred_fallthru
      _
    // Predicated region
    $region38: #{tpu_custom_call.1} parent=1 // pred_check
      _
    $region39: #{tpu_custom_call.1} parent=1 // pred_check_branch
      %190 = sbr.rel (0) target = $region41
    $region40: #{tpu_custom_call.1} parent=1 // pred_region
      %s192 = ssub.s32 16, 16
      %193 = vsyncadd [#allocation22], %s192
      %s195 = sshll.u32 [#allocation21], 4
      %s196 = int_to_ptr.vmem [resolvable:$true] %s195
      %198 = dma.hbm_to_vmem [thread:$0]  %s19, 16, %s196, [#allocation22]
    $region41: #{tpu_custom_call.1} parent=1 // pred_fallthru
      _
    // Predicated region
    $region42: #{tpu_custom_call.1} parent=1 // pred_check
      _
    $region43: #{tpu_custom_call.1} parent=1 // pred_check_branch
      %200 = sbr.rel (0) target = $region45
    $region44: #{tpu_custom_call.1} parent=1 // pred_region
      %s202 = ssub.s32 512, 512
      %203 = vsyncadd [#allocation22], %s202
      %s204 = sshll.u32 [#allocation23], 4
      %s205 = int_to_ptr.vmem [resolvable:$true] %s204
      %210 = dma.hbm_to_vmem [thread:$0]  %s21, 512, %s205, [#allocation22], 128, 128, 8
    $region45: #{tpu_custom_call.1} parent=1 // pred_fallthru
      _
    // Predicated region
    $region46: #{tpu_custom_call.1} parent=1 // pred_check
      _
    $region47: #{tpu_custom_call.1} parent=1 // pred_check_branch
      %212 = sbr.rel (0) target = $region49
    $region48: #{tpu_custom_call.1} parent=1 // pred_region
      %s214 = ssub.s32 512, 512
      %215 = vsyncadd [#allocation25], %s214
      %s216 = sshll.u32 [#allocation24], 4
      %s217 = int_to_ptr.vmem [resolvable:$true] %s216
      %222 = dma.hbm_to_vmem [thread:$0]  %s23, 512, %s217, [#allocation25], 128, 128, 8
    $region49: #{tpu_custom_call.1} parent=1 // pred_fallthru
      _
    // Predicated region
    $region50: #{tpu_custom_call.1} parent=1 // pred_check
      _
    $region51: #{tpu_custom_call.1} parent=1 // pred_check_branch
      %224 = sbr.rel (0) target = $region53
    $region52: #{tpu_custom_call.1} parent=1 // pred_region
      %s226 = ssub.s32 16, 16
      %227 = vsyncadd [#allocation25], %s226
      %s229 = sshll.u32 [#allocation26], 4
      %s230 = int_to_ptr.vmem [resolvable:$true] %s229
      %232 = dma.hbm_to_vmem [thread:$0]  %s25, 16, %s230, [#allocation25]
    $region53: #{tpu_custom_call.1} parent=1 // pred_fallthru
      _
    // Predicated region
    $region54: #{tpu_custom_call.1} parent=1 // pred_check
      _
    $region55: #{tpu_custom_call.1} parent=1 // pred_check_branch
      %234 = sbr.rel (0) target = $region57
    $region56: #{tpu_custom_call.1} parent=1 // pred_region
      %s236 = ssub.s32 512, 512
      %237 = vsyncadd [#allocation28], %s236
      %s238 = sshll.u32 [#allocation27], 4
      %s239 = int_to_ptr.vmem [resolvable:$true] %s238
      %244 = dma.hbm_to_vmem [thread:$0]  %s27, 512, %s239, [#allocation28], 128, 128, 8
    $region57: #{tpu_custom_call.1} parent=1 // pred_fallthru
      _
    // Predicated region
    $region58: #{tpu_custom_call.1} parent=1 // pred_check
      _
    $region59: #{tpu_custom_call.1} parent=1 // pred_check_branch
      %246 = sbr.rel (0) target = $region61
    $region60: #{tpu_custom_call.1} parent=1 // pred_region
      %s248 = ssub.s32 16, 16
      %249 = vsyncadd [#allocation28], %s248
      %s251 = sshll.u32 [#allocation29], 4
      %s252 = int_to_ptr.vmem [resolvable:$true] %s251
      %254 = dma.hbm_to_vmem [thread:$0]  %s29, 16, %s252, [#allocation28]
    $region61: #{tpu_custom_call.1} parent=1 // pred_fallthru
      _
    // Predicated region
    $region62: #{tpu_custom_call.1} parent=1 // pred_check
      _
    $region63: #{tpu_custom_call.1} parent=1 // pred_check_branch
      %256 = sbr.rel (0) target = $region65
    $region64: #{tpu_custom_call.1} parent=1 // pred_region
      %s258 = ssub.s32 256, 256
      %259 = vsyncadd [#allocation31], %s258
      %s260 = sshll.u32 [#allocation30], 4
      %s261 = int_to_ptr.vmem [resolvable:$true] %s260
      %266 = dma.hbm_to_vmem [thread:$0]  %s31, 256, %s261, [#allocation31], 128, 128, 8
    $region65: #{tpu_custom_call.1} parent=1 // pred_fallthru
      _
    // Predicated region
    $region66: #{tpu_custom_call.1} parent=1 // pred_check
      _
    $region67: #{tpu_custom_call.1} parent=1 // pred_check_branch
      %268 = sbr.rel (0) target = $region69
    $region68: #{tpu_custom_call.1} parent=1 // pred_region
      %s270 = ssub.s32 16, 16
      %271 = vsyncadd [#allocation31], %s270
      %s273 = sshll.u32 [#allocation32], 4
      %s274 = int_to_ptr.vmem [resolvable:$true] %s273
      %276 = dma.hbm_to_vmem [thread:$0]  %s33, 16, %s274, [#allocation31]
    $region69: #{tpu_custom_call.1} parent=1 // pred_fallthru
      _
    // Predicated region
    $region70: #{tpu_custom_call.1} parent=1 // pred_check
      _
    $region71: #{tpu_custom_call.1} parent=1 // pred_check_branch
      %278 = sbr.rel (0) target = $region73
    $region72: #{tpu_custom_call.1} parent=1 // pred_region
      %s280 = ssub.s32 512, 512
      %281 = vsyncadd [#allocation34], %s280
      %s282 = sshll.u32 [#allocation33], 4
      %s283 = int_to_ptr.vmem [resolvable:$true] %s282
      %288 = dma.hbm_to_vmem [thread:$0]  %s35, 512, %s283, [#allocation34], 128, 128, 8
    $region73: #{tpu_custom_call.1} parent=1 // pred_fallthru
      _
    // Predicated region
    $region74: #{tpu_custom_call.1} parent=1 // pred_check
      _
    $region75: #{tpu_custom_call.1} parent=1 // pred_check_branch
      %290 = sbr.rel (0) target = $region77
    $region76: #{tpu_custom_call.1} parent=1 // pred_region
      _
    $region77: #{tpu_custom_call.1} parent=1 // pred_fallthru
      _
    // Predicated region
    $region78: #{tpu_custom_call.1} parent=1 // pred_check
      _
    $region79: #{tpu_custom_call.1} parent=1 // pred_check_branch
      %292 = sbr.rel (0) target = $region81
    $region80: #{tpu_custom_call.1} parent=1 // pred_region
      _
    $region81: #{tpu_custom_call.1} parent=1 // pred_fallthru
      _
    // Predicated region
    $region82: #{tpu_custom_call.1} parent=1 // pred_check
      _
    $region83: #{tpu_custom_call.1} parent=1 // pred_check_branch
      %294 = sbr.rel (0) target = $region85
    $region84: #{tpu_custom_call.1} parent=1 // pred_region
      %s296 = ssub.s32 512, 512
      %297 = vsyncadd [#allocation34], %s296
      %s298 = sshll.u32 [#allocation35], 4
      %s299 = int_to_ptr.vmem [resolvable:$true] %s298
      %304 = dma.hbm_to_vmem [thread:$0]  %s41, 512, %s299, [#allocation34], 128, 128, 8
    $region85: #{tpu_custom_call.1} parent=1 // pred_fallthru
      _
    // Predicated region
    $region86: #{tpu_custom_call.1} parent=1 // pred_check
      _
    $region87: #{tpu_custom_call.1} parent=1 // pred_check_branch
      %306 = sbr.rel (0) target = $region89
    $region88: #{tpu_custom_call.1} parent=1 // pred_region
      %s308 = ssub.s32 16, 16
      %309 = vsyncadd [#allocation37], %s308
      %s311 = sshll.u32 [#allocation36], 4
      %s312 = int_to_ptr.vmem [resolvable:$true] %s311
      %314 = dma.hbm_to_vmem [thread:$0]  %s43, 16, %s312, [#allocation37]
    $region89: #{tpu_custom_call.1} parent=1 // pred_fallthru
      _
    // Predicated region
    $region90: #{tpu_custom_call.1} parent=1 // pred_check
      _
    $region91: #{tpu_custom_call.1} parent=1 // pred_check_branch
      %316 = sbr.rel (0) target = $region93
    $region92: #{tpu_custom_call.1} parent=1 // pred_region
      %s318 = ssub.s32 512, 512
      %319 = vsyncadd [#allocation37], %s318
      %s320 = sshll.u32 [#allocation38], 4
      %s321 = int_to_ptr.vmem [resolvable:$true] %s320
      %326 = dma.hbm_to_vmem [thread:$0]  %s45, 512, %s321, [#allocation37], 128, 128, 8
    $region93: #{tpu_custom_call.1} parent=1 // pred_fallthru
      _
    // Predicated region
    $region94: #{tpu_custom_call.1} parent=1 // pred_check
      _
    $region95: #{tpu_custom_call.1} parent=1 // pred_check_branch
      %328 = sbr.rel (0) target = $region97
    $region96: #{tpu_custom_call.1} parent=1 // pred_region
      %s330 = ssub.s32 512, 512
      %331 = vsyncadd [#allocation40], %s330
      %s332 = sshll.u32 [#allocation39], 4
      %s333 = int_to_ptr.vmem [resolvable:$true] %s332
      %338 = dma.hbm_to_vmem [thread:$0]  %s47, 512, %s333, [#allocation40], 128, 128, 8
    $region97: #{tpu_custom_call.1} parent=1 // pred_fallthru
      _
    // Predicated region
    $region98: #{tpu_custom_call.1} parent=1 // pred_check
      _
    $region99: #{tpu_custom_call.1} parent=1 // pred_check_branch
      %340 = sbr.rel (0) target = $region101
    $region100: #{tpu_custom_call.1} parent=1 // pred_region
      %s342 = ssub.s32 16, 16
      %343 = vsyncadd [#allocation40], %s342
      %s345 = sshll.u32 [#allocation41], 4
      %s346 = int_to_ptr.vmem [resolvable:$true] %s345
      %348 = dma.hbm_to_vmem [thread:$0]  %s49, 16, %s346, [#allocation40]
    $region101: #{tpu_custom_call.1} parent=1 // pred_fallthru
      _
    // Predicated region
    $region102: #{tpu_custom_call.1} parent=1 // pred_check
      _
    $region103: #{tpu_custom_call.1} parent=1 // pred_check_branch
      %350 = sbr.rel (0) target = $region105
    $region104: #{tpu_custom_call.1} parent=1 // pred_region
      %s352 = ssub.s32 512, 512
      %353 = vsyncadd [#allocation43], %s352
      %s354 = sshll.u32 [#allocation42], 4
      %s355 = int_to_ptr.vmem [resolvable:$true] %s354
      %360 = dma.hbm_to_vmem [thread:$0]  %s51, 512, %s355, [#allocation43], 128, 128, 8
    $region105: #{tpu_custom_call.1} parent=1 // pred_fallthru
      _
    // Predicated region
    $region106: #{tpu_custom_call.1} parent=1 // pred_check
      _
    $region107: #{tpu_custom_call.1} parent=1 // pred_check_branch
      %362 = sbr.rel (0) target = $region109
    $region108: #{tpu_custom_call.1} parent=1 // pred_region
      %s364 = ssub.s32 16, 16
      %365 = vsyncadd [#allocation43], %s364
      %s367 = sshll.u32 [#allocation44], 4
      %s368 = int_to_ptr.vmem [resolvable:$true] %s367
      %370 = dma.hbm_to_vmem [thread:$0]  %s53, 16, %s368, [#allocation43]
    $region109: #{tpu_custom_call.1} parent=1 // pred_fallthru
      _
    // Predicated region
    $region110: #{tpu_custom_call.1} parent=1 // pred_check
      _
    $region111: #{tpu_custom_call.1} parent=1 // pred_check_branch
      %372 = sbr.rel (0) target = $region113
    $region112: #{tpu_custom_call.1} parent=1 // pred_region
      _
    $region113: #{tpu_custom_call.1} parent=1 // pred_fallthru
      _
    // Predicated region
    $region114: #{tpu_custom_call.1} parent=1 // pred_check
      _
    $region115: #{tpu_custom_call.1} parent=1 // pred_check_branch
      %374 = sbr.rel (0) target = $region117
    $region116: #{tpu_custom_call.1} parent=1 // pred_region
      _
    $region117: #{tpu_custom_call.1} parent=1 // pred_fallthru
      _
    // Predicated region
    $region118: #{tpu_custom_call.1} parent=1 // pred_check
      _
    $region119: #{tpu_custom_call.1} parent=1 // pred_check_branch
      %376 = sbr.rel (0) target = $region121
    $region120: #{tpu_custom_call.1} parent=1 // pred_region
      %377 = dma.done [#allocation7], 1024
    $region121: #{tpu_custom_call.1} parent=1 // pred_fallthru
      _
    // Predicated region
    $region122: #{tpu_custom_call.1} parent=1 // pred_check
      _
    $region123: #{tpu_custom_call.1} parent=1 // pred_check_branch
      %379 = sbr.rel (0) target = $region125
    $region124: #{tpu_custom_call.1} parent=1 // pred_region
      %380 = dma.done [#allocation10], 1024
    $region125: #{tpu_custom_call.1} parent=1 // pred_fallthru
      _
    // Predicated region
    $region126: #{tpu_custom_call.1} parent=1 // pred_check
      _
    $region127: #{tpu_custom_call.1} parent=1 // pred_check_branch
      %382 = sbr.rel (0) target = $region129
    $region128: #{tpu_custom_call.1} parent=1 // pred_region
      %383 = dma.done [#allocation10], 1024
    $region129: #{tpu_custom_call.1} parent=1 // pred_fallthru
      _
    // Predicated region
    $region130: #{tpu_custom_call.1} parent=1 // pred_check
      _
    $region131: #{tpu_custom_call.1} parent=1 // pred_check_branch
      %385 = sbr.rel (0) target = $region133
    $region132: #{tpu_custom_call.1} parent=1 // pred_region
      %386 = dma.done [#allocation13], 128
    $region133: #{tpu_custom_call.1} parent=1 // pred_fallthru
      _
    // Predicated region
    $region134: #{tpu_custom_call.1} parent=1 // pred_check
      _
    $region135: #{tpu_custom_call.1} parent=1 // pred_check_branch
      %388 = sbr.rel (0) target = $region137
    $region136: #{tpu_custom_call.1} parent=1 // pred_region
      %389 = dma.done [#allocation13], 256
    $region137: #{tpu_custom_call.1} parent=1 // pred_fallthru
      _
    // Predicated region
    $region138: #{tpu_custom_call.1} parent=1 // pred_check
      _
    $region139: #{tpu_custom_call.1} parent=1 // pred_check_branch
      %391 = sbr.rel (0) target = $region141
    $region140: #{tpu_custom_call.1} parent=1 // pred_region
      %392 = dma.done [#allocation16], 16
    $region141: #{tpu_custom_call.1} parent=1 // pred_fallthru
      _
    // Predicated region
    $region142: #{tpu_custom_call.1} parent=1 // pred_check
      _
    $region143: #{tpu_custom_call.1} parent=1 // pred_check_branch
      %394 = sbr.rel (0) target = $region145
    $region144: #{tpu_custom_call.1} parent=1 // pred_region
      %395 = dma.done [#allocation16], 512
    $region145: #{tpu_custom_call.1} parent=1 // pred_fallthru
      _
    // Predicated region
    $region146: #{tpu_custom_call.1} parent=1 // pred_check
      _
    $region147: #{tpu_custom_call.1} parent=1 // pred_check_branch
      %397 = sbr.rel (0) target = $region149
    $region148: #{tpu_custom_call.1} parent=1 // pred_region
      %398 = dma.done [#allocation19], 16
    $region149: #{tpu_custom_call.1} parent=1 // pred_fallthru
      _
    // Predicated region
    $region150: #{tpu_custom_call.1} parent=1 // pred_check
      _
    $region151: #{tpu_custom_call.1} parent=1 // pred_check_branch
      %400 = sbr.rel (0) target = $region153
    $region152: #{tpu_custom_call.1} parent=1 // pred_region
      %401 = dma.done [#allocation19], 512
    $region153: #{tpu_custom_call.1} parent=1 // pred_fallthru
      _
    // Predicated region
    $region154: #{tpu_custom_call.1} parent=1 // pred_check
      _
    $region155: #{tpu_custom_call.1} parent=1 // pred_check_branch
      %403 = sbr.rel (0) target = $region157
    $region156: #{tpu_custom_call.1} parent=1 // pred_region
      %404 = dma.done [#allocation22], 16
    $region157: #{tpu_custom_call.1} parent=1 // pred_fallthru
      _
    // Predicated region
    $region158: #{tpu_custom_call.1} parent=1 // pred_check
      _
    $region159: #{tpu_custom_call.1} parent=1 // pred_check_branch
      %406 = sbr.rel (0) target = $region161
    $region160: #{tpu_custom_call.1} parent=1 // pred_region
      %407 = dma.done [#allocation22], 512
    $region161: #{tpu_custom_call.1} parent=1 // pred_fallthru
      _
    // Predicated region
    $region162: #{tpu_custom_call.1} parent=1 // pred_check
      _
    $region163: #{tpu_custom_call.1} parent=1 // pred_check_branch
      %409 = sbr.rel (0) target = $region165
    $region164: #{tpu_custom_call.1} parent=1 // pred_region
      %410 = dma.done [#allocation25], 512
    $region165: #{tpu_custom_call.1} parent=1 // pred_fallthru
      _
    // Predicated region
    $region166: #{tpu_custom_call.1} parent=1 // pred_check
      _
    $region167: #{tpu_custom_call.1} parent=1 // pred_check_branch
      %412 = sbr.rel (0) target = $region169
    $region168: #{tpu_custom_call.1} parent=1 // pred_region
      %413 = dma.done [#allocation25], 16
    $region169: #{tpu_custom_call.1} parent=1 // pred_fallthru
      _
    // Predicated region
    $region170: #{tpu_custom_call.1} parent=1 // pred_check
      _
    $region171: #{tpu_custom_call.1} parent=1 // pred_check_branch
      %415 = sbr.rel (0) target = $region173
    $region172: #{tpu_custom_call.1} parent=1 // pred_region
      %416 = dma.done [#allocation28], 512
    $region173: #{tpu_custom_call.1} parent=1 // pred_fallthru
      _
    // Predicated region
    $region174: #{tpu_custom_call.1} parent=1 // pred_check
      _
    $region175: #{tpu_custom_call.1} parent=1 // pred_check_branch
      %418 = sbr.rel (0) target = $region177
    $region176: #{tpu_custom_call.1} parent=1 // pred_region
      %419 = dma.done [#allocation28], 16
    $region177: #{tpu_custom_call.1} parent=1 // pred_fallthru
      _
    // Predicated region
    $region178: #{tpu_custom_call.1} parent=1 // pred_check
      _
    $region179: #{tpu_custom_call.1} parent=1 // pred_check_branch
      %421 = sbr.rel (0) target = $region181
    $region180: #{tpu_custom_call.1} parent=1 // pred_region
      %422 = dma.done [#allocation31], 256
    $region181: #{tpu_custom_call.1} parent=1 // pred_fallthru
      _
    // Predicated region
    $region182: #{tpu_custom_call.1} parent=1 // pred_check
      _
    $region183: #{tpu_custom_call.1} parent=1 // pred_check_branch
      %424 = sbr.rel (0) target = $region185
    $region184: #{tpu_custom_call.1} parent=1 // pred_region
      %425 = dma.done [#allocation31], 16
    $region185: #{tpu_custom_call.1} parent=1 // pred_fallthru
      _
    // Predicated region
    $region186: #{tpu_custom_call.1} parent=1 // pred_check
      _
    $region187: #{tpu_custom_call.1} parent=1 // pred_check_branch
      %427 = sbr.rel (0) target = $region189
    $region188: #{tpu_custom_call.1} parent=1 // pred_region
      %428 = dma.done [#allocation34], 512
    $region189: #{tpu_custom_call.1} parent=1 // pred_fallthru
      _
    // Predicated region
    $region190: #{tpu_custom_call.1} parent=1 // pred_check
      _
    $region191: #{tpu_custom_call.1} parent=1 // pred_check_branch
      %430 = sbr.rel (0) target = $region193
    $region192: #{tpu_custom_call.1} parent=1 // pred_region
      %431 = dma.done [#allocation34], 512
    $region193: #{tpu_custom_call.1} parent=1 // pred_fallthru
      _
    // Predicated region
    $region194: #{tpu_custom_call.1} parent=1 // pred_check
      _
    $region195: #{tpu_custom_call.1} parent=1 // pred_check_branch
      %433 = sbr.rel (0) target = $region197
    $region196: #{tpu_custom_call.1} parent=1 // pred_region
      %434 = dma.done [#allocation37], 16
    $region197: #{tpu_custom_call.1} parent=1 // pred_fallthru
      _
    // Predicated region
    $region198: #{tpu_custom_call.1} parent=1 // pred_check
      _
    $region199: #{tpu_custom_call.1} parent=1 // pred_check_branch
      %436 = sbr.rel (0) target = $region201
    $region200: #{tpu_custom_call.1} parent=1 // pred_region
      %437 = dma.done [#allocation37], 512
    $region201: #{tpu_custom_call.1} parent=1 // pred_fallthru
      _
    // Predicated region
    $region202: #{tpu_custom_call.1} parent=1 // pred_check
      _
    $region203: #{tpu_custom_call.1} parent=1 // pred_check_branch
      %439 = sbr.rel (0) target = $region205
    $region204: #{tpu_custom_call.1} parent=1 // pred_region
      %440 = dma.done [#allocation40], 512
    $region205: #{tpu_custom_call.1} parent=1 // pred_fallthru
      _
    // Predicated region
    $region206: #{tpu_custom_call.1} parent=1 // pred_check
      _
    $region207: #{tpu_custom_call.1} parent=1 // pred_check_branch
      %442 = sbr.rel (0) target = $region209
    $region208: #{tpu_custom_call.1} parent=1 // pred_region
      %443 = dma.done [#allocation40], 16
    $region209: #{tpu_custom_call.1} parent=1 // pred_fallthru
      _
    // Predicated region
    $region210: #{tpu_custom_call.1} parent=1 // pred_check
      _
    $region211: #{tpu_custom_call.1} parent=1 // pred_check_branch
      %445 = sbr.rel (0) target = $region213
    $region212: #{tpu_custom_call.1} parent=1 // pred_region
      %446 = dma.done [#allocation43], 512
    $region213: #{tpu_custom_call.1} parent=1 // pred_fallthru
      _
    // Predicated region
    $region214: #{tpu_custom_call.1} parent=1 // pred_check
      _
    $region215: #{tpu_custom_call.1} parent=1 // pred_check_branch
      %448 = sbr.rel (0) target = $region217
    $region216: #{tpu_custom_call.1} parent=1 // pred_region
      %449 = dma.done [#allocation43], 16
    $region217: #{tpu_custom_call.1} parent=1 // pred_fallthru
      _
    %v450 = vld [vmem:[#allocation6] sm:$0xff]
    %v451 = vld [vmem:[#allocation6 + $0x8] sm:$0xff]
    %v452 = vld [vmem:[#allocation6 + $0x10] sm:$0xff]
    %v453 = vld [vmem:[#allocation6 + $0x18] sm:$0xff]
    %v454 = vld [vmem:[#allocation6 + $0x20] sm:$0xff]
    %v455 = vld [vmem:[#allocation6 + $0x28] sm:$0xff]
    %v456 = vld [vmem:[#allocation6 + $0x30] sm:$0xff]
    %v457 = vld [vmem:[#allocation6 + $0x38] sm:$0xff]
    %v458 = vld [vmem:[#allocation14] sm:$0xff]
    %v459 = vld [vmem:[#allocation14 + $0x8] sm:$0xff]
    %v460 = vld [vmem:[#allocation15] sm:$0x1]
    %v462 = vlaneseq
    %v463 = vshrl.u32 %v462, 7
    %v464 = vsub.s32 0, %v463
    %v465 = vrot.slane %v460, %v464
    %vm467 = vcmask 130048
    %v469 = vsel %vm467, %v450, 0
    %v472 = vsel %vm467, %v451, 0
    %v475 = vsel %vm467, %v452, 0
    %v478 = vsel %vm467, %v453, 0
    %v481 = vsel %vm467, %v454, 0
    %v484 = vsel %vm467, %v455, 0
    %v487 = vsel %vm467, %v456, 0
    %v490 = vsel %vm467, %v457, 0
    %492 = vmatprep.subr.mxu0 0.0
    %493 = vmatpush1.msra.mxu0 0.0
    %494 = vmatprep.subr.mxu0 0.0
    %495 = vmatpush1.msra.mxu0 0.0
    %496 = vmatprep.subr.mxu0 0.0
    %497 = vmatpush1.msra.mxu0 0.0
    %498 = vmatprep.subr.mxu0 0.0
    %499 = vmatpush1.msra.mxu0 0.0
    %500 = vmatprep.subr.mxu0 0.0
    %501 = vmatpush1.msra.mxu0 0.0
    %502 = vmatprep.subr.mxu0 0.0
    %503 = vmatpush1.msra.mxu0 0.0
    %504 = vmatprep.subr.mxu0 0.0
    %505 = vmatpush1.msra.mxu0 0.0
    %506 = vmatprep.subr.mxu0 0.0
    %507 = vmatpush1.msra.mxu0 0.0
    %508 = vmatprep.subr.mxu0 0.0
    %509 = vmatpush1.msra.mxu0 0.0
    %510 = vmatprep.subr.mxu0 0.0
    %511 = vmatpush1.msra.mxu0 0.0
    %512 = vmatprep.subr.mxu0 0.0
    %513 = vmatpush1.msra.mxu0 0.0
    %514 = vmatprep.subr.mxu0 0.0
    %515 = vmatpush1.msra.mxu0 0.0
    %516 = vmatprep.subr.mxu0 0.0
    %517 = vmatpush1.msra.mxu0 0.0
    %518 = vmatprep.subr.mxu0 0.0
    %519 = vmatpush1.msra.mxu0 0.0
    %520 = vmatprep.subr.mxu0 0.0
    %521 = vmatpush1.msra.mxu0 %v459
    %522 = vmatprep.subr.mxu0 0.0
    %523 = vmatpush1.msra.mxu0 %v458
    %524 = vmatprep.subr.mxu0 0.0
    %525 = vmatpush2.msra.mxu0 0.0
    %526 = vmatprep.subr.mxu0 0.0
    %527 = vmatpush2.msra.mxu0 0.0
    %528 = vmatprep.subr.mxu0 0.0
    %529 = vmatpush2.msra.mxu0 0.0
    %530 = vmatprep.subr.mxu0 0.0
    %531 = vmatpush2.msra.mxu0 0.0
    %532 = vmatprep.subr.mxu0 0.0
    %533 = vmatpush2.msra.mxu0 0.0
    %534 = vmatprep.subr.mxu0 0.0
    %535 = vmatpush2.msra.mxu0 0.0
    %536 = vmatprep.subr.mxu0 0.0
    %537 = vmatpush2.msra.mxu0 0.0
    %538 = vmatprep.subr.mxu0 0.0
    %539 = vmatpush2.msra.mxu0 0.0
    %540 = vmatprep.subr.mxu0 0.0
    %541 = vmatpush2.msra.mxu0 0.0
    %542 = vmatprep.subr.mxu0 0.0
    %543 = vmatpush2.msra.mxu0 0.0
    %544 = vmatprep.subr.mxu0 0.0
    %545 = vmatpush2.msra.mxu0 0.0
    %546 = vmatprep.subr.mxu0 0.0
    %547 = vmatpush2.msra.mxu0 0.0
    %548 = vmatprep.subr.mxu0 0.0
    %549 = vmatpush2.msra.mxu0 0.0
    %550 = vmatprep.subr.mxu0 0.0
    %551 = vmatpush2.msra.mxu0 0.0
    %552 = vmatprep.subr.mxu0 0.0
    %553 = vmatpush2.msra.mxu0 0.0
    %554 = vmatprep.subr.mxu0 0.0
    %555 = vmatpush2.msra.mxu0 0.0
    %556 = vmatprep.mubr.f32.mxu0 0.0
    %557 = vmatmul.mubr.f32.gmra.mxu0 %v469
    %v558 = vpop.f32.mrf.mxu0
    %v559 = vadd.f32 %v465, %v558
    %v560 = vpop.f32.mrf.mxu0
    %561 = vmatprep.mubr.f32.mxu0 0.0
    %562 = vmatmul.mubr.f32.gmra.mxu0 %v472
    %v563 = vpop.f32.mrf.mxu0
    %v564 = vadd.f32 %v465, %v563
    %v565 = vpop.f32.mrf.mxu0
    %566 = vmatprep.mubr.f32.mxu0 0.0
    %567 = vmatmul.mubr.f32.gmra.mxu0 %v475
    %v568 = vpop.f32.mrf.mxu0
    %v569 = vadd.f32 %v465, %v568
    %v570 = vpop.f32.mrf.mxu0
    %571 = vmatprep.mubr.f32.mxu0 0.0
    %572 = vmatmul.mubr.f32.gmra.mxu0 %v478
    %v573 = vpop.f32.mrf.mxu0
    %v574 = vadd.f32 %v465, %v573
    %v575 = vpop.f32.mrf.mxu0
    %576 = vmatprep.mubr.f32.mxu0 0.0
    %577 = vmatmul.mubr.f32.gmra.mxu0 %v481
    %v578 = vpop.f32.mrf.mxu0
    %v579 = vadd.f32 %v465, %v578
    %v580 = vpop.f32.mrf.mxu0
    %581 = vmatprep.mubr.f32.mxu0 0.0
    %582 = vmatmul.mubr.f32.gmra.mxu0 %v484
    %v583 = vpop.f32.mrf.mxu0
    %v584 = vadd.f32 %v465, %v583
    %v585 = vpop.f32.mrf.mxu0
    %586 = vmatprep.mubr.f32.mxu0 0.0
    %587 = vmatmul.mubr.f32.gmra.mxu0 %v487
    %v588 = vpop.f32.mrf.mxu0
    %v589 = vadd.f32 %v465, %v588
    %v590 = vpop.f32.mrf.mxu0
    %591 = vmatprep.mubr.f32.mxu0 0.0
    %592 = vmatmul.mubr.f32.gmra.mxu0 %v490
    %v593 = vpop.f32.mrf.mxu0
    %v594 = vadd.f32 %v465, %v593
    %v595 = vpop.f32.mrf.mxu0
    %596 = vdwg.mxu0
    %v597 = vmax.f32 %v559, 0.0
    %v598 = vmax.f32 %v564, 0.0
    %v599 = vmax.f32 %v569, 0.0
    %v600 = vmax.f32 %v574, 0.0
    %v601 = vmax.f32 %v579, 0.0
    %v602 = vmax.f32 %v584, 0.0
    %v603 = vmax.f32 %v589, 0.0
    %v604 = vmax.f32 %v594, 0.0
    %v605 = vld [vmem:[#allocation17] sm:$0xff]
    %v606 = vld [vmem:[#allocation17 + $0x8] sm:$0xff]
    %v607 = vld [vmem:[#allocation17 + $0x10] sm:$0xff]
    %v608 = vld [vmem:[#allocation17 + $0x18] sm:$0xff]
    %v609 = vld [vmem:[#allocation18] sm:$0x1]
    %v611 = vlaneseq
    %v612 = vshrl.u32 %v611, 7
    %v613 = vsub.s32 0, %v612
    %v614 = vrot.slane %v609, %v613
    %vm616 = vcmask 261120
    %v618 = vsel %vm616, %v597, 0
    %v621 = vsel %vm616, %v598, 0
    %v624 = vsel %vm616, %v599, 0
    %v627 = vsel %vm616, %v600, 0
    %v630 = vsel %vm616, %v601, 0
    %v633 = vsel %vm616, %v602, 0
    %v636 = vsel %vm616, %v603, 0
    %v639 = vsel %vm616, %v604, 0
    %641 = vmatprep.subr.mxu0 0.0
    %642 = vmatpush1.msra.mxu0 0.0
    %643 = vmatprep.subr.mxu0 0.0
    %644 = vmatpush1.msra.mxu0 0.0
    %645 = vmatprep.subr.mxu0 0.0
    %646 = vmatpush1.msra.mxu0 0.0
    %647 = vmatprep.subr.mxu0 0.0
    %648 = vmatpush1.msra.mxu0 0.0
    %649 = vmatprep.subr.mxu0 0.0
    %650 = vmatpush1.msra.mxu0 0.0
    %651 = vmatprep.subr.mxu0 0.0
    %652 = vmatpush1.msra.mxu0 0.0
    %653 = vmatprep.subr.mxu0 0.0
    %654 = vmatpush1.msra.mxu0 0.0
    %655 = vmatprep.subr.mxu0 0.0
    %656 = vmatpush1.msra.mxu0 0.0
    %657 = vmatprep.subr.mxu0 0.0
    %658 = vmatpush1.msra.mxu0 0.0
    %659 = vmatprep.subr.mxu0 0.0
    %660 = vmatpush1.msra.mxu0 0.0
    %661 = vmatprep.subr.mxu0 0.0
    %662 = vmatpush1.msra.mxu0 0.0
    %663 = vmatprep.subr.mxu0 0.0
    %664 = vmatpush1.msra.mxu0 0.0
    %665 = vmatprep.subr.mxu0 0.0
    %666 = vmatpush1.msra.mxu0 %v608
    %667 = vmatprep.subr.mxu0 0.0
    %668 = vmatpush1.msra.mxu0 %v607
    %669 = vmatprep.subr.mxu0 0.0
    %670 = vmatpush1.msra.mxu0 %v606
    %671 = vmatprep.subr.mxu0 0.0
    %672 = vmatpush1.msra.mxu0 %v605
    %673 = vmatprep.subr.mxu0 0.0
    %674 = vmatpush2.msra.mxu0 0.0
    %675 = vmatprep.subr.mxu0 0.0
    %676 = vmatpush2.msra.mxu0 0.0
    %677 = vmatprep.subr.mxu0 0.0
    %678 = vmatpush2.msra.mxu0 0.0
    %679 = vmatprep.subr.mxu0 0.0
    %680 = vmatpush2.msra.mxu0 0.0
    %681 = vmatprep.subr.mxu0 0.0
    %682 = vmatpush2.msra.mxu0 0.0
    %683 = vmatprep.subr.mxu0 0.0
    %684 = vmatpush2.msra.mxu0 0.0
    %685 = vmatprep.subr.mxu0 0.0
    %686 = vmatpush2.msra.mxu0 0.0
    %687 = vmatprep.subr.mxu0 0.0
    %688 = vmatpush2.msra.mxu0 0.0
    %689 = vmatprep.subr.mxu0 0.0
    %690 = vmatpush2.msra.mxu0 0.0
    %691 = vmatprep.subr.mxu0 0.0
    %692 = vmatpush2.msra.mxu0 0.0
    %693 = vmatprep.subr.mxu0 0.0
    %694 = vmatpush2.msra.mxu0 0.0
    %695 = vmatprep.subr.mxu0 0.0
    %696 = vmatpush2.msra.mxu0 0.0
    %697 = vmatprep.subr.mxu0 0.0
    %698 = vmatpush2.msra.mxu0 0.0
    %699 = vmatprep.subr.mxu0 0.0
    %700 = vmatpush2.msra.mxu0 0.0
    %701 = vmatprep.subr.mxu0 0.0
    %702 = vmatpush2.msra.mxu0 0.0
    %703 = vmatprep.subr.mxu0 0.0
    %704 = vmatpush2.msra.mxu0 0.0
    %705 = vmatprep.mubr.f32.mxu0 0.0
    %706 = vmatmul.mubr.f32.gmra.mxu0 %v618
    %v707 = vpop.f32.mrf.mxu0
    %v708 = vadd.f32 %v614, %v707
    %v709 = vpop.f32.mrf.mxu0
    %710 = vmatprep.mubr.f32.mxu0 0.0
    %711 = vmatmul.mubr.f32.gmra.mxu0 %v621
    %v712 = vpop.f32.mrf.mxu0
    %v713 = vadd.f32 %v614, %v712
    %v714 = vpop.f32.mrf.mxu0
    %715 = vmatprep.mubr.f32.mxu0 0.0
    %716 = vmatmul.mubr.f32.gmra.mxu0 %v624
    %v717 = vpop.f32.mrf.mxu0
    %v718 = vadd.f32 %v614, %v717
    %v719 = vpop.f32.mrf.mxu0
    %720 = vmatprep.mubr.f32.mxu0 0.0
    %721 = vmatmul.mubr.f32.gmra.mxu0 %v627
    %v722 = vpop.f32.mrf.mxu0
    %v723 = vadd.f32 %v614, %v722
    %v724 = vpop.f32.mrf.mxu0
    %725 = vmatprep.mubr.f32.mxu0 0.0
    %726 = vmatmul.mubr.f32.gmra.mxu0 %v630
    %v727 = vpop.f32.mrf.mxu0
    %v728 = vadd.f32 %v614, %v727
    %v729 = vpop.f32.mrf.mxu0
    %730 = vmatprep.mubr.f32.mxu0 0.0
    %731 = vmatmul.mubr.f32.gmra.mxu0 %v633
    %v732 = vpop.f32.mrf.mxu0
    %v733 = vadd.f32 %v614, %v732
    %v734 = vpop.f32.mrf.mxu0
    %735 = vmatprep.mubr.f32.mxu0 0.0
    %736 = vmatmul.mubr.f32.gmra.mxu0 %v636
    %v737 = vpop.f32.mrf.mxu0
    %v738 = vadd.f32 %v614, %v737
    %v739 = vpop.f32.mrf.mxu0
    %740 = vmatprep.mubr.f32.mxu0 0.0
    %741 = vmatmul.mubr.f32.gmra.mxu0 %v639
    %v742 = vpop.f32.mrf.mxu0
    %v743 = vadd.f32 %v614, %v742
    %v744 = vpop.f32.mrf.mxu0
    %745 = vdwg.mxu0
    %v746 = vmax.f32 %v708, 0.0
    %v747 = vmax.f32 %v713, 0.0
    %v748 = vmax.f32 %v718, 0.0
    %v749 = vmax.f32 %v723, 0.0
    %v750 = vmax.f32 %v728, 0.0
    %v751 = vmax.f32 %v733, 0.0
    %v752 = vmax.f32 %v738, 0.0
    %v753 = vmax.f32 %v743, 0.0
    %v754 = vld [vmem:[#allocation20] sm:$0xff]
    %v755 = vld [vmem:[#allocation20 + $0x8] sm:$0xff]
    %v756 = vld [vmem:[#allocation20 + $0x10] sm:$0xff]
    %v757 = vld [vmem:[#allocation20 + $0x18] sm:$0xff]
    %v758 = vld [vmem:[#allocation21] sm:$0x1]
    %v760 = vlaneseq
    %v761 = vshrl.u32 %v760, 7
    %v762 = vsub.s32 0, %v761
    %v763 = vrot.slane %v758, %v762
    %v766 = vsel %vm616, %v746, 0
    %v769 = vsel %vm616, %v747, 0
    %v772 = vsel %vm616, %v748, 0
    %v775 = vsel %vm616, %v749, 0
    %v778 = vsel %vm616, %v750, 0
    %v781 = vsel %vm616, %v751, 0
    %v784 = vsel %vm616, %v752, 0
    %v787 = vsel %vm616, %v753, 0
    %789 = vmatprep.subr.mxu0 0.0
    %790 = vmatpush1.msra.mxu0 0.0
    %791 = vmatprep.subr.mxu0 0.0
    %792 = vmatpush1.msra.mxu0 0.0
    %793 = vmatprep.subr.mxu0 0.0
    %794 = vmatpush1.msra.mxu0 0.0
    %795 = vmatprep.subr.mxu0 0.0
    %796 = vmatpush1.msra.mxu0 0.0
    %797 = vmatprep.subr.mxu0 0.0
    %798 = vmatpush1.msra.mxu0 0.0
    %799 = vmatprep.subr.mxu0 0.0
    %800 = vmatpush1.msra.mxu0 0.0
    %801 = vmatprep.subr.mxu0 0.0
    %802 = vmatpush1.msra.mxu0 0.0
    %803 = vmatprep.subr.mxu0 0.0
    %804 = vmatpush1.msra.mxu0 0.0
    %805 = vmatprep.subr.mxu0 0.0
    %806 = vmatpush1.msra.mxu0 0.0
    %807 = vmatprep.subr.mxu0 0.0
    %808 = vmatpush1.msra.mxu0 0.0
    %809 = vmatprep.subr.mxu0 0.0
    %810 = vmatpush1.msra.mxu0 0.0
    %811 = vmatprep.subr.mxu0 0.0
    %812 = vmatpush1.msra.mxu0 0.0
    %813 = vmatprep.subr.mxu0 0.0
    %814 = vmatpush1.msra.mxu0 %v757
    %815 = vmatprep.subr.mxu0 0.0
    %816 = vmatpush1.msra.mxu0 %v756
    %817 = vmatprep.subr.mxu0 0.0
    %818 = vmatpush1.msra.mxu0 %v755
    %819 = vmatprep.subr.mxu0 0.0
    %820 = vmatpush1.msra.mxu0 %v754
    %821 = vmatprep.subr.mxu0 0.0
    %822 = vmatpush2.msra.mxu0 0.0
    %823 = vmatprep.subr.mxu0 0.0
    %824 = vmatpush2.msra.mxu0 0.0
    %825 = vmatprep.subr.mxu0 0.0
    %826 = vmatpush2.msra.mxu0 0.0
    %827 = vmatprep.subr.mxu0 0.0
    %828 = vmatpush2.msra.mxu0 0.0
    %829 = vmatprep.subr.mxu0 0.0
    %830 = vmatpush2.msra.mxu0 0.0
    %831 = vmatprep.subr.mxu0 0.0
    %832 = vmatpush2.msra.mxu0 0.0
    %833 = vmatprep.subr.mxu0 0.0
    %834 = vmatpush2.msra.mxu0 0.0
    %835 = vmatprep.subr.mxu0 0.0
    %836 = vmatpush2.msra.mxu0 0.0
    %837 = vmatprep.subr.mxu0 0.0
    %838 = vmatpush2.msra.mxu0 0.0
    %839 = vmatprep.subr.mxu0 0.0
    %840 = vmatpush2.msra.mxu0 0.0
    %841 = vmatprep.subr.mxu0 0.0
    %842 = vmatpush2.msra.mxu0 0.0
    %843 = vmatprep.subr.mxu0 0.0
    %844 = vmatpush2.msra.mxu0 0.0
    %845 = vmatprep.subr.mxu0 0.0
    %846 = vmatpush2.msra.mxu0 0.0
    %847 = vmatprep.subr.mxu0 0.0
    %848 = vmatpush2.msra.mxu0 0.0
    %849 = vmatprep.subr.mxu0 0.0
    %850 = vmatpush2.msra.mxu0 0.0
    %851 = vmatprep.subr.mxu0 0.0
    %852 = vmatpush2.msra.mxu0 0.0
    %853 = vmatprep.mubr.f32.mxu0 0.0
    %854 = vmatmul.mubr.f32.gmra.mxu0 %v766
    %v855 = vpop.f32.mrf.mxu0
    %v856 = vadd.f32 %v763, %v855
    %v857 = vpop.f32.mrf.mxu0
    %858 = vmatprep.mubr.f32.mxu0 0.0
    %859 = vmatmul.mubr.f32.gmra.mxu0 %v769
    %v860 = vpop.f32.mrf.mxu0
    %v861 = vadd.f32 %v763, %v860
    %v862 = vpop.f32.mrf.mxu0
    %863 = vmatprep.mubr.f32.mxu0 0.0
    %864 = vmatmul.mubr.f32.gmra.mxu0 %v772
    %v865 = vpop.f32.mrf.mxu0
    %v866 = vadd.f32 %v763, %v865
    %v867 = vpop.f32.mrf.mxu0
    %868 = vmatprep.mubr.f32.mxu0 0.0
    %869 = vmatmul.mubr.f32.gmra.mxu0 %v775
    %v870 = vpop.f32.mrf.mxu0
    %v871 = vadd.f32 %v763, %v870
    %v872 = vpop.f32.mrf.mxu0
    %873 = vmatprep.mubr.f32.mxu0 0.0
    %874 = vmatmul.mubr.f32.gmra.mxu0 %v778
    %v875 = vpop.f32.mrf.mxu0
    %v876 = vadd.f32 %v763, %v875
    %v877 = vpop.f32.mrf.mxu0
    %878 = vmatprep.mubr.f32.mxu0 0.0
    %879 = vmatmul.mubr.f32.gmra.mxu0 %v781
    %v880 = vpop.f32.mrf.mxu0
    %v881 = vadd.f32 %v763, %v880
    %v882 = vpop.f32.mrf.mxu0
    %883 = vmatprep.mubr.f32.mxu0 0.0
    %884 = vmatmul.mubr.f32.gmra.mxu0 %v784
    %v885 = vpop.f32.mrf.mxu0
    %v886 = vadd.f32 %v763, %v885
    %v887 = vpop.f32.mrf.mxu0
    %888 = vmatprep.mubr.f32.mxu0 0.0
    %889 = vmatmul.mubr.f32.gmra.mxu0 %v787
    %v890 = vpop.f32.mrf.mxu0
    %v891 = vadd.f32 %v763, %v890
    %v892 = vpop.f32.mrf.mxu0
    %893 = vdwg.mxu0
    %894 = vst [vmem:[#allocation2] sm:$0xff] %v856
    %895 = vst [vmem:[#allocation2 + $0x8] sm:$0xff] %v861
    %896 = vst [vmem:[#allocation2 + $0x10] sm:$0xff] %v866
    %897 = vst [vmem:[#allocation2 + $0x18] sm:$0xff] %v871
    %898 = vst [vmem:[#allocation2 + $0x20] sm:$0xff] %v876
    %899 = vst [vmem:[#allocation2 + $0x28] sm:$0xff] %v881
    %900 = vst [vmem:[#allocation2 + $0x30] sm:$0xff] %v886
    %901 = vst [vmem:[#allocation2 + $0x38] sm:$0xff] %v891
    %v902 = vld [vmem:[#allocation26] sm:$0x1]
    %v904 = vlaneseq
    %v905 = vshrl.u32 %v904, 7
    %v906 = vsub.s32 0, %v905
    %v907 = vrot.slane %v902, %v906
    %v909 = vld [vmem:[#allocation29] sm:$0x1]
    %v911 = vlaneseq
    %v912 = vshrl.u32 %v911, 7
    %v913 = vsub.s32 0, %v912
    %v914 = vrot.slane %v909, %v913
    %v916 = vld [vmem:[#allocation32] sm:$0x1]
    %v918 = vlaneseq
    %v919 = vshrl.u32 %v918, 7
    %v920 = vsub.s32 0, %v919
    %v921 = vrot.slane %v916, %v920
    %v923 = vld [vmem:[#allocation12] sm:$0xff]
    %v924 = vld [vmem:[#allocation2] sm:$0xff]
    %v925 = vld [vmem:[#allocation23] sm:$0xff]
    %v926 = vld [vmem:[#allocation23 + $0x8] sm:$0xff]
    %v927 = vld [vmem:[#allocation23 + $0x10] sm:$0xff]
    %v928 = vld [vmem:[#allocation23 + $0x18] sm:$0xff]
    %v930 = vsel %vm616, %v923, 0
    %932 = vmatprep.subr.mxu0 0.0
    %933 = vmatpush1.msra.mxu0 0.0
    %934 = vmatprep.subr.mxu0 0.0
    %935 = vmatpush1.msra.mxu0 0.0
    %936 = vmatprep.subr.mxu0 0.0
    %937 = vmatpush1.msra.mxu0 0.0
    %938 = vmatprep.subr.mxu0 0.0
    %939 = vmatpush1.msra.mxu0 0.0
    %940 = vmatprep.subr.mxu0 0.0
    %941 = vmatpush1.msra.mxu0 0.0
    %942 = vmatprep.subr.mxu0 0.0
    %943 = vmatpush1.msra.mxu0 0.0
    %944 = vmatprep.subr.mxu0 0.0
    %945 = vmatpush1.msra.mxu0 0.0
    %946 = vmatprep.subr.mxu0 0.0
    %947 = vmatpush1.msra.mxu0 0.0
    %948 = vmatprep.subr.mxu0 0.0
    %949 = vmatpush1.msra.mxu0 0.0
    %950 = vmatprep.subr.mxu0 0.0
    %951 = vmatpush1.msra.mxu0 0.0
    %952 = vmatprep.subr.mxu0 0.0
    %953 = vmatpush1.msra.mxu0 0.0
    %954 = vmatprep.subr.mxu0 0.0
    %955 = vmatpush1.msra.mxu0 0.0
    %956 = vmatprep.subr.mxu0 0.0
    %957 = vmatpush1.msra.mxu0 %v928
    %958 = vmatprep.subr.mxu0 0.0
    %959 = vmatpush1.msra.mxu0 %v927
    %960 = vmatprep.subr.mxu0 0.0
    %961 = vmatpush1.msra.mxu0 %v926
    %962 = vmatprep.subr.mxu0 0.0
    %963 = vmatpush1.msra.mxu0 %v925
    %964 = vmatprep.subr.mxu0 0.0
    %965 = vmatpush2.msra.mxu0 0.0
    %966 = vmatprep.subr.mxu0 0.0
    %967 = vmatpush2.msra.mxu0 0.0
    %968 = vmatprep.subr.mxu0 0.0
    %969 = vmatpush2.msra.mxu0 0.0
    %970 = vmatprep.subr.mxu0 0.0
    %971 = vmatpush2.msra.mxu0 0.0
    %972 = vmatprep.subr.mxu0 0.0
    %973 = vmatpush2.msra.mxu0 0.0
    %974 = vmatprep.subr.mxu0 0.0
    %975 = vmatpush2.msra.mxu0 0.0
    %976 = vmatprep.subr.mxu0 0.0
    %977 = vmatpush2.msra.mxu0 0.0
    %978 = vmatprep.subr.mxu0 0.0
    %979 = vmatpush2.msra.mxu0 0.0
    %980 = vmatprep.subr.mxu0 0.0
    %981 = vmatpush2.msra.mxu0 0.0
    %982 = vmatprep.subr.mxu0 0.0
    %983 = vmatpush2.msra.mxu0 0.0
    %984 = vmatprep.subr.mxu0 0.0
    %985 = vmatpush2.msra.mxu0 0.0
    %986 = vmatprep.subr.mxu0 0.0
    %987 = vmatpush2.msra.mxu0 0.0
    %988 = vmatprep.subr.mxu0 0.0
    %989 = vmatpush2.msra.mxu0 0.0
    %990 = vmatprep.subr.mxu0 0.0
    %991 = vmatpush2.msra.mxu0 0.0
    %992 = vmatprep.subr.mxu0 0.0
    %993 = vmatpush2.msra.mxu0 0.0
    %994 = vmatprep.subr.mxu0 0.0
    %995 = vmatpush2.msra.mxu0 0.0
    %996 = vmatprep.mubr.f32.mxu0 0.0
    %997 = vmatmul.mubr.f32.gmra.mxu0 %v930
    %v998 = vpop.f32.mrf.mxu0
    %v999 = vadd.f32 0.0, %v998
    %v1000 = vpop.f32.mrf.mxu0
    %1001 = vdwg.mxu0
    %1003 = vrot.lane.b32.xlu0 %v999, 32
    %v1004 = vpop.permute.xlu0 %1003
    %v1006 = vadd.f32 %v924, %v1004
    %v1007 = vmax.f32 %v1006, 0.0
    %v1008 = vld [vmem:[#allocation24] sm:$0xff]
    %v1009 = vld [vmem:[#allocation24 + $0x8] sm:$0xff]
    %v1010 = vld [vmem:[#allocation24 + $0x10] sm:$0xff]
    %v1011 = vld [vmem:[#allocation24 + $0x18] sm:$0xff]
    %v1013 = vsel %vm616, %v1007, 0
    %1015 = vmatprep.subr.mxu0 0.0
    %1016 = vmatpush1.msra.mxu0 0.0
    %1017 = vmatprep.subr.mxu0 0.0
    %1018 = vmatpush1.msra.mxu0 0.0
    %1019 = vmatprep.subr.mxu0 0.0
    %1020 = vmatpush1.msra.mxu0 0.0
    %1021 = vmatprep.subr.mxu0 0.0
    %1022 = vmatpush1.msra.mxu0 0.0
    %1023 = vmatprep.subr.mxu0 0.0
    %1024 = vmatpush1.msra.mxu0 0.0
    %1025 = vmatprep.subr.mxu0 0.0
    %1026 = vmatpush1.msra.mxu0 0.0
    %1027 = vmatprep.subr.mxu0 0.0
    %1028 = vmatpush1.msra.mxu0 0.0
    %1029 = vmatprep.subr.mxu0 0.0
    %1030 = vmatpush1.msra.mxu0 0.0
    %1031 = vmatprep.subr.mxu0 0.0
    %1032 = vmatpush1.msra.mxu0 0.0
    %1033 = vmatprep.subr.mxu0 0.0
    %1034 = vmatpush1.msra.mxu0 0.0
    %1035 = vmatprep.subr.mxu0 0.0
    %1036 = vmatpush1.msra.mxu0 0.0
    %1037 = vmatprep.subr.mxu0 0.0
    %1038 = vmatpush1.msra.mxu0 0.0
    %1039 = vmatprep.subr.mxu0 0.0
    %1040 = vmatpush1.msra.mxu0 %v1011
    %1041 = vmatprep.subr.mxu0 0.0
    %1042 = vmatpush1.msra.mxu0 %v1010
    %1043 = vmatprep.subr.mxu0 0.0
    %1044 = vmatpush1.msra.mxu0 %v1009
    %1045 = vmatprep.subr.mxu0 0.0
    %1046 = vmatpush1.msra.mxu0 %v1008
    %1047 = vmatprep.subr.mxu0 0.0
    %1048 = vmatpush2.msra.mxu0 0.0
    %1049 = vmatprep.subr.mxu0 0.0
    %1050 = vmatpush2.msra.mxu0 0.0
    %1051 = vmatprep.subr.mxu0 0.0
    %1052 = vmatpush2.msra.mxu0 0.0
    %1053 = vmatprep.subr.mxu0 0.0
    %1054 = vmatpush2.msra.mxu0 0.0
    %1055 = vmatprep.subr.mxu0 0.0
    %1056 = vmatpush2.msra.mxu0 0.0
    %1057 = vmatprep.subr.mxu0 0.0
    %1058 = vmatpush2.msra.mxu0 0.0
    %1059 = vmatprep.subr.mxu0 0.0
    %1060 = vmatpush2.msra.mxu0 0.0
    %1061 = vmatprep.subr.mxu0 0.0
    %1062 = vmatpush2.msra.mxu0 0.0
    %1063 = vmatprep.subr.mxu0 0.0
    %1064 = vmatpush2.msra.mxu0 0.0
    %1065 = vmatprep.subr.mxu0 0.0
    %1066 = vmatpush2.msra.mxu0 0.0
    %1067 = vmatprep.subr.mxu0 0.0
    %1068 = vmatpush2.msra.mxu0 0.0
    %1069 = vmatprep.subr.mxu0 0.0
    %1070 = vmatpush2.msra.mxu0 0.0
    %1071 = vmatprep.subr.mxu0 0.0
    %1072 = vmatpush2.msra.mxu0 0.0
    %1073 = vmatprep.subr.mxu0 0.0
    %1074 = vmatpush2.msra.mxu0 0.0
    %1075 = vmatprep.subr.mxu0 0.0
    %1076 = vmatpush2.msra.mxu0 0.0
    %1077 = vmatprep.subr.mxu0 0.0
    %1078 = vmatpush2.msra.mxu0 0.0
    %1079 = vmatprep.mubr.f32.mxu0 0.0
    %1080 = vmatmul.mubr.f32.gmra.mxu0 %v1013
    %v1081 = vpop.f32.mrf.mxu0
    %v1082 = vadd.f32 %v907, %v1081
    %v1083 = vpop.f32.mrf.mxu0
    %1084 = vdwg.mxu0
    %v1085 = vmax.f32 %v1082, 0.0
    %v1086 = vld [vmem:[#allocation27] sm:$0xff]
    %v1087 = vld [vmem:[#allocation27 + $0x8] sm:$0xff]
    %v1088 = vld [vmem:[#allocation27 + $0x10] sm:$0xff]
    %v1089 = vld [vmem:[#allocation27 + $0x18] sm:$0xff]
    %v1091 = vsel %vm616, %v1085, 0
    %1093 = vmatprep.subr.mxu0 0.0
    %1094 = vmatpush1.msra.mxu0 0.0
    %1095 = vmatprep.subr.mxu0 0.0
    %1096 = vmatpush1.msra.mxu0 0.0
    %1097 = vmatprep.subr.mxu0 0.0
    %1098 = vmatpush1.msra.mxu0 0.0
    %1099 = vmatprep.subr.mxu0 0.0
    %1100 = vmatpush1.msra.mxu0 0.0
    %1101 = vmatprep.subr.mxu0 0.0
    %1102 = vmatpush1.msra.mxu0 0.0
    %1103 = vmatprep.subr.mxu0 0.0
    %1104 = vmatpush1.msra.mxu0 0.0
    %1105 = vmatprep.subr.mxu0 0.0
    %1106 = vmatpush1.msra.mxu0 0.0
    %1107 = vmatprep.subr.mxu0 0.0
    %1108 = vmatpush1.msra.mxu0 0.0
    %1109 = vmatprep.subr.mxu0 0.0
    %1110 = vmatpush1.msra.mxu0 0.0
    %1111 = vmatprep.subr.mxu0 0.0
    %1112 = vmatpush1.msra.mxu0 0.0
    %1113 = vmatprep.subr.mxu0 0.0
    %1114 = vmatpush1.msra.mxu0 0.0
    %1115 = vmatprep.subr.mxu0 0.0
    %1116 = vmatpush1.msra.mxu0 0.0
    %1117 = vmatprep.subr.mxu0 0.0
    %1118 = vmatpush1.msra.mxu0 %v1089
    %1119 = vmatprep.subr.mxu0 0.0
    %1120 = vmatpush1.msra.mxu0 %v1088
    %1121 = vmatprep.subr.mxu0 0.0
    %1122 = vmatpush1.msra.mxu0 %v1087
    %1123 = vmatprep.subr.mxu0 0.0
    %1124 = vmatpush1.msra.mxu0 %v1086
    %1125 = vmatprep.subr.mxu0 0.0
    %1126 = vmatpush2.msra.mxu0 0.0
    %1127 = vmatprep.subr.mxu0 0.0
    %1128 = vmatpush2.msra.mxu0 0.0
    %1129 = vmatprep.subr.mxu0 0.0
    %1130 = vmatpush2.msra.mxu0 0.0
    %1131 = vmatprep.subr.mxu0 0.0
    %1132 = vmatpush2.msra.mxu0 0.0
    %1133 = vmatprep.subr.mxu0 0.0
    %1134 = vmatpush2.msra.mxu0 0.0
    %1135 = vmatprep.subr.mxu0 0.0
    %1136 = vmatpush2.msra.mxu0 0.0
    %1137 = vmatprep.subr.mxu0 0.0
    %1138 = vmatpush2.msra.mxu0 0.0
    %1139 = vmatprep.subr.mxu0 0.0
    %1140 = vmatpush2.msra.mxu0 0.0
    %1141 = vmatprep.subr.mxu0 0.0
    %1142 = vmatpush2.msra.mxu0 0.0
    %1143 = vmatprep.subr.mxu0 0.0
    %1144 = vmatpush2.msra.mxu0 0.0
    %1145 = vmatprep.subr.mxu0 0.0
    %1146 = vmatpush2.msra.mxu0 0.0
    %1147 = vmatprep.subr.mxu0 0.0
    %1148 = vmatpush2.msra.mxu0 0.0
    %1149 = vmatprep.subr.mxu0 0.0
    %1150 = vmatpush2.msra.mxu0 0.0
    %1151 = vmatprep.subr.mxu0 0.0
    %1152 = vmatpush2.msra.mxu0 0.0
    %1153 = vmatprep.subr.mxu0 0.0
    %1154 = vmatpush2.msra.mxu0 0.0
    %1155 = vmatprep.subr.mxu0 0.0
    %1156 = vmatpush2.msra.mxu0 0.0
    %1157 = vmatprep.mubr.f32.mxu0 0.0
    %1158 = vmatmul.mubr.f32.gmra.mxu0 %v1091
    %v1159 = vpop.f32.mrf.mxu0
    %v1160 = vadd.f32 %v914, %v1159
    %v1161 = vpop.f32.mrf.mxu0
    %1162 = vdwg.mxu0
    %v1163 = vmax.f32 %v1160, 0.0
    %vm1164 = vcmp.ne.f32.partialorder %v1160, %v1160
    %v1165 = vadd.f32 %v1160, 0.0
    %v1166 = vand.u32 2147483647, %v1160
    %v1167 = vsub.f32 0.0, %v1166
    %v1168 = vmul.f32 %v1167, 1.442695
    %v1169 = vpow.pop %v1168
    %v1170 = vadd.f32 %v1169, 1.0
    %v1171 = vlog2.pop %v1170
    %v1172 = vmul.f32 %v1171, 0.6931472
    %v1173 = vmul.f32 -0.5, %v1169
    %v1174 = vadd.f32 %v1173, 1.0
    %v1175 = vmul.f32 %v1174, %v1169
    %v1176 = vand.u32 2147483647, %v1169
    %vm1177 = vcmp.lt.f32.partialorder %v1176, 0.0004427343
    %v1178 = vsel %vm1177, %v1175, %v1172
    %v1179 = vadd.f32 %v1163, %v1178
    %v1180 = vsel %vm1164, %v1165, %v1179
    %v1181 = vld [vmem:[#allocation9] sm:$0xff]
    %1183 = vrot.lane.b32.xlu0 %v1180, 112
    %v1184 = vpop.permute.xlu0 %1183
    %v1186 = vmul.f32 %v1181, %v1184
    %v1187 = vadd.f32 %v1186, %v1160
    %v1188 = vld [vmem:[#allocation30] sm:$0xff]
    %v1189 = vld [vmem:[#allocation30 + $0x8] sm:$0xff]
    %v1191 = vsel %vm467, %v1187, 0
    %1193 = vmatprep.subr.mxu0 0.0
    %1194 = vmatpush1.msra.mxu0 0.0
    %1195 = vmatprep.subr.mxu0 0.0
    %1196 = vmatpush1.msra.mxu0 0.0
    %1197 = vmatprep.subr.mxu0 0.0
    %1198 = vmatpush1.msra.mxu0 0.0
    %1199 = vmatprep.subr.mxu0 0.0
    %1200 = vmatpush1.msra.mxu0 0.0
    %1201 = vmatprep.subr.mxu0 0.0
    %1202 = vmatpush1.msra.mxu0 0.0
    %1203 = vmatprep.subr.mxu0 0.0
    %1204 = vmatpush1.msra.mxu0 0.0
    %1205 = vmatprep.subr.mxu0 0.0
    %1206 = vmatpush1.msra.mxu0 0.0
    %1207 = vmatprep.subr.mxu0 0.0
    %1208 = vmatpush1.msra.mxu0 0.0
    %1209 = vmatprep.subr.mxu0 0.0
    %1210 = vmatpush1.msra.mxu0 0.0
    %1211 = vmatprep.subr.mxu0 0.0
    %1212 = vmatpush1.msra.mxu0 0.0
    %1213 = vmatprep.subr.mxu0 0.0
    %1214 = vmatpush1.msra.mxu0 0.0
    %1215 = vmatprep.subr.mxu0 0.0
    %1216 = vmatpush1.msra.mxu0 0.0
    %1217 = vmatprep.subr.mxu0 0.0
    %1218 = vmatpush1.msra.mxu0 0.0
    %1219 = vmatprep.subr.mxu0 0.0
    %1220 = vmatpush1.msra.mxu0 0.0
    %1221 = vmatprep.subr.mxu0 0.0
    %1222 = vmatpush1.msra.mxu0 %v1189
    %1223 = vmatprep.subr.mxu0 0.0
    %1224 = vmatpush1.msra.mxu0 %v1188
    %1225 = vmatprep.subr.mxu0 0.0
    %1226 = vmatpush2.msra.mxu0 0.0
    %1227 = vmatprep.subr.mxu0 0.0
    %1228 = vmatpush2.msra.mxu0 0.0
    %1229 = vmatprep.subr.mxu0 0.0
    %1230 = vmatpush2.msra.mxu0 0.0
    %1231 = vmatprep.subr.mxu0 0.0
    %1232 = vmatpush2.msra.mxu0 0.0
    %1233 = vmatprep.subr.mxu0 0.0
    %1234 = vmatpush2.msra.mxu0 0.0
    %1235 = vmatprep.subr.mxu0 0.0
    %1236 = vmatpush2.msra.mxu0 0.0
    %1237 = vmatprep.subr.mxu0 0.0
    %1238 = vmatpush2.msra.mxu0 0.0
    %1239 = vmatprep.subr.mxu0 0.0
    %1240 = vmatpush2.msra.mxu0 0.0
    %1241 = vmatprep.subr.mxu0 0.0
    %1242 = vmatpush2.msra.mxu0 0.0
    %1243 = vmatprep.subr.mxu0 0.0
    %1244 = vmatpush2.msra.mxu0 0.0
    %1245 = vmatprep.subr.mxu0 0.0
    %1246 = vmatpush2.msra.mxu0 0.0
    %1247 = vmatprep.subr.mxu0 0.0
    %1248 = vmatpush2.msra.mxu0 0.0
    %1249 = vmatprep.subr.mxu0 0.0
    %1250 = vmatpush2.msra.mxu0 0.0
    %1251 = vmatprep.subr.mxu0 0.0
    %1252 = vmatpush2.msra.mxu0 0.0
    %1253 = vmatprep.subr.mxu0 0.0
    %1254 = vmatpush2.msra.mxu0 0.0
    %1255 = vmatprep.subr.mxu0 0.0
    %1256 = vmatpush2.msra.mxu0 0.0
    %1257 = vmatprep.mubr.f32.mxu0 0.0
    %1258 = vmatmul.mubr.f32.gmra.mxu0 %v1191
    %v1259 = vpop.f32.mrf.mxu0
    %v1260 = vadd.f32 %v921, %v1259
    %v1261 = vpop.f32.mrf.mxu0
    %1262 = vdwg.mxu0
    %v1263 = vmax.f32 %v1260, 0.0
    %v1264 = vld [vmem:[#allocation33] sm:$0xff]
    %v1265 = vld [vmem:[#allocation33 + $0x8] sm:$0xff]
    %v1266 = vld [vmem:[#allocation33 + $0x10] sm:$0xff]
    %v1267 = vld [vmem:[#allocation33 + $0x18] sm:$0xff]
    %v1269 = vsel %vm616, %v1263, 0
    %1271 = vmatprep.subr.mxu0 0.0
    %1272 = vmatpush1.msra.mxu0 0.0
    %1273 = vmatprep.subr.mxu0 0.0
    %1274 = vmatpush1.msra.mxu0 0.0
    %1275 = vmatprep.subr.mxu0 0.0
    %1276 = vmatpush1.msra.mxu0 0.0
    %1277 = vmatprep.subr.mxu0 0.0
    %1278 = vmatpush1.msra.mxu0 0.0
    %1279 = vmatprep.subr.mxu0 0.0
    %1280 = vmatpush1.msra.mxu0 0.0
    %1281 = vmatprep.subr.mxu0 0.0
    %1282 = vmatpush1.msra.mxu0 0.0
    %1283 = vmatprep.subr.mxu0 0.0
    %1284 = vmatpush1.msra.mxu0 0.0
    %1285 = vmatprep.subr.mxu0 0.0
    %1286 = vmatpush1.msra.mxu0 0.0
    %1287 = vmatprep.subr.mxu0 0.0
    %1288 = vmatpush1.msra.mxu0 0.0
    %1289 = vmatprep.subr.mxu0 0.0
    %1290 = vmatpush1.msra.mxu0 0.0
    %1291 = vmatprep.subr.mxu0 0.0
    %1292 = vmatpush1.msra.mxu0 0.0
    %1293 = vmatprep.subr.mxu0 0.0
    %1294 = vmatpush1.msra.mxu0 0.0
    %1295 = vmatprep.subr.mxu0 0.0
    %1296 = vmatpush1.msra.mxu0 %v1267
    %1297 = vmatprep.subr.mxu0 0.0
    %1298 = vmatpush1.msra.mxu0 %v1266
    %1299 = vmatprep.subr.mxu0 0.0
    %1300 = vmatpush1.msra.mxu0 %v1265
    %1301 = vmatprep.subr.mxu0 0.0
    %1302 = vmatpush1.msra.mxu0 %v1264
    %1303 = vmatprep.subr.mxu0 0.0
    %1304 = vmatpush2.msra.mxu0 0.0
    %1305 = vmatprep.subr.mxu0 0.0
    %1306 = vmatpush2.msra.mxu0 0.0
    %1307 = vmatprep.subr.mxu0 0.0
    %1308 = vmatpush2.msra.mxu0 0.0
    %1309 = vmatprep.subr.mxu0 0.0
    %1310 = vmatpush2.msra.mxu0 0.0
    %1311 = vmatprep.subr.mxu0 0.0
    %1312 = vmatpush2.msra.mxu0 0.0
    %1313 = vmatprep.subr.mxu0 0.0
    %1314 = vmatpush2.msra.mxu0 0.0
    %1315 = vmatprep.subr.mxu0 0.0
    %1316 = vmatpush2.msra.mxu0 0.0
    %1317 = vmatprep.subr.mxu0 0.0
    %1318 = vmatpush2.msra.mxu0 0.0
    %1319 = vmatprep.subr.mxu0 0.0
    %1320 = vmatpush2.msra.mxu0 0.0
    %1321 = vmatprep.subr.mxu0 0.0
    %1322 = vmatpush2.msra.mxu0 0.0
    %1323 = vmatprep.subr.mxu0 0.0
    %1324 = vmatpush2.msra.mxu0 0.0
    %1325 = vmatprep.subr.mxu0 0.0
    %1326 = vmatpush2.msra.mxu0 0.0
    %1327 = vmatprep.subr.mxu0 0.0
    %1328 = vmatpush2.msra.mxu0 0.0
    %1329 = vmatprep.subr.mxu0 0.0
    %1330 = vmatpush2.msra.mxu0 0.0
    %1331 = vmatprep.subr.mxu0 0.0
    %1332 = vmatpush2.msra.mxu0 0.0
    %1333 = vmatprep.subr.mxu0 0.0
    %1334 = vmatpush2.msra.mxu0 0.0
    %1335 = vmatprep.mubr.f32.mxu0 0.0
    %1336 = vmatmul.mubr.f32.gmra.mxu0 %v1269
    %v1337 = vpop.f32.mrf.mxu0
    %v1338 = vadd.f32 0.0, %v1337
    %v1339 = vpop.f32.mrf.mxu0
    %1340 = vdwg.mxu0
    %1342 = vrot.lane.b32.xlu0 %v1338, 32
    %v1343 = vpop.permute.xlu0 %1342
    %v1345 = vadd.f32 %v924, %v1343
    %v1346 = vadd.f32 %v1345, %v1004
    %v1347 = vxor.u32 %v1346, 2147483648
    %v1348 = vmul.f32 %v1347, 1.442695
    %v1349 = vpow.pop %v1348
    %v1350 = vadd.f32 %v1349, 1.0
    %v1351 = vrcp.pop %v1350
    %v1352 = vmul.f32 1.0, %v1351
    %1353 = vrot.lane.b32.xlu0 %v999, 96
    %v1354 = vpop.permute.xlu0 %1353
    %v1356 = vmul.f32 %v1352, %v1354
    %1358 = vrot.lane.b32.xlu0 %v1356, 64
    %v1359 = vpop.permute.xlu0 %1358
    %v1361 = vadd.f32 %v1345, %v1359
    %v1362 = vtanh.pop %v1361
    %v1363 = vsub.f32 1.0, %v1352
    %1365 = vrot.lane.b32.xlu0 %v1362, 96
    %v1366 = vpop.permute.xlu0 %1365
    %v1368 = vmul.f32 %v1363, %v1366
    %1369 = vrot.lane.b32.xlu0 %v923, 64
    %v1370 = vpop.permute.xlu0 %1369
    %v1372 = vmul.f32 %v1352, %v1370
    %v1373 = vadd.f32 %v1368, %v1372
    %1374 = vst.msk [vmem:[#allocation3] sm:$0xff] %vm616, %v1160
    %1375 = vst.msk [vmem:[#allocation4] sm:$0xff] %vm616, %v1263
    %1376 = vst.msk [vmem:[#allocation5] sm:$0xff] %vm616, %v923
    %s1377 = scalar_lea.vmem [#allocation2], 8
    %v1378 = vld [vmem:[%s1377] sm:$0xff]
    %v1379 = vld [vmem:[#allocation23] sm:$0xff]
    %v1380 = vld [vmem:[#allocation23 + $0x8] sm:$0xff]
    %v1381 = vld [vmem:[#allocation23 + $0x10] sm:$0xff]
    %v1382 = vld [vmem:[#allocation23 + $0x18] sm:$0xff]
    %1384 = vrot.lane.b32.xlu0 %v1373, 64
    %v1385 = vpop.permute.xlu0 %1384
    %v1386 = vsel %vm616, %v1385, 0
    %1388 = vmatprep.subr.mxu0 0.0
    %1389 = vmatpush1.msra.mxu0 0.0
    %1390 = vmatprep.subr.mxu0 0.0
    %1391 = vmatpush1.msra.mxu0 0.0
    %1392 = vmatprep.subr.mxu0 0.0
    %1393 = vmatpush1.msra.mxu0 0.0
    %1394 = vmatprep.subr.mxu0 0.0
    %1395 = vmatpush1.msra.mxu0 0.0
    %1396 = vmatprep.subr.mxu0 0.0
    %1397 = vmatpush1.msra.mxu0 0.0
    %1398 = vmatprep.subr.mxu0 0.0
    %1399 = vmatpush1.msra.mxu0 0.0
    %1400 = vmatprep.subr.mxu0 0.0
    %1401 = vmatpush1.msra.mxu0 0.0
    %1402 = vmatprep.subr.mxu0 0.0
    %1403 = vmatpush1.msra.mxu0 0.0
    %1404 = vmatprep.subr.mxu0 0.0
    %1405 = vmatpush1.msra.mxu0 0.0
    %1406 = vmatprep.subr.mxu0 0.0
    %1407 = vmatpush1.msra.mxu0 0.0
    %1408 = vmatprep.subr.mxu0 0.0
    %1409 = vmatpush1.msra.mxu0 0.0
    %1410 = vmatprep.subr.mxu0 0.0
    %1411 = vmatpush1.msra.mxu0 0.0
    %1412 = vmatprep.subr.mxu0 0.0
    %1413 = vmatpush1.msra.mxu0 %v1382
    %1414 = vmatprep.subr.mxu0 0.0
    %1415 = vmatpush1.msra.mxu0 %v1381
    %1416 = vmatprep.subr.mxu0 0.0
    %1417 = vmatpush1.msra.mxu0 %v1380
    %1418 = vmatprep.subr.mxu0 0.0
    %1419 = vmatpush1.msra.mxu0 %v1379
    %1420 = vmatprep.subr.mxu0 0.0
    %1421 = vmatpush2.msra.mxu0 0.0
    %1422 = vmatprep.subr.mxu0 0.0
    %1423 = vmatpush2.msra.mxu0 0.0
    %1424 = vmatprep.subr.mxu0 0.0
    %1425 = vmatpush2.msra.mxu0 0.0
    %1426 = vmatprep.subr.mxu0 0.0
    %1427 = vmatpush2.msra.mxu0 0.0
    %1428 = vmatprep.subr.mxu0 0.0
    %1429 = vmatpush2.msra.mxu0 0.0
    %1430 = vmatprep.subr.mxu0 0.0
    %1431 = vmatpush2.msra.mxu0 0.0
    %1432 = vmatprep.subr.mxu0 0.0
    %1433 = vmatpush2.msra.mxu0 0.0
    %1434 = vmatprep.subr.mxu0 0.0
    %1435 = vmatpush2.msra.mxu0 0.0
    %1436 = vmatprep.subr.mxu0 0.0
    %1437 = vmatpush2.msra.mxu0 0.0
    %1438 = vmatprep.subr.mxu0 0.0
    %1439 = vmatpush2.msra.mxu0 0.0
    %1440 = vmatprep.subr.mxu0 0.0
    %1441 = vmatpush2.msra.mxu0 0.0
    %1442 = vmatprep.subr.mxu0 0.0
    %1443 = vmatpush2.msra.mxu0 0.0
    %1444 = vmatprep.subr.mxu0 0.0
    %1445 = vmatpush2.msra.mxu0 0.0
    %1446 = vmatprep.subr.mxu0 0.0
    %1447 = vmatpush2.msra.mxu0 0.0
    %1448 = vmatprep.subr.mxu0 0.0
    %1449 = vmatpush2.msra.mxu0 0.0
    %1450 = vmatprep.subr.mxu0 0.0
    %1451 = vmatpush2.msra.mxu0 0.0
    %1452 = vmatprep.mubr.f32.mxu0 0.0
    %1453 = vmatmul.mubr.f32.gmra.mxu0 %v1386
    %v1454 = vpop.f32.mrf.mxu0
    %v1455 = vadd.f32 0.0, %v1454
    %v1456 = vpop.f32.mrf.mxu0
    %1457 = vdwg.mxu0
    %1459 = vrot.lane.b32.xlu0 %v1455, 32
    %v1460 = vpop.permute.xlu0 %1459
    %v1462 = vadd.f32 %v1378, %v1460
    %v1463 = vmax.f32 %v1462, 0.0
    %v1464 = vld [vmem:[#allocation24] sm:$0xff]
    %v1465 = vld [vmem:[#allocation24 + $0x8] sm:$0xff]
    %v1466 = vld [vmem:[#allocation24 + $0x10] sm:$0xff]
    %v1467 = vld [vmem:[#allocation24 + $0x18] sm:$0xff]
    %v1469 = vsel %vm616, %v1463, 0
    %1471 = vmatprep.subr.mxu0 0.0
    %1472 = vmatpush1.msra.mxu0 0.0
    %1473 = vmatprep.subr.mxu0 0.0
    %1474 = vmatpush1.msra.mxu0 0.0
    %1475 = vmatprep.subr.mxu0 0.0
    %1476 = vmatpush1.msra.mxu0 0.0
    %1477 = vmatprep.subr.mxu0 0.0
    %1478 = vmatpush1.msra.mxu0 0.0
    %1479 = vmatprep.subr.mxu0 0.0
    %1480 = vmatpush1.msra.mxu0 0.0
    %1481 = vmatprep.subr.mxu0 0.0
    %1482 = vmatpush1.msra.mxu0 0.0
    %1483 = vmatprep.subr.mxu0 0.0
    %1484 = vmatpush1.msra.mxu0 0.0
    %1485 = vmatprep.subr.mxu0 0.0
    %1486 = vmatpush1.msra.mxu0 0.0
    %1487 = vmatprep.subr.mxu0 0.0
    %1488 = vmatpush1.msra.mxu0 0.0
    %1489 = vmatprep.subr.mxu0 0.0
    %1490 = vmatpush1.msra.mxu0 0.0
    %1491 = vmatprep.subr.mxu0 0.0
    %1492 = vmatpush1.msra.mxu0 0.0
    %1493 = vmatprep.subr.mxu0 0.0
    %1494 = vmatpush1.msra.mxu0 0.0
    %1495 = vmatprep.subr.mxu0 0.0
    %1496 = vmatpush1.msra.mxu0 %v1467
    %1497 = vmatprep.subr.mxu0 0.0
    %1498 = vmatpush1.msra.mxu0 %v1466
    %1499 = vmatprep.subr.mxu0 0.0
    %1500 = vmatpush1.msra.mxu0 %v1465
    %1501 = vmatprep.subr.mxu0 0.0
    %1502 = vmatpush1.msra.mxu0 %v1464
    %1503 = vmatprep.subr.mxu0 0.0
    %1504 = vmatpush2.msra.mxu0 0.0
    %1505 = vmatprep.subr.mxu0 0.0
    %1506 = vmatpush2.msra.mxu0 0.0
    %1507 = vmatprep.subr.mxu0 0.0
    %1508 = vmatpush2.msra.mxu0 0.0
    %1509 = vmatprep.subr.mxu0 0.0
    %1510 = vmatpush2.msra.mxu0 0.0
    %1511 = vmatprep.subr.mxu0 0.0
    %1512 = vmatpush2.msra.mxu0 0.0
    %1513 = vmatprep.subr.mxu0 0.0
    %1514 = vmatpush2.msra.mxu0 0.0
    %1515 = vmatprep.subr.mxu0 0.0
    %1516 = vmatpush2.msra.mxu0 0.0
    %1517 = vmatprep.subr.mxu0 0.0
    %1518 = vmatpush2.msra.mxu0 0.0
    %1519 = vmatprep.subr.mxu0 0.0
    %1520 = vmatpush2.msra.mxu0 0.0
    %1521 = vmatprep.subr.mxu0 0.0
    %1522 = vmatpush2.msra.mxu0 0.0
    %1523 = vmatprep.subr.mxu0 0.0
    %1524 = vmatpush2.msra.mxu0 0.0
    %1525 = vmatprep.subr.mxu0 0.0
    %1526 = vmatpush2.msra.mxu0 0.0
    %1527 = vmatprep.subr.mxu0 0.0
    %1528 = vmatpush2.msra.mxu0 0.0
    %1529 = vmatprep.subr.mxu0 0.0
    %1530 = vmatpush2.msra.mxu0 0.0
    %1531 = vmatprep.subr.mxu0 0.0
    %1532 = vmatpush2.msra.mxu0 0.0
    %1533 = vmatprep.subr.mxu0 0.0
    %1534 = vmatpush2.msra.mxu0 0.0
    %1535 = vmatprep.mubr.f32.mxu0 0.0
    %1536 = vmatmul.mubr.f32.gmra.mxu0 %v1469
    %v1537 = vpop.f32.mrf.mxu0
    %v1538 = vadd.f32 %v907, %v1537
    %v1539 = vpop.f32.mrf.mxu0
    %1540 = vdwg.mxu0
    %v1541 = vmax.f32 %v1538, 0.0
    %v1542 = vld [vmem:[#allocation27] sm:$0xff]
    %v1543 = vld [vmem:[#allocation27 + $0x8] sm:$0xff]
    %v1544 = vld [vmem:[#allocation27 + $0x10] sm:$0xff]
    %v1545 = vld [vmem:[#allocation27 + $0x18] sm:$0xff]
    %v1547 = vsel %vm616, %v1541, 0
    %1549 = vmatprep.subr.mxu0 0.0
    %1550 = vmatpush1.msra.mxu0 0.0
    %1551 = vmatprep.subr.mxu0 0.0
    %1552 = vmatpush1.msra.mxu0 0.0
    %1553 = vmatprep.subr.mxu0 0.0
    %1554 = vmatpush1.msra.mxu0 0.0
    %1555 = vmatprep.subr.mxu0 0.0
    %1556 = vmatpush1.msra.mxu0 0.0
    %1557 = vmatprep.subr.mxu0 0.0
    %1558 = vmatpush1.msra.mxu0 0.0
    %1559 = vmatprep.subr.mxu0 0.0
    %1560 = vmatpush1.msra.mxu0 0.0
    %1561 = vmatprep.subr.mxu0 0.0
    %1562 = vmatpush1.msra.mxu0 0.0
    %1563 = vmatprep.subr.mxu0 0.0
    %1564 = vmatpush1.msra.mxu0 0.0
    %1565 = vmatprep.subr.mxu0 0.0
    %1566 = vmatpush1.msra.mxu0 0.0
    %1567 = vmatprep.subr.mxu0 0.0
    %1568 = vmatpush1.msra.mxu0 0.0
    %1569 = vmatprep.subr.mxu0 0.0
    %1570 = vmatpush1.msra.mxu0 0.0
    %1571 = vmatprep.subr.mxu0 0.0
    %1572 = vmatpush1.msra.mxu0 0.0
    %1573 = vmatprep.subr.mxu0 0.0
    %1574 = vmatpush1.msra.mxu0 %v1545
    %1575 = vmatprep.subr.mxu0 0.0
    %1576 = vmatpush1.msra.mxu0 %v1544
    %1577 = vmatprep.subr.mxu0 0.0
    %1578 = vmatpush1.msra.mxu0 %v1543
    %1579 = vmatprep.subr.mxu0 0.0
    %1580 = vmatpush1.msra.mxu0 %v1542
    %1581 = vmatprep.subr.mxu0 0.0
    %1582 = vmatpush2.msra.mxu0 0.0
    %1583 = vmatprep.subr.mxu0 0.0
    %1584 = vmatpush2.msra.mxu0 0.0
    %1585 = vmatprep.subr.mxu0 0.0
    %1586 = vmatpush2.msra.mxu0 0.0
    %1587 = vmatprep.subr.mxu0 0.0
    %1588 = vmatpush2.msra.mxu0 0.0
    %1589 = vmatprep.subr.mxu0 0.0
    %1590 = vmatpush2.msra.mxu0 0.0
    %1591 = vmatprep.subr.mxu0 0.0
    %1592 = vmatpush2.msra.mxu0 0.0
    %1593 = vmatprep.subr.mxu0 0.0
    %1594 = vmatpush2.msra.mxu0 0.0
    %1595 = vmatprep.subr.mxu0 0.0
    %1596 = vmatpush2.msra.mxu0 0.0
    %1597 = vmatprep.subr.mxu0 0.0
    %1598 = vmatpush2.msra.mxu0 0.0
    %1599 = vmatprep.subr.mxu0 0.0
    %1600 = vmatpush2.msra.mxu0 0.0
    %1601 = vmatprep.subr.mxu0 0.0
    %1602 = vmatpush2.msra.mxu0 0.0
    %1603 = vmatprep.subr.mxu0 0.0
    %1604 = vmatpush2.msra.mxu0 0.0
    %1605 = vmatprep.subr.mxu0 0.0
    %1606 = vmatpush2.msra.mxu0 0.0
    %1607 = vmatprep.subr.mxu0 0.0
    %1608 = vmatpush2.msra.mxu0 0.0
    %1609 = vmatprep.subr.mxu0 0.0
    %1610 = vmatpush2.msra.mxu0 0.0
    %1611 = vmatprep.subr.mxu0 0.0
    %1612 = vmatpush2.msra.mxu0 0.0
    %1613 = vmatprep.mubr.f32.mxu0 0.0
    %1614 = vmatmul.mubr.f32.gmra.mxu0 %v1547
    %v1615 = vpop.f32.mrf.mxu0
    %v1616 = vadd.f32 %v914, %v1615
    %v1617 = vpop.f32.mrf.mxu0
    %1618 = vdwg.mxu0
    %v1619 = vmax.f32 %v1616, 0.0
    %vm1620 = vcmp.ne.f32.partialorder %v1616, %v1616
    %v1621 = vadd.f32 %v1616, 0.0
    %v1622 = vand.u32 2147483647, %v1616
    %v1623 = vsub.f32 0.0, %v1622
    %v1624 = vmul.f32 %v1623, 1.442695
    %v1625 = vpow.pop %v1624
    %v1626 = vadd.f32 %v1625, 1.0
    %v1627 = vlog2.pop %v1626
    %v1628 = vmul.f32 %v1627, 0.6931472
    %v1629 = vmul.f32 -0.5, %v1625
    %v1630 = vadd.f32 %v1629, 1.0
    %v1631 = vmul.f32 %v1630, %v1625
    %v1632 = vand.u32 2147483647, %v1625
    %vm1633 = vcmp.lt.f32.partialorder %v1632, 0.0004427343
    %v1634 = vsel %vm1633, %v1631, %v1628
    %v1635 = vadd.f32 %v1619, %v1634
    %v1636 = vsel %vm1620, %v1621, %v1635
    %s1637 = scalar_lea.vmem [#allocation9], 8
    %v1638 = vld [vmem:[%s1637] sm:$0xff]
    %1640 = vrot.lane.b32.xlu0 %v1636, 112
    %v1641 = vpop.permute.xlu0 %1640
    %v1643 = vmul.f32 %v1638, %v1641
    %v1644 = vadd.f32 %v1643, %v1616
    %v1645 = vld [vmem:[#allocation30] sm:$0xff]
    %v1646 = vld [vmem:[#allocation30 + $0x8] sm:$0xff]
    %v1648 = vsel %vm467, %v1644, 0
    %1650 = vmatprep.subr.mxu0 0.0
    %1651 = vmatpush1.msra.mxu0 0.0
    %1652 = vmatprep.subr.mxu0 0.0
    %1653 = vmatpush1.msra.mxu0 0.0
    %1654 = vmatprep.subr.mxu0 0.0
    %1655 = vmatpush1.msra.mxu0 0.0
    %1656 = vmatprep.subr.mxu0 0.0
    %1657 = vmatpush1.msra.mxu0 0.0
    %1658 = vmatprep.subr.mxu0 0.0
    %1659 = vmatpush1.msra.mxu0 0.0
    %1660 = vmatprep.subr.mxu0 0.0
    %1661 = vmatpush1.msra.mxu0 0.0
    %1662 = vmatprep.subr.mxu0 0.0
    %1663 = vmatpush1.msra.mxu0 0.0
    %1664 = vmatprep.subr.mxu0 0.0
    %1665 = vmatpush1.msra.mxu0 0.0
    %1666 = vmatprep.subr.mxu0 0.0
    %1667 = vmatpush1.msra.mxu0 0.0
    %1668 = vmatprep.subr.mxu0 0.0
    %1669 = vmatpush1.msra.mxu0 0.0
    %1670 = vmatprep.subr.mxu0 0.0
    %1671 = vmatpush1.msra.mxu0 0.0
    %1672 = vmatprep.subr.mxu0 0.0
    %1673 = vmatpush1.msra.mxu0 0.0
    %1674 = vmatprep.subr.mxu0 0.0
    %1675 = vmatpush1.msra.mxu0 0.0
    %1676 = vmatprep.subr.mxu0 0.0
    %1677 = vmatpush1.msra.mxu0 0.0
    %1678 = vmatprep.subr.mxu0 0.0
    %1679 = vmatpush1.msra.mxu0 %v1646
    %1680 = vmatprep.subr.mxu0 0.0
    %1681 = vmatpush1.msra.mxu0 %v1645
    %1682 = vmatprep.subr.mxu0 0.0
    %1683 = vmatpush2.msra.mxu0 0.0
    %1684 = vmatprep.subr.mxu0 0.0
    %1685 = vmatpush2.msra.mxu0 0.0
    %1686 = vmatprep.subr.mxu0 0.0
    %1687 = vmatpush2.msra.mxu0 0.0
    %1688 = vmatprep.subr.mxu0 0.0
    %1689 = vmatpush2.msra.mxu0 0.0
    %1690 = vmatprep.subr.mxu0 0.0
    %1691 = vmatpush2.msra.mxu0 0.0
    %1692 = vmatprep.subr.mxu0 0.0
    %1693 = vmatpush2.msra.mxu0 0.0
    %1694 = vmatprep.subr.mxu0 0.0
    %1695 = vmatpush2.msra.mxu0 0.0
    %1696 = vmatprep.subr.mxu0 0.0
    %1697 = vmatpush2.msra.mxu0 0.0
    %1698 = vmatprep.subr.mxu0 0.0
    %1699 = vmatpush2.msra.mxu0 0.0
    %1700 = vmatprep.subr.mxu0 0.0
    %1701 = vmatpush2.msra.mxu0 0.0
    %1702 = vmatprep.subr.mxu0 0.0
    %1703 = vmatpush2.msra.mxu0 0.0
    %1704 = vmatprep.subr.mxu0 0.0
    %1705 = vmatpush2.msra.mxu0 0.0
    %1706 = vmatprep.subr.mxu0 0.0
    %1707 = vmatpush2.msra.mxu0 0.0
    %1708 = vmatprep.subr.mxu0 0.0
    %1709 = vmatpush2.msra.mxu0 0.0
    %1710 = vmatprep.subr.mxu0 0.0
    %1711 = vmatpush2.msra.mxu0 0.0
    %1712 = vmatprep.subr.mxu0 0.0
    %1713 = vmatpush2.msra.mxu0 0.0
    %1714 = vmatprep.mubr.f32.mxu0 0.0
    %1715 = vmatmul.mubr.f32.gmra.mxu0 %v1648
    %v1716 = vpop.f32.mrf.mxu0
    %v1717 = vadd.f32 %v921, %v1716
    %v1718 = vpop.f32.mrf.mxu0
    %1719 = vdwg.mxu0
    %v1720 = vmax.f32 %v1717, 0.0
    %v1721 = vld [vmem:[#allocation33] sm:$0xff]
    %v1722 = vld [vmem:[#allocation33 + $0x8] sm:$0xff]
    %v1723 = vld [vmem:[#allocation33 + $0x10] sm:$0xff]
    %v1724 = vld [vmem:[#allocation33 + $0x18] sm:$0xff]
    %v1726 = vsel %vm616, %v1720, 0
    %1728 = vmatprep.subr.mxu0 0.0
    %1729 = vmatpush1.msra.mxu0 0.0
    %1730 = vmatprep.subr.mxu0 0.0
    %1731 = vmatpush1.msra.mxu0 0.0
    %1732 = vmatprep.subr.mxu0 0.0
    %1733 = vmatpush1.msra.mxu0 0.0
    %1734 = vmatprep.subr.mxu0 0.0
    %1735 = vmatpush1.msra.mxu0 0.0
    %1736 = vmatprep.subr.mxu0 0.0
    %1737 = vmatpush1.msra.mxu0 0.0
    %1738 = vmatprep.subr.mxu0 0.0
    %1739 = vmatpush1.msra.mxu0 0.0
    %1740 = vmatprep.subr.mxu0 0.0
    %1741 = vmatpush1.msra.mxu0 0.0
    %1742 = vmatprep.subr.mxu0 0.0
    %1743 = vmatpush1.msra.mxu0 0.0
    %1744 = vmatprep.subr.mxu0 0.0
    %1745 = vmatpush1.msra.mxu0 0.0
    %1746 = vmatprep.subr.mxu0 0.0
    %1747 = vmatpush1.msra.mxu0 0.0
    %1748 = vmatprep.subr.mxu0 0.0
    %1749 = vmatpush1.msra.mxu0 0.0
    %1750 = vmatprep.subr.mxu0 0.0
    %1751 = vmatpush1.msra.mxu0 0.0
    %1752 = vmatprep.subr.mxu0 0.0
    %1753 = vmatpush1.msra.mxu0 %v1724
    %1754 = vmatprep.subr.mxu0 0.0
    %1755 = vmatpush1.msra.mxu0 %v1723
    %1756 = vmatprep.subr.mxu0 0.0
    %1757 = vmatpush1.msra.mxu0 %v1722
    %1758 = vmatprep.subr.mxu0 0.0
    %1759 = vmatpush1.msra.mxu0 %v1721
    %1760 = vmatprep.subr.mxu0 0.0
    %1761 = vmatpush2.msra.mxu0 0.0
    %1762 = vmatprep.subr.mxu0 0.0
    %1763 = vmatpush2.msra.mxu0 0.0
    %1764 = vmatprep.subr.mxu0 0.0
    %1765 = vmatpush2.msra.mxu0 0.0
    %1766 = vmatprep.subr.mxu0 0.0
    %1767 = vmatpush2.msra.mxu0 0.0
    %1768 = vmatprep.subr.mxu0 0.0
    %1769 = vmatpush2.msra.mxu0 0.0
    %1770 = vmatprep.subr.mxu0 0.0
    %1771 = vmatpush2.msra.mxu0 0.0
    %1772 = vmatprep.subr.mxu0 0.0
    %1773 = vmatpush2.msra.mxu0 0.0
    %1774 = vmatprep.subr.mxu0 0.0
    %1775 = vmatpush2.msra.mxu0 0.0
    %1776 = vmatprep.subr.mxu0 0.0
    %1777 = vmatpush2.msra.mxu0 0.0
    %1778 = vmatprep.subr.mxu0 0.0
    %1779 = vmatpush2.msra.mxu0 0.0
    %1780 = vmatprep.subr.mxu0 0.0
    %1781 = vmatpush2.msra.mxu0 0.0
    %1782 = vmatprep.subr.mxu0 0.0
    %1783 = vmatpush2.msra.mxu0 0.0
    %1784 = vmatprep.subr.mxu0 0.0
    %1785 = vmatpush2.msra.mxu0 0.0
    %1786 = vmatprep.subr.mxu0 0.0
    %1787 = vmatpush2.msra.mxu0 0.0
    %1788 = vmatprep.subr.mxu0 0.0
    %1789 = vmatpush2.msra.mxu0 0.0
    %1790 = vmatprep.subr.mxu0 0.0
    %1791 = vmatpush2.msra.mxu0 0.0
    %1792 = vmatprep.mubr.f32.mxu0 0.0
    %1793 = vmatmul.mubr.f32.gmra.mxu0 %v1726
    %v1794 = vpop.f32.mrf.mxu0
    %v1795 = vadd.f32 0.0, %v1794
    %v1796 = vpop.f32.mrf.mxu0
    %1797 = vdwg.mxu0
    %1799 = vrot.lane.b32.xlu0 %v1795, 32
    %v1800 = vpop.permute.xlu0 %1799
    %v1802 = vadd.f32 %v1378, %v1800
    %v1803 = vadd.f32 %v1802, %v1460
    %v1804 = vxor.u32 %v1803, 2147483648
    %v1805 = vmul.f32 %v1804, 1.442695
    %v1806 = vpow.pop %v1805
    %v1807 = vadd.f32 %v1806, 1.0
    %v1808 = vrcp.pop %v1807
    %v1809 = vmul.f32 1.0, %v1808
    %1810 = vrot.lane.b32.xlu0 %v1455, 96
    %v1811 = vpop.permute.xlu0 %1810
    %v1813 = vmul.f32 %v1809, %v1811
    %1815 = vrot.lane.b32.xlu0 %v1813, 64
    %v1816 = vpop.permute.xlu0 %1815
    %v1818 = vadd.f32 %v1802, %v1816
    %v1819 = vtanh.pop %v1818
    %v1820 = vsub.f32 1.0, %v1809
    %1822 = vrot.lane.b32.xlu0 %v1819, 96
    %v1823 = vpop.permute.xlu0 %1822
    %v1825 = vmul.f32 %v1820, %v1823
    %v1826 = vmul.f32 %v1809, %v1373
    %v1827 = vadd.f32 %v1825, %v1826
    %s1828 = scalar_lea.vmem [#allocation3], 8
    %1829 = vst.msk [vmem:[%s1828] sm:$0xff] %vm616, %v1616
    %s1830 = scalar_lea.vmem [#allocation4], 8
    %1831 = vst.msk [vmem:[%s1830] sm:$0xff] %vm616, %v1720
    %s1833 = scalar_lea.vmem [#allocation5], 8
    %1834 = vst.msk [vmem:[%s1833] sm:$0xff] %vm616, %v1385
    %s1835 = scalar_lea.vmem [#allocation2], 16
    %v1836 = vld [vmem:[%s1835] sm:$0xff]
    %v1837 = vld [vmem:[#allocation23] sm:$0xff]
    %v1838 = vld [vmem:[#allocation23 + $0x8] sm:$0xff]
    %v1839 = vld [vmem:[#allocation23 + $0x10] sm:$0xff]
    %v1840 = vld [vmem:[#allocation23 + $0x18] sm:$0xff]
    %1842 = vrot.lane.b32.xlu0 %v1827, 64
    %v1843 = vpop.permute.xlu0 %1842
    %v1844 = vsel %vm616, %v1843, 0
    %1846 = vmatprep.subr.mxu0 0.0
    %1847 = vmatpush1.msra.mxu0 0.0
    %1848 = vmatprep.subr.mxu0 0.0
    %1849 = vmatpush1.msra.mxu0 0.0
    %1850 = vmatprep.subr.mxu0 0.0
    %1851 = vmatpush1.msra.mxu0 0.0
    %1852 = vmatprep.subr.mxu0 0.0
    %1853 = vmatpush1.msra.mxu0 0.0
    %1854 = vmatprep.subr.mxu0 0.0
    %1855 = vmatpush1.msra.mxu0 0.0
    %1856 = vmatprep.subr.mxu0 0.0
    %1857 = vmatpush1.msra.mxu0 0.0
    %1858 = vmatprep.subr.mxu0 0.0
    %1859 = vmatpush1.msra.mxu0 0.0
    %1860 = vmatprep.subr.mxu0 0.0
    %1861 = vmatpush1.msra.mxu0 0.0
    %1862 = vmatprep.subr.mxu0 0.0
    %1863 = vmatpush1.msra.mxu0 0.0
    %1864 = vmatprep.subr.mxu0 0.0
    %1865 = vmatpush1.msra.mxu0 0.0
    %1866 = vmatprep.subr.mxu0 0.0
    %1867 = vmatpush1.msra.mxu0 0.0
    %1868 = vmatprep.subr.mxu0 0.0
    %1869 = vmatpush1.msra.mxu0 0.0
    %1870 = vmatprep.subr.mxu0 0.0
    %1871 = vmatpush1.msra.mxu0 %v1840
    %1872 = vmatprep.subr.mxu0 0.0
    %1873 = vmatpush1.msra.mxu0 %v1839
    %1874 = vmatprep.subr.mxu0 0.0
    %1875 = vmatpush1.msra.mxu0 %v1838
    %1876 = vmatprep.subr.mxu0 0.0
    %1877 = vmatpush1.msra.mxu0 %v1837
    %1878 = vmatprep.subr.mxu0 0.0
    %1879 = vmatpush2.msra.mxu0 0.0
    %1880 = vmatprep.subr.mxu0 0.0
    %1881 = vmatpush2.msra.mxu0 0.0
    %1882 = vmatprep.subr.mxu0 0.0
    %1883 = vmatpush2.msra.mxu0 0.0
    %1884 = vmatprep.subr.mxu0 0.0
    %1885 = vmatpush2.msra.mxu0 0.0
    %1886 = vmatprep.subr.mxu0 0.0
    %1887 = vmatpush2.msra.mxu0 0.0
    %1888 = vmatprep.subr.mxu0 0.0
    %1889 = vmatpush2.msra.mxu0 0.0
    %1890 = vmatprep.subr.mxu0 0.0
    %1891 = vmatpush2.msra.mxu0 0.0
    %1892 = vmatprep.subr.mxu0 0.0
    %1893 = vmatpush2.msra.mxu0 0.0
    %1894 = vmatprep.subr.mxu0 0.0
    %1895 = vmatpush2.msra.mxu0 0.0
    %1896 = vmatprep.subr.mxu0 0.0
    %1897 = vmatpush2.msra.mxu0 0.0
    %1898 = vmatprep.subr.mxu0 0.0
    %1899 = vmatpush2.msra.mxu0 0.0
    %1900 = vmatprep.subr.mxu0 0.0
    %1901 = vmatpush2.msra.mxu0 0.0
    %1902 = vmatprep.subr.mxu0 0.0
    %1903 = vmatpush2.msra.mxu0 0.0
    %1904 = vmatprep.subr.mxu0 0.0
    %1905 = vmatpush2.msra.mxu0 0.0
    %1906 = vmatprep.subr.mxu0 0.0
    %1907 = vmatpush2.msra.mxu0 0.0
    %1908 = vmatprep.subr.mxu0 0.0
    %1909 = vmatpush2.msra.mxu0 0.0
    %1910 = vmatprep.mubr.f32.mxu0 0.0
    %1911 = vmatmul.mubr.f32.gmra.mxu0 %v1844
    %v1912 = vpop.f32.mrf.mxu0
    %v1913 = vadd.f32 0.0, %v1912
    %v1914 = vpop.f32.mrf.mxu0
    %1915 = vdwg.mxu0
    %1917 = vrot.lane.b32.xlu0 %v1913, 32
    %v1918 = vpop.permute.xlu0 %1917
    %v1920 = vadd.f32 %v1836, %v1918
    %v1921 = vmax.f32 %v1920, 0.0
    %v1922 = vld [vmem:[#allocation24] sm:$0xff]
    %v1923 = vld [vmem:[#allocation24 + $0x8] sm:$0xff]
    %v1924 = vld [vmem:[#allocation24 + $0x10] sm:$0xff]
    %v1925 = vld [vmem:[#allocation24 + $0x18] sm:$0xff]
    %v1927 = vsel %vm616, %v1921, 0
    %1929 = vmatprep.subr.mxu0 0.0
    %1930 = vmatpush1.msra.mxu0 0.0
    %1931 = vmatprep.subr.mxu0 0.0
    %1932 = vmatpush1.msra.mxu0 0.0
    %1933 = vmatprep.subr.mxu0 0.0
    %1934 = vmatpush1.msra.mxu0 0.0
    %1935 = vmatprep.subr.mxu0 0.0
    %1936 = vmatpush1.msra.mxu0 0.0
    %1937 = vmatprep.subr.mxu0 0.0
    %1938 = vmatpush1.msra.mxu0 0.0
    %1939 = vmatprep.subr.mxu0 0.0
    %1940 = vmatpush1.msra.mxu0 0.0
    %1941 = vmatprep.subr.mxu0 0.0
    %1942 = vmatpush1.msra.mxu0 0.0
    %1943 = vmatprep.subr.mxu0 0.0
    %1944 = vmatpush1.msra.mxu0 0.0
    %1945 = vmatprep.subr.mxu0 0.0
    %1946 = vmatpush1.msra.mxu0 0.0
    %1947 = vmatprep.subr.mxu0 0.0
    %1948 = vmatpush1.msra.mxu0 0.0
    %1949 = vmatprep.subr.mxu0 0.0
    %1950 = vmatpush1.msra.mxu0 0.0
    %1951 = vmatprep.subr.mxu0 0.0
    %1952 = vmatpush1.msra.mxu0 0.0
    %1953 = vmatprep.subr.mxu0 0.0
    %1954 = vmatpush1.msra.mxu0 %v1925
    %1955 = vmatprep.subr.mxu0 0.0
    %1956 = vmatpush1.msra.mxu0 %v1924
    %1957 = vmatprep.subr.mxu0 0.0
    %1958 = vmatpush1.msra.mxu0 %v1923
    %1959 = vmatprep.subr.mxu0 0.0
    %1960 = vmatpush1.msra.mxu0 %v1922
    %1961 = vmatprep.subr.mxu0 0.0
    %1962 = vmatpush2.msra.mxu0 0.0
    %1963 = vmatprep.subr.mxu0 0.0
    %1964 = vmatpush2.msra.mxu0 0.0
    %1965 = vmatprep.subr.mxu0 0.0
    %1966 = vmatpush2.msra.mxu0 0.0
    %1967 = vmatprep.subr.mxu0 0.0
    %1968 = vmatpush2.msra.mxu0 0.0
    %1969 = vmatprep.subr.mxu0 0.0
    %1970 = vmatpush2.msra.mxu0 0.0
    %1971 = vmatprep.subr.mxu0 0.0
    %1972 = vmatpush2.msra.mxu0 0.0
    %1973 = vmatprep.subr.mxu0 0.0
    %1974 = vmatpush2.msra.mxu0 0.0
    %1975 = vmatprep.subr.mxu0 0.0
    %1976 = vmatpush2.msra.mxu0 0.0
    %1977 = vmatprep.subr.mxu0 0.0
    %1978 = vmatpush2.msra.mxu0 0.0
    %1979 = vmatprep.subr.mxu0 0.0
    %1980 = vmatpush2.msra.mxu0 0.0
    %1981 = vmatprep.subr.mxu0 0.0
    %1982 = vmatpush2.msra.mxu0 0.0
    %1983 = vmatprep.subr.mxu0 0.0
    %1984 = vmatpush2.msra.mxu0 0.0
    %1985 = vmatprep.subr.mxu0 0.0
    %1986 = vmatpush2.msra.mxu0 0.0
    %1987 = vmatprep.subr.mxu0 0.0
    %1988 = vmatpush2.msra.mxu0 0.0
    %1989 = vmatprep.subr.mxu0 0.0
    %1990 = vmatpush2.msra.mxu0 0.0
    %1991 = vmatprep.subr.mxu0 0.0
    %1992 = vmatpush2.msra.mxu0 0.0
    %1993 = vmatprep.mubr.f32.mxu0 0.0
    %1994 = vmatmul.mubr.f32.gmra.mxu0 %v1927
    %v1995 = vpop.f32.mrf.mxu0
    %v1996 = vadd.f32 %v907, %v1995
    %v1997 = vpop.f32.mrf.mxu0
    %1998 = vdwg.mxu0
    %v1999 = vmax.f32 %v1996, 0.0
    %v2000 = vld [vmem:[#allocation27] sm:$0xff]
    %v2001 = vld [vmem:[#allocation27 + $0x8] sm:$0xff]
    %v2002 = vld [vmem:[#allocation27 + $0x10] sm:$0xff]
    %v2003 = vld [vmem:[#allocation27 + $0x18] sm:$0xff]
    %v2005 = vsel %vm616, %v1999, 0
    %2007 = vmatprep.subr.mxu0 0.0
    %2008 = vmatpush1.msra.mxu0 0.0
    %2009 = vmatprep.subr.mxu0 0.0
    %2010 = vmatpush1.msra.mxu0 0.0
    %2011 = vmatprep.subr.mxu0 0.0
    %2012 = vmatpush1.msra.mxu0 0.0
    %2013 = vmatprep.subr.mxu0 0.0
    %2014 = vmatpush1.msra.mxu0 0.0
    %2015 = vmatprep.subr.mxu0 0.0
    %2016 = vmatpush1.msra.mxu0 0.0
    %2017 = vmatprep.subr.mxu0 0.0
    %2018 = vmatpush1.msra.mxu0 0.0
    %2019 = vmatprep.subr.mxu0 0.0
    %2020 = vmatpush1.msra.mxu0 0.0
    %2021 = vmatprep.subr.mxu0 0.0
    %2022 = vmatpush1.msra.mxu0 0.0
    %2023 = vmatprep.subr.mxu0 0.0
    %2024 = vmatpush1.msra.mxu0 0.0
    %2025 = vmatprep.subr.mxu0 0.0
    %2026 = vmatpush1.msra.mxu0 0.0
    %2027 = vmatprep.subr.mxu0 0.0
    %2028 = vmatpush1.msra.mxu0 0.0
    %2029 = vmatprep.subr.mxu0 0.0
    %2030 = vmatpush1.msra.mxu0 0.0
    %2031 = vmatprep.subr.mxu0 0.0
    %2032 = vmatpush1.msra.mxu0 %v2003
    %2033 = vmatprep.subr.mxu0 0.0
    %2034 = vmatpush1.msra.mxu0 %v2002
    %2035 = vmatprep.subr.mxu0 0.0
    %2036 = vmatpush1.msra.mxu0 %v2001
    %2037 = vmatprep.subr.mxu0 0.0
    %2038 = vmatpush1.msra.mxu0 %v2000
    %2039 = vmatprep.subr.mxu0 0.0
    %2040 = vmatpush2.msra.mxu0 0.0
    %2041 = vmatprep.subr.mxu0 0.0
    %2042 = vmatpush2.msra.mxu0 0.0
    %2043 = vmatprep.subr.mxu0 0.0
    %2044 = vmatpush2.msra.mxu0 0.0
    %2045 = vmatprep.subr.mxu0 0.0
    %2046 = vmatpush2.msra.mxu0 0.0
    %2047 = vmatprep.subr.mxu0 0.0
    %2048 = vmatpush2.msra.mxu0 0.0
    %2049 = vmatprep.subr.mxu0 0.0
    %2050 = vmatpush2.msra.mxu0 0.0
    %2051 = vmatprep.subr.mxu0 0.0
    %2052 = vmatpush2.msra.mxu0 0.0
    %2053 = vmatprep.subr.mxu0 0.0
    %2054 = vmatpush2.msra.mxu0 0.0
    %2055 = vmatprep.subr.mxu0 0.0
    %2056 = vmatpush2.msra.mxu0 0.0
    %2057 = vmatprep.subr.mxu0 0.0
    %2058 = vmatpush2.msra.mxu0 0.0
    %2059 = vmatprep.subr.mxu0 0.0
    %2060 = vmatpush2.msra.mxu0 0.0
    %2061 = vmatprep.subr.mxu0 0.0
    %2062 = vmatpush2.msra.mxu0 0.0
    %2063 = vmatprep.subr.mxu0 0.0
    %2064 = vmatpush2.msra.mxu0 0.0
    %2065 = vmatprep.subr.mxu0 0.0
    %2066 = vmatpush2.msra.mxu0 0.0
    %2067 = vmatprep.subr.mxu0 0.0
    %2068 = vmatpush2.msra.mxu0 0.0
    %2069 = vmatprep.subr.mxu0 0.0
    %2070 = vmatpush2.msra.mxu0 0.0
    %2071 = vmatprep.mubr.f32.mxu0 0.0
    %2072 = vmatmul.mubr.f32.gmra.mxu0 %v2005
    %v2073 = vpop.f32.mrf.mxu0
    %v2074 = vadd.f32 %v914, %v2073
    %v2075 = vpop.f32.mrf.mxu0
    %2076 = vdwg.mxu0
    %v2077 = vmax.f32 %v2074, 0.0
    %vm2078 = vcmp.ne.f32.partialorder %v2074, %v2074
    %v2079 = vadd.f32 %v2074, 0.0
    %v2080 = vand.u32 2147483647, %v2074
    %v2081 = vsub.f32 0.0, %v2080
    %v2082 = vmul.f32 %v2081, 1.442695
    %v2083 = vpow.pop %v2082
    %v2084 = vadd.f32 %v2083, 1.0
    %v2085 = vlog2.pop %v2084
    %v2086 = vmul.f32 %v2085, 0.6931472
    %v2087 = vmul.f32 -0.5, %v2083
    %v2088 = vadd.f32 %v2087, 1.0
    %v2089 = vmul.f32 %v2088, %v2083
    %v2090 = vand.u32 2147483647, %v2083
    %vm2091 = vcmp.lt.f32.partialorder %v2090, 0.0004427343
    %v2092 = vsel %vm2091, %v2089, %v2086
    %v2093 = vadd.f32 %v2077, %v2092
    %v2094 = vsel %vm2078, %v2079, %v2093
    %s2095 = scalar_lea.vmem [#allocation9], 16
    %v2096 = vld [vmem:[%s2095] sm:$0xff]
    %2098 = vrot.lane.b32.xlu0 %v2094, 112
    %v2099 = vpop.permute.xlu0 %2098
    %v2101 = vmul.f32 %v2096, %v2099
    %v2102 = vadd.f32 %v2101, %v2074
    %v2103 = vld [vmem:[#allocation30] sm:$0xff]
    %v2104 = vld [vmem:[#allocation30 + $0x8] sm:$0xff]
    %v2106 = vsel %vm467, %v2102, 0
    %2108 = vmatprep.subr.mxu0 0.0
    %2109 = vmatpush1.msra.mxu0 0.0
    %2110 = vmatprep.subr.mxu0 0.0
    %2111 = vmatpush1.msra.mxu0 0.0
    %2112 = vmatprep.subr.mxu0 0.0
    %2113 = vmatpush1.msra.mxu0 0.0
    %2114 = vmatprep.subr.mxu0 0.0
    %2115 = vmatpush1.msra.mxu0 0.0
    %2116 = vmatprep.subr.mxu0 0.0
    %2117 = vmatpush1.msra.mxu0 0.0
    %2118 = vmatprep.subr.mxu0 0.0
    %2119 = vmatpush1.msra.mxu0 0.0
    %2120 = vmatprep.subr.mxu0 0.0
    %2121 = vmatpush1.msra.mxu0 0.0
    %2122 = vmatprep.subr.mxu0 0.0
    %2123 = vmatpush1.msra.mxu0 0.0
    %2124 = vmatprep.subr.mxu0 0.0
    %2125 = vmatpush1.msra.mxu0 0.0
    %2126 = vmatprep.subr.mxu0 0.0
    %2127 = vmatpush1.msra.mxu0 0.0
    %2128 = vmatprep.subr.mxu0 0.0
    %2129 = vmatpush1.msra.mxu0 0.0
    %2130 = vmatprep.subr.mxu0 0.0
    %2131 = vmatpush1.msra.mxu0 0.0
    %2132 = vmatprep.subr.mxu0 0.0
    %2133 = vmatpush1.msra.mxu0 0.0
    %2134 = vmatprep.subr.mxu0 0.0
    %2135 = vmatpush1.msra.mxu0 0.0
    %2136 = vmatprep.subr.mxu0 0.0
    %2137 = vmatpush1.msra.mxu0 %v2104
    %2138 = vmatprep.subr.mxu0 0.0
    %2139 = vmatpush1.msra.mxu0 %v2103
    %2140 = vmatprep.subr.mxu0 0.0
    %2141 = vmatpush2.msra.mxu0 0.0
    %2142 = vmatprep.subr.mxu0 0.0
    %2143 = vmatpush2.msra.mxu0 0.0
    %2144 = vmatprep.subr.mxu0 0.0
    %2145 = vmatpush2.msra.mxu0 0.0
    %2146 = vmatprep.subr.mxu0 0.0
    %2147 = vmatpush2.msra.mxu0 0.0
    %2148 = vmatprep.subr.mxu0 0.0
    %2149 = vmatpush2.msra.mxu0 0.0
    %2150 = vmatprep.subr.mxu0 0.0
    %2151 = vmatpush2.msra.mxu0 0.0
    %2152 = vmatprep.subr.mxu0 0.0
    %2153 = vmatpush2.msra.mxu0 0.0
    %2154 = vmatprep.subr.mxu0 0.0
    %2155 = vmatpush2.msra.mxu0 0.0
    %2156 = vmatprep.subr.mxu0 0.0
    %2157 = vmatpush2.msra.mxu0 0.0
    %2158 = vmatprep.subr.mxu0 0.0
    %2159 = vmatpush2.msra.mxu0 0.0
    %2160 = vmatprep.subr.mxu0 0.0
    %2161 = vmatpush2.msra.mxu0 0.0
    %2162 = vmatprep.subr.mxu0 0.0
    %2163 = vmatpush2.msra.mxu0 0.0
    %2164 = vmatprep.subr.mxu0 0.0
    %2165 = vmatpush2.msra.mxu0 0.0
    %2166 = vmatprep.subr.mxu0 0.0
    %2167 = vmatpush2.msra.mxu0 0.0
    %2168 = vmatprep.subr.mxu0 0.0
    %2169 = vmatpush2.msra.mxu0 0.0
    %2170 = vmatprep.subr.mxu0 0.0
    %2171 = vmatpush2.msra.mxu0 0.0
    %2172 = vmatprep.mubr.f32.mxu0 0.0
    %2173 = vmatmul.mubr.f32.gmra.mxu0 %v2106
    %v2174 = vpop.f32.mrf.mxu0
    %v2175 = vadd.f32 %v921, %v2174
    %v2176 = vpop.f32.mrf.mxu0
    %2177 = vdwg.mxu0
    %v2178 = vmax.f32 %v2175, 0.0
    %v2179 = vld [vmem:[#allocation33] sm:$0xff]
    %v2180 = vld [vmem:[#allocation33 + $0x8] sm:$0xff]
    %v2181 = vld [vmem:[#allocation33 + $0x10] sm:$0xff]
    %v2182 = vld [vmem:[#allocation33 + $0x18] sm:$0xff]
    %v2184 = vsel %vm616, %v2178, 0
    %2186 = vmatprep.subr.mxu0 0.0
    %2187 = vmatpush1.msra.mxu0 0.0
    %2188 = vmatprep.subr.mxu0 0.0
    %2189 = vmatpush1.msra.mxu0 0.0
    %2190 = vmatprep.subr.mxu0 0.0
    %2191 = vmatpush1.msra.mxu0 0.0
    %2192 = vmatprep.subr.mxu0 0.0
    %2193 = vmatpush1.msra.mxu0 0.0
    %2194 = vmatprep.subr.mxu0 0.0
    %2195 = vmatpush1.msra.mxu0 0.0
    %2196 = vmatprep.subr.mxu0 0.0
    %2197 = vmatpush1.msra.mxu0 0.0
    %2198 = vmatprep.subr.mxu0 0.0
    %2199 = vmatpush1.msra.mxu0 0.0
    %2200 = vmatprep.subr.mxu0 0.0
    %2201 = vmatpush1.msra.mxu0 0.0
    %2202 = vmatprep.subr.mxu0 0.0
    %2203 = vmatpush1.msra.mxu0 0.0
    %2204 = vmatprep.subr.mxu0 0.0
    %2205 = vmatpush1.msra.mxu0 0.0
    %2206 = vmatprep.subr.mxu0 0.0
    %2207 = vmatpush1.msra.mxu0 0.0
    %2208 = vmatprep.subr.mxu0 0.0
    %2209 = vmatpush1.msra.mxu0 0.0
    %2210 = vmatprep.subr.mxu0 0.0
    %2211 = vmatpush1.msra.mxu0 %v2182
    %2212 = vmatprep.subr.mxu0 0.0
    %2213 = vmatpush1.msra.mxu0 %v2181
    %2214 = vmatprep.subr.mxu0 0.0
    %2215 = vmatpush1.msra.mxu0 %v2180
    %2216 = vmatprep.subr.mxu0 0.0
    %2217 = vmatpush1.msra.mxu0 %v2179
    %2218 = vmatprep.subr.mxu0 0.0
    %2219 = vmatpush2.msra.mxu0 0.0
    %2220 = vmatprep.subr.mxu0 0.0
    %2221 = vmatpush2.msra.mxu0 0.0
    %2222 = vmatprep.subr.mxu0 0.0
    %2223 = vmatpush2.msra.mxu0 0.0
    %2224 = vmatprep.subr.mxu0 0.0
    %2225 = vmatpush2.msra.mxu0 0.0
    %2226 = vmatprep.subr.mxu0 0.0
    %2227 = vmatpush2.msra.mxu0 0.0
    %2228 = vmatprep.subr.mxu0 0.0
    %2229 = vmatpush2.msra.mxu0 0.0
    %2230 = vmatprep.subr.mxu0 0.0
    %2231 = vmatpush2.msra.mxu0 0.0
    %2232 = vmatprep.subr.mxu0 0.0
    %2233 = vmatpush2.msra.mxu0 0.0
    %2234 = vmatprep.subr.mxu0 0.0
    %2235 = vmatpush2.msra.mxu0 0.0
    %2236 = vmatprep.subr.mxu0 0.0
    %2237 = vmatpush2.msra.mxu0 0.0
    %2238 = vmatprep.subr.mxu0 0.0
    %2239 = vmatpush2.msra.mxu0 0.0
    %2240 = vmatprep.subr.mxu0 0.0
    %2241 = vmatpush2.msra.mxu0 0.0
    %2242 = vmatprep.subr.mxu0 0.0
    %2243 = vmatpush2.msra.mxu0 0.0
    %2244 = vmatprep.subr.mxu0 0.0
    %2245 = vmatpush2.msra.mxu0 0.0
    %2246 = vmatprep.subr.mxu0 0.0
    %2247 = vmatpush2.msra.mxu0 0.0
    %2248 = vmatprep.subr.mxu0 0.0
    %2249 = vmatpush2.msra.mxu0 0.0
    %2250 = vmatprep.mubr.f32.mxu0 0.0
    %2251 = vmatmul.mubr.f32.gmra.mxu0 %v2184
    %v2252 = vpop.f32.mrf.mxu0
    %v2253 = vadd.f32 0.0, %v2252
    %v2254 = vpop.f32.mrf.mxu0
    %2255 = vdwg.mxu0
    %2257 = vrot.lane.b32.xlu0 %v2253, 32
    %v2258 = vpop.permute.xlu0 %2257
    %v2260 = vadd.f32 %v1836, %v2258
    %v2261 = vadd.f32 %v2260, %v1918
    %v2262 = vxor.u32 %v2261, 2147483648
    %v2263 = vmul.f32 %v2262, 1.442695
    %v2264 = vpow.pop %v2263
    %v2265 = vadd.f32 %v2264, 1.0
    %v2266 = vrcp.pop %v2265
    %v2267 = vmul.f32 1.0, %v2266
    %2268 = vrot.lane.b32.xlu0 %v1913, 96
    %v2269 = vpop.permute.xlu0 %2268
    %v2271 = vmul.f32 %v2267, %v2269
    %2273 = vrot.lane.b32.xlu0 %v2271, 64
    %v2274 = vpop.permute.xlu0 %2273
    %v2276 = vadd.f32 %v2260, %v2274
    %v2277 = vtanh.pop %v2276
    %v2278 = vsub.f32 1.0, %v2267
    %2280 = vrot.lane.b32.xlu0 %v2277, 96
    %v2281 = vpop.permute.xlu0 %2280
    %v2283 = vmul.f32 %v2278, %v2281
    %v2284 = vmul.f32 %v2267, %v1827
    %v2285 = vadd.f32 %v2283, %v2284
    %s2286 = scalar_lea.vmem [#allocation3], 16
    %2287 = vst.msk [vmem:[%s2286] sm:$0xff] %vm616, %v2074
    %s2288 = scalar_lea.vmem [#allocation4], 16
    %2289 = vst.msk [vmem:[%s2288] sm:$0xff] %vm616, %v2178
    %s2291 = scalar_lea.vmem [#allocation5], 16
    %2292 = vst.msk [vmem:[%s2291] sm:$0xff] %vm616, %v1843
    %s2293 = scalar_lea.vmem [#allocation2], 24
    %v2294 = vld [vmem:[%s2293] sm:$0xff]
    %v2295 = vld [vmem:[#allocation23] sm:$0xff]
    %v2296 = vld [vmem:[#allocation23 + $0x8] sm:$0xff]
    %v2297 = vld [vmem:[#allocation23 + $0x10] sm:$0xff]
    %v2298 = vld [vmem:[#allocation23 + $0x18] sm:$0xff]
    %2300 = vrot.lane.b32.xlu0 %v2285, 64
    %v2301 = vpop.permute.xlu0 %2300
    %v2302 = vsel %vm616, %v2301, 0
    %2304 = vmatprep.subr.mxu0 0.0
    %2305 = vmatpush1.msra.mxu0 0.0
    %2306 = vmatprep.subr.mxu0 0.0
    %2307 = vmatpush1.msra.mxu0 0.0
    %2308 = vmatprep.subr.mxu0 0.0
    %2309 = vmatpush1.msra.mxu0 0.0
    %2310 = vmatprep.subr.mxu0 0.0
    %2311 = vmatpush1.msra.mxu0 0.0
    %2312 = vmatprep.subr.mxu0 0.0
    %2313 = vmatpush1.msra.mxu0 0.0
    %2314 = vmatprep.subr.mxu0 0.0
    %2315 = vmatpush1.msra.mxu0 0.0
    %2316 = vmatprep.subr.mxu0 0.0
    %2317 = vmatpush1.msra.mxu0 0.0
    %2318 = vmatprep.subr.mxu0 0.0
    %2319 = vmatpush1.msra.mxu0 0.0
    %2320 = vmatprep.subr.mxu0 0.0
    %2321 = vmatpush1.msra.mxu0 0.0
    %2322 = vmatprep.subr.mxu0 0.0
    %2323 = vmatpush1.msra.mxu0 0.0
    %2324 = vmatprep.subr.mxu0 0.0
    %2325 = vmatpush1.msra.mxu0 0.0
    %2326 = vmatprep.subr.mxu0 0.0
    %2327 = vmatpush1.msra.mxu0 0.0
    %2328 = vmatprep.subr.mxu0 0.0
    %2329 = vmatpush1.msra.mxu0 %v2298
    %2330 = vmatprep.subr.mxu0 0.0
    %2331 = vmatpush1.msra.mxu0 %v2297
    %2332 = vmatprep.subr.mxu0 0.0
    %2333 = vmatpush1.msra.mxu0 %v2296
    %2334 = vmatprep.subr.mxu0 0.0
    %2335 = vmatpush1.msra.mxu0 %v2295
    %2336 = vmatprep.subr.mxu0 0.0
    %2337 = vmatpush2.msra.mxu0 0.0
    %2338 = vmatprep.subr.mxu0 0.0
    %2339 = vmatpush2.msra.mxu0 0.0
    %2340 = vmatprep.subr.mxu0 0.0
    %2341 = vmatpush2.msra.mxu0 0.0
    %2342 = vmatprep.subr.mxu0 0.0
    %2343 = vmatpush2.msra.mxu0 0.0
    %2344 = vmatprep.subr.mxu0 0.0
    %2345 = vmatpush2.msra.mxu0 0.0
    %2346 = vmatprep.subr.mxu0 0.0
    %2347 = vmatpush2.msra.mxu0 0.0
    %2348 = vmatprep.subr.mxu0 0.0
    %2349 = vmatpush2.msra.mxu0 0.0
    %2350 = vmatprep.subr.mxu0 0.0
    %2351 = vmatpush2.msra.mxu0 0.0
    %2352 = vmatprep.subr.mxu0 0.0
    %2353 = vmatpush2.msra.mxu0 0.0
    %2354 = vmatprep.subr.mxu0 0.0
    %2355 = vmatpush2.msra.mxu0 0.0
    %2356 = vmatprep.subr.mxu0 0.0
    %2357 = vmatpush2.msra.mxu0 0.0
    %2358 = vmatprep.subr.mxu0 0.0
    %2359 = vmatpush2.msra.mxu0 0.0
    %2360 = vmatprep.subr.mxu0 0.0
    %2361 = vmatpush2.msra.mxu0 0.0
    %2362 = vmatprep.subr.mxu0 0.0
    %2363 = vmatpush2.msra.mxu0 0.0
    %2364 = vmatprep.subr.mxu0 0.0
    %2365 = vmatpush2.msra.mxu0 0.0
    %2366 = vmatprep.subr.mxu0 0.0
    %2367 = vmatpush2.msra.mxu0 0.0
    %2368 = vmatprep.mubr.f32.mxu0 0.0
    %2369 = vmatmul.mubr.f32.gmra.mxu0 %v2302
    %v2370 = vpop.f32.mrf.mxu0
    %v2371 = vadd.f32 0.0, %v2370
    %v2372 = vpop.f32.mrf.mxu0
    %2373 = vdwg.mxu0
    %2375 = vrot.lane.b32.xlu0 %v2371, 32
    %v2376 = vpop.permute.xlu0 %2375
    %v2378 = vadd.f32 %v2294, %v2376
    %v2379 = vmax.f32 %v2378, 0.0
    %v2380 = vld [vmem:[#allocation24] sm:$0xff]
    %v2381 = vld [vmem:[#allocation24 + $0x8] sm:$0xff]
    %v2382 = vld [vmem:[#allocation24 + $0x10] sm:$0xff]
    %v2383 = vld [vmem:[#allocation24 + $0x18] sm:$0xff]
    %v2385 = vsel %vm616, %v2379, 0
    %2387 = vmatprep.subr.mxu0 0.0
    %2388 = vmatpush1.msra.mxu0 0.0
    %2389 = vmatprep.subr.mxu0 0.0
    %2390 = vmatpush1.msra.mxu0 0.0
    %2391 = vmatprep.subr.mxu0 0.0
    %2392 = vmatpush1.msra.mxu0 0.0
    %2393 = vmatprep.subr.mxu0 0.0
    %2394 = vmatpush1.msra.mxu0 0.0
    %2395 = vmatprep.subr.mxu0 0.0
    %2396 = vmatpush1.msra.mxu0 0.0
    %2397 = vmatprep.subr.mxu0 0.0
    %2398 = vmatpush1.msra.mxu0 0.0
    %2399 = vmatprep.subr.mxu0 0.0
    %2400 = vmatpush1.msra.mxu0 0.0
    %2401 = vmatprep.subr.mxu0 0.0
    %2402 = vmatpush1.msra.mxu0 0.0
    %2403 = vmatprep.subr.mxu0 0.0
    %2404 = vmatpush1.msra.mxu0 0.0
    %2405 = vmatprep.subr.mxu0 0.0
    %2406 = vmatpush1.msra.mxu0 0.0
    %2407 = vmatprep.subr.mxu0 0.0
    %2408 = vmatpush1.msra.mxu0 0.0
    %2409 = vmatprep.subr.mxu0 0.0
    %2410 = vmatpush1.msra.mxu0 0.0
    %2411 = vmatprep.subr.mxu0 0.0
    %2412 = vmatpush1.msra.mxu0 %v2383
    %2413 = vmatprep.subr.mxu0 0.0
    %2414 = vmatpush1.msra.mxu0 %v2382
    %2415 = vmatprep.subr.mxu0 0.0
    %2416 = vmatpush1.msra.mxu0 %v2381
    %2417 = vmatprep.subr.mxu0 0.0
    %2418 = vmatpush1.msra.mxu0 %v2380
    %2419 = vmatprep.subr.mxu0 0.0
    %2420 = vmatpush2.msra.mxu0 0.0
    %2421 = vmatprep.subr.mxu0 0.0
    %2422 = vmatpush2.msra.mxu0 0.0
    %2423 = vmatprep.subr.mxu0 0.0
    %2424 = vmatpush2.msra.mxu0 0.0
    %2425 = vmatprep.subr.mxu0 0.0
    %2426 = vmatpush2.msra.mxu0 0.0
    %2427 = vmatprep.subr.mxu0 0.0
    %2428 = vmatpush2.msra.mxu0 0.0
    %2429 = vmatprep.subr.mxu0 0.0
    %2430 = vmatpush2.msra.mxu0 0.0
    %2431 = vmatprep.subr.mxu0 0.0
    %2432 = vmatpush2.msra.mxu0 0.0
    %2433 = vmatprep.subr.mxu0 0.0
    %2434 = vmatpush2.msra.mxu0 0.0
    %2435 = vmatprep.subr.mxu0 0.0
    %2436 = vmatpush2.msra.mxu0 0.0
    %2437 = vmatprep.subr.mxu0 0.0
    %2438 = vmatpush2.msra.mxu0 0.0
    %2439 = vmatprep.subr.mxu0 0.0
    %2440 = vmatpush2.msra.mxu0 0.0
    %2441 = vmatprep.subr.mxu0 0.0
    %2442 = vmatpush2.msra.mxu0 0.0
    %2443 = vmatprep.subr.mxu0 0.0
    %2444 = vmatpush2.msra.mxu0 0.0
    %2445 = vmatprep.subr.mxu0 0.0
    %2446 = vmatpush2.msra.mxu0 0.0
    %2447 = vmatprep.subr.mxu0 0.0
    %2448 = vmatpush2.msra.mxu0 0.0
    %2449 = vmatprep.subr.mxu0 0.0
    %2450 = vmatpush2.msra.mxu0 0.0
    %2451 = vmatprep.mubr.f32.mxu0 0.0
    %2452 = vmatmul.mubr.f32.gmra.mxu0 %v2385
    %v2453 = vpop.f32.mrf.mxu0
    %v2454 = vadd.f32 %v907, %v2453
    %v2455 = vpop.f32.mrf.mxu0
    %2456 = vdwg.mxu0
    %v2457 = vmax.f32 %v2454, 0.0
    %v2458 = vld [vmem:[#allocation27] sm:$0xff]
    %v2459 = vld [vmem:[#allocation27 + $0x8] sm:$0xff]
    %v2460 = vld [vmem:[#allocation27 + $0x10] sm:$0xff]
    %v2461 = vld [vmem:[#allocation27 + $0x18] sm:$0xff]
    %v2463 = vsel %vm616, %v2457, 0
    %2465 = vmatprep.subr.mxu0 0.0
    %2466 = vmatpush1.msra.mxu0 0.0
    %2467 = vmatprep.subr.mxu0 0.0
    %2468 = vmatpush1.msra.mxu0 0.0
    %2469 = vmatprep.subr.mxu0 0.0
    %2470 = vmatpush1.msra.mxu0 0.0
    %2471 = vmatprep.subr.mxu0 0.0
    %2472 = vmatpush1.msra.mxu0 0.0
    %2473 = vmatprep.subr.mxu0 0.0
    %2474 = vmatpush1.msra.mxu0 0.0
    %2475 = vmatprep.subr.mxu0 0.0
    %2476 = vmatpush1.msra.mxu0 0.0
    %2477 = vmatprep.subr.mxu0 0.0
    %2478 = vmatpush1.msra.mxu0 0.0
    %2479 = vmatprep.subr.mxu0 0.0
    %2480 = vmatpush1.msra.mxu0 0.0
    %2481 = vmatprep.subr.mxu0 0.0
    %2482 = vmatpush1.msra.mxu0 0.0
    %2483 = vmatprep.subr.mxu0 0.0
    %2484 = vmatpush1.msra.mxu0 0.0
    %2485 = vmatprep.subr.mxu0 0.0
    %2486 = vmatpush1.msra.mxu0 0.0
    %2487 = vmatprep.subr.mxu0 0.0
    %2488 = vmatpush1.msra.mxu0 0.0
    %2489 = vmatprep.subr.mxu0 0.0
    %2490 = vmatpush1.msra.mxu0 %v2461
    %2491 = vmatprep.subr.mxu0 0.0
    %2492 = vmatpush1.msra.mxu0 %v2460
    %2493 = vmatprep.subr.mxu0 0.0
    %2494 = vmatpush1.msra.mxu0 %v2459
    %2495 = vmatprep.subr.mxu0 0.0
    %2496 = vmatpush1.msra.mxu0 %v2458
    %2497 = vmatprep.subr.mxu0 0.0
    %2498 = vmatpush2.msra.mxu0 0.0
    %2499 = vmatprep.subr.mxu0 0.0
    %2500 = vmatpush2.msra.mxu0 0.0
    %2501 = vmatprep.subr.mxu0 0.0
    %2502 = vmatpush2.msra.mxu0 0.0
    %2503 = vmatprep.subr.mxu0 0.0
    %2504 = vmatpush2.msra.mxu0 0.0
    %2505 = vmatprep.subr.mxu0 0.0
    %2506 = vmatpush2.msra.mxu0 0.0
    %2507 = vmatprep.subr.mxu0 0.0
    %2508 = vmatpush2.msra.mxu0 0.0
    %2509 = vmatprep.subr.mxu0 0.0
    %2510 = vmatpush2.msra.mxu0 0.0
    %2511 = vmatprep.subr.mxu0 0.0
    %2512 = vmatpush2.msra.mxu0 0.0
    %2513 = vmatprep.subr.mxu0 0.0
    %2514 = vmatpush2.msra.mxu0 0.0
    %2515 = vmatprep.subr.mxu0 0.0
    %2516 = vmatpush2.msra.mxu0 0.0
    %2517 = vmatprep.subr.mxu0 0.0
    %2518 = vmatpush2.msra.mxu0 0.0
    %2519 = vmatprep.subr.mxu0 0.0
    %2520 = vmatpush2.msra.mxu0 0.0
    %2521 = vmatprep.subr.mxu0 0.0
    %2522 = vmatpush2.msra.mxu0 0.0
    %2523 = vmatprep.subr.mxu0 0.0
    %2524 = vmatpush2.msra.mxu0 0.0
    %2525 = vmatprep.subr.mxu0 0.0
    %2526 = vmatpush2.msra.mxu0 0.0
    %2527 = vmatprep.subr.mxu0 0.0
    %2528 = vmatpush2.msra.mxu0 0.0
    %2529 = vmatprep.mubr.f32.mxu0 0.0
    %2530 = vmatmul.mubr.f32.gmra.mxu0 %v2463
    %v2531 = vpop.f32.mrf.mxu0
    %v2532 = vadd.f32 %v914, %v2531
    %v2533 = vpop.f32.mrf.mxu0
    %2534 = vdwg.mxu0
    %v2535 = vmax.f32 %v2532, 0.0
    %vm2536 = vcmp.ne.f32.partialorder %v2532, %v2532
    %v2537 = vadd.f32 %v2532, 0.0
    %v2538 = vand.u32 2147483647, %v2532
    %v2539 = vsub.f32 0.0, %v2538
    %v2540 = vmul.f32 %v2539, 1.442695
    %v2541 = vpow.pop %v2540
    %v2542 = vadd.f32 %v2541, 1.0
    %v2543 = vlog2.pop %v2542
    %v2544 = vmul.f32 %v2543, 0.6931472
    %v2545 = vmul.f32 -0.5, %v2541
    %v2546 = vadd.f32 %v2545, 1.0
    %v2547 = vmul.f32 %v2546, %v2541
    %v2548 = vand.u32 2147483647, %v2541
    %vm2549 = vcmp.lt.f32.partialorder %v2548, 0.0004427343
    %v2550 = vsel %vm2549, %v2547, %v2544
    %v2551 = vadd.f32 %v2535, %v2550
    %v2552 = vsel %vm2536, %v2537, %v2551
    %s2553 = scalar_lea.vmem [#allocation9], 24
    %v2554 = vld [vmem:[%s2553] sm:$0xff]
    %2556 = vrot.lane.b32.xlu0 %v2552, 112
    %v2557 = vpop.permute.xlu0 %2556
    %v2559 = vmul.f32 %v2554, %v2557
    %v2560 = vadd.f32 %v2559, %v2532
    %v2561 = vld [vmem:[#allocation30] sm:$0xff]
    %v2562 = vld [vmem:[#allocation30 + $0x8] sm:$0xff]
    %v2564 = vsel %vm467, %v2560, 0
    %2566 = vmatprep.subr.mxu0 0.0
    %2567 = vmatpush1.msra.mxu0 0.0
    %2568 = vmatprep.subr.mxu0 0.0
    %2569 = vmatpush1.msra.mxu0 0.0
    %2570 = vmatprep.subr.mxu0 0.0
    %2571 = vmatpush1.msra.mxu0 0.0
    %2572 = vmatprep.subr.mxu0 0.0
    %2573 = vmatpush1.msra.mxu0 0.0
    %2574 = vmatprep.subr.mxu0 0.0
    %2575 = vmatpush1.msra.mxu0 0.0
    %2576 = vmatprep.subr.mxu0 0.0
    %2577 = vmatpush1.msra.mxu0 0.0
    %2578 = vmatprep.subr.mxu0 0.0
    %2579 = vmatpush1.msra.mxu0 0.0
    %2580 = vmatprep.subr.mxu0 0.0
    %2581 = vmatpush1.msra.mxu0 0.0
    %2582 = vmatprep.subr.mxu0 0.0
    %2583 = vmatpush1.msra.mxu0 0.0
    %2584 = vmatprep.subr.mxu0 0.0
    %2585 = vmatpush1.msra.mxu0 0.0
    %2586 = vmatprep.subr.mxu0 0.0
    %2587 = vmatpush1.msra.mxu0 0.0
    %2588 = vmatprep.subr.mxu0 0.0
    %2589 = vmatpush1.msra.mxu0 0.0
    %2590 = vmatprep.subr.mxu0 0.0
    %2591 = vmatpush1.msra.mxu0 0.0
    %2592 = vmatprep.subr.mxu0 0.0
    %2593 = vmatpush1.msra.mxu0 0.0
    %2594 = vmatprep.subr.mxu0 0.0
    %2595 = vmatpush1.msra.mxu0 %v2562
    %2596 = vmatprep.subr.mxu0 0.0
    %2597 = vmatpush1.msra.mxu0 %v2561
    %2598 = vmatprep.subr.mxu0 0.0
    %2599 = vmatpush2.msra.mxu0 0.0
    %2600 = vmatprep.subr.mxu0 0.0
    %2601 = vmatpush2.msra.mxu0 0.0
    %2602 = vmatprep.subr.mxu0 0.0
    %2603 = vmatpush2.msra.mxu0 0.0
    %2604 = vmatprep.subr.mxu0 0.0
    %2605 = vmatpush2.msra.mxu0 0.0
    %2606 = vmatprep.subr.mxu0 0.0
    %2607 = vmatpush2.msra.mxu0 0.0
    %2608 = vmatprep.subr.mxu0 0.0
    %2609 = vmatpush2.msra.mxu0 0.0
    %2610 = vmatprep.subr.mxu0 0.0
    %2611 = vmatpush2.msra.mxu0 0.0
    %2612 = vmatprep.subr.mxu0 0.0
    %2613 = vmatpush2.msra.mxu0 0.0
    %2614 = vmatprep.subr.mxu0 0.0
    %2615 = vmatpush2.msra.mxu0 0.0
    %2616 = vmatprep.subr.mxu0 0.0
    %2617 = vmatpush2.msra.mxu0 0.0
    %2618 = vmatprep.subr.mxu0 0.0
    %2619 = vmatpush2.msra.mxu0 0.0
    %2620 = vmatprep.subr.mxu0 0.0
    %2621 = vmatpush2.msra.mxu0 0.0
    %2622 = vmatprep.subr.mxu0 0.0
    %2623 = vmatpush2.msra.mxu0 0.0
    %2624 = vmatprep.subr.mxu0 0.0
    %2625 = vmatpush2.msra.mxu0 0.0
    %2626 = vmatprep.subr.mxu0 0.0
    %2627 = vmatpush2.msra.mxu0 0.0
    %2628 = vmatprep.subr.mxu0 0.0
    %2629 = vmatpush2.msra.mxu0 0.0
    %2630 = vmatprep.mubr.f32.mxu0 0.0
    %2631 = vmatmul.mubr.f32.gmra.mxu0 %v2564
    %v2632 = vpop.f32.mrf.mxu0
    %v2633 = vadd.f32 %v921, %v2632
    %v2634 = vpop.f32.mrf.mxu0
    %2635 = vdwg.mxu0
    %v2636 = vmax.f32 %v2633, 0.0
    %v2637 = vld [vmem:[#allocation33] sm:$0xff]
    %v2638 = vld [vmem:[#allocation33 + $0x8] sm:$0xff]
    %v2639 = vld [vmem:[#allocation33 + $0x10] sm:$0xff]
    %v2640 = vld [vmem:[#allocation33 + $0x18] sm:$0xff]
    %v2642 = vsel %vm616, %v2636, 0
    %2644 = vmatprep.subr.mxu0 0.0
    %2645 = vmatpush1.msra.mxu0 0.0
    %2646 = vmatprep.subr.mxu0 0.0
    %2647 = vmatpush1.msra.mxu0 0.0
    %2648 = vmatprep.subr.mxu0 0.0
    %2649 = vmatpush1.msra.mxu0 0.0
    %2650 = vmatprep.subr.mxu0 0.0
    %2651 = vmatpush1.msra.mxu0 0.0
    %2652 = vmatprep.subr.mxu0 0.0
    %2653 = vmatpush1.msra.mxu0 0.0
    %2654 = vmatprep.subr.mxu0 0.0
    %2655 = vmatpush1.msra.mxu0 0.0
    %2656 = vmatprep.subr.mxu0 0.0
    %2657 = vmatpush1.msra.mxu0 0.0
    %2658 = vmatprep.subr.mxu0 0.0
    %2659 = vmatpush1.msra.mxu0 0.0
    %2660 = vmatprep.subr.mxu0 0.0
    %2661 = vmatpush1.msra.mxu0 0.0
    %2662 = vmatprep.subr.mxu0 0.0
    %2663 = vmatpush1.msra.mxu0 0.0
    %2664 = vmatprep.subr.mxu0 0.0
    %2665 = vmatpush1.msra.mxu0 0.0
    %2666 = vmatprep.subr.mxu0 0.0
    %2667 = vmatpush1.msra.mxu0 0.0
    %2668 = vmatprep.subr.mxu0 0.0
    %2669 = vmatpush1.msra.mxu0 %v2640
    %2670 = vmatprep.subr.mxu0 0.0
    %2671 = vmatpush1.msra.mxu0 %v2639
    %2672 = vmatprep.subr.mxu0 0.0
    %2673 = vmatpush1.msra.mxu0 %v2638
    %2674 = vmatprep.subr.mxu0 0.0
    %2675 = vmatpush1.msra.mxu0 %v2637
    %2676 = vmatprep.subr.mxu0 0.0
    %2677 = vmatpush2.msra.mxu0 0.0
    %2678 = vmatprep.subr.mxu0 0.0
    %2679 = vmatpush2.msra.mxu0 0.0
    %2680 = vmatprep.subr.mxu0 0.0
    %2681 = vmatpush2.msra.mxu0 0.0
    %2682 = vmatprep.subr.mxu0 0.0
    %2683 = vmatpush2.msra.mxu0 0.0
    %2684 = vmatprep.subr.mxu0 0.0
    %2685 = vmatpush2.msra.mxu0 0.0
    %2686 = vmatprep.subr.mxu0 0.0
    %2687 = vmatpush2.msra.mxu0 0.0
    %2688 = vmatprep.subr.mxu0 0.0
    %2689 = vmatpush2.msra.mxu0 0.0
    %2690 = vmatprep.subr.mxu0 0.0
    %2691 = vmatpush2.msra.mxu0 0.0
    %2692 = vmatprep.subr.mxu0 0.0
    %2693 = vmatpush2.msra.mxu0 0.0
    %2694 = vmatprep.subr.mxu0 0.0
    %2695 = vmatpush2.msra.mxu0 0.0
    %2696 = vmatprep.subr.mxu0 0.0
    %2697 = vmatpush2.msra.mxu0 0.0
    %2698 = vmatprep.subr.mxu0 0.0
    %2699 = vmatpush2.msra.mxu0 0.0
    %2700 = vmatprep.subr.mxu0 0.0
    %2701 = vmatpush2.msra.mxu0 0.0
    %2702 = vmatprep.subr.mxu0 0.0
    %2703 = vmatpush2.msra.mxu0 0.0
    %2704 = vmatprep.subr.mxu0 0.0
    %2705 = vmatpush2.msra.mxu0 0.0
    %2706 = vmatprep.subr.mxu0 0.0
    %2707 = vmatpush2.msra.mxu0 0.0
    %2708 = vmatprep.mubr.f32.mxu0 0.0
    %2709 = vmatmul.mubr.f32.gmra.mxu0 %v2642
    %v2710 = vpop.f32.mrf.mxu0
    %v2711 = vadd.f32 0.0, %v2710
    %v2712 = vpop.f32.mrf.mxu0
    %2713 = vdwg.mxu0
    %2715 = vrot.lane.b32.xlu0 %v2711, 32
    %v2716 = vpop.permute.xlu0 %2715
    %v2718 = vadd.f32 %v2294, %v2716
    %v2719 = vadd.f32 %v2718, %v2376
    %v2720 = vxor.u32 %v2719, 2147483648
    %v2721 = vmul.f32 %v2720, 1.442695
    %v2722 = vpow.pop %v2721
    %v2723 = vadd.f32 %v2722, 1.0
    %v2724 = vrcp.pop %v2723
    %v2725 = vmul.f32 1.0, %v2724
    %2726 = vrot.lane.b32.xlu0 %v2371, 96
    %v2727 = vpop.permute.xlu0 %2726
    %v2729 = vmul.f32 %v2725, %v2727
    %2731 = vrot.lane.b32.xlu0 %v2729, 64
    %v2732 = vpop.permute.xlu0 %2731
    %v2734 = vadd.f32 %v2718, %v2732
    %v2735 = vtanh.pop %v2734
    %v2736 = vsub.f32 1.0, %v2725
    %2738 = vrot.lane.b32.xlu0 %v2735, 96
    %v2739 = vpop.permute.xlu0 %2738
    %v2741 = vmul.f32 %v2736, %v2739
    %v2742 = vmul.f32 %v2725, %v2285
    %v2743 = vadd.f32 %v2741, %v2742
    %s2744 = scalar_lea.vmem [#allocation3], 24
    %2745 = vst.msk [vmem:[%s2744] sm:$0xff] %vm616, %v2532
    %s2746 = scalar_lea.vmem [#allocation4], 24
    %2747 = vst.msk [vmem:[%s2746] sm:$0xff] %vm616, %v2636
    %s2749 = scalar_lea.vmem [#allocation5], 24
    %2750 = vst.msk [vmem:[%s2749] sm:$0xff] %vm616, %v2301
    %s2751 = scalar_lea.vmem [#allocation2], 32
    %v2752 = vld [vmem:[%s2751] sm:$0xff]
    %v2753 = vld [vmem:[#allocation23] sm:$0xff]
    %v2754 = vld [vmem:[#allocation23 + $0x8] sm:$0xff]
    %v2755 = vld [vmem:[#allocation23 + $0x10] sm:$0xff]
    %v2756 = vld [vmem:[#allocation23 + $0x18] sm:$0xff]
    %2758 = vrot.lane.b32.xlu0 %v2743, 64
    %v2759 = vpop.permute.xlu0 %2758
    %v2760 = vsel %vm616, %v2759, 0
    %2762 = vmatprep.subr.mxu0 0.0
    %2763 = vmatpush1.msra.mxu0 0.0
    %2764 = vmatprep.subr.mxu0 0.0
    %2765 = vmatpush1.msra.mxu0 0.0
    %2766 = vmatprep.subr.mxu0 0.0
    %2767 = vmatpush1.msra.mxu0 0.0
    %2768 = vmatprep.subr.mxu0 0.0
    %2769 = vmatpush1.msra.mxu0 0.0
    %2770 = vmatprep.subr.mxu0 0.0
    %2771 = vmatpush1.msra.mxu0 0.0
    %2772 = vmatprep.subr.mxu0 0.0
    %2773 = vmatpush1.msra.mxu0 0.0
    %2774 = vmatprep.subr.mxu0 0.0
    %2775 = vmatpush1.msra.mxu0 0.0
    %2776 = vmatprep.subr.mxu0 0.0
    %2777 = vmatpush1.msra.mxu0 0.0
    %2778 = vmatprep.subr.mxu0 0.0
    %2779 = vmatpush1.msra.mxu0 0.0
    %2780 = vmatprep.subr.mxu0 0.0
    %2781 = vmatpush1.msra.mxu0 0.0
    %2782 = vmatprep.subr.mxu0 0.0
    %2783 = vmatpush1.msra.mxu0 0.0
    %2784 = vmatprep.subr.mxu0 0.0
    %2785 = vmatpush1.msra.mxu0 0.0
    %2786 = vmatprep.subr.mxu0 0.0
    %2787 = vmatpush1.msra.mxu0 %v2756
    %2788 = vmatprep.subr.mxu0 0.0
    %2789 = vmatpush1.msra.mxu0 %v2755
    %2790 = vmatprep.subr.mxu0 0.0
    %2791 = vmatpush1.msra.mxu0 %v2754
    %2792 = vmatprep.subr.mxu0 0.0
    %2793 = vmatpush1.msra.mxu0 %v2753
    %2794 = vmatprep.subr.mxu0 0.0
    %2795 = vmatpush2.msra.mxu0 0.0
    %2796 = vmatprep.subr.mxu0 0.0
    %2797 = vmatpush2.msra.mxu0 0.0
    %2798 = vmatprep.subr.mxu0 0.0
    %2799 = vmatpush2.msra.mxu0 0.0
    %2800 = vmatprep.subr.mxu0 0.0
    %2801 = vmatpush2.msra.mxu0 0.0
    %2802 = vmatprep.subr.mxu0 0.0
    %2803 = vmatpush2.msra.mxu0 0.0
    %2804 = vmatprep.subr.mxu0 0.0
    %2805 = vmatpush2.msra.mxu0 0.0
    %2806 = vmatprep.subr.mxu0 0.0
    %2807 = vmatpush2.msra.mxu0 0.0
    %2808 = vmatprep.subr.mxu0 0.0
    %2809 = vmatpush2.msra.mxu0 0.0
    %2810 = vmatprep.subr.mxu0 0.0
    %2811 = vmatpush2.msra.mxu0 0.0
    %2812 = vmatprep.subr.mxu0 0.0
    %2813 = vmatpush2.msra.mxu0 0.0
    %2814 = vmatprep.subr.mxu0 0.0
    %2815 = vmatpush2.msra.mxu0 0.0
    %2816 = vmatprep.subr.mxu0 0.0
    %2817 = vmatpush2.msra.mxu0 0.0
    %2818 = vmatprep.subr.mxu0 0.0
    %2819 = vmatpush2.msra.mxu0 0.0
    %2820 = vmatprep.subr.mxu0 0.0
    %2821 = vmatpush2.msra.mxu0 0.0
    %2822 = vmatprep.subr.mxu0 0.0
    %2823 = vmatpush2.msra.mxu0 0.0
    %2824 = vmatprep.subr.mxu0 0.0
    %2825 = vmatpush2.msra.mxu0 0.0
    %2826 = vmatprep.mubr.f32.mxu0 0.0
    %2827 = vmatmul.mubr.f32.gmra.mxu0 %v2760
    %v2828 = vpop.f32.mrf.mxu0
    %v2829 = vadd.f32 0.0, %v2828
    %v2830 = vpop.f32.mrf.mxu0
    %2831 = vdwg.mxu0
    %2833 = vrot.lane.b32.xlu0 %v2829, 32
    %v2834 = vpop.permute.xlu0 %2833
    %v2836 = vadd.f32 %v2752, %v2834
    %v2837 = vmax.f32 %v2836, 0.0
    %v2838 = vld [vmem:[#allocation24] sm:$0xff]
    %v2839 = vld [vmem:[#allocation24 + $0x8] sm:$0xff]
    %v2840 = vld [vmem:[#allocation24 + $0x10] sm:$0xff]
    %v2841 = vld [vmem:[#allocation24 + $0x18] sm:$0xff]
    %v2843 = vsel %vm616, %v2837, 0
    %2845 = vmatprep.subr.mxu0 0.0
    %2846 = vmatpush1.msra.mxu0 0.0
    %2847 = vmatprep.subr.mxu0 0.0
    %2848 = vmatpush1.msra.mxu0 0.0
    %2849 = vmatprep.subr.mxu0 0.0
    %2850 = vmatpush1.msra.mxu0 0.0
    %2851 = vmatprep.subr.mxu0 0.0
    %2852 = vmatpush1.msra.mxu0 0.0
    %2853 = vmatprep.subr.mxu0 0.0
    %2854 = vmatpush1.msra.mxu0 0.0
    %2855 = vmatprep.subr.mxu0 0.0
    %2856 = vmatpush1.msra.mxu0 0.0
    %2857 = vmatprep.subr.mxu0 0.0
    %2858 = vmatpush1.msra.mxu0 0.0
    %2859 = vmatprep.subr.mxu0 0.0
    %2860 = vmatpush1.msra.mxu0 0.0
    %2861 = vmatprep.subr.mxu0 0.0
    %2862 = vmatpush1.msra.mxu0 0.0
    %2863 = vmatprep.subr.mxu0 0.0
    %2864 = vmatpush1.msra.mxu0 0.0
    %2865 = vmatprep.subr.mxu0 0.0
    %2866 = vmatpush1.msra.mxu0 0.0
    %2867 = vmatprep.subr.mxu0 0.0
    %2868 = vmatpush1.msra.mxu0 0.0
    %2869 = vmatprep.subr.mxu0 0.0
    %2870 = vmatpush1.msra.mxu0 %v2841
    %2871 = vmatprep.subr.mxu0 0.0
    %2872 = vmatpush1.msra.mxu0 %v2840
    %2873 = vmatprep.subr.mxu0 0.0
    %2874 = vmatpush1.msra.mxu0 %v2839
    %2875 = vmatprep.subr.mxu0 0.0
    %2876 = vmatpush1.msra.mxu0 %v2838
    %2877 = vmatprep.subr.mxu0 0.0
    %2878 = vmatpush2.msra.mxu0 0.0
    %2879 = vmatprep.subr.mxu0 0.0
    %2880 = vmatpush2.msra.mxu0 0.0
    %2881 = vmatprep.subr.mxu0 0.0
    %2882 = vmatpush2.msra.mxu0 0.0
    %2883 = vmatprep.subr.mxu0 0.0
    %2884 = vmatpush2.msra.mxu0 0.0
    %2885 = vmatprep.subr.mxu0 0.0
    %2886 = vmatpush2.msra.mxu0 0.0
    %2887 = vmatprep.subr.mxu0 0.0
    %2888 = vmatpush2.msra.mxu0 0.0
    %2889 = vmatprep.subr.mxu0 0.0
    %2890 = vmatpush2.msra.mxu0 0.0
    %2891 = vmatprep.subr.mxu0 0.0
    %2892 = vmatpush2.msra.mxu0 0.0
    %2893 = vmatprep.subr.mxu0 0.0
    %2894 = vmatpush2.msra.mxu0 0.0
    %2895 = vmatprep.subr.mxu0 0.0
    %2896 = vmatpush2.msra.mxu0 0.0
    %2897 = vmatprep.subr.mxu0 0.0
    %2898 = vmatpush2.msra.mxu0 0.0
    %2899 = vmatprep.subr.mxu0 0.0
    %2900 = vmatpush2.msra.mxu0 0.0
    %2901 = vmatprep.subr.mxu0 0.0
    %2902 = vmatpush2.msra.mxu0 0.0
    %2903 = vmatprep.subr.mxu0 0.0
    %2904 = vmatpush2.msra.mxu0 0.0
    %2905 = vmatprep.subr.mxu0 0.0
    %2906 = vmatpush2.msra.mxu0 0.0
    %2907 = vmatprep.subr.mxu0 0.0
    %2908 = vmatpush2.msra.mxu0 0.0
    %2909 = vmatprep.mubr.f32.mxu0 0.0
    %2910 = vmatmul.mubr.f32.gmra.mxu0 %v2843
    %v2911 = vpop.f32.mrf.mxu0
    %v2912 = vadd.f32 %v907, %v2911
    %v2913 = vpop.f32.mrf.mxu0
    %2914 = vdwg.mxu0
    %v2915 = vmax.f32 %v2912, 0.0
    %v2916 = vld [vmem:[#allocation27] sm:$0xff]
    %v2917 = vld [vmem:[#allocation27 + $0x8] sm:$0xff]
    %v2918 = vld [vmem:[#allocation27 + $0x10] sm:$0xff]
    %v2919 = vld [vmem:[#allocation27 + $0x18] sm:$0xff]
    %v2921 = vsel %vm616, %v2915, 0
    %2923 = vmatprep.subr.mxu0 0.0
    %2924 = vmatpush1.msra.mxu0 0.0
    %2925 = vmatprep.subr.mxu0 0.0
    %2926 = vmatpush1.msra.mxu0 0.0
    %2927 = vmatprep.subr.mxu0 0.0
    %2928 = vmatpush1.msra.mxu0 0.0
    %2929 = vmatprep.subr.mxu0 0.0
    %2930 = vmatpush1.msra.mxu0 0.0
    %2931 = vmatprep.subr.mxu0 0.0
    %2932 = vmatpush1.msra.mxu0 0.0
    %2933 = vmatprep.subr.mxu0 0.0
    %2934 = vmatpush1.msra.mxu0 0.0
    %2935 = vmatprep.subr.mxu0 0.0
    %2936 = vmatpush1.msra.mxu0 0.0
    %2937 = vmatprep.subr.mxu0 0.0
    %2938 = vmatpush1.msra.mxu0 0.0
    %2939 = vmatprep.subr.mxu0 0.0
    %2940 = vmatpush1.msra.mxu0 0.0
    %2941 = vmatprep.subr.mxu0 0.0
    %2942 = vmatpush1.msra.mxu0 0.0
    %2943 = vmatprep.subr.mxu0 0.0
    %2944 = vmatpush1.msra.mxu0 0.0
    %2945 = vmatprep.subr.mxu0 0.0
    %2946 = vmatpush1.msra.mxu0 0.0
    %2947 = vmatprep.subr.mxu0 0.0
    %2948 = vmatpush1.msra.mxu0 %v2919
    %2949 = vmatprep.subr.mxu0 0.0
    %2950 = vmatpush1.msra.mxu0 %v2918
    %2951 = vmatprep.subr.mxu0 0.0
    %2952 = vmatpush1.msra.mxu0 %v2917
    %2953 = vmatprep.subr.mxu0 0.0
    %2954 = vmatpush1.msra.mxu0 %v2916
    %2955 = vmatprep.subr.mxu0 0.0
    %2956 = vmatpush2.msra.mxu0 0.0
    %2957 = vmatprep.subr.mxu0 0.0
    %2958 = vmatpush2.msra.mxu0 0.0
    %2959 = vmatprep.subr.mxu0 0.0
    %2960 = vmatpush2.msra.mxu0 0.0
    %2961 = vmatprep.subr.mxu0 0.0
    %2962 = vmatpush2.msra.mxu0 0.0
    %2963 = vmatprep.subr.mxu0 0.0
    %2964 = vmatpush2.msra.mxu0 0.0
    %2965 = vmatprep.subr.mxu0 0.0
    %2966 = vmatpush2.msra.mxu0 0.0
    %2967 = vmatprep.subr.mxu0 0.0
    %2968 = vmatpush2.msra.mxu0 0.0
    %2969 = vmatprep.subr.mxu0 0.0
    %2970 = vmatpush2.msra.mxu0 0.0
    %2971 = vmatprep.subr.mxu0 0.0
    %2972 = vmatpush2.msra.mxu0 0.0
    %2973 = vmatprep.subr.mxu0 0.0
    %2974 = vmatpush2.msra.mxu0 0.0
    %2975 = vmatprep.subr.mxu0 0.0
    %2976 = vmatpush2.msra.mxu0 0.0
    %2977 = vmatprep.subr.mxu0 0.0
    %2978 = vmatpush2.msra.mxu0 0.0
    %2979 = vmatprep.subr.mxu0 0.0
    %2980 = vmatpush2.msra.mxu0 0.0
    %2981 = vmatprep.subr.mxu0 0.0
    %2982 = vmatpush2.msra.mxu0 0.0
    %2983 = vmatprep.subr.mxu0 0.0
    %2984 = vmatpush2.msra.mxu0 0.0
    %2985 = vmatprep.subr.mxu0 0.0
    %2986 = vmatpush2.msra.mxu0 0.0
    %2987 = vmatprep.mubr.f32.mxu0 0.0
    %2988 = vmatmul.mubr.f32.gmra.mxu0 %v2921
    %v2989 = vpop.f32.mrf.mxu0
    %v2990 = vadd.f32 %v914, %v2989
    %v2991 = vpop.f32.mrf.mxu0
    %2992 = vdwg.mxu0
    %v2993 = vmax.f32 %v2990, 0.0
    %vm2994 = vcmp.ne.f32.partialorder %v2990, %v2990
    %v2995 = vadd.f32 %v2990, 0.0
    %v2996 = vand.u32 2147483647, %v2990
    %v2997 = vsub.f32 0.0, %v2996
    %v2998 = vmul.f32 %v2997, 1.442695
    %v2999 = vpow.pop %v2998
    %v3000 = vadd.f32 %v2999, 1.0
    %v3001 = vlog2.pop %v3000
    %v3002 = vmul.f32 %v3001, 0.6931472
    %v3003 = vmul.f32 -0.5, %v2999
    %v3004 = vadd.f32 %v3003, 1.0
    %v3005 = vmul.f32 %v3004, %v2999
    %v3006 = vand.u32 2147483647, %v2999
    %vm3007 = vcmp.lt.f32.partialorder %v3006, 0.0004427343
    %v3008 = vsel %vm3007, %v3005, %v3002
    %v3009 = vadd.f32 %v2993, %v3008
    %v3010 = vsel %vm2994, %v2995, %v3009
    %s3011 = scalar_lea.vmem [#allocation9], 32
    %v3012 = vld [vmem:[%s3011] sm:$0xff]
    %3014 = vrot.lane.b32.xlu0 %v3010, 112
    %v3015 = vpop.permute.xlu0 %3014
    %v3017 = vmul.f32 %v3012, %v3015
    %v3018 = vadd.f32 %v3017, %v2990
    %v3019 = vld [vmem:[#allocation30] sm:$0xff]
    %v3020 = vld [vmem:[#allocation30 + $0x8] sm:$0xff]
    %v3022 = vsel %vm467, %v3018, 0
    %3024 = vmatprep.subr.mxu0 0.0
    %3025 = vmatpush1.msra.mxu0 0.0
    %3026 = vmatprep.subr.mxu0 0.0
    %3027 = vmatpush1.msra.mxu0 0.0
    %3028 = vmatprep.subr.mxu0 0.0
    %3029 = vmatpush1.msra.mxu0 0.0
    %3030 = vmatprep.subr.mxu0 0.0
    %3031 = vmatpush1.msra.mxu0 0.0
    %3032 = vmatprep.subr.mxu0 0.0
    %3033 = vmatpush1.msra.mxu0 0.0
    %3034 = vmatprep.subr.mxu0 0.0
    %3035 = vmatpush1.msra.mxu0 0.0
    %3036 = vmatprep.subr.mxu0 0.0
    %3037 = vmatpush1.msra.mxu0 0.0
    %3038 = vmatprep.subr.mxu0 0.0
    %3039 = vmatpush1.msra.mxu0 0.0
    %3040 = vmatprep.subr.mxu0 0.0
    %3041 = vmatpush1.msra.mxu0 0.0
    %3042 = vmatprep.subr.mxu0 0.0
    %3043 = vmatpush1.msra.mxu0 0.0
    %3044 = vmatprep.subr.mxu0 0.0
    %3045 = vmatpush1.msra.mxu0 0.0
    %3046 = vmatprep.subr.mxu0 0.0
    %3047 = vmatpush1.msra.mxu0 0.0
    %3048 = vmatprep.subr.mxu0 0.0
    %3049 = vmatpush1.msra.mxu0 0.0
    %3050 = vmatprep.subr.mxu0 0.0
    %3051 = vmatpush1.msra.mxu0 0.0
    %3052 = vmatprep.subr.mxu0 0.0
    %3053 = vmatpush1.msra.mxu0 %v3020
    %3054 = vmatprep.subr.mxu0 0.0
    %3055 = vmatpush1.msra.mxu0 %v3019
    %3056 = vmatprep.subr.mxu0 0.0
    %3057 = vmatpush2.msra.mxu0 0.0
    %3058 = vmatprep.subr.mxu0 0.0
    %3059 = vmatpush2.msra.mxu0 0.0
    %3060 = vmatprep.subr.mxu0 0.0
    %3061 = vmatpush2.msra.mxu0 0.0
    %3062 = vmatprep.subr.mxu0 0.0
    %3063 = vmatpush2.msra.mxu0 0.0
    %3064 = vmatprep.subr.mxu0 0.0
    %3065 = vmatpush2.msra.mxu0 0.0
    %3066 = vmatprep.subr.mxu0 0.0
    %3067 = vmatpush2.msra.mxu0 0.0
    %3068 = vmatprep.subr.mxu0 0.0
    %3069 = vmatpush2.msra.mxu0 0.0
    %3070 = vmatprep.subr.mxu0 0.0
    %3071 = vmatpush2.msra.mxu0 0.0
    %3072 = vmatprep.subr.mxu0 0.0
    %3073 = vmatpush2.msra.mxu0 0.0
    %3074 = vmatprep.subr.mxu0 0.0
    %3075 = vmatpush2.msra.mxu0 0.0
    %3076 = vmatprep.subr.mxu0 0.0
    %3077 = vmatpush2.msra.mxu0 0.0
    %3078 = vmatprep.subr.mxu0 0.0
    %3079 = vmatpush2.msra.mxu0 0.0
    %3080 = vmatprep.subr.mxu0 0.0
    %3081 = vmatpush2.msra.mxu0 0.0
    %3082 = vmatprep.subr.mxu0 0.0
    %3083 = vmatpush2.msra.mxu0 0.0
    %3084 = vmatprep.subr.mxu0 0.0
    %3085 = vmatpush2.msra.mxu0 0.0
    %3086 = vmatprep.subr.mxu0 0.0
    %3087 = vmatpush2.msra.mxu0 0.0
    %3088 = vmatprep.mubr.f32.mxu0 0.0
    %3089 = vmatmul.mubr.f32.gmra.mxu0 %v3022
    %v3090 = vpop.f32.mrf.mxu0
    %v3091 = vadd.f32 %v921, %v3090
    %v3092 = vpop.f32.mrf.mxu0
    %3093 = vdwg.mxu0
    %v3094 = vmax.f32 %v3091, 0.0
    %v3095 = vld [vmem:[#allocation33] sm:$0xff]
    %v3096 = vld [vmem:[#allocation33 + $0x8] sm:$0xff]
    %v3097 = vld [vmem:[#allocation33 + $0x10] sm:$0xff]
    %v3098 = vld [vmem:[#allocation33 + $0x18] sm:$0xff]
    %v3100 = vsel %vm616, %v3094, 0
    %3102 = vmatprep.subr.mxu0 0.0
    %3103 = vmatpush1.msra.mxu0 0.0
    %3104 = vmatprep.subr.mxu0 0.0
    %3105 = vmatpush1.msra.mxu0 0.0
    %3106 = vmatprep.subr.mxu0 0.0
    %3107 = vmatpush1.msra.mxu0 0.0
    %3108 = vmatprep.subr.mxu0 0.0
    %3109 = vmatpush1.msra.mxu0 0.0
    %3110 = vmatprep.subr.mxu0 0.0
    %3111 = vmatpush1.msra.mxu0 0.0
    %3112 = vmatprep.subr.mxu0 0.0
    %3113 = vmatpush1.msra.mxu0 0.0
    %3114 = vmatprep.subr.mxu0 0.0
    %3115 = vmatpush1.msra.mxu0 0.0
    %3116 = vmatprep.subr.mxu0 0.0
    %3117 = vmatpush1.msra.mxu0 0.0
    %3118 = vmatprep.subr.mxu0 0.0
    %3119 = vmatpush1.msra.mxu0 0.0
    %3120 = vmatprep.subr.mxu0 0.0
    %3121 = vmatpush1.msra.mxu0 0.0
    %3122 = vmatprep.subr.mxu0 0.0
    %3123 = vmatpush1.msra.mxu0 0.0
    %3124 = vmatprep.subr.mxu0 0.0
    %3125 = vmatpush1.msra.mxu0 0.0
    %3126 = vmatprep.subr.mxu0 0.0
    %3127 = vmatpush1.msra.mxu0 %v3098
    %3128 = vmatprep.subr.mxu0 0.0
    %3129 = vmatpush1.msra.mxu0 %v3097
    %3130 = vmatprep.subr.mxu0 0.0
    %3131 = vmatpush1.msra.mxu0 %v3096
    %3132 = vmatprep.subr.mxu0 0.0
    %3133 = vmatpush1.msra.mxu0 %v3095
    %3134 = vmatprep.subr.mxu0 0.0
    %3135 = vmatpush2.msra.mxu0 0.0
    %3136 = vmatprep.subr.mxu0 0.0
    %3137 = vmatpush2.msra.mxu0 0.0
    %3138 = vmatprep.subr.mxu0 0.0
    %3139 = vmatpush2.msra.mxu0 0.0
    %3140 = vmatprep.subr.mxu0 0.0
    %3141 = vmatpush2.msra.mxu0 0.0
    %3142 = vmatprep.subr.mxu0 0.0
    %3143 = vmatpush2.msra.mxu0 0.0
    %3144 = vmatprep.subr.mxu0 0.0
    %3145 = vmatpush2.msra.mxu0 0.0
    %3146 = vmatprep.subr.mxu0 0.0
    %3147 = vmatpush2.msra.mxu0 0.0
    %3148 = vmatprep.subr.mxu0 0.0
    %3149 = vmatpush2.msra.mxu0 0.0
    %3150 = vmatprep.subr.mxu0 0.0
    %3151 = vmatpush2.msra.mxu0 0.0
    %3152 = vmatprep.subr.mxu0 0.0
    %3153 = vmatpush2.msra.mxu0 0.0
    %3154 = vmatprep.subr.mxu0 0.0
    %3155 = vmatpush2.msra.mxu0 0.0
    %3156 = vmatprep.subr.mxu0 0.0
    %3157 = vmatpush2.msra.mxu0 0.0
    %3158 = vmatprep.subr.mxu0 0.0
    %3159 = vmatpush2.msra.mxu0 0.0
    %3160 = vmatprep.subr.mxu0 0.0
    %3161 = vmatpush2.msra.mxu0 0.0
    %3162 = vmatprep.subr.mxu0 0.0
    %3163 = vmatpush2.msra.mxu0 0.0
    %3164 = vmatprep.subr.mxu0 0.0
    %3165 = vmatpush2.msra.mxu0 0.0
    %3166 = vmatprep.mubr.f32.mxu0 0.0
    %3167 = vmatmul.mubr.f32.gmra.mxu0 %v3100
    %v3168 = vpop.f32.mrf.mxu0
    %v3169 = vadd.f32 0.0, %v3168
    %v3170 = vpop.f32.mrf.mxu0
    %3171 = vdwg.mxu0
    %3173 = vrot.lane.b32.xlu0 %v3169, 32
    %v3174 = vpop.permute.xlu0 %3173
    %v3176 = vadd.f32 %v2752, %v3174
    %v3177 = vadd.f32 %v3176, %v2834
    %v3178 = vxor.u32 %v3177, 2147483648
    %v3179 = vmul.f32 %v3178, 1.442695
    %v3180 = vpow.pop %v3179
    %v3181 = vadd.f32 %v3180, 1.0
    %v3182 = vrcp.pop %v3181
    %v3183 = vmul.f32 1.0, %v3182
    %3184 = vrot.lane.b32.xlu0 %v2829, 96
    %v3185 = vpop.permute.xlu0 %3184
    %v3187 = vmul.f32 %v3183, %v3185
    %3189 = vrot.lane.b32.xlu0 %v3187, 64
    %v3190 = vpop.permute.xlu0 %3189
    %v3192 = vadd.f32 %v3176, %v3190
    %v3193 = vtanh.pop %v3192
    %v3194 = vsub.f32 1.0, %v3183
    %3196 = vrot.lane.b32.xlu0 %v3193, 96
    %v3197 = vpop.permute.xlu0 %3196
    %v3199 = vmul.f32 %v3194, %v3197
    %v3200 = vmul.f32 %v3183, %v2743
    %v3201 = vadd.f32 %v3199, %v3200
    %s3202 = scalar_lea.vmem [#allocation3], 32
    %3203 = vst.msk [vmem:[%s3202] sm:$0xff] %vm616, %v2990
    %s3204 = scalar_lea.vmem [#allocation4], 32
    %3205 = vst.msk [vmem:[%s3204] sm:$0xff] %vm616, %v3094
    %s3207 = scalar_lea.vmem [#allocation5], 32
    %3208 = vst.msk [vmem:[%s3207] sm:$0xff] %vm616, %v2759
    %s3209 = scalar_lea.vmem [#allocation2], 40
    %v3210 = vld [vmem:[%s3209] sm:$0xff]
    %v3211 = vld [vmem:[#allocation23] sm:$0xff]
    %v3212 = vld [vmem:[#allocation23 + $0x8] sm:$0xff]
    %v3213 = vld [vmem:[#allocation23 + $0x10] sm:$0xff]
    %v3214 = vld [vmem:[#allocation23 + $0x18] sm:$0xff]
    %3216 = vrot.lane.b32.xlu0 %v3201, 64
    %v3217 = vpop.permute.xlu0 %3216
    %v3218 = vsel %vm616, %v3217, 0
    %3220 = vmatprep.subr.mxu0 0.0
    %3221 = vmatpush1.msra.mxu0 0.0
    %3222 = vmatprep.subr.mxu0 0.0
    %3223 = vmatpush1.msra.mxu0 0.0
    %3224 = vmatprep.subr.mxu0 0.0
    %3225 = vmatpush1.msra.mxu0 0.0
    %3226 = vmatprep.subr.mxu0 0.0
    %3227 = vmatpush1.msra.mxu0 0.0
    %3228 = vmatprep.subr.mxu0 0.0
    %3229 = vmatpush1.msra.mxu0 0.0
    %3230 = vmatprep.subr.mxu0 0.0
    %3231 = vmatpush1.msra.mxu0 0.0
    %3232 = vmatprep.subr.mxu0 0.0
    %3233 = vmatpush1.msra.mxu0 0.0
    %3234 = vmatprep.subr.mxu0 0.0
    %3235 = vmatpush1.msra.mxu0 0.0
    %3236 = vmatprep.subr.mxu0 0.0
    %3237 = vmatpush1.msra.mxu0 0.0
    %3238 = vmatprep.subr.mxu0 0.0
    %3239 = vmatpush1.msra.mxu0 0.0
    %3240 = vmatprep.subr.mxu0 0.0
    %3241 = vmatpush1.msra.mxu0 0.0
    %3242 = vmatprep.subr.mxu0 0.0
    %3243 = vmatpush1.msra.mxu0 0.0
    %3244 = vmatprep.subr.mxu0 0.0
    %3245 = vmatpush1.msra.mxu0 %v3214
    %3246 = vmatprep.subr.mxu0 0.0
    %3247 = vmatpush1.msra.mxu0 %v3213
    %3248 = vmatprep.subr.mxu0 0.0
    %3249 = vmatpush1.msra.mxu0 %v3212
    %3250 = vmatprep.subr.mxu0 0.0
    %3251 = vmatpush1.msra.mxu0 %v3211
    %3252 = vmatprep.subr.mxu0 0.0
    %3253 = vmatpush2.msra.mxu0 0.0
    %3254 = vmatprep.subr.mxu0 0.0
    %3255 = vmatpush2.msra.mxu0 0.0
    %3256 = vmatprep.subr.mxu0 0.0
    %3257 = vmatpush2.msra.mxu0 0.0
    %3258 = vmatprep.subr.mxu0 0.0
    %3259 = vmatpush2.msra.mxu0 0.0
    %3260 = vmatprep.subr.mxu0 0.0
    %3261 = vmatpush2.msra.mxu0 0.0
    %3262 = vmatprep.subr.mxu0 0.0
    %3263 = vmatpush2.msra.mxu0 0.0
    %3264 = vmatprep.subr.mxu0 0.0
    %3265 = vmatpush2.msra.mxu0 0.0
    %3266 = vmatprep.subr.mxu0 0.0
    %3267 = vmatpush2.msra.mxu0 0.0
    %3268 = vmatprep.subr.mxu0 0.0
    %3269 = vmatpush2.msra.mxu0 0.0
    %3270 = vmatprep.subr.mxu0 0.0
    %3271 = vmatpush2.msra.mxu0 0.0
    %3272 = vmatprep.subr.mxu0 0.0
    %3273 = vmatpush2.msra.mxu0 0.0
    %3274 = vmatprep.subr.mxu0 0.0
    %3275 = vmatpush2.msra.mxu0 0.0
    %3276 = vmatprep.subr.mxu0 0.0
    %3277 = vmatpush2.msra.mxu0 0.0
    %3278 = vmatprep.subr.mxu0 0.0
    %3279 = vmatpush2.msra.mxu0 0.0
    %3280 = vmatprep.subr.mxu0 0.0
    %3281 = vmatpush2.msra.mxu0 0.0
    %3282 = vmatprep.subr.mxu0 0.0
    %3283 = vmatpush2.msra.mxu0 0.0
    %3284 = vmatprep.mubr.f32.mxu0 0.0
    %3285 = vmatmul.mubr.f32.gmra.mxu0 %v3218
    %v3286 = vpop.f32.mrf.mxu0
    %v3287 = vadd.f32 0.0, %v3286
    %v3288 = vpop.f32.mrf.mxu0
    %3289 = vdwg.mxu0
    %3291 = vrot.lane.b32.xlu0 %v3287, 32
    %v3292 = vpop.permute.xlu0 %3291
    %v3294 = vadd.f32 %v3210, %v3292
    %v3295 = vmax.f32 %v3294, 0.0
    %v3296 = vld [vmem:[#allocation24] sm:$0xff]
    %v3297 = vld [vmem:[#allocation24 + $0x8] sm:$0xff]
    %v3298 = vld [vmem:[#allocation24 + $0x10] sm:$0xff]
    %v3299 = vld [vmem:[#allocation24 + $0x18] sm:$0xff]
    %v3301 = vsel %vm616, %v3295, 0
    %3303 = vmatprep.subr.mxu0 0.0
    %3304 = vmatpush1.msra.mxu0 0.0
    %3305 = vmatprep.subr.mxu0 0.0
    %3306 = vmatpush1.msra.mxu0 0.0
    %3307 = vmatprep.subr.mxu0 0.0
    %3308 = vmatpush1.msra.mxu0 0.0
    %3309 = vmatprep.subr.mxu0 0.0
    %3310 = vmatpush1.msra.mxu0 0.0
    %3311 = vmatprep.subr.mxu0 0.0
    %3312 = vmatpush1.msra.mxu0 0.0
    %3313 = vmatprep.subr.mxu0 0.0
    %3314 = vmatpush1.msra.mxu0 0.0
    %3315 = vmatprep.subr.mxu0 0.0
    %3316 = vmatpush1.msra.mxu0 0.0
    %3317 = vmatprep.subr.mxu0 0.0
    %3318 = vmatpush1.msra.mxu0 0.0
    %3319 = vmatprep.subr.mxu0 0.0
    %3320 = vmatpush1.msra.mxu0 0.0
    %3321 = vmatprep.subr.mxu0 0.0
    %3322 = vmatpush1.msra.mxu0 0.0
    %3323 = vmatprep.subr.mxu0 0.0
    %3324 = vmatpush1.msra.mxu0 0.0
    %3325 = vmatprep.subr.mxu0 0.0
    %3326 = vmatpush1.msra.mxu0 0.0
    %3327 = vmatprep.subr.mxu0 0.0
    %3328 = vmatpush1.msra.mxu0 %v3299
    %3329 = vmatprep.subr.mxu0 0.0
    %3330 = vmatpush1.msra.mxu0 %v3298
    %3331 = vmatprep.subr.mxu0 0.0
    %3332 = vmatpush1.msra.mxu0 %v3297
    %3333 = vmatprep.subr.mxu0 0.0
    %3334 = vmatpush1.msra.mxu0 %v3296
    %3335 = vmatprep.subr.mxu0 0.0
    %3336 = vmatpush2.msra.mxu0 0.0
    %3337 = vmatprep.subr.mxu0 0.0
    %3338 = vmatpush2.msra.mxu0 0.0
    %3339 = vmatprep.subr.mxu0 0.0
    %3340 = vmatpush2.msra.mxu0 0.0
    %3341 = vmatprep.subr.mxu0 0.0
    %3342 = vmatpush2.msra.mxu0 0.0
    %3343 = vmatprep.subr.mxu0 0.0
    %3344 = vmatpush2.msra.mxu0 0.0
    %3345 = vmatprep.subr.mxu0 0.0
    %3346 = vmatpush2.msra.mxu0 0.0
    %3347 = vmatprep.subr.mxu0 0.0
    %3348 = vmatpush2.msra.mxu0 0.0
    %3349 = vmatprep.subr.mxu0 0.0
    %3350 = vmatpush2.msra.mxu0 0.0
    %3351 = vmatprep.subr.mxu0 0.0
    %3352 = vmatpush2.msra.mxu0 0.0
    %3353 = vmatprep.subr.mxu0 0.0
    %3354 = vmatpush2.msra.mxu0 0.0
    %3355 = vmatprep.subr.mxu0 0.0
    %3356 = vmatpush2.msra.mxu0 0.0
    %3357 = vmatprep.subr.mxu0 0.0
    %3358 = vmatpush2.msra.mxu0 0.0
    %3359 = vmatprep.subr.mxu0 0.0
    %3360 = vmatpush2.msra.mxu0 0.0
    %3361 = vmatprep.subr.mxu0 0.0
    %3362 = vmatpush2.msra.mxu0 0.0
    %3363 = vmatprep.subr.mxu0 0.0
    %3364 = vmatpush2.msra.mxu0 0.0
    %3365 = vmatprep.subr.mxu0 0.0
    %3366 = vmatpush2.msra.mxu0 0.0
    %3367 = vmatprep.mubr.f32.mxu0 0.0
    %3368 = vmatmul.mubr.f32.gmra.mxu0 %v3301
    %v3369 = vpop.f32.mrf.mxu0
    %v3370 = vadd.f32 %v907, %v3369
    %v3371 = vpop.f32.mrf.mxu0
    %3372 = vdwg.mxu0
    %v3373 = vmax.f32 %v3370, 0.0
    %v3374 = vld [vmem:[#allocation27] sm:$0xff]
    %v3375 = vld [vmem:[#allocation27 + $0x8] sm:$0xff]
    %v3376 = vld [vmem:[#allocation27 + $0x10] sm:$0xff]
    %v3377 = vld [vmem:[#allocation27 + $0x18] sm:$0xff]
    %v3379 = vsel %vm616, %v3373, 0
    %3381 = vmatprep.subr.mxu0 0.0
    %3382 = vmatpush1.msra.mxu0 0.0
    %3383 = vmatprep.subr.mxu0 0.0
    %3384 = vmatpush1.msra.mxu0 0.0
    %3385 = vmatprep.subr.mxu0 0.0
    %3386 = vmatpush1.msra.mxu0 0.0
    %3387 = vmatprep.subr.mxu0 0.0
    %3388 = vmatpush1.msra.mxu0 0.0
    %3389 = vmatprep.subr.mxu0 0.0
    %3390 = vmatpush1.msra.mxu0 0.0
    %3391 = vmatprep.subr.mxu0 0.0
    %3392 = vmatpush1.msra.mxu0 0.0
    %3393 = vmatprep.subr.mxu0 0.0
    %3394 = vmatpush1.msra.mxu0 0.0
    %3395 = vmatprep.subr.mxu0 0.0
    %3396 = vmatpush1.msra.mxu0 0.0
    %3397 = vmatprep.subr.mxu0 0.0
    %3398 = vmatpush1.msra.mxu0 0.0
    %3399 = vmatprep.subr.mxu0 0.0
    %3400 = vmatpush1.msra.mxu0 0.0
    %3401 = vmatprep.subr.mxu0 0.0
    %3402 = vmatpush1.msra.mxu0 0.0
    %3403 = vmatprep.subr.mxu0 0.0
    %3404 = vmatpush1.msra.mxu0 0.0
    %3405 = vmatprep.subr.mxu0 0.0
    %3406 = vmatpush1.msra.mxu0 %v3377
    %3407 = vmatprep.subr.mxu0 0.0
    %3408 = vmatpush1.msra.mxu0 %v3376
    %3409 = vmatprep.subr.mxu0 0.0
    %3410 = vmatpush1.msra.mxu0 %v3375
    %3411 = vmatprep.subr.mxu0 0.0
    %3412 = vmatpush1.msra.mxu0 %v3374
    %3413 = vmatprep.subr.mxu0 0.0
    %3414 = vmatpush2.msra.mxu0 0.0
    %3415 = vmatprep.subr.mxu0 0.0
    %3416 = vmatpush2.msra.mxu0 0.0
    %3417 = vmatprep.subr.mxu0 0.0
    %3418 = vmatpush2.msra.mxu0 0.0
    %3419 = vmatprep.subr.mxu0 0.0
    %3420 = vmatpush2.msra.mxu0 0.0
    %3421 = vmatprep.subr.mxu0 0.0
    %3422 = vmatpush2.msra.mxu0 0.0
    %3423 = vmatprep.subr.mxu0 0.0
    %3424 = vmatpush2.msra.mxu0 0.0
    %3425 = vmatprep.subr.mxu0 0.0
    %3426 = vmatpush2.msra.mxu0 0.0
    %3427 = vmatprep.subr.mxu0 0.0
    %3428 = vmatpush2.msra.mxu0 0.0
    %3429 = vmatprep.subr.mxu0 0.0
    %3430 = vmatpush2.msra.mxu0 0.0
    %3431 = vmatprep.subr.mxu0 0.0
    %3432 = vmatpush2.msra.mxu0 0.0
    %3433 = vmatprep.subr.mxu0 0.0
    %3434 = vmatpush2.msra.mxu0 0.0
    %3435 = vmatprep.subr.mxu0 0.0
    %3436 = vmatpush2.msra.mxu0 0.0
    %3437 = vmatprep.subr.mxu0 0.0
    %3438 = vmatpush2.msra.mxu0 0.0
    %3439 = vmatprep.subr.mxu0 0.0
    %3440 = vmatpush2.msra.mxu0 0.0
    %3441 = vmatprep.subr.mxu0 0.0
    %3442 = vmatpush2.msra.mxu0 0.0
    %3443 = vmatprep.subr.mxu0 0.0
    %3444 = vmatpush2.msra.mxu0 0.0
    %3445 = vmatprep.mubr.f32.mxu0 0.0
    %3446 = vmatmul.mubr.f32.gmra.mxu0 %v3379
    %v3447 = vpop.f32.mrf.mxu0
    %v3448 = vadd.f32 %v914, %v3447
    %v3449 = vpop.f32.mrf.mxu0
    %3450 = vdwg.mxu0
    %v3451 = vmax.f32 %v3448, 0.0
    %vm3452 = vcmp.ne.f32.partialorder %v3448, %v3448
    %v3453 = vadd.f32 %v3448, 0.0
    %v3454 = vand.u32 2147483647, %v3448
    %v3455 = vsub.f32 0.0, %v3454
    %v3456 = vmul.f32 %v3455, 1.442695
    %v3457 = vpow.pop %v3456
    %v3458 = vadd.f32 %v3457, 1.0
    %v3459 = vlog2.pop %v3458
    %v3460 = vmul.f32 %v3459, 0.6931472
    %v3461 = vmul.f32 -0.5, %v3457
    %v3462 = vadd.f32 %v3461, 1.0
    %v3463 = vmul.f32 %v3462, %v3457
    %v3464 = vand.u32 2147483647, %v3457
    %vm3465 = vcmp.lt.f32.partialorder %v3464, 0.0004427343
    %v3466 = vsel %vm3465, %v3463, %v3460
    %v3467 = vadd.f32 %v3451, %v3466
    %v3468 = vsel %vm3452, %v3453, %v3467
    %s3469 = scalar_lea.vmem [#allocation9], 40
    %v3470 = vld [vmem:[%s3469] sm:$0xff]
    %3472 = vrot.lane.b32.xlu0 %v3468, 112
    %v3473 = vpop.permute.xlu0 %3472
    %v3475 = vmul.f32 %v3470, %v3473
    %v3476 = vadd.f32 %v3475, %v3448
    %v3477 = vld [vmem:[#allocation30] sm:$0xff]
    %v3478 = vld [vmem:[#allocation30 + $0x8] sm:$0xff]
    %v3480 = vsel %vm467, %v3476, 0
    %3482 = vmatprep.subr.mxu0 0.0
    %3483 = vmatpush1.msra.mxu0 0.0
    %3484 = vmatprep.subr.mxu0 0.0
    %3485 = vmatpush1.msra.mxu0 0.0
    %3486 = vmatprep.subr.mxu0 0.0
    %3487 = vmatpush1.msra.mxu0 0.0
    %3488 = vmatprep.subr.mxu0 0.0
    %3489 = vmatpush1.msra.mxu0 0.0
    %3490 = vmatprep.subr.mxu0 0.0
    %3491 = vmatpush1.msra.mxu0 0.0
    %3492 = vmatprep.subr.mxu0 0.0
    %3493 = vmatpush1.msra.mxu0 0.0
    %3494 = vmatprep.subr.mxu0 0.0
    %3495 = vmatpush1.msra.mxu0 0.0
    %3496 = vmatprep.subr.mxu0 0.0
    %3497 = vmatpush1.msra.mxu0 0.0
    %3498 = vmatprep.subr.mxu0 0.0
    %3499 = vmatpush1.msra.mxu0 0.0
    %3500 = vmatprep.subr.mxu0 0.0
    %3501 = vmatpush1.msra.mxu0 0.0
    %3502 = vmatprep.subr.mxu0 0.0
    %3503 = vmatpush1.msra.mxu0 0.0
    %3504 = vmatprep.subr.mxu0 0.0
    %3505 = vmatpush1.msra.mxu0 0.0
    %3506 = vmatprep.subr.mxu0 0.0
    %3507 = vmatpush1.msra.mxu0 0.0
    %3508 = vmatprep.subr.mxu0 0.0
    %3509 = vmatpush1.msra.mxu0 0.0
    %3510 = vmatprep.subr.mxu0 0.0
    %3511 = vmatpush1.msra.mxu0 %v3478
    %3512 = vmatprep.subr.mxu0 0.0
    %3513 = vmatpush1.msra.mxu0 %v3477
    %3514 = vmatprep.subr.mxu0 0.0
    %3515 = vmatpush2.msra.mxu0 0.0
    %3516 = vmatprep.subr.mxu0 0.0
    %3517 = vmatpush2.msra.mxu0 0.0
    %3518 = vmatprep.subr.mxu0 0.0
    %3519 = vmatpush2.msra.mxu0 0.0
    %3520 = vmatprep.subr.mxu0 0.0
    %3521 = vmatpush2.msra.mxu0 0.0
    %3522 = vmatprep.subr.mxu0 0.0
    %3523 = vmatpush2.msra.mxu0 0.0
    %3524 = vmatprep.subr.mxu0 0.0
    %3525 = vmatpush2.msra.mxu0 0.0
    %3526 = vmatprep.subr.mxu0 0.0
    %3527 = vmatpush2.msra.mxu0 0.0
    %3528 = vmatprep.subr.mxu0 0.0
    %3529 = vmatpush2.msra.mxu0 0.0
    %3530 = vmatprep.subr.mxu0 0.0
    %3531 = vmatpush2.msra.mxu0 0.0
    %3532 = vmatprep.subr.mxu0 0.0
    %3533 = vmatpush2.msra.mxu0 0.0
    %3534 = vmatprep.subr.mxu0 0.0
    %3535 = vmatpush2.msra.mxu0 0.0
    %3536 = vmatprep.subr.mxu0 0.0
    %3537 = vmatpush2.msra.mxu0 0.0
    %3538 = vmatprep.subr.mxu0 0.0
    %3539 = vmatpush2.msra.mxu0 0.0
    %3540 = vmatprep.subr.mxu0 0.0
    %3541 = vmatpush2.msra.mxu0 0.0
    %3542 = vmatprep.subr.mxu0 0.0
    %3543 = vmatpush2.msra.mxu0 0.0
    %3544 = vmatprep.subr.mxu0 0.0
    %3545 = vmatpush2.msra.mxu0 0.0
    %3546 = vmatprep.mubr.f32.mxu0 0.0
    %3547 = vmatmul.mubr.f32.gmra.mxu0 %v3480
    %v3548 = vpop.f32.mrf.mxu0
    %v3549 = vadd.f32 %v921, %v3548
    %v3550 = vpop.f32.mrf.mxu0
    %3551 = vdwg.mxu0
    %v3552 = vmax.f32 %v3549, 0.0
    %v3553 = vld [vmem:[#allocation33] sm:$0xff]
    %v3554 = vld [vmem:[#allocation33 + $0x8] sm:$0xff]
    %v3555 = vld [vmem:[#allocation33 + $0x10] sm:$0xff]
    %v3556 = vld [vmem:[#allocation33 + $0x18] sm:$0xff]
    %v3558 = vsel %vm616, %v3552, 0
    %3560 = vmatprep.subr.mxu0 0.0
    %3561 = vmatpush1.msra.mxu0 0.0
    %3562 = vmatprep.subr.mxu0 0.0
    %3563 = vmatpush1.msra.mxu0 0.0
    %3564 = vmatprep.subr.mxu0 0.0
    %3565 = vmatpush1.msra.mxu0 0.0
    %3566 = vmatprep.subr.mxu0 0.0
    %3567 = vmatpush1.msra.mxu0 0.0
    %3568 = vmatprep.subr.mxu0 0.0
    %3569 = vmatpush1.msra.mxu0 0.0
    %3570 = vmatprep.subr.mxu0 0.0
    %3571 = vmatpush1.msra.mxu0 0.0
    %3572 = vmatprep.subr.mxu0 0.0
    %3573 = vmatpush1.msra.mxu0 0.0
    %3574 = vmatprep.subr.mxu0 0.0
    %3575 = vmatpush1.msra.mxu0 0.0
    %3576 = vmatprep.subr.mxu0 0.0
    %3577 = vmatpush1.msra.mxu0 0.0
    %3578 = vmatprep.subr.mxu0 0.0
    %3579 = vmatpush1.msra.mxu0 0.0
    %3580 = vmatprep.subr.mxu0 0.0
    %3581 = vmatpush1.msra.mxu0 0.0
    %3582 = vmatprep.subr.mxu0 0.0
    %3583 = vmatpush1.msra.mxu0 0.0
    %3584 = vmatprep.subr.mxu0 0.0
    %3585 = vmatpush1.msra.mxu0 %v3556
    %3586 = vmatprep.subr.mxu0 0.0
    %3587 = vmatpush1.msra.mxu0 %v3555
    %3588 = vmatprep.subr.mxu0 0.0
    %3589 = vmatpush1.msra.mxu0 %v3554
    %3590 = vmatprep.subr.mxu0 0.0
    %3591 = vmatpush1.msra.mxu0 %v3553
    %3592 = vmatprep.subr.mxu0 0.0
    %3593 = vmatpush2.msra.mxu0 0.0
    %3594 = vmatprep.subr.mxu0 0.0
    %3595 = vmatpush2.msra.mxu0 0.0
    %3596 = vmatprep.subr.mxu0 0.0
    %3597 = vmatpush2.msra.mxu0 0.0
    %3598 = vmatprep.subr.mxu0 0.0
    %3599 = vmatpush2.msra.mxu0 0.0
    %3600 = vmatprep.subr.mxu0 0.0
    %3601 = vmatpush2.msra.mxu0 0.0
    %3602 = vmatprep.subr.mxu0 0.0
    %3603 = vmatpush2.msra.mxu0 0.0
    %3604 = vmatprep.subr.mxu0 0.0
    %3605 = vmatpush2.msra.mxu0 0.0
    %3606 = vmatprep.subr.mxu0 0.0
    %3607 = vmatpush2.msra.mxu0 0.0
    %3608 = vmatprep.subr.mxu0 0.0
    %3609 = vmatpush2.msra.mxu0 0.0
    %3610 = vmatprep.subr.mxu0 0.0
    %3611 = vmatpush2.msra.mxu0 0.0
    %3612 = vmatprep.subr.mxu0 0.0
    %3613 = vmatpush2.msra.mxu0 0.0
    %3614 = vmatprep.subr.mxu0 0.0
    %3615 = vmatpush2.msra.mxu0 0.0
    %3616 = vmatprep.subr.mxu0 0.0
    %3617 = vmatpush2.msra.mxu0 0.0
    %3618 = vmatprep.subr.mxu0 0.0
    %3619 = vmatpush2.msra.mxu0 0.0
    %3620 = vmatprep.subr.mxu0 0.0
    %3621 = vmatpush2.msra.mxu0 0.0
    %3622 = vmatprep.subr.mxu0 0.0
    %3623 = vmatpush2.msra.mxu0 0.0
    %3624 = vmatprep.mubr.f32.mxu0 0.0
    %3625 = vmatmul.mubr.f32.gmra.mxu0 %v3558
    %v3626 = vpop.f32.mrf.mxu0
    %v3627 = vadd.f32 0.0, %v3626
    %v3628 = vpop.f32.mrf.mxu0
    %3629 = vdwg.mxu0
    %3631 = vrot.lane.b32.xlu0 %v3627, 32
    %v3632 = vpop.permute.xlu0 %3631
    %v3634 = vadd.f32 %v3210, %v3632
    %v3635 = vadd.f32 %v3634, %v3292
    %v3636 = vxor.u32 %v3635, 2147483648
    %v3637 = vmul.f32 %v3636, 1.442695
    %v3638 = vpow.pop %v3637
    %v3639 = vadd.f32 %v3638, 1.0
    %v3640 = vrcp.pop %v3639
    %v3641 = vmul.f32 1.0, %v3640
    %3642 = vrot.lane.b32.xlu0 %v3287, 96
    %v3643 = vpop.permute.xlu0 %3642
    %v3645 = vmul.f32 %v3641, %v3643
    %3647 = vrot.lane.b32.xlu0 %v3645, 64
    %v3648 = vpop.permute.xlu0 %3647
    %v3650 = vadd.f32 %v3634, %v3648
    %v3651 = vtanh.pop %v3650
    %v3652 = vsub.f32 1.0, %v3641
    %3654 = vrot.lane.b32.xlu0 %v3651, 96
    %v3655 = vpop.permute.xlu0 %3654
    %v3657 = vmul.f32 %v3652, %v3655
    %v3658 = vmul.f32 %v3641, %v3201
    %v3659 = vadd.f32 %v3657, %v3658
    %s3660 = scalar_lea.vmem [#allocation3], 40
    %3661 = vst.msk [vmem:[%s3660] sm:$0xff] %vm616, %v3448
    %s3662 = scalar_lea.vmem [#allocation4], 40
    %3663 = vst.msk [vmem:[%s3662] sm:$0xff] %vm616, %v3552
    %s3665 = scalar_lea.vmem [#allocation5], 40
    %3666 = vst.msk [vmem:[%s3665] sm:$0xff] %vm616, %v3217
    %s3667 = scalar_lea.vmem [#allocation2], 48
    %v3668 = vld [vmem:[%s3667] sm:$0xff]
    %v3669 = vld [vmem:[#allocation23] sm:$0xff]
    %v3670 = vld [vmem:[#allocation23 + $0x8] sm:$0xff]
    %v3671 = vld [vmem:[#allocation23 + $0x10] sm:$0xff]
    %v3672 = vld [vmem:[#allocation23 + $0x18] sm:$0xff]
    %3674 = vrot.lane.b32.xlu0 %v3659, 64
    %v3675 = vpop.permute.xlu0 %3674
    %v3676 = vsel %vm616, %v3675, 0
    %3678 = vmatprep.subr.mxu0 0.0
    %3679 = vmatpush1.msra.mxu0 0.0
    %3680 = vmatprep.subr.mxu0 0.0
    %3681 = vmatpush1.msra.mxu0 0.0
    %3682 = vmatprep.subr.mxu0 0.0
    %3683 = vmatpush1.msra.mxu0 0.0
    %3684 = vmatprep.subr.mxu0 0.0
    %3685 = vmatpush1.msra.mxu0 0.0
    %3686 = vmatprep.subr.mxu0 0.0
    %3687 = vmatpush1.msra.mxu0 0.0
    %3688 = vmatprep.subr.mxu0 0.0
    %3689 = vmatpush1.msra.mxu0 0.0
    %3690 = vmatprep.subr.mxu0 0.0
    %3691 = vmatpush1.msra.mxu0 0.0
    %3692 = vmatprep.subr.mxu0 0.0
    %3693 = vmatpush1.msra.mxu0 0.0
    %3694 = vmatprep.subr.mxu0 0.0
    %3695 = vmatpush1.msra.mxu0 0.0
    %3696 = vmatprep.subr.mxu0 0.0
    %3697 = vmatpush1.msra.mxu0 0.0
    %3698 = vmatprep.subr.mxu0 0.0
    %3699 = vmatpush1.msra.mxu0 0.0
    %3700 = vmatprep.subr.mxu0 0.0
    %3701 = vmatpush1.msra.mxu0 0.0
    %3702 = vmatprep.subr.mxu0 0.0
    %3703 = vmatpush1.msra.mxu0 %v3672
    %3704 = vmatprep.subr.mxu0 0.0
    %3705 = vmatpush1.msra.mxu0 %v3671
    %3706 = vmatprep.subr.mxu0 0.0
    %3707 = vmatpush1.msra.mxu0 %v3670
    %3708 = vmatprep.subr.mxu0 0.0
    %3709 = vmatpush1.msra.mxu0 %v3669
    %3710 = vmatprep.subr.mxu0 0.0
    %3711 = vmatpush2.msra.mxu0 0.0
    %3712 = vmatprep.subr.mxu0 0.0
    %3713 = vmatpush2.msra.mxu0 0.0
    %3714 = vmatprep.subr.mxu0 0.0
    %3715 = vmatpush2.msra.mxu0 0.0
    %3716 = vmatprep.subr.mxu0 0.0
    %3717 = vmatpush2.msra.mxu0 0.0
    %3718 = vmatprep.subr.mxu0 0.0
    %3719 = vmatpush2.msra.mxu0 0.0
    %3720 = vmatprep.subr.mxu0 0.0
    %3721 = vmatpush2.msra.mxu0 0.0
    %3722 = vmatprep.subr.mxu0 0.0
    %3723 = vmatpush2.msra.mxu0 0.0
    %3724 = vmatprep.subr.mxu0 0.0
    %3725 = vmatpush2.msra.mxu0 0.0
    %3726 = vmatprep.subr.mxu0 0.0
    %3727 = vmatpush2.msra.mxu0 0.0
    %3728 = vmatprep.subr.mxu0 0.0
    %3729 = vmatpush2.msra.mxu0 0.0
    %3730 = vmatprep.subr.mxu0 0.0
    %3731 = vmatpush2.msra.mxu0 0.0
    %3732 = vmatprep.subr.mxu0 0.0
    %3733 = vmatpush2.msra.mxu0 0.0
    %3734 = vmatprep.subr.mxu0 0.0
    %3735 = vmatpush2.msra.mxu0 0.0
    %3736 = vmatprep.subr.mxu0 0.0
    %3737 = vmatpush2.msra.mxu0 0.0
    %3738 = vmatprep.subr.mxu0 0.0
    %3739 = vmatpush2.msra.mxu0 0.0
    %3740 = vmatprep.subr.mxu0 0.0
    %3741 = vmatpush2.msra.mxu0 0.0
    %3742 = vmatprep.mubr.f32.mxu0 0.0
    %3743 = vmatmul.mubr.f32.gmra.mxu0 %v3676
    %v3744 = vpop.f32.mrf.mxu0
    %v3745 = vadd.f32 0.0, %v3744
    %v3746 = vpop.f32.mrf.mxu0
    %3747 = vdwg.mxu0
    %3749 = vrot.lane.b32.xlu0 %v3745, 32
    %v3750 = vpop.permute.xlu0 %3749
    %v3752 = vadd.f32 %v3668, %v3750
    %v3753 = vmax.f32 %v3752, 0.0
    %v3754 = vld [vmem:[#allocation24] sm:$0xff]
    %v3755 = vld [vmem:[#allocation24 + $0x8] sm:$0xff]
    %v3756 = vld [vmem:[#allocation24 + $0x10] sm:$0xff]
    %v3757 = vld [vmem:[#allocation24 + $0x18] sm:$0xff]
    %v3759 = vsel %vm616, %v3753, 0
    %3761 = vmatprep.subr.mxu0 0.0
    %3762 = vmatpush1.msra.mxu0 0.0
    %3763 = vmatprep.subr.mxu0 0.0
    %3764 = vmatpush1.msra.mxu0 0.0
    %3765 = vmatprep.subr.mxu0 0.0
    %3766 = vmatpush1.msra.mxu0 0.0
    %3767 = vmatprep.subr.mxu0 0.0
    %3768 = vmatpush1.msra.mxu0 0.0
    %3769 = vmatprep.subr.mxu0 0.0
    %3770 = vmatpush1.msra.mxu0 0.0
    %3771 = vmatprep.subr.mxu0 0.0
    %3772 = vmatpush1.msra.mxu0 0.0
    %3773 = vmatprep.subr.mxu0 0.0
    %3774 = vmatpush1.msra.mxu0 0.0
    %3775 = vmatprep.subr.mxu0 0.0
    %3776 = vmatpush1.msra.mxu0 0.0
    %3777 = vmatprep.subr.mxu0 0.0
    %3778 = vmatpush1.msra.mxu0 0.0
    %3779 = vmatprep.subr.mxu0 0.0
    %3780 = vmatpush1.msra.mxu0 0.0
    %3781 = vmatprep.subr.mxu0 0.0
    %3782 = vmatpush1.msra.mxu0 0.0
    %3783 = vmatprep.subr.mxu0 0.0
    %3784 = vmatpush1.msra.mxu0 0.0
    %3785 = vmatprep.subr.mxu0 0.0
    %3786 = vmatpush1.msra.mxu0 %v3757
    %3787 = vmatprep.subr.mxu0 0.0
    %3788 = vmatpush1.msra.mxu0 %v3756
    %3789 = vmatprep.subr.mxu0 0.0
    %3790 = vmatpush1.msra.mxu0 %v3755
    %3791 = vmatprep.subr.mxu0 0.0
    %3792 = vmatpush1.msra.mxu0 %v3754
    %3793 = vmatprep.subr.mxu0 0.0
    %3794 = vmatpush2.msra.mxu0 0.0
    %3795 = vmatprep.subr.mxu0 0.0
    %3796 = vmatpush2.msra.mxu0 0.0
    %3797 = vmatprep.subr.mxu0 0.0
    %3798 = vmatpush2.msra.mxu0 0.0
    %3799 = vmatprep.subr.mxu0 0.0
    %3800 = vmatpush2.msra.mxu0 0.0
    %3801 = vmatprep.subr.mxu0 0.0
    %3802 = vmatpush2.msra.mxu0 0.0
    %3803 = vmatprep.subr.mxu0 0.0
    %3804 = vmatpush2.msra.mxu0 0.0
    %3805 = vmatprep.subr.mxu0 0.0
    %3806 = vmatpush2.msra.mxu0 0.0
    %3807 = vmatprep.subr.mxu0 0.0
    %3808 = vmatpush2.msra.mxu0 0.0
    %3809 = vmatprep.subr.mxu0 0.0
    %3810 = vmatpush2.msra.mxu0 0.0
    %3811 = vmatprep.subr.mxu0 0.0
    %3812 = vmatpush2.msra.mxu0 0.0
    %3813 = vmatprep.subr.mxu0 0.0
    %3814 = vmatpush2.msra.mxu0 0.0
    %3815 = vmatprep.subr.mxu0 0.0
    %3816 = vmatpush2.msra.mxu0 0.0
    %3817 = vmatprep.subr.mxu0 0.0
    %3818 = vmatpush2.msra.mxu0 0.0
    %3819 = vmatprep.subr.mxu0 0.0
    %3820 = vmatpush2.msra.mxu0 0.0
    %3821 = vmatprep.subr.mxu0 0.0
    %3822 = vmatpush2.msra.mxu0 0.0
    %3823 = vmatprep.subr.mxu0 0.0
    %3824 = vmatpush2.msra.mxu0 0.0
    %3825 = vmatprep.mubr.f32.mxu0 0.0
    %3826 = vmatmul.mubr.f32.gmra.mxu0 %v3759
    %v3827 = vpop.f32.mrf.mxu0
    %v3828 = vadd.f32 %v907, %v3827
    %v3829 = vpop.f32.mrf.mxu0
    %3830 = vdwg.mxu0
    %v3831 = vmax.f32 %v3828, 0.0
    %v3832 = vld [vmem:[#allocation27] sm:$0xff]
    %v3833 = vld [vmem:[#allocation27 + $0x8] sm:$0xff]
    %v3834 = vld [vmem:[#allocation27 + $0x10] sm:$0xff]
    %v3835 = vld [vmem:[#allocation27 + $0x18] sm:$0xff]
    %v3837 = vsel %vm616, %v3831, 0
    %3839 = vmatprep.subr.mxu0 0.0
    %3840 = vmatpush1.msra.mxu0 0.0
    %3841 = vmatprep.subr.mxu0 0.0
    %3842 = vmatpush1.msra.mxu0 0.0
    %3843 = vmatprep.subr.mxu0 0.0
    %3844 = vmatpush1.msra.mxu0 0.0
    %3845 = vmatprep.subr.mxu0 0.0
    %3846 = vmatpush1.msra.mxu0 0.0
    %3847 = vmatprep.subr.mxu0 0.0
    %3848 = vmatpush1.msra.mxu0 0.0
    %3849 = vmatprep.subr.mxu0 0.0
    %3850 = vmatpush1.msra.mxu0 0.0
    %3851 = vmatprep.subr.mxu0 0.0
    %3852 = vmatpush1.msra.mxu0 0.0
    %3853 = vmatprep.subr.mxu0 0.0
    %3854 = vmatpush1.msra.mxu0 0.0
    %3855 = vmatprep.subr.mxu0 0.0
    %3856 = vmatpush1.msra.mxu0 0.0
    %3857 = vmatprep.subr.mxu0 0.0
    %3858 = vmatpush1.msra.mxu0 0.0
    %3859 = vmatprep.subr.mxu0 0.0
    %3860 = vmatpush1.msra.mxu0 0.0
    %3861 = vmatprep.subr.mxu0 0.0
    %3862 = vmatpush1.msra.mxu0 0.0
    %3863 = vmatprep.subr.mxu0 0.0
    %3864 = vmatpush1.msra.mxu0 %v3835
    %3865 = vmatprep.subr.mxu0 0.0
    %3866 = vmatpush1.msra.mxu0 %v3834
    %3867 = vmatprep.subr.mxu0 0.0
    %3868 = vmatpush1.msra.mxu0 %v3833
    %3869 = vmatprep.subr.mxu0 0.0
    %3870 = vmatpush1.msra.mxu0 %v3832
    %3871 = vmatprep.subr.mxu0 0.0
    %3872 = vmatpush2.msra.mxu0 0.0
    %3873 = vmatprep.subr.mxu0 0.0
    %3874 = vmatpush2.msra.mxu0 0.0
    %3875 = vmatprep.subr.mxu0 0.0
    %3876 = vmatpush2.msra.mxu0 0.0
    %3877 = vmatprep.subr.mxu0 0.0
    %3878 = vmatpush2.msra.mxu0 0.0
    %3879 = vmatprep.subr.mxu0 0.0
    %3880 = vmatpush2.msra.mxu0 0.0
    %3881 = vmatprep.subr.mxu0 0.0
    %3882 = vmatpush2.msra.mxu0 0.0
    %3883 = vmatprep.subr.mxu0 0.0
    %3884 = vmatpush2.msra.mxu0 0.0
    %3885 = vmatprep.subr.mxu0 0.0
    %3886 = vmatpush2.msra.mxu0 0.0
    %3887 = vmatprep.subr.mxu0 0.0
    %3888 = vmatpush2.msra.mxu0 0.0
    %3889 = vmatprep.subr.mxu0 0.0
    %3890 = vmatpush2.msra.mxu0 0.0
    %3891 = vmatprep.subr.mxu0 0.0
    %3892 = vmatpush2.msra.mxu0 0.0
    %3893 = vmatprep.subr.mxu0 0.0
    %3894 = vmatpush2.msra.mxu0 0.0
    %3895 = vmatprep.subr.mxu0 0.0
    %3896 = vmatpush2.msra.mxu0 0.0
    %3897 = vmatprep.subr.mxu0 0.0
    %3898 = vmatpush2.msra.mxu0 0.0
    %3899 = vmatprep.subr.mxu0 0.0
    %3900 = vmatpush2.msra.mxu0 0.0
    %3901 = vmatprep.subr.mxu0 0.0
    %3902 = vmatpush2.msra.mxu0 0.0
    %3903 = vmatprep.mubr.f32.mxu0 0.0
    %3904 = vmatmul.mubr.f32.gmra.mxu0 %v3837
    %v3905 = vpop.f32.mrf.mxu0
    %v3906 = vadd.f32 %v914, %v3905
    %v3907 = vpop.f32.mrf.mxu0
    %3908 = vdwg.mxu0
    %v3909 = vmax.f32 %v3906, 0.0
    %vm3910 = vcmp.ne.f32.partialorder %v3906, %v3906
    %v3911 = vadd.f32 %v3906, 0.0
    %v3912 = vand.u32 2147483647, %v3906
    %v3913 = vsub.f32 0.0, %v3912
    %v3914 = vmul.f32 %v3913, 1.442695
    %v3915 = vpow.pop %v3914
    %v3916 = vadd.f32 %v3915, 1.0
    %v3917 = vlog2.pop %v3916
    %v3918 = vmul.f32 %v3917, 0.6931472
    %v3919 = vmul.f32 -0.5, %v3915
    %v3920 = vadd.f32 %v3919, 1.0
    %v3921 = vmul.f32 %v3920, %v3915
    %v3922 = vand.u32 2147483647, %v3915
    %vm3923 = vcmp.lt.f32.partialorder %v3922, 0.0004427343
    %v3924 = vsel %vm3923, %v3921, %v3918
    %v3925 = vadd.f32 %v3909, %v3924
    %v3926 = vsel %vm3910, %v3911, %v3925
    %s3927 = scalar_lea.vmem [#allocation9], 48
    %v3928 = vld [vmem:[%s3927] sm:$0xff]
    %3930 = vrot.lane.b32.xlu0 %v3926, 112
    %v3931 = vpop.permute.xlu0 %3930
    %v3933 = vmul.f32 %v3928, %v3931
    %v3934 = vadd.f32 %v3933, %v3906
    %v3935 = vld [vmem:[#allocation30] sm:$0xff]
    %v3936 = vld [vmem:[#allocation30 + $0x8] sm:$0xff]
    %v3938 = vsel %vm467, %v3934, 0
    %3940 = vmatprep.subr.mxu0 0.0
    %3941 = vmatpush1.msra.mxu0 0.0
    %3942 = vmatprep.subr.mxu0 0.0
    %3943 = vmatpush1.msra.mxu0 0.0
    %3944 = vmatprep.subr.mxu0 0.0
    %3945 = vmatpush1.msra.mxu0 0.0
    %3946 = vmatprep.subr.mxu0 0.0
    %3947 = vmatpush1.msra.mxu0 0.0
    %3948 = vmatprep.subr.mxu0 0.0
    %3949 = vmatpush1.msra.mxu0 0.0
    %3950 = vmatprep.subr.mxu0 0.0
    %3951 = vmatpush1.msra.mxu0 0.0
    %3952 = vmatprep.subr.mxu0 0.0
    %3953 = vmatpush1.msra.mxu0 0.0
    %3954 = vmatprep.subr.mxu0 0.0
    %3955 = vmatpush1.msra.mxu0 0.0
    %3956 = vmatprep.subr.mxu0 0.0
    %3957 = vmatpush1.msra.mxu0 0.0
    %3958 = vmatprep.subr.mxu0 0.0
    %3959 = vmatpush1.msra.mxu0 0.0
    %3960 = vmatprep.subr.mxu0 0.0
    %3961 = vmatpush1.msra.mxu0 0.0
    %3962 = vmatprep.subr.mxu0 0.0
    %3963 = vmatpush1.msra.mxu0 0.0
    %3964 = vmatprep.subr.mxu0 0.0
    %3965 = vmatpush1.msra.mxu0 0.0
    %3966 = vmatprep.subr.mxu0 0.0
    %3967 = vmatpush1.msra.mxu0 0.0
    %3968 = vmatprep.subr.mxu0 0.0
    %3969 = vmatpush1.msra.mxu0 %v3936
    %3970 = vmatprep.subr.mxu0 0.0
    %3971 = vmatpush1.msra.mxu0 %v3935
    %3972 = vmatprep.subr.mxu0 0.0
    %3973 = vmatpush2.msra.mxu0 0.0
    %3974 = vmatprep.subr.mxu0 0.0
    %3975 = vmatpush2.msra.mxu0 0.0
    %3976 = vmatprep.subr.mxu0 0.0
    %3977 = vmatpush2.msra.mxu0 0.0
    %3978 = vmatprep.subr.mxu0 0.0
    %3979 = vmatpush2.msra.mxu0 0.0
    %3980 = vmatprep.subr.mxu0 0.0
    %3981 = vmatpush2.msra.mxu0 0.0
    %3982 = vmatprep.subr.mxu0 0.0
    %3983 = vmatpush2.msra.mxu0 0.0
    %3984 = vmatprep.subr.mxu0 0.0
    %3985 = vmatpush2.msra.mxu0 0.0
    %3986 = vmatprep.subr.mxu0 0.0
    %3987 = vmatpush2.msra.mxu0 0.0
    %3988 = vmatprep.subr.mxu0 0.0
    %3989 = vmatpush2.msra.mxu0 0.0
    %3990 = vmatprep.subr.mxu0 0.0
    %3991 = vmatpush2.msra.mxu0 0.0
    %3992 = vmatprep.subr.mxu0 0.0
    %3993 = vmatpush2.msra.mxu0 0.0
    %3994 = vmatprep.subr.mxu0 0.0
    %3995 = vmatpush2.msra.mxu0 0.0
    %3996 = vmatprep.subr.mxu0 0.0
    %3997 = vmatpush2.msra.mxu0 0.0
    %3998 = vmatprep.subr.mxu0 0.0
    %3999 = vmatpush2.msra.mxu0 0.0
    %4000 = vmatprep.subr.mxu0 0.0
    %4001 = vmatpush2.msra.mxu0 0.0
    %4002 = vmatprep.subr.mxu0 0.0
    %4003 = vmatpush2.msra.mxu0 0.0
    %4004 = vmatprep.mubr.f32.mxu0 0.0
    %4005 = vmatmul.mubr.f32.gmra.mxu0 %v3938
    %v4006 = vpop.f32.mrf.mxu0
    %v4007 = vadd.f32 %v921, %v4006
    %v4008 = vpop.f32.mrf.mxu0
    %4009 = vdwg.mxu0
    %v4010 = vmax.f32 %v4007, 0.0
    %v4011 = vld [vmem:[#allocation33] sm:$0xff]
    %v4012 = vld [vmem:[#allocation33 + $0x8] sm:$0xff]
    %v4013 = vld [vmem:[#allocation33 + $0x10] sm:$0xff]
    %v4014 = vld [vmem:[#allocation33 + $0x18] sm:$0xff]
    %v4016 = vsel %vm616, %v4010, 0
    %4018 = vmatprep.subr.mxu0 0.0
    %4019 = vmatpush1.msra.mxu0 0.0
    %4020 = vmatprep.subr.mxu0 0.0
    %4021 = vmatpush1.msra.mxu0 0.0
    %4022 = vmatprep.subr.mxu0 0.0
    %4023 = vmatpush1.msra.mxu0 0.0
    %4024 = vmatprep.subr.mxu0 0.0
    %4025 = vmatpush1.msra.mxu0 0.0
    %4026 = vmatprep.subr.mxu0 0.0
    %4027 = vmatpush1.msra.mxu0 0.0
    %4028 = vmatprep.subr.mxu0 0.0
    %4029 = vmatpush1.msra.mxu0 0.0
    %4030 = vmatprep.subr.mxu0 0.0
    %4031 = vmatpush1.msra.mxu0 0.0
    %4032 = vmatprep.subr.mxu0 0.0
    %4033 = vmatpush1.msra.mxu0 0.0
    %4034 = vmatprep.subr.mxu0 0.0
    %4035 = vmatpush1.msra.mxu0 0.0
    %4036 = vmatprep.subr.mxu0 0.0
    %4037 = vmatpush1.msra.mxu0 0.0
    %4038 = vmatprep.subr.mxu0 0.0
    %4039 = vmatpush1.msra.mxu0 0.0
    %4040 = vmatprep.subr.mxu0 0.0
    %4041 = vmatpush1.msra.mxu0 0.0
    %4042 = vmatprep.subr.mxu0 0.0
    %4043 = vmatpush1.msra.mxu0 %v4014
    %4044 = vmatprep.subr.mxu0 0.0
    %4045 = vmatpush1.msra.mxu0 %v4013
    %4046 = vmatprep.subr.mxu0 0.0
    %4047 = vmatpush1.msra.mxu0 %v4012
    %4048 = vmatprep.subr.mxu0 0.0
    %4049 = vmatpush1.msra.mxu0 %v4011
    %4050 = vmatprep.subr.mxu0 0.0
    %4051 = vmatpush2.msra.mxu0 0.0
    %4052 = vmatprep.subr.mxu0 0.0
    %4053 = vmatpush2.msra.mxu0 0.0
    %4054 = vmatprep.subr.mxu0 0.0
    %4055 = vmatpush2.msra.mxu0 0.0
    %4056 = vmatprep.subr.mxu0 0.0
    %4057 = vmatpush2.msra.mxu0 0.0
    %4058 = vmatprep.subr.mxu0 0.0
    %4059 = vmatpush2.msra.mxu0 0.0
    %4060 = vmatprep.subr.mxu0 0.0
    %4061 = vmatpush2.msra.mxu0 0.0
    %4062 = vmatprep.subr.mxu0 0.0
    %4063 = vmatpush2.msra.mxu0 0.0
    %4064 = vmatprep.subr.mxu0 0.0
    %4065 = vmatpush2.msra.mxu0 0.0
    %4066 = vmatprep.subr.mxu0 0.0
    %4067 = vmatpush2.msra.mxu0 0.0
    %4068 = vmatprep.subr.mxu0 0.0
    %4069 = vmatpush2.msra.mxu0 0.0
    %4070 = vmatprep.subr.mxu0 0.0
    %4071 = vmatpush2.msra.mxu0 0.0
    %4072 = vmatprep.subr.mxu0 0.0
    %4073 = vmatpush2.msra.mxu0 0.0
    %4074 = vmatprep.subr.mxu0 0.0
    %4075 = vmatpush2.msra.mxu0 0.0
    %4076 = vmatprep.subr.mxu0 0.0
    %4077 = vmatpush2.msra.mxu0 0.0
    %4078 = vmatprep.subr.mxu0 0.0
    %4079 = vmatpush2.msra.mxu0 0.0
    %4080 = vmatprep.subr.mxu0 0.0
    %4081 = vmatpush2.msra.mxu0 0.0
    %4082 = vmatprep.mubr.f32.mxu0 0.0
    %4083 = vmatmul.mubr.f32.gmra.mxu0 %v4016
    %v4084 = vpop.f32.mrf.mxu0
    %v4085 = vadd.f32 0.0, %v4084
    %v4086 = vpop.f32.mrf.mxu0
    %4087 = vdwg.mxu0
    %4089 = vrot.lane.b32.xlu0 %v4085, 32
    %v4090 = vpop.permute.xlu0 %4089
    %v4092 = vadd.f32 %v3668, %v4090
    %v4093 = vadd.f32 %v4092, %v3750
    %v4094 = vxor.u32 %v4093, 2147483648
    %v4095 = vmul.f32 %v4094, 1.442695
    %v4096 = vpow.pop %v4095
    %v4097 = vadd.f32 %v4096, 1.0
    %v4098 = vrcp.pop %v4097
    %v4099 = vmul.f32 1.0, %v4098
    %4100 = vrot.lane.b32.xlu0 %v3745, 96
    %v4101 = vpop.permute.xlu0 %4100
    %v4103 = vmul.f32 %v4099, %v4101
    %4105 = vrot.lane.b32.xlu0 %v4103, 64
    %v4106 = vpop.permute.xlu0 %4105
    %v4108 = vadd.f32 %v4092, %v4106
    %v4109 = vtanh.pop %v4108
    %v4110 = vsub.f32 1.0, %v4099
    %4112 = vrot.lane.b32.xlu0 %v4109, 96
    %v4113 = vpop.permute.xlu0 %4112
    %v4115 = vmul.f32 %v4110, %v4113
    %v4116 = vmul.f32 %v4099, %v3659
    %v4117 = vadd.f32 %v4115, %v4116
    %s4118 = scalar_lea.vmem [#allocation3], 48
    %4119 = vst.msk [vmem:[%s4118] sm:$0xff] %vm616, %v3906
    %s4120 = scalar_lea.vmem [#allocation4], 48
    %4121 = vst.msk [vmem:[%s4120] sm:$0xff] %vm616, %v4010
    %s4123 = scalar_lea.vmem [#allocation5], 48
    %4124 = vst.msk [vmem:[%s4123] sm:$0xff] %vm616, %v3675
    %s4125 = scalar_lea.vmem [#allocation2], 56
    %v4126 = vld [vmem:[%s4125] sm:$0xff]
    %v4127 = vld [vmem:[#allocation23] sm:$0xff]
    %v4128 = vld [vmem:[#allocation23 + $0x8] sm:$0xff]
    %v4129 = vld [vmem:[#allocation23 + $0x10] sm:$0xff]
    %v4130 = vld [vmem:[#allocation23 + $0x18] sm:$0xff]
    %4132 = vrot.lane.b32.xlu0 %v4117, 64
    %v4133 = vpop.permute.xlu0 %4132
    %v4134 = vsel %vm616, %v4133, 0
    %4136 = vmatprep.subr.mxu0 0.0
    %4137 = vmatpush1.msra.mxu0 0.0
    %4138 = vmatprep.subr.mxu0 0.0
    %4139 = vmatpush1.msra.mxu0 0.0
    %4140 = vmatprep.subr.mxu0 0.0
    %4141 = vmatpush1.msra.mxu0 0.0
    %4142 = vmatprep.subr.mxu0 0.0
    %4143 = vmatpush1.msra.mxu0 0.0
    %4144 = vmatprep.subr.mxu0 0.0
    %4145 = vmatpush1.msra.mxu0 0.0
    %4146 = vmatprep.subr.mxu0 0.0
    %4147 = vmatpush1.msra.mxu0 0.0
    %4148 = vmatprep.subr.mxu0 0.0
    %4149 = vmatpush1.msra.mxu0 0.0
    %4150 = vmatprep.subr.mxu0 0.0
    %4151 = vmatpush1.msra.mxu0 0.0
    %4152 = vmatprep.subr.mxu0 0.0
    %4153 = vmatpush1.msra.mxu0 0.0
    %4154 = vmatprep.subr.mxu0 0.0
    %4155 = vmatpush1.msra.mxu0 0.0
    %4156 = vmatprep.subr.mxu0 0.0
    %4157 = vmatpush1.msra.mxu0 0.0
    %4158 = vmatprep.subr.mxu0 0.0
    %4159 = vmatpush1.msra.mxu0 0.0
    %4160 = vmatprep.subr.mxu0 0.0
    %4161 = vmatpush1.msra.mxu0 %v4130
    %4162 = vmatprep.subr.mxu0 0.0
    %4163 = vmatpush1.msra.mxu0 %v4129
    %4164 = vmatprep.subr.mxu0 0.0
    %4165 = vmatpush1.msra.mxu0 %v4128
    %4166 = vmatprep.subr.mxu0 0.0
    %4167 = vmatpush1.msra.mxu0 %v4127
    %4168 = vmatprep.subr.mxu0 0.0
    %4169 = vmatpush2.msra.mxu0 0.0
    %4170 = vmatprep.subr.mxu0 0.0
    %4171 = vmatpush2.msra.mxu0 0.0
    %4172 = vmatprep.subr.mxu0 0.0
    %4173 = vmatpush2.msra.mxu0 0.0
    %4174 = vmatprep.subr.mxu0 0.0
    %4175 = vmatpush2.msra.mxu0 0.0
    %4176 = vmatprep.subr.mxu0 0.0
    %4177 = vmatpush2.msra.mxu0 0.0
    %4178 = vmatprep.subr.mxu0 0.0
    %4179 = vmatpush2.msra.mxu0 0.0
    %4180 = vmatprep.subr.mxu0 0.0
    %4181 = vmatpush2.msra.mxu0 0.0
    %4182 = vmatprep.subr.mxu0 0.0
    %4183 = vmatpush2.msra.mxu0 0.0
    %4184 = vmatprep.subr.mxu0 0.0
    %4185 = vmatpush2.msra.mxu0 0.0
    %4186 = vmatprep.subr.mxu0 0.0
    %4187 = vmatpush2.msra.mxu0 0.0
    %4188 = vmatprep.subr.mxu0 0.0
    %4189 = vmatpush2.msra.mxu0 0.0
    %4190 = vmatprep.subr.mxu0 0.0
    %4191 = vmatpush2.msra.mxu0 0.0
    %4192 = vmatprep.subr.mxu0 0.0
    %4193 = vmatpush2.msra.mxu0 0.0
    %4194 = vmatprep.subr.mxu0 0.0
    %4195 = vmatpush2.msra.mxu0 0.0
    %4196 = vmatprep.subr.mxu0 0.0
    %4197 = vmatpush2.msra.mxu0 0.0
    %4198 = vmatprep.subr.mxu0 0.0
    %4199 = vmatpush2.msra.mxu0 0.0
    %4200 = vmatprep.mubr.f32.mxu0 0.0
    %4201 = vmatmul.mubr.f32.gmra.mxu0 %v4134
    %v4202 = vpop.f32.mrf.mxu0
    %v4203 = vadd.f32 0.0, %v4202
    %v4204 = vpop.f32.mrf.mxu0
    %4205 = vdwg.mxu0
    %4207 = vrot.lane.b32.xlu0 %v4203, 32
    %v4208 = vpop.permute.xlu0 %4207
    %v4210 = vadd.f32 %v4126, %v4208
    %v4211 = vmax.f32 %v4210, 0.0
    %v4212 = vld [vmem:[#allocation24] sm:$0xff]
    %v4213 = vld [vmem:[#allocation24 + $0x8] sm:$0xff]
    %v4214 = vld [vmem:[#allocation24 + $0x10] sm:$0xff]
    %v4215 = vld [vmem:[#allocation24 + $0x18] sm:$0xff]
    %v4217 = vsel %vm616, %v4211, 0
    %4219 = vmatprep.subr.mxu0 0.0
    %4220 = vmatpush1.msra.mxu0 0.0
    %4221 = vmatprep.subr.mxu0 0.0
    %4222 = vmatpush1.msra.mxu0 0.0
    %4223 = vmatprep.subr.mxu0 0.0
    %4224 = vmatpush1.msra.mxu0 0.0
    %4225 = vmatprep.subr.mxu0 0.0
    %4226 = vmatpush1.msra.mxu0 0.0
    %4227 = vmatprep.subr.mxu0 0.0
    %4228 = vmatpush1.msra.mxu0 0.0
    %4229 = vmatprep.subr.mxu0 0.0
    %4230 = vmatpush1.msra.mxu0 0.0
    %4231 = vmatprep.subr.mxu0 0.0
    %4232 = vmatpush1.msra.mxu0 0.0
    %4233 = vmatprep.subr.mxu0 0.0
    %4234 = vmatpush1.msra.mxu0 0.0
    %4235 = vmatprep.subr.mxu0 0.0
    %4236 = vmatpush1.msra.mxu0 0.0
    %4237 = vmatprep.subr.mxu0 0.0
    %4238 = vmatpush1.msra.mxu0 0.0
    %4239 = vmatprep.subr.mxu0 0.0
    %4240 = vmatpush1.msra.mxu0 0.0
    %4241 = vmatprep.subr.mxu0 0.0
    %4242 = vmatpush1.msra.mxu0 0.0
    %4243 = vmatprep.subr.mxu0 0.0
    %4244 = vmatpush1.msra.mxu0 %v4215
    %4245 = vmatprep.subr.mxu0 0.0
    %4246 = vmatpush1.msra.mxu0 %v4214
    %4247 = vmatprep.subr.mxu0 0.0
    %4248 = vmatpush1.msra.mxu0 %v4213
    %4249 = vmatprep.subr.mxu0 0.0
    %4250 = vmatpush1.msra.mxu0 %v4212
    %4251 = vmatprep.subr.mxu0 0.0
    %4252 = vmatpush2.msra.mxu0 0.0
    %4253 = vmatprep.subr.mxu0 0.0
    %4254 = vmatpush2.msra.mxu0 0.0
    %4255 = vmatprep.subr.mxu0 0.0
    %4256 = vmatpush2.msra.mxu0 0.0
    %4257 = vmatprep.subr.mxu0 0.0
    %4258 = vmatpush2.msra.mxu0 0.0
    %4259 = vmatprep.subr.mxu0 0.0
    %4260 = vmatpush2.msra.mxu0 0.0
    %4261 = vmatprep.subr.mxu0 0.0
    %4262 = vmatpush2.msra.mxu0 0.0
    %4263 = vmatprep.subr.mxu0 0.0
    %4264 = vmatpush2.msra.mxu0 0.0
    %4265 = vmatprep.subr.mxu0 0.0
    %4266 = vmatpush2.msra.mxu0 0.0
    %4267 = vmatprep.subr.mxu0 0.0
    %4268 = vmatpush2.msra.mxu0 0.0
    %4269 = vmatprep.subr.mxu0 0.0
    %4270 = vmatpush2.msra.mxu0 0.0
    %4271 = vmatprep.subr.mxu0 0.0
    %4272 = vmatpush2.msra.mxu0 0.0
    %4273 = vmatprep.subr.mxu0 0.0
    %4274 = vmatpush2.msra.mxu0 0.0
    %4275 = vmatprep.subr.mxu0 0.0
    %4276 = vmatpush2.msra.mxu0 0.0
    %4277 = vmatprep.subr.mxu0 0.0
    %4278 = vmatpush2.msra.mxu0 0.0
    %4279 = vmatprep.subr.mxu0 0.0
    %4280 = vmatpush2.msra.mxu0 0.0
    %4281 = vmatprep.subr.mxu0 0.0
    %4282 = vmatpush2.msra.mxu0 0.0
    %4283 = vmatprep.mubr.f32.mxu0 0.0
    %4284 = vmatmul.mubr.f32.gmra.mxu0 %v4217
    %v4285 = vpop.f32.mrf.mxu0
    %v4286 = vadd.f32 %v907, %v4285
    %v4287 = vpop.f32.mrf.mxu0
    %4288 = vdwg.mxu0
    %v4289 = vmax.f32 %v4286, 0.0
    %v4290 = vld [vmem:[#allocation27] sm:$0xff]
    %v4291 = vld [vmem:[#allocation27 + $0x8] sm:$0xff]
    %v4292 = vld [vmem:[#allocation27 + $0x10] sm:$0xff]
    %v4293 = vld [vmem:[#allocation27 + $0x18] sm:$0xff]
    %v4295 = vsel %vm616, %v4289, 0
    %4297 = vmatprep.subr.mxu0 0.0
    %4298 = vmatpush1.msra.mxu0 0.0
    %4299 = vmatprep.subr.mxu0 0.0
    %4300 = vmatpush1.msra.mxu0 0.0
    %4301 = vmatprep.subr.mxu0 0.0
    %4302 = vmatpush1.msra.mxu0 0.0
    %4303 = vmatprep.subr.mxu0 0.0
    %4304 = vmatpush1.msra.mxu0 0.0
    %4305 = vmatprep.subr.mxu0 0.0
    %4306 = vmatpush1.msra.mxu0 0.0
    %4307 = vmatprep.subr.mxu0 0.0
    %4308 = vmatpush1.msra.mxu0 0.0
    %4309 = vmatprep.subr.mxu0 0.0
    %4310 = vmatpush1.msra.mxu0 0.0
    %4311 = vmatprep.subr.mxu0 0.0
    %4312 = vmatpush1.msra.mxu0 0.0
    %4313 = vmatprep.subr.mxu0 0.0
    %4314 = vmatpush1.msra.mxu0 0.0
    %4315 = vmatprep.subr.mxu0 0.0
    %4316 = vmatpush1.msra.mxu0 0.0
    %4317 = vmatprep.subr.mxu0 0.0
    %4318 = vmatpush1.msra.mxu0 0.0
    %4319 = vmatprep.subr.mxu0 0.0
    %4320 = vmatpush1.msra.mxu0 0.0
    %4321 = vmatprep.subr.mxu0 0.0
    %4322 = vmatpush1.msra.mxu0 %v4293
    %4323 = vmatprep.subr.mxu0 0.0
    %4324 = vmatpush1.msra.mxu0 %v4292
    %4325 = vmatprep.subr.mxu0 0.0
    %4326 = vmatpush1.msra.mxu0 %v4291
    %4327 = vmatprep.subr.mxu0 0.0
    %4328 = vmatpush1.msra.mxu0 %v4290
    %4329 = vmatprep.subr.mxu0 0.0
    %4330 = vmatpush2.msra.mxu0 0.0
    %4331 = vmatprep.subr.mxu0 0.0
    %4332 = vmatpush2.msra.mxu0 0.0
    %4333 = vmatprep.subr.mxu0 0.0
    %4334 = vmatpush2.msra.mxu0 0.0
    %4335 = vmatprep.subr.mxu0 0.0
    %4336 = vmatpush2.msra.mxu0 0.0
    %4337 = vmatprep.subr.mxu0 0.0
    %4338 = vmatpush2.msra.mxu0 0.0
    %4339 = vmatprep.subr.mxu0 0.0
    %4340 = vmatpush2.msra.mxu0 0.0
    %4341 = vmatprep.subr.mxu0 0.0
    %4342 = vmatpush2.msra.mxu0 0.0
    %4343 = vmatprep.subr.mxu0 0.0
    %4344 = vmatpush2.msra.mxu0 0.0
    %4345 = vmatprep.subr.mxu0 0.0
    %4346 = vmatpush2.msra.mxu0 0.0
    %4347 = vmatprep.subr.mxu0 0.0
    %4348 = vmatpush2.msra.mxu0 0.0
    %4349 = vmatprep.subr.mxu0 0.0
    %4350 = vmatpush2.msra.mxu0 0.0
    %4351 = vmatprep.subr.mxu0 0.0
    %4352 = vmatpush2.msra.mxu0 0.0
    %4353 = vmatprep.subr.mxu0 0.0
    %4354 = vmatpush2.msra.mxu0 0.0
    %4355 = vmatprep.subr.mxu0 0.0
    %4356 = vmatpush2.msra.mxu0 0.0
    %4357 = vmatprep.subr.mxu0 0.0
    %4358 = vmatpush2.msra.mxu0 0.0
    %4359 = vmatprep.subr.mxu0 0.0
    %4360 = vmatpush2.msra.mxu0 0.0
    %4361 = vmatprep.mubr.f32.mxu0 0.0
    %4362 = vmatmul.mubr.f32.gmra.mxu0 %v4295
    %v4363 = vpop.f32.mrf.mxu0
    %v4364 = vadd.f32 %v914, %v4363
    %v4365 = vpop.f32.mrf.mxu0
    %4366 = vdwg.mxu0
    %v4367 = vmax.f32 %v4364, 0.0
    %vm4368 = vcmp.ne.f32.partialorder %v4364, %v4364
    %v4369 = vadd.f32 %v4364, 0.0
    %v4370 = vand.u32 2147483647, %v4364
    %v4371 = vsub.f32 0.0, %v4370
    %v4372 = vmul.f32 %v4371, 1.442695
    %v4373 = vpow.pop %v4372
    %v4374 = vadd.f32 %v4373, 1.0
    %v4375 = vlog2.pop %v4374
    %v4376 = vmul.f32 %v4375, 0.6931472
    %v4377 = vmul.f32 -0.5, %v4373
    %v4378 = vadd.f32 %v4377, 1.0
    %v4379 = vmul.f32 %v4378, %v4373
    %v4380 = vand.u32 2147483647, %v4373
    %vm4381 = vcmp.lt.f32.partialorder %v4380, 0.0004427343
    %v4382 = vsel %vm4381, %v4379, %v4376
    %v4383 = vadd.f32 %v4367, %v4382
    %v4384 = vsel %vm4368, %v4369, %v4383
    %s4385 = scalar_lea.vmem [#allocation9], 56
    %v4386 = vld [vmem:[%s4385] sm:$0xff]
    %4388 = vrot.lane.b32.xlu0 %v4384, 112
    %v4389 = vpop.permute.xlu0 %4388
    %v4391 = vmul.f32 %v4386, %v4389
    %v4392 = vadd.f32 %v4391, %v4364
    %v4393 = vld [vmem:[#allocation30] sm:$0xff]
    %v4394 = vld [vmem:[#allocation30 + $0x8] sm:$0xff]
    %v4396 = vsel %vm467, %v4392, 0
    %4398 = vmatprep.subr.mxu0 0.0
    %4399 = vmatpush1.msra.mxu0 0.0
    %4400 = vmatprep.subr.mxu0 0.0
    %4401 = vmatpush1.msra.mxu0 0.0
    %4402 = vmatprep.subr.mxu0 0.0
    %4403 = vmatpush1.msra.mxu0 0.0
    %4404 = vmatprep.subr.mxu0 0.0
    %4405 = vmatpush1.msra.mxu0 0.0
    %4406 = vmatprep.subr.mxu0 0.0
    %4407 = vmatpush1.msra.mxu0 0.0
    %4408 = vmatprep.subr.mxu0 0.0
    %4409 = vmatpush1.msra.mxu0 0.0
    %4410 = vmatprep.subr.mxu0 0.0
    %4411 = vmatpush1.msra.mxu0 0.0
    %4412 = vmatprep.subr.mxu0 0.0
    %4413 = vmatpush1.msra.mxu0 0.0
    %4414 = vmatprep.subr.mxu0 0.0
    %4415 = vmatpush1.msra.mxu0 0.0
    %4416 = vmatprep.subr.mxu0 0.0
    %4417 = vmatpush1.msra.mxu0 0.0
    %4418 = vmatprep.subr.mxu0 0.0
    %4419 = vmatpush1.msra.mxu0 0.0
    %4420 = vmatprep.subr.mxu0 0.0
    %4421 = vmatpush1.msra.mxu0 0.0
    %4422 = vmatprep.subr.mxu0 0.0
    %4423 = vmatpush1.msra.mxu0 0.0
    %4424 = vmatprep.subr.mxu0 0.0
    %4425 = vmatpush1.msra.mxu0 0.0
    %4426 = vmatprep.subr.mxu0 0.0
    %4427 = vmatpush1.msra.mxu0 %v4394
    %4428 = vmatprep.subr.mxu0 0.0
    %4429 = vmatpush1.msra.mxu0 %v4393
    %4430 = vmatprep.subr.mxu0 0.0
    %4431 = vmatpush2.msra.mxu0 0.0
    %4432 = vmatprep.subr.mxu0 0.0
    %4433 = vmatpush2.msra.mxu0 0.0
    %4434 = vmatprep.subr.mxu0 0.0
    %4435 = vmatpush2.msra.mxu0 0.0
    %4436 = vmatprep.subr.mxu0 0.0
    %4437 = vmatpush2.msra.mxu0 0.0
    %4438 = vmatprep.subr.mxu0 0.0
    %4439 = vmatpush2.msra.mxu0 0.0
    %4440 = vmatprep.subr.mxu0 0.0
    %4441 = vmatpush2.msra.mxu0 0.0
    %4442 = vmatprep.subr.mxu0 0.0
    %4443 = vmatpush2.msra.mxu0 0.0
    %4444 = vmatprep.subr.mxu0 0.0
    %4445 = vmatpush2.msra.mxu0 0.0
    %4446 = vmatprep.subr.mxu0 0.0
    %4447 = vmatpush2.msra.mxu0 0.0
    %4448 = vmatprep.subr.mxu0 0.0
    %4449 = vmatpush2.msra.mxu0 0.0
    %4450 = vmatprep.subr.mxu0 0.0
    %4451 = vmatpush2.msra.mxu0 0.0
    %4452 = vmatprep.subr.mxu0 0.0
    %4453 = vmatpush2.msra.mxu0 0.0
    %4454 = vmatprep.subr.mxu0 0.0
    %4455 = vmatpush2.msra.mxu0 0.0
    %4456 = vmatprep.subr.mxu0 0.0
    %4457 = vmatpush2.msra.mxu0 0.0
    %4458 = vmatprep.subr.mxu0 0.0
    %4459 = vmatpush2.msra.mxu0 0.0
    %4460 = vmatprep.subr.mxu0 0.0
    %4461 = vmatpush2.msra.mxu0 0.0
    %4462 = vmatprep.mubr.f32.mxu0 0.0
    %4463 = vmatmul.mubr.f32.gmra.mxu0 %v4396
    %v4464 = vpop.f32.mrf.mxu0
    %v4465 = vadd.f32 %v921, %v4464
    %v4466 = vpop.f32.mrf.mxu0
    %4467 = vdwg.mxu0
    %v4468 = vmax.f32 %v4465, 0.0
    %v4469 = vld [vmem:[#allocation33] sm:$0xff]
    %v4470 = vld [vmem:[#allocation33 + $0x8] sm:$0xff]
    %v4471 = vld [vmem:[#allocation33 + $0x10] sm:$0xff]
    %v4472 = vld [vmem:[#allocation33 + $0x18] sm:$0xff]
    %v4474 = vsel %vm616, %v4468, 0
    %4476 = vmatprep.subr.mxu0 0.0
    %4477 = vmatpush1.msra.mxu0 0.0
    %4478 = vmatprep.subr.mxu0 0.0
    %4479 = vmatpush1.msra.mxu0 0.0
    %4480 = vmatprep.subr.mxu0 0.0
    %4481 = vmatpush1.msra.mxu0 0.0
    %4482 = vmatprep.subr.mxu0 0.0
    %4483 = vmatpush1.msra.mxu0 0.0
    %4484 = vmatprep.subr.mxu0 0.0
    %4485 = vmatpush1.msra.mxu0 0.0
    %4486 = vmatprep.subr.mxu0 0.0
    %4487 = vmatpush1.msra.mxu0 0.0
    %4488 = vmatprep.subr.mxu0 0.0
    %4489 = vmatpush1.msra.mxu0 0.0
    %4490 = vmatprep.subr.mxu0 0.0
    %4491 = vmatpush1.msra.mxu0 0.0
    %4492 = vmatprep.subr.mxu0 0.0
    %4493 = vmatpush1.msra.mxu0 0.0
    %4494 = vmatprep.subr.mxu0 0.0
    %4495 = vmatpush1.msra.mxu0 0.0
    %4496 = vmatprep.subr.mxu0 0.0
    %4497 = vmatpush1.msra.mxu0 0.0
    %4498 = vmatprep.subr.mxu0 0.0
    %4499 = vmatpush1.msra.mxu0 0.0
    %4500 = vmatprep.subr.mxu0 0.0
    %4501 = vmatpush1.msra.mxu0 %v4472
    %4502 = vmatprep.subr.mxu0 0.0
    %4503 = vmatpush1.msra.mxu0 %v4471
    %4504 = vmatprep.subr.mxu0 0.0
    %4505 = vmatpush1.msra.mxu0 %v4470
    %4506 = vmatprep.subr.mxu0 0.0
    %4507 = vmatpush1.msra.mxu0 %v4469
    %4508 = vmatprep.subr.mxu0 0.0
    %4509 = vmatpush2.msra.mxu0 0.0
    %4510 = vmatprep.subr.mxu0 0.0
    %4511 = vmatpush2.msra.mxu0 0.0
    %4512 = vmatprep.subr.mxu0 0.0
    %4513 = vmatpush2.msra.mxu0 0.0
    %4514 = vmatprep.subr.mxu0 0.0
    %4515 = vmatpush2.msra.mxu0 0.0
    %4516 = vmatprep.subr.mxu0 0.0
    %4517 = vmatpush2.msra.mxu0 0.0
    %4518 = vmatprep.subr.mxu0 0.0
    %4519 = vmatpush2.msra.mxu0 0.0
    %4520 = vmatprep.subr.mxu0 0.0
    %4521 = vmatpush2.msra.mxu0 0.0
    %4522 = vmatprep.subr.mxu0 0.0
    %4523 = vmatpush2.msra.mxu0 0.0
    %4524 = vmatprep.subr.mxu0 0.0
    %4525 = vmatpush2.msra.mxu0 0.0
    %4526 = vmatprep.subr.mxu0 0.0
    %4527 = vmatpush2.msra.mxu0 0.0
    %4528 = vmatprep.subr.mxu0 0.0
    %4529 = vmatpush2.msra.mxu0 0.0
    %4530 = vmatprep.subr.mxu0 0.0
    %4531 = vmatpush2.msra.mxu0 0.0
    %4532 = vmatprep.subr.mxu0 0.0
    %4533 = vmatpush2.msra.mxu0 0.0
    %4534 = vmatprep.subr.mxu0 0.0
    %4535 = vmatpush2.msra.mxu0 0.0
    %4536 = vmatprep.subr.mxu0 0.0
    %4537 = vmatpush2.msra.mxu0 0.0
    %4538 = vmatprep.subr.mxu0 0.0
    %4539 = vmatpush2.msra.mxu0 0.0
    %4540 = vmatprep.mubr.f32.mxu0 0.0
    %4541 = vmatmul.mubr.f32.gmra.mxu0 %v4474
    %v4542 = vpop.f32.mrf.mxu0
    %v4543 = vadd.f32 0.0, %v4542
    %v4544 = vpop.f32.mrf.mxu0
    %4545 = vdwg.mxu0
    %4547 = vrot.lane.b32.xlu0 %v4543, 32
    %v4548 = vpop.permute.xlu0 %4547
    %v4550 = vadd.f32 %v4126, %v4548
    %v4551 = vadd.f32 %v4550, %v4208
    %v4552 = vxor.u32 %v4551, 2147483648
    %v4553 = vmul.f32 %v4552, 1.442695
    %v4554 = vpow.pop %v4553
    %v4555 = vadd.f32 %v4554, 1.0
    %v4556 = vrcp.pop %v4555
    %v4557 = vmul.f32 1.0, %v4556
    %4558 = vrot.lane.b32.xlu0 %v4203, 96
    %v4559 = vpop.permute.xlu0 %4558
    %v4561 = vmul.f32 %v4557, %v4559
    %4563 = vrot.lane.b32.xlu0 %v4561, 64
    %v4564 = vpop.permute.xlu0 %4563
    %v4566 = vadd.f32 %v4550, %v4564
    %v4567 = vtanh.pop %v4566
    %v4568 = vsub.f32 1.0, %v4557
    %4570 = vrot.lane.b32.xlu0 %v4567, 96
    %v4571 = vpop.permute.xlu0 %4570
    %v4573 = vmul.f32 %v4568, %v4571
    %v4574 = vmul.f32 %v4557, %v4117
    %v4575 = vadd.f32 %v4573, %v4574
    %s4576 = scalar_lea.vmem [#allocation3], 56
    %4577 = vst.msk [vmem:[%s4576] sm:$0xff] %vm616, %v4364
    %s4578 = scalar_lea.vmem [#allocation4], 56
    %4579 = vst.msk [vmem:[%s4578] sm:$0xff] %vm616, %v4468
    %s4581 = scalar_lea.vmem [#allocation5], 56
    %4582 = vst.msk [vmem:[%s4581] sm:$0xff] %vm616, %v4133
    %v4583 = vld [vmem:[#allocation5] sm:$0xff]
    %v4584 = vld [vmem:[#allocation5 + $0x8] sm:$0xff]
    %v4585 = vld [vmem:[#allocation5 + $0x10] sm:$0xff]
    %v4586 = vld [vmem:[#allocation5 + $0x18] sm:$0xff]
    %v4587 = vld [vmem:[#allocation5 + $0x20] sm:$0xff]
    %v4588 = vld [vmem:[#allocation5 + $0x28] sm:$0xff]
    %v4589 = vld [vmem:[#allocation5 + $0x30] sm:$0xff]
    %v4590 = vld [vmem:[#allocation5 + $0x38] sm:$0xff]
    %v4591 = vld [vmem:[#allocation4] sm:$0xff]
    %v4592 = vld [vmem:[#allocation4 + $0x8] sm:$0xff]
    %v4593 = vld [vmem:[#allocation4 + $0x10] sm:$0xff]
    %v4594 = vld [vmem:[#allocation4 + $0x18] sm:$0xff]
    %v4595 = vld [vmem:[#allocation4 + $0x20] sm:$0xff]
    %v4596 = vld [vmem:[#allocation4 + $0x28] sm:$0xff]
    %v4597 = vld [vmem:[#allocation4 + $0x30] sm:$0xff]
    %v4598 = vld [vmem:[#allocation4 + $0x38] sm:$0xff]
    %v4599 = vld [vmem:[#allocation3] sm:$0xff]
    %v4600 = vld [vmem:[#allocation3 + $0x8] sm:$0xff]
    %v4601 = vld [vmem:[#allocation3 + $0x10] sm:$0xff]
    %v4602 = vld [vmem:[#allocation3 + $0x18] sm:$0xff]
    %v4603 = vld [vmem:[#allocation3 + $0x20] sm:$0xff]
    %v4604 = vld [vmem:[#allocation3 + $0x28] sm:$0xff]
    %v4605 = vld [vmem:[#allocation3 + $0x30] sm:$0xff]
    %v4606 = vld [vmem:[#allocation3 + $0x38] sm:$0xff]
    %v4607 = vmax.f32 %v4599, 0.0
    %v4608 = vmax.f32 %v4600, 0.0
    %v4609 = vmax.f32 %v4601, 0.0
    %v4610 = vmax.f32 %v4602, 0.0
    %v4611 = vmax.f32 %v4603, 0.0
    %v4612 = vmax.f32 %v4604, 0.0
    %v4613 = vmax.f32 %v4605, 0.0
    %v4614 = vmax.f32 %v4606, 0.0
    %vm4615 = vcmp.ne.f32.partialorder %v4599, %v4599
    %vm4616 = vcmp.ne.f32.partialorder %v4600, %v4600
    %vm4617 = vcmp.ne.f32.partialorder %v4601, %v4601
    %vm4618 = vcmp.ne.f32.partialorder %v4602, %v4602
    %vm4619 = vcmp.ne.f32.partialorder %v4603, %v4603
    %vm4620 = vcmp.ne.f32.partialorder %v4604, %v4604
    %vm4621 = vcmp.ne.f32.partialorder %v4605, %v4605
    %vm4622 = vcmp.ne.f32.partialorder %v4606, %v4606
    %v4623 = vadd.f32 %v4599, 0.0
    %v4624 = vadd.f32 %v4600, 0.0
    %v4625 = vadd.f32 %v4601, 0.0
    %v4626 = vadd.f32 %v4602, 0.0
    %v4627 = vadd.f32 %v4603, 0.0
    %v4628 = vadd.f32 %v4604, 0.0
    %v4629 = vadd.f32 %v4605, 0.0
    %v4630 = vadd.f32 %v4606, 0.0
    %v4631 = vand.u32 2147483647, %v4599
    %v4632 = vand.u32 2147483647, %v4600
    %v4633 = vand.u32 2147483647, %v4601
    %v4634 = vand.u32 2147483647, %v4602
    %v4635 = vand.u32 2147483647, %v4603
    %v4636 = vand.u32 2147483647, %v4604
    %v4637 = vand.u32 2147483647, %v4605
    %v4638 = vand.u32 2147483647, %v4606
    %v4639 = vsub.f32 0.0, %v4631
    %v4640 = vsub.f32 0.0, %v4632
    %v4641 = vsub.f32 0.0, %v4633
    %v4642 = vsub.f32 0.0, %v4634
    %v4643 = vsub.f32 0.0, %v4635
    %v4644 = vsub.f32 0.0, %v4636
    %v4645 = vsub.f32 0.0, %v4637
    %v4646 = vsub.f32 0.0, %v4638
    %v4647 = vmul.f32 %v4639, 1.442695
    %v4648 = vpow.pop %v4647
    %v4649 = vmul.f32 %v4640, 1.442695
    %v4650 = vpow.pop %v4649
    %v4651 = vmul.f32 %v4641, 1.442695
    %v4652 = vpow.pop %v4651
    %v4653 = vmul.f32 %v4642, 1.442695
    %v4654 = vpow.pop %v4653
    %v4655 = vmul.f32 %v4643, 1.442695
    %v4656 = vpow.pop %v4655
    %v4657 = vmul.f32 %v4644, 1.442695
    %v4658 = vpow.pop %v4657
    %v4659 = vmul.f32 %v4645, 1.442695
    %v4660 = vpow.pop %v4659
    %v4661 = vmul.f32 %v4646, 1.442695
    %v4662 = vpow.pop %v4661
    %v4663 = vadd.f32 %v4648, 1.0
    %v4664 = vlog2.pop %v4663
    %v4665 = vmul.f32 %v4664, 0.6931472
    %v4666 = vmul.f32 -0.5, %v4648
    %v4667 = vadd.f32 %v4666, 1.0
    %v4668 = vmul.f32 %v4667, %v4648
    %v4669 = vand.u32 2147483647, %v4648
    %vm4670 = vcmp.lt.f32.partialorder %v4669, 0.0004427343
    %v4671 = vsel %vm4670, %v4668, %v4665
    %v4672 = vadd.f32 %v4650, 1.0
    %v4673 = vlog2.pop %v4672
    %v4674 = vmul.f32 %v4673, 0.6931472
    %v4675 = vmul.f32 -0.5, %v4650
    %v4676 = vadd.f32 %v4675, 1.0
    %v4677 = vmul.f32 %v4676, %v4650
    %v4678 = vand.u32 2147483647, %v4650
    %vm4679 = vcmp.lt.f32.partialorder %v4678, 0.0004427343
    %v4680 = vsel %vm4679, %v4677, %v4674
    %v4681 = vadd.f32 %v4652, 1.0
    %v4682 = vlog2.pop %v4681
    %v4683 = vmul.f32 %v4682, 0.6931472
    %v4684 = vmul.f32 -0.5, %v4652
    %v4685 = vadd.f32 %v4684, 1.0
    %v4686 = vmul.f32 %v4685, %v4652
    %v4687 = vand.u32 2147483647, %v4652
    %vm4688 = vcmp.lt.f32.partialorder %v4687, 0.0004427343
    %v4689 = vsel %vm4688, %v4686, %v4683
    %v4690 = vadd.f32 %v4654, 1.0
    %v4691 = vlog2.pop %v4690
    %v4692 = vmul.f32 %v4691, 0.6931472
    %v4693 = vmul.f32 -0.5, %v4654
    %v4694 = vadd.f32 %v4693, 1.0
    %v4695 = vmul.f32 %v4694, %v4654
    %v4696 = vand.u32 2147483647, %v4654
    %vm4697 = vcmp.lt.f32.partialorder %v4696, 0.0004427343
    %v4698 = vsel %vm4697, %v4695, %v4692
    %v4699 = vadd.f32 %v4656, 1.0
    %v4700 = vlog2.pop %v4699
    %v4701 = vmul.f32 %v4700, 0.6931472
    %v4702 = vmul.f32 -0.5, %v4656
    %v4703 = vadd.f32 %v4702, 1.0
    %v4704 = vmul.f32 %v4703, %v4656
    %v4705 = vand.u32 2147483647, %v4656
    %vm4706 = vcmp.lt.f32.partialorder %v4705, 0.0004427343
    %v4707 = vsel %vm4706, %v4704, %v4701
    %v4708 = vadd.f32 %v4658, 1.0
    %v4709 = vlog2.pop %v4708
    %v4710 = vmul.f32 %v4709, 0.6931472
    %v4711 = vmul.f32 -0.5, %v4658
    %v4712 = vadd.f32 %v4711, 1.0
    %v4713 = vmul.f32 %v4712, %v4658
    %v4714 = vand.u32 2147483647, %v4658
    %vm4715 = vcmp.lt.f32.partialorder %v4714, 0.0004427343
    %v4716 = vsel %vm4715, %v4713, %v4710
    %v4717 = vadd.f32 %v4660, 1.0
    %v4718 = vlog2.pop %v4717
    %v4719 = vmul.f32 %v4718, 0.6931472
    %v4720 = vmul.f32 -0.5, %v4660
    %v4721 = vadd.f32 %v4720, 1.0
    %v4722 = vmul.f32 %v4721, %v4660
    %v4723 = vand.u32 2147483647, %v4660
    %vm4724 = vcmp.lt.f32.partialorder %v4723, 0.0004427343
    %v4725 = vsel %vm4724, %v4722, %v4719
    %v4726 = vadd.f32 %v4662, 1.0
    %v4727 = vlog2.pop %v4726
    %v4728 = vmul.f32 %v4727, 0.6931472
    %v4729 = vmul.f32 -0.5, %v4662
    %v4730 = vadd.f32 %v4729, 1.0
    %v4731 = vmul.f32 %v4730, %v4662
    %v4732 = vand.u32 2147483647, %v4662
    %vm4733 = vcmp.lt.f32.partialorder %v4732, 0.0004427343
    %v4734 = vsel %vm4733, %v4731, %v4728
    %v4735 = vadd.f32 %v4607, %v4671
    %v4736 = vadd.f32 %v4608, %v4680
    %v4737 = vadd.f32 %v4609, %v4689
    %v4738 = vadd.f32 %v4610, %v4698
    %v4739 = vadd.f32 %v4611, %v4707
    %v4740 = vadd.f32 %v4612, %v4716
    %v4741 = vadd.f32 %v4613, %v4725
    %v4742 = vadd.f32 %v4614, %v4734
    %v4743 = vsel %vm4615, %v4623, %v4735
    %v4744 = vsel %vm4616, %v4624, %v4736
    %v4745 = vsel %vm4617, %v4625, %v4737
    %v4746 = vsel %vm4618, %v4626, %v4738
    %v4747 = vsel %vm4619, %v4627, %v4739
    %v4748 = vsel %vm4620, %v4628, %v4740
    %v4749 = vsel %vm4621, %v4629, %v4741
    %v4750 = vsel %vm4622, %v4630, %v4742
    %v4751 = vld [vmem:[%s37] sm:$0xff]
    %v4752 = vld [vmem:[%s37 + $0x8] sm:$0xff]
    %v4753 = vld [vmem:[%s37 + $0x10] sm:$0xff]
    %v4754 = vld [vmem:[%s37 + $0x18] sm:$0xff]
    %v4755 = vld [vmem:[%s39] sm:$0x1]
    %v4757 = vlaneseq
    %v4758 = vshrl.u32 %v4757, 7
    %v4759 = vsub.s32 0, %v4758
    %v4760 = vrot.slane %v4755, %v4759
    %v4763 = vsel %vm616, %v4583, 0
    %v4766 = vsel %vm616, %v4584, 0
    %v4769 = vsel %vm616, %v4585, 0
    %v4772 = vsel %vm616, %v4586, 0
    %v4775 = vsel %vm616, %v4587, 0
    %v4778 = vsel %vm616, %v4588, 0
    %v4781 = vsel %vm616, %v4589, 0
    %v4784 = vsel %vm616, %v4590, 0
    %4786 = vmatprep.subr.mxu0 0.0
    %4787 = vmatpush1.msra.mxu0 0.0
    %4788 = vmatprep.subr.mxu0 0.0
    %4789 = vmatpush1.msra.mxu0 0.0
    %4790 = vmatprep.subr.mxu0 0.0
    %4791 = vmatpush1.msra.mxu0 0.0
    %4792 = vmatprep.subr.mxu0 0.0
    %4793 = vmatpush1.msra.mxu0 0.0
    %4794 = vmatprep.subr.mxu0 0.0
    %4795 = vmatpush1.msra.mxu0 0.0
    %4796 = vmatprep.subr.mxu0 0.0
    %4797 = vmatpush1.msra.mxu0 0.0
    %4798 = vmatprep.subr.mxu0 0.0
    %4799 = vmatpush1.msra.mxu0 0.0
    %4800 = vmatprep.subr.mxu0 0.0
    %4801 = vmatpush1.msra.mxu0 0.0
    %4802 = vmatprep.subr.mxu0 0.0
    %4803 = vmatpush1.msra.mxu0 0.0
    %4804 = vmatprep.subr.mxu0 0.0
    %4805 = vmatpush1.msra.mxu0 0.0
    %4806 = vmatprep.subr.mxu0 0.0
    %4807 = vmatpush1.msra.mxu0 0.0
    %4808 = vmatprep.subr.mxu0 0.0
    %4809 = vmatpush1.msra.mxu0 0.0
    %4810 = vmatprep.subr.mxu0 0.0
    %4811 = vmatpush1.msra.mxu0 %v4754
    %4812 = vmatprep.subr.mxu0 0.0
    %4813 = vmatpush1.msra.mxu0 %v4753
    %4814 = vmatprep.subr.mxu0 0.0
    %4815 = vmatpush1.msra.mxu0 %v4752
    %4816 = vmatprep.subr.mxu0 0.0
    %4817 = vmatpush1.msra.mxu0 %v4751
    %4818 = vmatprep.subr.mxu0 0.0
    %4819 = vmatpush2.msra.mxu0 0.0
    %4820 = vmatprep.subr.mxu0 0.0
    %4821 = vmatpush2.msra.mxu0 0.0
    %4822 = vmatprep.subr.mxu0 0.0
    %4823 = vmatpush2.msra.mxu0 0.0
    %4824 = vmatprep.subr.mxu0 0.0
    %4825 = vmatpush2.msra.mxu0 0.0
    %4826 = vmatprep.subr.mxu0 0.0
    %4827 = vmatpush2.msra.mxu0 0.0
    %4828 = vmatprep.subr.mxu0 0.0
    %4829 = vmatpush2.msra.mxu0 0.0
    %4830 = vmatprep.subr.mxu0 0.0
    %4831 = vmatpush2.msra.mxu0 0.0
    %4832 = vmatprep.subr.mxu0 0.0
    %4833 = vmatpush2.msra.mxu0 0.0
    %4834 = vmatprep.subr.mxu0 0.0
    %4835 = vmatpush2.msra.mxu0 0.0
    %4836 = vmatprep.subr.mxu0 0.0
    %4837 = vmatpush2.msra.mxu0 0.0
    %4838 = vmatprep.subr.mxu0 0.0
    %4839 = vmatpush2.msra.mxu0 0.0
    %4840 = vmatprep.subr.mxu0 0.0
    %4841 = vmatpush2.msra.mxu0 0.0
    %4842 = vmatprep.subr.mxu0 0.0
    %4843 = vmatpush2.msra.mxu0 0.0
    %4844 = vmatprep.subr.mxu0 0.0
    %4845 = vmatpush2.msra.mxu0 0.0
    %4846 = vmatprep.subr.mxu0 0.0
    %4847 = vmatpush2.msra.mxu0 0.0
    %4848 = vmatprep.subr.mxu0 0.0
    %4849 = vmatpush2.msra.mxu0 0.0
    %4850 = vmatprep.mubr.f32.mxu0 0.0
    %4851 = vmatmul.mubr.f32.gmra.mxu0 %v4763
    %v4852 = vpop.f32.mrf.mxu0
    %v4853 = vadd.f32 %v4760, %v4852
    %v4854 = vpop.f32.mrf.mxu0
    %4855 = vmatprep.mubr.f32.mxu0 0.0
    %4856 = vmatmul.mubr.f32.gmra.mxu0 %v4766
    %v4857 = vpop.f32.mrf.mxu0
    %v4858 = vadd.f32 %v4760, %v4857
    %v4859 = vpop.f32.mrf.mxu0
    %4860 = vmatprep.mubr.f32.mxu0 0.0
    %4861 = vmatmul.mubr.f32.gmra.mxu0 %v4769
    %v4862 = vpop.f32.mrf.mxu0
    %v4863 = vadd.f32 %v4760, %v4862
    %v4864 = vpop.f32.mrf.mxu0
    %4865 = vmatprep.mubr.f32.mxu0 0.0
    %4866 = vmatmul.mubr.f32.gmra.mxu0 %v4772
    %v4867 = vpop.f32.mrf.mxu0
    %v4868 = vadd.f32 %v4760, %v4867
    %v4869 = vpop.f32.mrf.mxu0
    %4870 = vmatprep.mubr.f32.mxu0 0.0
    %4871 = vmatmul.mubr.f32.gmra.mxu0 %v4775
    %v4872 = vpop.f32.mrf.mxu0
    %v4873 = vadd.f32 %v4760, %v4872
    %v4874 = vpop.f32.mrf.mxu0
    %4875 = vmatprep.mubr.f32.mxu0 0.0
    %4876 = vmatmul.mubr.f32.gmra.mxu0 %v4778
    %v4877 = vpop.f32.mrf.mxu0
    %v4878 = vadd.f32 %v4760, %v4877
    %v4879 = vpop.f32.mrf.mxu0
    %4880 = vmatprep.mubr.f32.mxu0 0.0
    %4881 = vmatmul.mubr.f32.gmra.mxu0 %v4781
    %v4882 = vpop.f32.mrf.mxu0
    %v4883 = vadd.f32 %v4760, %v4882
    %v4884 = vpop.f32.mrf.mxu0
    %4885 = vmatprep.mubr.f32.mxu0 0.0
    %4886 = vmatmul.mubr.f32.gmra.mxu0 %v4784
    %v4887 = vpop.f32.mrf.mxu0
    %v4888 = vadd.f32 %v4760, %v4887
    %v4889 = vpop.f32.mrf.mxu0
    %4890 = vdwg.mxu0
    %v4891 = vmax.f32 %v4853, 0.0
    %v4892 = vmax.f32 %v4858, 0.0
    %v4893 = vmax.f32 %v4863, 0.0
    %v4894 = vmax.f32 %v4868, 0.0
    %v4895 = vmax.f32 %v4873, 0.0
    %v4896 = vmax.f32 %v4878, 0.0
    %v4897 = vmax.f32 %v4883, 0.0
    %v4898 = vmax.f32 %v4888, 0.0
    %v4899 = vld [vmem:[#allocation35] sm:$0xff]
    %v4900 = vld [vmem:[#allocation35 + $0x8] sm:$0xff]
    %v4901 = vld [vmem:[#allocation35 + $0x10] sm:$0xff]
    %v4902 = vld [vmem:[#allocation35 + $0x18] sm:$0xff]
    %v4903 = vld [vmem:[#allocation36] sm:$0x1]
    %v4905 = vlaneseq
    %v4906 = vshrl.u32 %v4905, 7
    %v4907 = vsub.s32 0, %v4906
    %v4908 = vrot.slane %v4903, %v4907
    %v4911 = vsel %vm616, %v4891, 0
    %v4914 = vsel %vm616, %v4892, 0
    %v4917 = vsel %vm616, %v4893, 0
    %v4920 = vsel %vm616, %v4894, 0
    %v4923 = vsel %vm616, %v4895, 0
    %v4926 = vsel %vm616, %v4896, 0
    %v4929 = vsel %vm616, %v4897, 0
    %v4932 = vsel %vm616, %v4898, 0
    %4934 = vmatprep.subr.mxu0 0.0
    %4935 = vmatpush1.msra.mxu0 0.0
    %4936 = vmatprep.subr.mxu0 0.0
    %4937 = vmatpush1.msra.mxu0 0.0
    %4938 = vmatprep.subr.mxu0 0.0
    %4939 = vmatpush1.msra.mxu0 0.0
    %4940 = vmatprep.subr.mxu0 0.0
    %4941 = vmatpush1.msra.mxu0 0.0
    %4942 = vmatprep.subr.mxu0 0.0
    %4943 = vmatpush1.msra.mxu0 0.0
    %4944 = vmatprep.subr.mxu0 0.0
    %4945 = vmatpush1.msra.mxu0 0.0
    %4946 = vmatprep.subr.mxu0 0.0
    %4947 = vmatpush1.msra.mxu0 0.0
    %4948 = vmatprep.subr.mxu0 0.0
    %4949 = vmatpush1.msra.mxu0 0.0
    %4950 = vmatprep.subr.mxu0 0.0
    %4951 = vmatpush1.msra.mxu0 0.0
    %4952 = vmatprep.subr.mxu0 0.0
    %4953 = vmatpush1.msra.mxu0 0.0
    %4954 = vmatprep.subr.mxu0 0.0
    %4955 = vmatpush1.msra.mxu0 0.0
    %4956 = vmatprep.subr.mxu0 0.0
    %4957 = vmatpush1.msra.mxu0 0.0
    %4958 = vmatprep.subr.mxu0 0.0
    %4959 = vmatpush1.msra.mxu0 %v4902
    %4960 = vmatprep.subr.mxu0 0.0
    %4961 = vmatpush1.msra.mxu0 %v4901
    %4962 = vmatprep.subr.mxu0 0.0
    %4963 = vmatpush1.msra.mxu0 %v4900
    %4964 = vmatprep.subr.mxu0 0.0
    %4965 = vmatpush1.msra.mxu0 %v4899
    %4966 = vmatprep.subr.mxu0 0.0
    %4967 = vmatpush2.msra.mxu0 0.0
    %4968 = vmatprep.subr.mxu0 0.0
    %4969 = vmatpush2.msra.mxu0 0.0
    %4970 = vmatprep.subr.mxu0 0.0
    %4971 = vmatpush2.msra.mxu0 0.0
    %4972 = vmatprep.subr.mxu0 0.0
    %4973 = vmatpush2.msra.mxu0 0.0
    %4974 = vmatprep.subr.mxu0 0.0
    %4975 = vmatpush2.msra.mxu0 0.0
    %4976 = vmatprep.subr.mxu0 0.0
    %4977 = vmatpush2.msra.mxu0 0.0
    %4978 = vmatprep.subr.mxu0 0.0
    %4979 = vmatpush2.msra.mxu0 0.0
    %4980 = vmatprep.subr.mxu0 0.0
    %4981 = vmatpush2.msra.mxu0 0.0
    %4982 = vmatprep.subr.mxu0 0.0
    %4983 = vmatpush2.msra.mxu0 0.0
    %4984 = vmatprep.subr.mxu0 0.0
    %4985 = vmatpush2.msra.mxu0 0.0
    %4986 = vmatprep.subr.mxu0 0.0
    %4987 = vmatpush2.msra.mxu0 0.0
    %4988 = vmatprep.subr.mxu0 0.0
    %4989 = vmatpush2.msra.mxu0 0.0
    %4990 = vmatprep.subr.mxu0 0.0
    %4991 = vmatpush2.msra.mxu0 0.0
    %4992 = vmatprep.subr.mxu0 0.0
    %4993 = vmatpush2.msra.mxu0 0.0
    %4994 = vmatprep.subr.mxu0 0.0
    %4995 = vmatpush2.msra.mxu0 0.0
    %4996 = vmatprep.subr.mxu0 0.0
    %4997 = vmatpush2.msra.mxu0 0.0
    %4998 = vmatprep.mubr.f32.mxu0 0.0
    %4999 = vmatmul.mubr.f32.gmra.mxu0 %v4911
    %v5000 = vpop.f32.mrf.mxu0
    %v5001 = vadd.f32 %v4908, %v5000
    %v5002 = vpop.f32.mrf.mxu0
    %5003 = vmatprep.mubr.f32.mxu0 0.0
    %5004 = vmatmul.mubr.f32.gmra.mxu0 %v4914
    %v5005 = vpop.f32.mrf.mxu0
    %v5006 = vadd.f32 %v4908, %v5005
    %v5007 = vpop.f32.mrf.mxu0
    %5008 = vmatprep.mubr.f32.mxu0 0.0
    %5009 = vmatmul.mubr.f32.gmra.mxu0 %v4917
    %v5010 = vpop.f32.mrf.mxu0
    %v5011 = vadd.f32 %v4908, %v5010
    %v5012 = vpop.f32.mrf.mxu0
    %5013 = vmatprep.mubr.f32.mxu0 0.0
    %5014 = vmatmul.mubr.f32.gmra.mxu0 %v4920
    %v5015 = vpop.f32.mrf.mxu0
    %v5016 = vadd.f32 %v4908, %v5015
    %v5017 = vpop.f32.mrf.mxu0
    %5018 = vmatprep.mubr.f32.mxu0 0.0
    %5019 = vmatmul.mubr.f32.gmra.mxu0 %v4923
    %v5020 = vpop.f32.mrf.mxu0
    %v5021 = vadd.f32 %v4908, %v5020
    %v5022 = vpop.f32.mrf.mxu0
    %5023 = vmatprep.mubr.f32.mxu0 0.0
    %5024 = vmatmul.mubr.f32.gmra.mxu0 %v4926
    %v5025 = vpop.f32.mrf.mxu0
    %v5026 = vadd.f32 %v4908, %v5025
    %v5027 = vpop.f32.mrf.mxu0
    %5028 = vmatprep.mubr.f32.mxu0 0.0
    %5029 = vmatmul.mubr.f32.gmra.mxu0 %v4929
    %v5030 = vpop.f32.mrf.mxu0
    %v5031 = vadd.f32 %v4908, %v5030
    %v5032 = vpop.f32.mrf.mxu0
    %5033 = vmatprep.mubr.f32.mxu0 0.0
    %5034 = vmatmul.mubr.f32.gmra.mxu0 %v4932
    %v5035 = vpop.f32.mrf.mxu0
    %v5036 = vadd.f32 %v4908, %v5035
    %v5037 = vpop.f32.mrf.mxu0
    %5038 = vdwg.mxu0
    %v5039 = vmax.f32 %v5001, 0.0
    %v5040 = vmax.f32 %v5006, 0.0
    %v5041 = vmax.f32 %v5011, 0.0
    %v5042 = vmax.f32 %v5016, 0.0
    %v5043 = vmax.f32 %v5021, 0.0
    %v5044 = vmax.f32 %v5026, 0.0
    %v5045 = vmax.f32 %v5031, 0.0
    %v5046 = vmax.f32 %v5036, 0.0
    %vm5047 = vcmp.ne.f32.partialorder %v5001, %v5001
    %vm5048 = vcmp.ne.f32.partialorder %v5006, %v5006
    %vm5049 = vcmp.ne.f32.partialorder %v5011, %v5011
    %vm5050 = vcmp.ne.f32.partialorder %v5016, %v5016
    %vm5051 = vcmp.ne.f32.partialorder %v5021, %v5021
    %vm5052 = vcmp.ne.f32.partialorder %v5026, %v5026
    %vm5053 = vcmp.ne.f32.partialorder %v5031, %v5031
    %vm5054 = vcmp.ne.f32.partialorder %v5036, %v5036
    %v5055 = vadd.f32 %v5001, 0.0
    %v5056 = vadd.f32 %v5006, 0.0
    %v5057 = vadd.f32 %v5011, 0.0
    %v5058 = vadd.f32 %v5016, 0.0
    %v5059 = vadd.f32 %v5021, 0.0
    %v5060 = vadd.f32 %v5026, 0.0
    %v5061 = vadd.f32 %v5031, 0.0
    %v5062 = vadd.f32 %v5036, 0.0
    %v5063 = vand.u32 2147483647, %v5001
    %v5064 = vand.u32 2147483647, %v5006
    %v5065 = vand.u32 2147483647, %v5011
    %v5066 = vand.u32 2147483647, %v5016
    %v5067 = vand.u32 2147483647, %v5021
    %v5068 = vand.u32 2147483647, %v5026
    %v5069 = vand.u32 2147483647, %v5031
    %v5070 = vand.u32 2147483647, %v5036
    %v5071 = vsub.f32 0.0, %v5063
    %v5072 = vsub.f32 0.0, %v5064
    %v5073 = vsub.f32 0.0, %v5065
    %v5074 = vsub.f32 0.0, %v5066
    %v5075 = vsub.f32 0.0, %v5067
    %v5076 = vsub.f32 0.0, %v5068
    %v5077 = vsub.f32 0.0, %v5069
    %v5078 = vsub.f32 0.0, %v5070
    %v5079 = vmul.f32 %v5071, 1.442695
    %v5080 = vpow.pop %v5079
    %v5081 = vmul.f32 %v5072, 1.442695
    %v5082 = vpow.pop %v5081
    %v5083 = vmul.f32 %v5073, 1.442695
    %v5084 = vpow.pop %v5083
    %v5085 = vmul.f32 %v5074, 1.442695
    %v5086 = vpow.pop %v5085
    %v5087 = vmul.f32 %v5075, 1.442695
    %v5088 = vpow.pop %v5087
    %v5089 = vmul.f32 %v5076, 1.442695
    %v5090 = vpow.pop %v5089
    %v5091 = vmul.f32 %v5077, 1.442695
    %v5092 = vpow.pop %v5091
    %v5093 = vmul.f32 %v5078, 1.442695
    %v5094 = vpow.pop %v5093
    %v5095 = vadd.f32 %v5080, 1.0
    %v5096 = vlog2.pop %v5095
    %v5097 = vmul.f32 %v5096, 0.6931472
    %v5098 = vmul.f32 -0.5, %v5080
    %v5099 = vadd.f32 %v5098, 1.0
    %v5100 = vmul.f32 %v5099, %v5080
    %v5101 = vand.u32 2147483647, %v5080
    %vm5102 = vcmp.lt.f32.partialorder %v5101, 0.0004427343
    %v5103 = vsel %vm5102, %v5100, %v5097
    %v5104 = vadd.f32 %v5082, 1.0
    %v5105 = vlog2.pop %v5104
    %v5106 = vmul.f32 %v5105, 0.6931472
    %v5107 = vmul.f32 -0.5, %v5082
    %v5108 = vadd.f32 %v5107, 1.0
    %v5109 = vmul.f32 %v5108, %v5082
    %v5110 = vand.u32 2147483647, %v5082
    %vm5111 = vcmp.lt.f32.partialorder %v5110, 0.0004427343
    %v5112 = vsel %vm5111, %v5109, %v5106
    %v5113 = vadd.f32 %v5084, 1.0
    %v5114 = vlog2.pop %v5113
    %v5115 = vmul.f32 %v5114, 0.6931472
    %v5116 = vmul.f32 -0.5, %v5084
    %v5117 = vadd.f32 %v5116, 1.0
    %v5118 = vmul.f32 %v5117, %v5084
    %v5119 = vand.u32 2147483647, %v5084
    %vm5120 = vcmp.lt.f32.partialorder %v5119, 0.0004427343
    %v5121 = vsel %vm5120, %v5118, %v5115
    %v5122 = vadd.f32 %v5086, 1.0
    %v5123 = vlog2.pop %v5122
    %v5124 = vmul.f32 %v5123, 0.6931472
    %v5125 = vmul.f32 -0.5, %v5086
    %v5126 = vadd.f32 %v5125, 1.0
    %v5127 = vmul.f32 %v5126, %v5086
    %v5128 = vand.u32 2147483647, %v5086
    %vm5129 = vcmp.lt.f32.partialorder %v5128, 0.0004427343
    %v5130 = vsel %vm5129, %v5127, %v5124
    %v5131 = vadd.f32 %v5088, 1.0
    %v5132 = vlog2.pop %v5131
    %v5133 = vmul.f32 %v5132, 0.6931472
    %v5134 = vmul.f32 -0.5, %v5088
    %v5135 = vadd.f32 %v5134, 1.0
    %v5136 = vmul.f32 %v5135, %v5088
    %v5137 = vand.u32 2147483647, %v5088
    %vm5138 = vcmp.lt.f32.partialorder %v5137, 0.0004427343
    %v5139 = vsel %vm5138, %v5136, %v5133
    %v5140 = vadd.f32 %v5090, 1.0
    %v5141 = vlog2.pop %v5140
    %v5142 = vmul.f32 %v5141, 0.6931472
    %v5143 = vmul.f32 -0.5, %v5090
    %v5144 = vadd.f32 %v5143, 1.0
    %v5145 = vmul.f32 %v5144, %v5090
    %v5146 = vand.u32 2147483647, %v5090
    %vm5147 = vcmp.lt.f32.partialorder %v5146, 0.0004427343
    %v5148 = vsel %vm5147, %v5145, %v5142
    %v5149 = vadd.f32 %v5092, 1.0
    %v5150 = vlog2.pop %v5149
    %v5151 = vmul.f32 %v5150, 0.6931472
    %v5152 = vmul.f32 -0.5, %v5092
    %v5153 = vadd.f32 %v5152, 1.0
    %v5154 = vmul.f32 %v5153, %v5092
    %v5155 = vand.u32 2147483647, %v5092
    %vm5156 = vcmp.lt.f32.partialorder %v5155, 0.0004427343
    %v5157 = vsel %vm5156, %v5154, %v5151
    %v5158 = vadd.f32 %v5094, 1.0
    %v5159 = vlog2.pop %v5158
    %v5160 = vmul.f32 %v5159, 0.6931472
    %v5161 = vmul.f32 -0.5, %v5094
    %v5162 = vadd.f32 %v5161, 1.0
    %v5163 = vmul.f32 %v5162, %v5094
    %v5164 = vand.u32 2147483647, %v5094
    %vm5165 = vcmp.lt.f32.partialorder %v5164, 0.0004427343
    %v5166 = vsel %vm5165, %v5163, %v5160
    %v5167 = vadd.f32 %v5039, %v5103
    %v5168 = vadd.f32 %v5040, %v5112
    %v5169 = vadd.f32 %v5041, %v5121
    %v5170 = vadd.f32 %v5042, %v5130
    %v5171 = vadd.f32 %v5043, %v5139
    %v5172 = vadd.f32 %v5044, %v5148
    %v5173 = vadd.f32 %v5045, %v5157
    %v5174 = vadd.f32 %v5046, %v5166
    %v5175 = vsel %vm5047, %v5055, %v5167
    %v5176 = vsel %vm5048, %v5056, %v5168
    %v5177 = vsel %vm5049, %v5057, %v5169
    %v5178 = vsel %vm5050, %v5058, %v5170
    %v5179 = vsel %vm5051, %v5059, %v5171
    %v5180 = vsel %vm5052, %v5060, %v5172
    %v5181 = vsel %vm5053, %v5061, %v5173
    %v5182 = vsel %vm5054, %v5062, %v5174
    %v5183 = vld [vmem:[#allocation38] sm:$0xff]
    %v5184 = vld [vmem:[#allocation38 + $0x8] sm:$0xff]
    %v5185 = vld [vmem:[#allocation38 + $0x10] sm:$0xff]
    %v5186 = vld [vmem:[#allocation38 + $0x18] sm:$0xff]
    %5195 = vrot.lane.b32.xlu0 %v4853, 96
    %v5196 = vpop.permute.xlu0 %5195
    %5197 = vrot.lane.b32.xlu0 %v4858, 96
    %v5198 = vpop.permute.xlu0 %5197
    %5199 = vrot.lane.b32.xlu0 %v4863, 96
    %v5200 = vpop.permute.xlu0 %5199
    %5201 = vrot.lane.b32.xlu0 %v4868, 96
    %v5202 = vpop.permute.xlu0 %5201
    %5203 = vrot.lane.b32.xlu0 %v4873, 96
    %v5204 = vpop.permute.xlu0 %5203
    %5205 = vrot.lane.b32.xlu0 %v4878, 96
    %v5206 = vpop.permute.xlu0 %5205
    %5207 = vrot.lane.b32.xlu0 %v4883, 96
    %v5208 = vpop.permute.xlu0 %5207
    %5209 = vrot.lane.b32.xlu0 %v4888, 96
    %v5210 = vpop.permute.xlu0 %5209
    %v5220 = vsel %vm616, %v4591, 0
    %v5223 = vsel %vm616, %v4592, 0
    %v5226 = vsel %vm616, %v4593, 0
    %v5229 = vsel %vm616, %v4594, 0
    %v5232 = vsel %vm616, %v4595, 0
    %v5235 = vsel %vm616, %v4596, 0
    %v5238 = vsel %vm616, %v4597, 0
    %v5241 = vsel %vm616, %v4598, 0
    %5243 = vmatprep.subr.mxu0 0.0
    %5244 = vmatpush1.msra.mxu0 0.0
    %5245 = vmatprep.subr.mxu0 0.0
    %5246 = vmatpush1.msra.mxu0 0.0
    %5247 = vmatprep.subr.mxu0 0.0
    %5248 = vmatpush1.msra.mxu0 0.0
    %5249 = vmatprep.subr.mxu0 0.0
    %5250 = vmatpush1.msra.mxu0 0.0
    %5251 = vmatprep.subr.mxu0 0.0
    %5252 = vmatpush1.msra.mxu0 0.0
    %5253 = vmatprep.subr.mxu0 0.0
    %5254 = vmatpush1.msra.mxu0 0.0
    %5255 = vmatprep.subr.mxu0 0.0
    %5256 = vmatpush1.msra.mxu0 0.0
    %5257 = vmatprep.subr.mxu0 0.0
    %5258 = vmatpush1.msra.mxu0 0.0
    %5259 = vmatprep.subr.mxu0 0.0
    %5260 = vmatpush1.msra.mxu0 0.0
    %5261 = vmatprep.subr.mxu0 0.0
    %5262 = vmatpush1.msra.mxu0 0.0
    %5263 = vmatprep.subr.mxu0 0.0
    %5264 = vmatpush1.msra.mxu0 0.0
    %5265 = vmatprep.subr.mxu0 0.0
    %5266 = vmatpush1.msra.mxu0 0.0
    %5267 = vmatprep.subr.mxu0 0.0
    %5268 = vmatpush1.msra.mxu0 %v5186
    %5269 = vmatprep.subr.mxu0 0.0
    %5270 = vmatpush1.msra.mxu0 %v5185
    %5271 = vmatprep.subr.mxu0 0.0
    %5272 = vmatpush1.msra.mxu0 %v5184
    %5273 = vmatprep.subr.mxu0 0.0
    %5274 = vmatpush1.msra.mxu0 %v5183
    %5275 = vmatprep.subr.mxu0 0.0
    %5276 = vmatpush2.msra.mxu0 0.0
    %5277 = vmatprep.subr.mxu0 0.0
    %5278 = vmatpush2.msra.mxu0 0.0
    %5279 = vmatprep.subr.mxu0 0.0
    %5280 = vmatpush2.msra.mxu0 0.0
    %5281 = vmatprep.subr.mxu0 0.0
    %5282 = vmatpush2.msra.mxu0 0.0
    %5283 = vmatprep.subr.mxu0 0.0
    %5284 = vmatpush2.msra.mxu0 0.0
    %5285 = vmatprep.subr.mxu0 0.0
    %5286 = vmatpush2.msra.mxu0 0.0
    %5287 = vmatprep.subr.mxu0 0.0
    %5288 = vmatpush2.msra.mxu0 0.0
    %5289 = vmatprep.subr.mxu0 0.0
    %5290 = vmatpush2.msra.mxu0 0.0
    %5291 = vmatprep.subr.mxu0 0.0
    %5292 = vmatpush2.msra.mxu0 0.0
    %5293 = vmatprep.subr.mxu0 0.0
    %5294 = vmatpush2.msra.mxu0 0.0
    %5295 = vmatprep.subr.mxu0 0.0
    %5296 = vmatpush2.msra.mxu0 0.0
    %5297 = vmatprep.subr.mxu0 0.0
    %5298 = vmatpush2.msra.mxu0 0.0
    %5299 = vmatprep.subr.mxu0 0.0
    %5300 = vmatpush2.msra.mxu0 0.0
    %5301 = vmatprep.subr.mxu0 0.0
    %5302 = vmatpush2.msra.mxu0 0.0
    %5303 = vmatprep.subr.mxu0 0.0
    %5304 = vmatpush2.msra.mxu0 0.0
    %5305 = vmatprep.subr.mxu0 0.0
    %5306 = vmatpush2.msra.mxu0 0.0
    %5307 = vmatprep.mubr.f32.mxu0 0.0
    %5308 = vmatmul.mubr.f32.gmra.mxu0 %v5220
    %v5309 = vpop.f32.mrf.mxu0
    %v5310 = vadd.f32 %v5196, %v5309
    %v5311 = vpop.f32.mrf.mxu0
    %5312 = vmatprep.mubr.f32.mxu0 0.0
    %5313 = vmatmul.mubr.f32.gmra.mxu0 %v5223
    %v5314 = vpop.f32.mrf.mxu0
    %v5315 = vadd.f32 %v5198, %v5314
    %v5316 = vpop.f32.mrf.mxu0
    %5317 = vmatprep.mubr.f32.mxu0 0.0
    %5318 = vmatmul.mubr.f32.gmra.mxu0 %v5226
    %v5319 = vpop.f32.mrf.mxu0
    %v5320 = vadd.f32 %v5200, %v5319
    %v5321 = vpop.f32.mrf.mxu0
    %5322 = vmatprep.mubr.f32.mxu0 0.0
    %5323 = vmatmul.mubr.f32.gmra.mxu0 %v5229
    %v5324 = vpop.f32.mrf.mxu0
    %v5325 = vadd.f32 %v5202, %v5324
    %v5326 = vpop.f32.mrf.mxu0
    %5327 = vmatprep.mubr.f32.mxu0 0.0
    %5328 = vmatmul.mubr.f32.gmra.mxu0 %v5232
    %v5329 = vpop.f32.mrf.mxu0
    %v5330 = vadd.f32 %v5204, %v5329
    %v5331 = vpop.f32.mrf.mxu0
    %5332 = vmatprep.mubr.f32.mxu0 0.0
    %5333 = vmatmul.mubr.f32.gmra.mxu0 %v5235
    %v5334 = vpop.f32.mrf.mxu0
    %v5335 = vadd.f32 %v5206, %v5334
    %v5336 = vpop.f32.mrf.mxu0
    %5337 = vmatprep.mubr.f32.mxu0 0.0
    %5338 = vmatmul.mubr.f32.gmra.mxu0 %v5238
    %v5339 = vpop.f32.mrf.mxu0
    %v5340 = vadd.f32 %v5208, %v5339
    %v5341 = vpop.f32.mrf.mxu0
    %5342 = vmatprep.mubr.f32.mxu0 0.0
    %5343 = vmatmul.mubr.f32.gmra.mxu0 %v5241
    %v5344 = vpop.f32.mrf.mxu0
    %v5345 = vadd.f32 %v5210, %v5344
    %v5346 = vpop.f32.mrf.mxu0
    %5347 = vdwg.mxu0
    %v5348 = vmax.f32 %v5310, 0.0
    %v5349 = vmax.f32 %v5315, 0.0
    %v5350 = vmax.f32 %v5320, 0.0
    %v5351 = vmax.f32 %v5325, 0.0
    %v5352 = vmax.f32 %v5330, 0.0
    %v5353 = vmax.f32 %v5335, 0.0
    %v5354 = vmax.f32 %v5340, 0.0
    %v5355 = vmax.f32 %v5345, 0.0
    %v5356 = vld [vmem:[#allocation39] sm:$0xff]
    %v5357 = vld [vmem:[#allocation39 + $0x8] sm:$0xff]
    %v5358 = vld [vmem:[#allocation39 + $0x10] sm:$0xff]
    %v5359 = vld [vmem:[#allocation39 + $0x18] sm:$0xff]
    %v5360 = vld [vmem:[#allocation41] sm:$0x1]
    %v5362 = vlaneseq
    %v5363 = vshrl.u32 %v5362, 7
    %v5364 = vsub.s32 0, %v5363
    %v5365 = vrot.slane %v5360, %v5364
    %v5368 = vsel %vm616, %v5348, 0
    %v5371 = vsel %vm616, %v5349, 0
    %v5374 = vsel %vm616, %v5350, 0
    %v5377 = vsel %vm616, %v5351, 0
    %v5380 = vsel %vm616, %v5352, 0
    %v5383 = vsel %vm616, %v5353, 0
    %v5386 = vsel %vm616, %v5354, 0
    %v5389 = vsel %vm616, %v5355, 0
    %5391 = vmatprep.subr.mxu0 0.0
    %5392 = vmatpush1.msra.mxu0 0.0
    %5393 = vmatprep.subr.mxu0 0.0
    %5394 = vmatpush1.msra.mxu0 0.0
    %5395 = vmatprep.subr.mxu0 0.0
    %5396 = vmatpush1.msra.mxu0 0.0
    %5397 = vmatprep.subr.mxu0 0.0
    %5398 = vmatpush1.msra.mxu0 0.0
    %5399 = vmatprep.subr.mxu0 0.0
    %5400 = vmatpush1.msra.mxu0 0.0
    %5401 = vmatprep.subr.mxu0 0.0
    %5402 = vmatpush1.msra.mxu0 0.0
    %5403 = vmatprep.subr.mxu0 0.0
    %5404 = vmatpush1.msra.mxu0 0.0
    %5405 = vmatprep.subr.mxu0 0.0
    %5406 = vmatpush1.msra.mxu0 0.0
    %5407 = vmatprep.subr.mxu0 0.0
    %5408 = vmatpush1.msra.mxu0 0.0
    %5409 = vmatprep.subr.mxu0 0.0
    %5410 = vmatpush1.msra.mxu0 0.0
    %5411 = vmatprep.subr.mxu0 0.0
    %5412 = vmatpush1.msra.mxu0 0.0
    %5413 = vmatprep.subr.mxu0 0.0
    %5414 = vmatpush1.msra.mxu0 0.0
    %5415 = vmatprep.subr.mxu0 0.0
    %5416 = vmatpush1.msra.mxu0 %v5359
    %5417 = vmatprep.subr.mxu0 0.0
    %5418 = vmatpush1.msra.mxu0 %v5358
    %5419 = vmatprep.subr.mxu0 0.0
    %5420 = vmatpush1.msra.mxu0 %v5357
    %5421 = vmatprep.subr.mxu0 0.0
    %5422 = vmatpush1.msra.mxu0 %v5356
    %5423 = vmatprep.subr.mxu0 0.0
    %5424 = vmatpush2.msra.mxu0 0.0
    %5425 = vmatprep.subr.mxu0 0.0
    %5426 = vmatpush2.msra.mxu0 0.0
    %5427 = vmatprep.subr.mxu0 0.0
    %5428 = vmatpush2.msra.mxu0 0.0
    %5429 = vmatprep.subr.mxu0 0.0
    %5430 = vmatpush2.msra.mxu0 0.0
    %5431 = vmatprep.subr.mxu0 0.0
    %5432 = vmatpush2.msra.mxu0 0.0
    %5433 = vmatprep.subr.mxu0 0.0
    %5434 = vmatpush2.msra.mxu0 0.0
    %5435 = vmatprep.subr.mxu0 0.0
    %5436 = vmatpush2.msra.mxu0 0.0
    %5437 = vmatprep.subr.mxu0 0.0
    %5438 = vmatpush2.msra.mxu0 0.0
    %5439 = vmatprep.subr.mxu0 0.0
    %5440 = vmatpush2.msra.mxu0 0.0
    %5441 = vmatprep.subr.mxu0 0.0
    %5442 = vmatpush2.msra.mxu0 0.0
    %5443 = vmatprep.subr.mxu0 0.0
    %5444 = vmatpush2.msra.mxu0 0.0
    %5445 = vmatprep.subr.mxu0 0.0
    %5446 = vmatpush2.msra.mxu0 0.0
    %5447 = vmatprep.subr.mxu0 0.0
    %5448 = vmatpush2.msra.mxu0 0.0
    %5449 = vmatprep.subr.mxu0 0.0
    %5450 = vmatpush2.msra.mxu0 0.0
    %5451 = vmatprep.subr.mxu0 0.0
    %5452 = vmatpush2.msra.mxu0 0.0
    %5453 = vmatprep.subr.mxu0 0.0
    %5454 = vmatpush2.msra.mxu0 0.0
    %5455 = vmatprep.mubr.f32.mxu0 0.0
    %5456 = vmatmul.mubr.f32.gmra.mxu0 %v5368
    %v5457 = vpop.f32.mrf.mxu0
    %v5458 = vadd.f32 %v5365, %v5457
    %v5459 = vpop.f32.mrf.mxu0
    %5460 = vmatprep.mubr.f32.mxu0 0.0
    %5461 = vmatmul.mubr.f32.gmra.mxu0 %v5371
    %v5462 = vpop.f32.mrf.mxu0
    %v5463 = vadd.f32 %v5365, %v5462
    %v5464 = vpop.f32.mrf.mxu0
    %5465 = vmatprep.mubr.f32.mxu0 0.0
    %5466 = vmatmul.mubr.f32.gmra.mxu0 %v5374
    %v5467 = vpop.f32.mrf.mxu0
    %v5468 = vadd.f32 %v5365, %v5467
    %v5469 = vpop.f32.mrf.mxu0
    %5470 = vmatprep.mubr.f32.mxu0 0.0
    %5471 = vmatmul.mubr.f32.gmra.mxu0 %v5377
    %v5472 = vpop.f32.mrf.mxu0
    %v5473 = vadd.f32 %v5365, %v5472
    %v5474 = vpop.f32.mrf.mxu0
    %5475 = vmatprep.mubr.f32.mxu0 0.0
    %5476 = vmatmul.mubr.f32.gmra.mxu0 %v5380
    %v5477 = vpop.f32.mrf.mxu0
    %v5478 = vadd.f32 %v5365, %v5477
    %v5479 = vpop.f32.mrf.mxu0
    %5480 = vmatprep.mubr.f32.mxu0 0.0
    %5481 = vmatmul.mubr.f32.gmra.mxu0 %v5383
    %v5482 = vpop.f32.mrf.mxu0
    %v5483 = vadd.f32 %v5365, %v5482
    %v5484 = vpop.f32.mrf.mxu0
    %5485 = vmatprep.mubr.f32.mxu0 0.0
    %5486 = vmatmul.mubr.f32.gmra.mxu0 %v5386
    %v5487 = vpop.f32.mrf.mxu0
    %v5488 = vadd.f32 %v5365, %v5487
    %v5489 = vpop.f32.mrf.mxu0
    %5490 = vmatprep.mubr.f32.mxu0 0.0
    %5491 = vmatmul.mubr.f32.gmra.mxu0 %v5389
    %v5492 = vpop.f32.mrf.mxu0
    %v5493 = vadd.f32 %v5365, %v5492
    %v5494 = vpop.f32.mrf.mxu0
    %5495 = vdwg.mxu0
    %v5496 = vmax.f32 %v5458, 0.0
    %v5497 = vmax.f32 %v5463, 0.0
    %v5498 = vmax.f32 %v5468, 0.0
    %v5499 = vmax.f32 %v5473, 0.0
    %v5500 = vmax.f32 %v5478, 0.0
    %v5501 = vmax.f32 %v5483, 0.0
    %v5502 = vmax.f32 %v5488, 0.0
    %v5503 = vmax.f32 %v5493, 0.0
    %v5504 = vld [vmem:[#allocation42] sm:$0xff]
    %v5505 = vld [vmem:[#allocation42 + $0x8] sm:$0xff]
    %v5506 = vld [vmem:[#allocation42 + $0x10] sm:$0xff]
    %v5507 = vld [vmem:[#allocation42 + $0x18] sm:$0xff]
    %v5508 = vld [vmem:[#allocation44] sm:$0x1]
    %v5510 = vlaneseq
    %v5511 = vshrl.u32 %v5510, 7
    %v5512 = vsub.s32 0, %v5511
    %v5513 = vrot.slane %v5508, %v5512
    %v5516 = vsel %vm616, %v5496, 0
    %v5519 = vsel %vm616, %v5497, 0
    %v5522 = vsel %vm616, %v5498, 0
    %v5525 = vsel %vm616, %v5499, 0
    %v5528 = vsel %vm616, %v5500, 0
    %v5531 = vsel %vm616, %v5501, 0
    %v5534 = vsel %vm616, %v5502, 0
    %v5537 = vsel %vm616, %v5503, 0
    %5539 = vmatprep.subr.mxu0 0.0
    %5540 = vmatpush1.msra.mxu0 0.0
    %5541 = vmatprep.subr.mxu0 0.0
    %5542 = vmatpush1.msra.mxu0 0.0
    %5543 = vmatprep.subr.mxu0 0.0
    %5544 = vmatpush1.msra.mxu0 0.0
    %5545 = vmatprep.subr.mxu0 0.0
    %5546 = vmatpush1.msra.mxu0 0.0
    %5547 = vmatprep.subr.mxu0 0.0
    %5548 = vmatpush1.msra.mxu0 0.0
    %5549 = vmatprep.subr.mxu0 0.0
    %5550 = vmatpush1.msra.mxu0 0.0
    %5551 = vmatprep.subr.mxu0 0.0
    %5552 = vmatpush1.msra.mxu0 0.0
    %5553 = vmatprep.subr.mxu0 0.0
    %5554 = vmatpush1.msra.mxu0 0.0
    %5555 = vmatprep.subr.mxu0 0.0
    %5556 = vmatpush1.msra.mxu0 0.0
    %5557 = vmatprep.subr.mxu0 0.0
    %5558 = vmatpush1.msra.mxu0 0.0
    %5559 = vmatprep.subr.mxu0 0.0
    %5560 = vmatpush1.msra.mxu0 0.0
    %5561 = vmatprep.subr.mxu0 0.0
    %5562 = vmatpush1.msra.mxu0 0.0
    %5563 = vmatprep.subr.mxu0 0.0
    %5564 = vmatpush1.msra.mxu0 %v5507
    %5565 = vmatprep.subr.mxu0 0.0
    %5566 = vmatpush1.msra.mxu0 %v5506
    %5567 = vmatprep.subr.mxu0 0.0
    %5568 = vmatpush1.msra.mxu0 %v5505
    %5569 = vmatprep.subr.mxu0 0.0
    %5570 = vmatpush1.msra.mxu0 %v5504
    %5571 = vmatprep.subr.mxu0 0.0
    %5572 = vmatpush2.msra.mxu0 0.0
    %5573 = vmatprep.subr.mxu0 0.0
    %5574 = vmatpush2.msra.mxu0 0.0
    %5575 = vmatprep.subr.mxu0 0.0
    %5576 = vmatpush2.msra.mxu0 0.0
    %5577 = vmatprep.subr.mxu0 0.0
    %5578 = vmatpush2.msra.mxu0 0.0
    %5579 = vmatprep.subr.mxu0 0.0
    %5580 = vmatpush2.msra.mxu0 0.0
    %5581 = vmatprep.subr.mxu0 0.0
    %5582 = vmatpush2.msra.mxu0 0.0
    %5583 = vmatprep.subr.mxu0 0.0
    %5584 = vmatpush2.msra.mxu0 0.0
    %5585 = vmatprep.subr.mxu0 0.0
    %5586 = vmatpush2.msra.mxu0 0.0
    %5587 = vmatprep.subr.mxu0 0.0
    %5588 = vmatpush2.msra.mxu0 0.0
    %5589 = vmatprep.subr.mxu0 0.0
    %5590 = vmatpush2.msra.mxu0 0.0
    %5591 = vmatprep.subr.mxu0 0.0
    %5592 = vmatpush2.msra.mxu0 0.0
    %5593 = vmatprep.subr.mxu0 0.0
    %5594 = vmatpush2.msra.mxu0 0.0
    %5595 = vmatprep.subr.mxu0 0.0
    %5596 = vmatpush2.msra.mxu0 0.0
    %5597 = vmatprep.subr.mxu0 0.0
    %5598 = vmatpush2.msra.mxu0 0.0
    %5599 = vmatprep.subr.mxu0 0.0
    %5600 = vmatpush2.msra.mxu0 0.0
    %5601 = vmatprep.subr.mxu0 0.0
    %5602 = vmatpush2.msra.mxu0 0.0
    %5603 = vmatprep.mubr.f32.mxu0 0.0
    %5604 = vmatmul.mubr.f32.gmra.mxu0 %v5516
    %v5605 = vpop.f32.mrf.mxu0
    %v5606 = vadd.f32 %v5513, %v5605
    %v5607 = vpop.f32.mrf.mxu0
    %5608 = vmatprep.mubr.f32.mxu0 0.0
    %5609 = vmatmul.mubr.f32.gmra.mxu0 %v5519
    %v5610 = vpop.f32.mrf.mxu0
    %v5611 = vadd.f32 %v5513, %v5610
    %v5612 = vpop.f32.mrf.mxu0
    %5613 = vmatprep.mubr.f32.mxu0 0.0
    %5614 = vmatmul.mubr.f32.gmra.mxu0 %v5522
    %v5615 = vpop.f32.mrf.mxu0
    %v5616 = vadd.f32 %v5513, %v5615
    %v5617 = vpop.f32.mrf.mxu0
    %5618 = vmatprep.mubr.f32.mxu0 0.0
    %5619 = vmatmul.mubr.f32.gmra.mxu0 %v5525
    %v5620 = vpop.f32.mrf.mxu0
    %v5621 = vadd.f32 %v5513, %v5620
    %v5622 = vpop.f32.mrf.mxu0
    %5623 = vmatprep.mubr.f32.mxu0 0.0
    %5624 = vmatmul.mubr.f32.gmra.mxu0 %v5528
    %v5625 = vpop.f32.mrf.mxu0
    %v5626 = vadd.f32 %v5513, %v5625
    %v5627 = vpop.f32.mrf.mxu0
    %5628 = vmatprep.mubr.f32.mxu0 0.0
    %5629 = vmatmul.mubr.f32.gmra.mxu0 %v5531
    %v5630 = vpop.f32.mrf.mxu0
    %v5631 = vadd.f32 %v5513, %v5630
    %v5632 = vpop.f32.mrf.mxu0
    %5633 = vmatprep.mubr.f32.mxu0 0.0
    %5634 = vmatmul.mubr.f32.gmra.mxu0 %v5534
    %v5635 = vpop.f32.mrf.mxu0
    %v5636 = vadd.f32 %v5513, %v5635
    %v5637 = vpop.f32.mrf.mxu0
    %5638 = vmatprep.mubr.f32.mxu0 0.0
    %5639 = vmatmul.mubr.f32.gmra.mxu0 %v5537
    %v5640 = vpop.f32.mrf.mxu0
    %v5641 = vadd.f32 %v5513, %v5640
    %v5642 = vpop.f32.mrf.mxu0
    %5643 = vdwg.mxu0
    %v5644 = vxor.u32 %v5606, 2147483648
    %v5645 = vxor.u32 %v5611, 2147483648
    %v5646 = vxor.u32 %v5616, 2147483648
    %v5647 = vxor.u32 %v5621, 2147483648
    %v5648 = vxor.u32 %v5626, 2147483648
    %v5649 = vxor.u32 %v5631, 2147483648
    %v5650 = vxor.u32 %v5636, 2147483648
    %v5651 = vxor.u32 %v5641, 2147483648
    %v5652 = vmul.f32 %v5644, 1.442695
    %v5653 = vpow.pop %v5652
    %v5654 = vmul.f32 %v5645, 1.442695
    %v5655 = vpow.pop %v5654
    %v5656 = vmul.f32 %v5646, 1.442695
    %v5657 = vpow.pop %v5656
    %v5658 = vmul.f32 %v5647, 1.442695
    %v5659 = vpow.pop %v5658
    %v5660 = vmul.f32 %v5648, 1.442695
    %v5661 = vpow.pop %v5660
    %v5662 = vmul.f32 %v5649, 1.442695
    %v5663 = vpow.pop %v5662
    %v5664 = vmul.f32 %v5650, 1.442695
    %v5665 = vpow.pop %v5664
    %v5666 = vmul.f32 %v5651, 1.442695
    %v5667 = vpow.pop %v5666
    %v5668 = vadd.f32 %v5653, 1.0
    %v5669 = vadd.f32 %v5655, 1.0
    %v5670 = vadd.f32 %v5657, 1.0
    %v5671 = vadd.f32 %v5659, 1.0
    %v5672 = vadd.f32 %v5661, 1.0
    %v5673 = vadd.f32 %v5663, 1.0
    %v5674 = vadd.f32 %v5665, 1.0
    %v5675 = vadd.f32 %v5667, 1.0
    %v5676 = vrcp.pop %v5668
    %v5677 = vmul.f32 1.0, %v5676
    %v5678 = vrcp.pop %v5669
    %v5679 = vmul.f32 1.0, %v5678
    %v5680 = vrcp.pop %v5670
    %v5681 = vmul.f32 1.0, %v5680
    %v5682 = vrcp.pop %v5671
    %v5683 = vmul.f32 1.0, %v5682
    %v5684 = vrcp.pop %v5672
    %v5685 = vmul.f32 1.0, %v5684
    %v5686 = vrcp.pop %v5673
    %v5687 = vmul.f32 1.0, %v5686
    %v5688 = vrcp.pop %v5674
    %v5689 = vmul.f32 1.0, %v5688
    %v5690 = vrcp.pop %v5675
    %v5691 = vmul.f32 1.0, %v5690
    %v5692 = vmax.f32 %v5606, 0.0
    %v5693 = vmax.f32 %v5611, 0.0
    %v5694 = vmax.f32 %v5616, 0.0
    %v5695 = vmax.f32 %v5621, 0.0
    %v5696 = vmax.f32 %v5626, 0.0
    %v5697 = vmax.f32 %v5631, 0.0
    %v5698 = vmax.f32 %v5636, 0.0
    %v5699 = vmax.f32 %v5641, 0.0
    %vm5700 = vcmp.ne.f32.partialorder %v5606, %v5606
    %vm5701 = vcmp.ne.f32.partialorder %v5611, %v5611
    %vm5702 = vcmp.ne.f32.partialorder %v5616, %v5616
    %vm5703 = vcmp.ne.f32.partialorder %v5621, %v5621
    %vm5704 = vcmp.ne.f32.partialorder %v5626, %v5626
    %vm5705 = vcmp.ne.f32.partialorder %v5631, %v5631
    %vm5706 = vcmp.ne.f32.partialorder %v5636, %v5636
    %vm5707 = vcmp.ne.f32.partialorder %v5641, %v5641
    %v5708 = vadd.f32 %v5606, 0.0
    %v5709 = vadd.f32 %v5611, 0.0
    %v5710 = vadd.f32 %v5616, 0.0
    %v5711 = vadd.f32 %v5621, 0.0
    %v5712 = vadd.f32 %v5626, 0.0
    %v5713 = vadd.f32 %v5631, 0.0
    %v5714 = vadd.f32 %v5636, 0.0
    %v5715 = vadd.f32 %v5641, 0.0
    %v5716 = vand.u32 2147483647, %v5606
    %v5717 = vand.u32 2147483647, %v5611
    %v5718 = vand.u32 2147483647, %v5616
    %v5719 = vand.u32 2147483647, %v5621
    %v5720 = vand.u32 2147483647, %v5626
    %v5721 = vand.u32 2147483647, %v5631
    %v5722 = vand.u32 2147483647, %v5636
    %v5723 = vand.u32 2147483647, %v5641
    %v5724 = vsub.f32 0.0, %v5716
    %v5725 = vsub.f32 0.0, %v5717
    %v5726 = vsub.f32 0.0, %v5718
    %v5727 = vsub.f32 0.0, %v5719
    %v5728 = vsub.f32 0.0, %v5720
    %v5729 = vsub.f32 0.0, %v5721
    %v5730 = vsub.f32 0.0, %v5722
    %v5731 = vsub.f32 0.0, %v5723
    %v5732 = vmul.f32 %v5724, 1.442695
    %v5733 = vpow.pop %v5732
    %v5734 = vmul.f32 %v5725, 1.442695
    %v5735 = vpow.pop %v5734
    %v5736 = vmul.f32 %v5726, 1.442695
    %v5737 = vpow.pop %v5736
    %v5738 = vmul.f32 %v5727, 1.442695
    %v5739 = vpow.pop %v5738
    %v5740 = vmul.f32 %v5728, 1.442695
    %v5741 = vpow.pop %v5740
    %v5742 = vmul.f32 %v5729, 1.442695
    %v5743 = vpow.pop %v5742
    %v5744 = vmul.f32 %v5730, 1.442695
    %v5745 = vpow.pop %v5744
    %v5746 = vmul.f32 %v5731, 1.442695
    %v5747 = vpow.pop %v5746
    %v5748 = vadd.f32 %v5733, 1.0
    %v5749 = vlog2.pop %v5748
    %v5750 = vmul.f32 %v5749, 0.6931472
    %v5751 = vmul.f32 -0.5, %v5733
    %v5752 = vadd.f32 %v5751, 1.0
    %v5753 = vmul.f32 %v5752, %v5733
    %v5754 = vand.u32 2147483647, %v5733
    %vm5755 = vcmp.lt.f32.partialorder %v5754, 0.0004427343
    %v5756 = vsel %vm5755, %v5753, %v5750
    %v5757 = vadd.f32 %v5735, 1.0
    %v5758 = vlog2.pop %v5757
    %v5759 = vmul.f32 %v5758, 0.6931472
    %v5760 = vmul.f32 -0.5, %v5735
    %v5761 = vadd.f32 %v5760, 1.0
    %v5762 = vmul.f32 %v5761, %v5735
    %v5763 = vand.u32 2147483647, %v5735
    %vm5764 = vcmp.lt.f32.partialorder %v5763, 0.0004427343
    %v5765 = vsel %vm5764, %v5762, %v5759
    %v5766 = vadd.f32 %v5737, 1.0
    %v5767 = vlog2.pop %v5766
    %v5768 = vmul.f32 %v5767, 0.6931472
    %v5769 = vmul.f32 -0.5, %v5737
    %v5770 = vadd.f32 %v5769, 1.0
    %v5771 = vmul.f32 %v5770, %v5737
    %v5772 = vand.u32 2147483647, %v5737
    %vm5773 = vcmp.lt.f32.partialorder %v5772, 0.0004427343
    %v5774 = vsel %vm5773, %v5771, %v5768
    %v5775 = vadd.f32 %v5739, 1.0
    %v5776 = vlog2.pop %v5775
    %v5777 = vmul.f32 %v5776, 0.6931472
    %v5778 = vmul.f32 -0.5, %v5739
    %v5779 = vadd.f32 %v5778, 1.0
    %v5780 = vmul.f32 %v5779, %v5739
    %v5781 = vand.u32 2147483647, %v5739
    %vm5782 = vcmp.lt.f32.partialorder %v5781, 0.0004427343
    %v5783 = vsel %vm5782, %v5780, %v5777
    %v5784 = vadd.f32 %v5741, 1.0
    %v5785 = vlog2.pop %v5784
    %v5786 = vmul.f32 %v5785, 0.6931472
    %v5787 = vmul.f32 -0.5, %v5741
    %v5788 = vadd.f32 %v5787, 1.0
    %v5789 = vmul.f32 %v5788, %v5741
    %v5790 = vand.u32 2147483647, %v5741
    %vm5791 = vcmp.lt.f32.partialorder %v5790, 0.0004427343
    %v5792 = vsel %vm5791, %v5789, %v5786
    %v5793 = vadd.f32 %v5743, 1.0
    %v5794 = vlog2.pop %v5793
    %v5795 = vmul.f32 %v5794, 0.6931472
    %v5796 = vmul.f32 -0.5, %v5743
    %v5797 = vadd.f32 %v5796, 1.0
    %v5798 = vmul.f32 %v5797, %v5743
    %v5799 = vand.u32 2147483647, %v5743
    %vm5800 = vcmp.lt.f32.partialorder %v5799, 0.0004427343
    %v5801 = vsel %vm5800, %v5798, %v5795
    %v5802 = vadd.f32 %v5745, 1.0
    %v5803 = vlog2.pop %v5802
    %v5804 = vmul.f32 %v5803, 0.6931472
    %v5805 = vmul.f32 -0.5, %v5745
    %v5806 = vadd.f32 %v5805, 1.0
    %v5807 = vmul.f32 %v5806, %v5745
    %v5808 = vand.u32 2147483647, %v5745
    %vm5809 = vcmp.lt.f32.partialorder %v5808, 0.0004427343
    %v5810 = vsel %vm5809, %v5807, %v5804
    %v5811 = vadd.f32 %v5747, 1.0
    %v5812 = vlog2.pop %v5811
    %v5813 = vmul.f32 %v5812, 0.6931472
    %v5814 = vmul.f32 -0.5, %v5747
    %v5815 = vadd.f32 %v5814, 1.0
    %v5816 = vmul.f32 %v5815, %v5747
    %v5817 = vand.u32 2147483647, %v5747
    %vm5818 = vcmp.lt.f32.partialorder %v5817, 0.0004427343
    %v5819 = vsel %vm5818, %v5816, %v5813
    %v5820 = vadd.f32 %v5692, %v5756
    %v5821 = vadd.f32 %v5693, %v5765
    %v5822 = vadd.f32 %v5694, %v5774
    %v5823 = vadd.f32 %v5695, %v5783
    %v5824 = vadd.f32 %v5696, %v5792
    %v5825 = vadd.f32 %v5697, %v5801
    %v5826 = vadd.f32 %v5698, %v5810
    %v5827 = vadd.f32 %v5699, %v5819
    %v5828 = vsel %vm5700, %v5708, %v5820
    %v5829 = vsel %vm5701, %v5709, %v5821
    %v5830 = vsel %vm5702, %v5710, %v5822
    %v5831 = vsel %vm5703, %v5711, %v5823
    %v5832 = vsel %vm5704, %v5712, %v5824
    %v5833 = vsel %vm5705, %v5713, %v5825
    %v5834 = vsel %vm5706, %v5714, %v5826
    %v5835 = vsel %vm5707, %v5715, %v5827
    %v5836 = vmul.f32 %v5828, 0.5
    %v5837 = vmul.f32 %v5829, 0.5
    %v5838 = vmul.f32 %v5830, 0.5
    %v5839 = vmul.f32 %v5831, 0.5
    %v5840 = vmul.f32 %v5832, 0.5
    %v5841 = vmul.f32 %v5833, 0.5
    %v5842 = vmul.f32 %v5834, 0.5
    %v5843 = vmul.f32 %v5835, 0.5
    %v5844 = vmul.f32 %v5836, 1.442695
    %v5845 = vpow.pop %v5844
    %v5846 = vmul.f32 %v5837, 1.442695
    %v5847 = vpow.pop %v5846
    %v5848 = vmul.f32 %v5838, 1.442695
    %v5849 = vpow.pop %v5848
    %v5850 = vmul.f32 %v5839, 1.442695
    %v5851 = vpow.pop %v5850
    %v5852 = vmul.f32 %v5840, 1.442695
    %v5853 = vpow.pop %v5852
    %v5854 = vmul.f32 %v5841, 1.442695
    %v5855 = vpow.pop %v5854
    %v5856 = vmul.f32 %v5842, 1.442695
    %v5857 = vpow.pop %v5856
    %v5858 = vmul.f32 %v5843, 1.442695
    %v5859 = vpow.pop %v5858
    %v5860 = vld [vmem:[#allocation11] sm:$0xff]
    %v5861 = vld [vmem:[#allocation11 + $0x8] sm:$0xff]
    %v5862 = vld [vmem:[#allocation11 + $0x10] sm:$0xff]
    %v5863 = vld [vmem:[#allocation11 + $0x18] sm:$0xff]
    %v5864 = vld [vmem:[#allocation11 + $0x20] sm:$0xff]
    %v5865 = vld [vmem:[#allocation11 + $0x28] sm:$0xff]
    %v5866 = vld [vmem:[#allocation11 + $0x30] sm:$0xff]
    %v5867 = vld [vmem:[#allocation11 + $0x38] sm:$0xff]
    %5876 = vrot.lane.b32.xlu0 %v5860, 16
    %v5877 = vpop.permute.xlu0 %5876
    %5878 = vrot.lane.b32.xlu0 %v5861, 16
    %v5879 = vpop.permute.xlu0 %5878
    %5880 = vrot.lane.b32.xlu0 %v5862, 16
    %v5881 = vpop.permute.xlu0 %5880
    %5882 = vrot.lane.b32.xlu0 %v5863, 16
    %v5883 = vpop.permute.xlu0 %5882
    %5884 = vrot.lane.b32.xlu0 %v5864, 16
    %v5885 = vpop.permute.xlu0 %5884
    %5886 = vrot.lane.b32.xlu0 %v5865, 16
    %v5887 = vpop.permute.xlu0 %5886
    %5888 = vrot.lane.b32.xlu0 %v5866, 16
    %v5889 = vpop.permute.xlu0 %5888
    %5890 = vrot.lane.b32.xlu0 %v5867, 16
    %v5891 = vpop.permute.xlu0 %5890
    %v5900 = vmul.f32 %v5845, %v5877
    %v5901 = vmul.f32 %v5847, %v5879
    %v5902 = vmul.f32 %v5849, %v5881
    %v5903 = vmul.f32 %v5851, %v5883
    %v5904 = vmul.f32 %v5853, %v5885
    %v5905 = vmul.f32 %v5855, %v5887
    %v5906 = vmul.f32 %v5857, %v5889
    %v5907 = vmul.f32 %v5859, %v5891
    %5916 = vrot.lane.b32.xlu0 %v5900, 112
    %v5917 = vpop.permute.xlu0 %5916
    %5918 = vrot.lane.b32.xlu0 %v5901, 112
    %v5919 = vpop.permute.xlu0 %5918
    %5920 = vrot.lane.b32.xlu0 %v5902, 112
    %v5921 = vpop.permute.xlu0 %5920
    %5922 = vrot.lane.b32.xlu0 %v5903, 112
    %v5923 = vpop.permute.xlu0 %5922
    %5924 = vrot.lane.b32.xlu0 %v5904, 112
    %v5925 = vpop.permute.xlu0 %5924
    %5926 = vrot.lane.b32.xlu0 %v5905, 112
    %v5927 = vpop.permute.xlu0 %5926
    %5928 = vrot.lane.b32.xlu0 %v5906, 112
    %v5929 = vpop.permute.xlu0 %5928
    %5930 = vrot.lane.b32.xlu0 %v5907, 112
    %v5931 = vpop.permute.xlu0 %5930
    %v5940 = vadd.f32 %v5677, %v5917
    %v5941 = vadd.f32 %v5679, %v5919
    %v5942 = vadd.f32 %v5681, %v5921
    %v5943 = vadd.f32 %v5683, %v5923
    %v5944 = vadd.f32 %v5685, %v5925
    %v5945 = vadd.f32 %v5687, %v5927
    %v5946 = vadd.f32 %v5689, %v5929
    %v5947 = vadd.f32 %v5691, %v5931
    %v5948 = vld [vmem:[%s55] sm:$0xff]
    %v5949 = vld [vmem:[%s55 + $0x8] sm:$0xff]
    %v5950 = vld [vmem:[%s57] sm:$0x1]
    %v5952 = vlaneseq
    %v5953 = vshrl.u32 %v5952, 7
    %v5954 = vsub.s32 0, %v5953
    %v5955 = vrot.slane %v5950, %v5954
    %v5958 = vsel %vm467, %v5940, 0
    %v5961 = vsel %vm467, %v5941, 0
    %v5964 = vsel %vm467, %v5942, 0
    %v5967 = vsel %vm467, %v5943, 0
    %v5970 = vsel %vm467, %v5944, 0
    %v5973 = vsel %vm467, %v5945, 0
    %v5976 = vsel %vm467, %v5946, 0
    %v5979 = vsel %vm467, %v5947, 0
    %5981 = vmatprep.subr.mxu0 0.0
    %5982 = vmatpush1.msra.mxu0 0.0
    %5983 = vmatprep.subr.mxu0 0.0
    %5984 = vmatpush1.msra.mxu0 0.0
    %5985 = vmatprep.subr.mxu0 0.0
    %5986 = vmatpush1.msra.mxu0 0.0
    %5987 = vmatprep.subr.mxu0 0.0
    %5988 = vmatpush1.msra.mxu0 0.0
    %5989 = vmatprep.subr.mxu0 0.0
    %5990 = vmatpush1.msra.mxu0 0.0
    %5991 = vmatprep.subr.mxu0 0.0
    %5992 = vmatpush1.msra.mxu0 0.0
    %5993 = vmatprep.subr.mxu0 0.0
    %5994 = vmatpush1.msra.mxu0 0.0
    %5995 = vmatprep.subr.mxu0 0.0
    %5996 = vmatpush1.msra.mxu0 0.0
    %5997 = vmatprep.subr.mxu0 0.0
    %5998 = vmatpush1.msra.mxu0 0.0
    %5999 = vmatprep.subr.mxu0 0.0
    %6000 = vmatpush1.msra.mxu0 0.0
    %6001 = vmatprep.subr.mxu0 0.0
    %6002 = vmatpush1.msra.mxu0 0.0
    %6003 = vmatprep.subr.mxu0 0.0
    %6004 = vmatpush1.msra.mxu0 0.0
    %6005 = vmatprep.subr.mxu0 0.0
    %6006 = vmatpush1.msra.mxu0 0.0
    %6007 = vmatprep.subr.mxu0 0.0
    %6008 = vmatpush1.msra.mxu0 0.0
    %6009 = vmatprep.subr.mxu0 0.0
    %6010 = vmatpush1.msra.mxu0 %v5949
    %6011 = vmatprep.subr.mxu0 0.0
    %6012 = vmatpush1.msra.mxu0 %v5948
    %6013 = vmatprep.subr.mxu0 0.0
    %6014 = vmatpush2.msra.mxu0 0.0
    %6015 = vmatprep.subr.mxu0 0.0
    %6016 = vmatpush2.msra.mxu0 0.0
    %6017 = vmatprep.subr.mxu0 0.0
    %6018 = vmatpush2.msra.mxu0 0.0
    %6019 = vmatprep.subr.mxu0 0.0
    %6020 = vmatpush2.msra.mxu0 0.0
    %6021 = vmatprep.subr.mxu0 0.0
    %6022 = vmatpush2.msra.mxu0 0.0
    %6023 = vmatprep.subr.mxu0 0.0
    %6024 = vmatpush2.msra.mxu0 0.0
    %6025 = vmatprep.subr.mxu0 0.0
    %6026 = vmatpush2.msra.mxu0 0.0
    %6027 = vmatprep.subr.mxu0 0.0
    %6028 = vmatpush2.msra.mxu0 0.0
    %6029 = vmatprep.subr.mxu0 0.0
    %6030 = vmatpush2.msra.mxu0 0.0
    %6031 = vmatprep.subr.mxu0 0.0
    %6032 = vmatpush2.msra.mxu0 0.0
    %6033 = vmatprep.subr.mxu0 0.0
    %6034 = vmatpush2.msra.mxu0 0.0
    %6035 = vmatprep.subr.mxu0 0.0
    %6036 = vmatpush2.msra.mxu0 0.0
    %6037 = vmatprep.subr.mxu0 0.0
    %6038 = vmatpush2.msra.mxu0 0.0
    %6039 = vmatprep.subr.mxu0 0.0
    %6040 = vmatpush2.msra.mxu0 0.0
    %6041 = vmatprep.subr.mxu0 0.0
    %6042 = vmatpush2.msra.mxu0 0.0
    %6043 = vmatprep.subr.mxu0 0.0
    %6044 = vmatpush2.msra.mxu0 0.0
    %6045 = vmatprep.mubr.f32.mxu0 0.0
    %6046 = vmatmul.mubr.f32.gmra.mxu0 %v5958
    %v6047 = vpop.f32.mrf.mxu0
    %v6048 = vadd.f32 %v5955, %v6047
    %v6049 = vpop.f32.mrf.mxu0
    %6050 = vmatprep.mubr.f32.mxu0 0.0
    %6051 = vmatmul.mubr.f32.gmra.mxu0 %v5961
    %v6052 = vpop.f32.mrf.mxu0
    %v6053 = vadd.f32 %v5955, %v6052
    %v6054 = vpop.f32.mrf.mxu0
    %6055 = vmatprep.mubr.f32.mxu0 0.0
    %6056 = vmatmul.mubr.f32.gmra.mxu0 %v5964
    %v6057 = vpop.f32.mrf.mxu0
    %v6058 = vadd.f32 %v5955, %v6057
    %v6059 = vpop.f32.mrf.mxu0
    %6060 = vmatprep.mubr.f32.mxu0 0.0
    %6061 = vmatmul.mubr.f32.gmra.mxu0 %v5967
    %v6062 = vpop.f32.mrf.mxu0
    %v6063 = vadd.f32 %v5955, %v6062
    %v6064 = vpop.f32.mrf.mxu0
    %6065 = vmatprep.mubr.f32.mxu0 0.0
    %6066 = vmatmul.mubr.f32.gmra.mxu0 %v5970
    %v6067 = vpop.f32.mrf.mxu0
    %v6068 = vadd.f32 %v5955, %v6067
    %v6069 = vpop.f32.mrf.mxu0
    %6070 = vmatprep.mubr.f32.mxu0 0.0
    %6071 = vmatmul.mubr.f32.gmra.mxu0 %v5973
    %v6072 = vpop.f32.mrf.mxu0
    %v6073 = vadd.f32 %v5955, %v6072
    %v6074 = vpop.f32.mrf.mxu0
    %6075 = vmatprep.mubr.f32.mxu0 0.0
    %6076 = vmatmul.mubr.f32.gmra.mxu0 %v5976
    %v6077 = vpop.f32.mrf.mxu0
    %v6078 = vadd.f32 %v5955, %v6077
    %v6079 = vpop.f32.mrf.mxu0
    %6080 = vmatprep.mubr.f32.mxu0 0.0
    %6081 = vmatmul.mubr.f32.gmra.mxu0 %v5979
    %v6082 = vpop.f32.mrf.mxu0
    %v6083 = vadd.f32 %v5955, %v6082
    %v6084 = vpop.f32.mrf.mxu0
    %6085 = vdwg.mxu0
    %v6086 = vrcp.pop %v4743
    %v6087 = vmul.f32 %v5175, %v6086
    %v6088 = vrcp.pop %v4744
    %v6089 = vmul.f32 %v5176, %v6088
    %v6090 = vrcp.pop %v4745
    %v6091 = vmul.f32 %v5177, %v6090
    %v6092 = vrcp.pop %v4746
    %v6093 = vmul.f32 %v5178, %v6092
    %v6094 = vrcp.pop %v4747
    %v6095 = vmul.f32 %v5179, %v6094
    %v6096 = vrcp.pop %v4748
    %v6097 = vmul.f32 %v5180, %v6096
    %v6098 = vrcp.pop %v4749
    %v6099 = vmul.f32 %v5181, %v6098
    %v6100 = vrcp.pop %v4750
    %v6101 = vmul.f32 %v5182, %v6100
    %v6102 = vlog2.pop %v6087
    %v6103 = vmul.f32 %v6102, 0.6931472
    %v6104 = vlog2.pop %v6089
    %v6105 = vmul.f32 %v6104, 0.6931472
    %v6106 = vlog2.pop %v6091
    %v6107 = vmul.f32 %v6106, 0.6931472
    %v6108 = vlog2.pop %v6093
    %v6109 = vmul.f32 %v6108, 0.6931472
    %v6110 = vlog2.pop %v6095
    %v6111 = vmul.f32 %v6110, 0.6931472
    %v6112 = vlog2.pop %v6097
    %v6113 = vmul.f32 %v6112, 0.6931472
    %v6114 = vlog2.pop %v6099
    %v6115 = vmul.f32 %v6114, 0.6931472
    %v6116 = vlog2.pop %v6101
    %v6117 = vmul.f32 %v6116, 0.6931472
    %v6118 = vmul.f32 %v6103, 2.0
    %v6119 = vmul.f32 %v6105, 2.0
    %v6120 = vmul.f32 %v6107, 2.0
    %v6121 = vmul.f32 %v6109, 2.0
    %v6122 = vmul.f32 %v6111, 2.0
    %v6123 = vmul.f32 %v6113, 2.0
    %v6124 = vmul.f32 %v6115, 2.0
    %v6125 = vmul.f32 %v6117, 2.0
    %v6126 = vmul.f32 %v4743, %v4743
    %v6127 = vmul.f32 %v4744, %v4744
    %v6128 = vmul.f32 %v4745, %v4745
    %v6129 = vmul.f32 %v4746, %v4746
    %v6130 = vmul.f32 %v4747, %v4747
    %v6131 = vmul.f32 %v4748, %v4748
    %v6132 = vmul.f32 %v4749, %v4749
    %v6133 = vmul.f32 %v4750, %v4750
    %v6134 = vsub.f32 %v4599, %v5001
    %v6135 = vsub.f32 %v4600, %v5006
    %v6136 = vsub.f32 %v4601, %v5011
    %v6137 = vsub.f32 %v4602, %v5016
    %v6138 = vsub.f32 %v4603, %v5021
    %v6139 = vsub.f32 %v4604, %v5026
    %v6140 = vsub.f32 %v4605, %v5031
    %v6141 = vsub.f32 %v4606, %v5036
    %v6142 = vmul.f32 %v6134, %v6134
    %v6143 = vmul.f32 %v6135, %v6135
    %v6144 = vmul.f32 %v6136, %v6136
    %v6145 = vmul.f32 %v6137, %v6137
    %v6146 = vmul.f32 %v6138, %v6138
    %v6147 = vmul.f32 %v6139, %v6139
    %v6148 = vmul.f32 %v6140, %v6140
    %v6149 = vmul.f32 %v6141, %v6141
    %6158 = vrot.lane.b32.xlu0 %v6142, 16
    %v6159 = vpop.permute.xlu0 %6158
    %6160 = vrot.lane.b32.xlu0 %v6143, 16
    %v6161 = vpop.permute.xlu0 %6160
    %6162 = vrot.lane.b32.xlu0 %v6144, 16
    %v6163 = vpop.permute.xlu0 %6162
    %6164 = vrot.lane.b32.xlu0 %v6145, 16
    %v6165 = vpop.permute.xlu0 %6164
    %6166 = vrot.lane.b32.xlu0 %v6146, 16
    %v6167 = vpop.permute.xlu0 %6166
    %6168 = vrot.lane.b32.xlu0 %v6147, 16
    %v6169 = vpop.permute.xlu0 %6168
    %6170 = vrot.lane.b32.xlu0 %v6148, 16
    %v6171 = vpop.permute.xlu0 %6170
    %6172 = vrot.lane.b32.xlu0 %v6149, 16
    %v6173 = vpop.permute.xlu0 %6172
    %v6182 = vadd.f32 %v6126, %v6159
    %v6183 = vadd.f32 %v6127, %v6161
    %v6184 = vadd.f32 %v6128, %v6163
    %v6185 = vadd.f32 %v6129, %v6165
    %v6186 = vadd.f32 %v6130, %v6167
    %v6187 = vadd.f32 %v6131, %v6169
    %v6188 = vadd.f32 %v6132, %v6171
    %v6189 = vadd.f32 %v6133, %v6173
    %v6190 = vmul.f32 %v5175, %v5175
    %v6191 = vmul.f32 %v5176, %v5176
    %v6192 = vmul.f32 %v5177, %v5177
    %v6193 = vmul.f32 %v5178, %v5178
    %v6194 = vmul.f32 %v5179, %v5179
    %v6195 = vmul.f32 %v5180, %v5180
    %v6196 = vmul.f32 %v5181, %v5181
    %v6197 = vmul.f32 %v5182, %v5182
    %v6198 = vrcp.pop %v6190
    %v6199 = vmul.f32 %v6182, %v6198
    %v6200 = vrcp.pop %v6191
    %v6201 = vmul.f32 %v6183, %v6200
    %v6202 = vrcp.pop %v6192
    %v6203 = vmul.f32 %v6184, %v6202
    %v6204 = vrcp.pop %v6193
    %v6205 = vmul.f32 %v6185, %v6204
    %v6206 = vrcp.pop %v6194
    %v6207 = vmul.f32 %v6186, %v6206
    %v6208 = vrcp.pop %v6195
    %v6209 = vmul.f32 %v6187, %v6208
    %v6210 = vrcp.pop %v6196
    %v6211 = vmul.f32 %v6188, %v6210
    %v6212 = vrcp.pop %v6197
    %v6213 = vmul.f32 %v6189, %v6212
    %v6214 = vadd.f32 %v6118, %v6199
    %v6215 = vadd.f32 %v6119, %v6201
    %v6216 = vadd.f32 %v6120, %v6203
    %v6217 = vadd.f32 %v6121, %v6205
    %v6218 = vadd.f32 %v6122, %v6207
    %v6219 = vadd.f32 %v6123, %v6209
    %v6220 = vadd.f32 %v6124, %v6211
    %v6221 = vadd.f32 %v6125, %v6213
    %v6222 = vsub.f32 %v6214, 1.0
    %v6223 = vsub.f32 %v6215, 1.0
    %v6224 = vsub.f32 %v6216, 1.0
    %v6225 = vsub.f32 %v6217, 1.0
    %v6226 = vsub.f32 %v6218, 1.0
    %v6227 = vsub.f32 %v6219, 1.0
    %v6228 = vsub.f32 %v6220, 1.0
    %v6229 = vsub.f32 %v6221, 1.0
    %v6230 = vsub.f32 0.0, %v5606
    %v6231 = vsub.f32 0.0, %v5611
    %v6232 = vsub.f32 0.0, %v5616
    %v6233 = vsub.f32 0.0, %v5621
    %v6234 = vsub.f32 0.0, %v5626
    %v6235 = vsub.f32 0.0, %v5631
    %v6236 = vsub.f32 0.0, %v5636
    %v6237 = vsub.f32 0.0, %v5641
    %v6238 = vmax.f32 %v6230, 0.0
    %v6239 = vmax.f32 %v6231, 0.0
    %v6240 = vmax.f32 %v6232, 0.0
    %v6241 = vmax.f32 %v6233, 0.0
    %v6242 = vmax.f32 %v6234, 0.0
    %v6243 = vmax.f32 %v6235, 0.0
    %v6244 = vmax.f32 %v6236, 0.0
    %v6245 = vmax.f32 %v6237, 0.0
    %vm6246 = vcmp.ne.f32.partialorder %v6230, %v6230
    %vm6247 = vcmp.ne.f32.partialorder %v6231, %v6231
    %vm6248 = vcmp.ne.f32.partialorder %v6232, %v6232
    %vm6249 = vcmp.ne.f32.partialorder %v6233, %v6233
    %vm6250 = vcmp.ne.f32.partialorder %v6234, %v6234
    %vm6251 = vcmp.ne.f32.partialorder %v6235, %v6235
    %vm6252 = vcmp.ne.f32.partialorder %v6236, %v6236
    %vm6253 = vcmp.ne.f32.partialorder %v6237, %v6237
    %v6254 = vadd.f32 %v6230, 0.0
    %v6255 = vadd.f32 %v6231, 0.0
    %v6256 = vadd.f32 %v6232, 0.0
    %v6257 = vadd.f32 %v6233, 0.0
    %v6258 = vadd.f32 %v6234, 0.0
    %v6259 = vadd.f32 %v6235, 0.0
    %v6260 = vadd.f32 %v6236, 0.0
    %v6261 = vadd.f32 %v6237, 0.0
    %v6262 = vand.u32 2147483647, %v6230
    %v6263 = vand.u32 2147483647, %v6231
    %v6264 = vand.u32 2147483647, %v6232
    %v6265 = vand.u32 2147483647, %v6233
    %v6266 = vand.u32 2147483647, %v6234
    %v6267 = vand.u32 2147483647, %v6235
    %v6268 = vand.u32 2147483647, %v6236
    %v6269 = vand.u32 2147483647, %v6237
    %v6270 = vsub.f32 0.0, %v6262
    %v6271 = vsub.f32 0.0, %v6263
    %v6272 = vsub.f32 0.0, %v6264
    %v6273 = vsub.f32 0.0, %v6265
    %v6274 = vsub.f32 0.0, %v6266
    %v6275 = vsub.f32 0.0, %v6267
    %v6276 = vsub.f32 0.0, %v6268
    %v6277 = vsub.f32 0.0, %v6269
    %v6278 = vmul.f32 %v6270, 1.442695
    %v6279 = vpow.pop %v6278
    %v6280 = vmul.f32 %v6271, 1.442695
    %v6281 = vpow.pop %v6280
    %v6282 = vmul.f32 %v6272, 1.442695
    %v6283 = vpow.pop %v6282
    %v6284 = vmul.f32 %v6273, 1.442695
    %v6285 = vpow.pop %v6284
    %v6286 = vmul.f32 %v6274, 1.442695
    %v6287 = vpow.pop %v6286
    %v6288 = vmul.f32 %v6275, 1.442695
    %v6289 = vpow.pop %v6288
    %v6290 = vmul.f32 %v6276, 1.442695
    %v6291 = vpow.pop %v6290
    %v6292 = vmul.f32 %v6277, 1.442695
    %v6293 = vpow.pop %v6292
    %v6294 = vadd.f32 %v6279, 1.0
    %v6295 = vlog2.pop %v6294
    %v6296 = vmul.f32 %v6295, 0.6931472
    %v6297 = vmul.f32 -0.5, %v6279
    %v6298 = vadd.f32 %v6297, 1.0
    %v6299 = vmul.f32 %v6298, %v6279
    %v6300 = vand.u32 2147483647, %v6279
    %vm6301 = vcmp.lt.f32.partialorder %v6300, 0.0004427343
    %v6302 = vsel %vm6301, %v6299, %v6296
    %v6303 = vadd.f32 %v6281, 1.0
    %v6304 = vlog2.pop %v6303
    %v6305 = vmul.f32 %v6304, 0.6931472
    %v6306 = vmul.f32 -0.5, %v6281
    %v6307 = vadd.f32 %v6306, 1.0
    %v6308 = vmul.f32 %v6307, %v6281
    %v6309 = vand.u32 2147483647, %v6281
    %vm6310 = vcmp.lt.f32.partialorder %v6309, 0.0004427343
    %v6311 = vsel %vm6310, %v6308, %v6305
    %v6312 = vadd.f32 %v6283, 1.0
    %v6313 = vlog2.pop %v6312
    %v6314 = vmul.f32 %v6313, 0.6931472
    %v6315 = vmul.f32 -0.5, %v6283
    %v6316 = vadd.f32 %v6315, 1.0
    %v6317 = vmul.f32 %v6316, %v6283
    %v6318 = vand.u32 2147483647, %v6283
    %vm6319 = vcmp.lt.f32.partialorder %v6318, 0.0004427343
    %v6320 = vsel %vm6319, %v6317, %v6314
    %v6321 = vadd.f32 %v6285, 1.0
    %v6322 = vlog2.pop %v6321
    %v6323 = vmul.f32 %v6322, 0.6931472
    %v6324 = vmul.f32 -0.5, %v6285
    %v6325 = vadd.f32 %v6324, 1.0
    %v6326 = vmul.f32 %v6325, %v6285
    %v6327 = vand.u32 2147483647, %v6285
    %vm6328 = vcmp.lt.f32.partialorder %v6327, 0.0004427343
    %v6329 = vsel %vm6328, %v6326, %v6323
    %v6330 = vadd.f32 %v6287, 1.0
    %v6331 = vlog2.pop %v6330
    %v6332 = vmul.f32 %v6331, 0.6931472
    %v6333 = vmul.f32 -0.5, %v6287
    %v6334 = vadd.f32 %v6333, 1.0
    %v6335 = vmul.f32 %v6334, %v6287
    %v6336 = vand.u32 2147483647, %v6287
    %vm6337 = vcmp.lt.f32.partialorder %v6336, 0.0004427343
    %v6338 = vsel %vm6337, %v6335, %v6332
    %v6339 = vadd.f32 %v6289, 1.0
    %v6340 = vlog2.pop %v6339
    %v6341 = vmul.f32 %v6340, 0.6931472
    %v6342 = vmul.f32 -0.5, %v6289
    %v6343 = vadd.f32 %v6342, 1.0
    %v6344 = vmul.f32 %v6343, %v6289
    %v6345 = vand.u32 2147483647, %v6289
    %vm6346 = vcmp.lt.f32.partialorder %v6345, 0.0004427343
    %v6347 = vsel %vm6346, %v6344, %v6341
    %v6348 = vadd.f32 %v6291, 1.0
    %v6349 = vlog2.pop %v6348
    %v6350 = vmul.f32 %v6349, 0.6931472
    %v6351 = vmul.f32 -0.5, %v6291
    %v6352 = vadd.f32 %v6351, 1.0
    %v6353 = vmul.f32 %v6352, %v6291
    %v6354 = vand.u32 2147483647, %v6291
    %vm6355 = vcmp.lt.f32.partialorder %v6354, 0.0004427343
    %v6356 = vsel %vm6355, %v6353, %v6350
    %v6357 = vadd.f32 %v6293, 1.0
    %v6358 = vlog2.pop %v6357
    %v6359 = vmul.f32 %v6358, 0.6931472
    %v6360 = vmul.f32 -0.5, %v6293
    %v6361 = vadd.f32 %v6360, 1.0
    %v6362 = vmul.f32 %v6361, %v6293
    %v6363 = vand.u32 2147483647, %v6293
    %vm6364 = vcmp.lt.f32.partialorder %v6363, 0.0004427343
    %v6365 = vsel %vm6364, %v6362, %v6359
    %v6366 = vadd.f32 %v6238, %v6302
    %v6367 = vadd.f32 %v6239, %v6311
    %v6368 = vadd.f32 %v6240, %v6320
    %v6369 = vadd.f32 %v6241, %v6329
    %v6370 = vadd.f32 %v6242, %v6338
    %v6371 = vadd.f32 %v6243, %v6347
    %v6372 = vadd.f32 %v6244, %v6356
    %v6373 = vadd.f32 %v6245, %v6365
    %v6374 = vsel %vm6246, %v6254, %v6366
    %v6375 = vsel %vm6247, %v6255, %v6367
    %v6376 = vsel %vm6248, %v6256, %v6368
    %v6377 = vsel %vm6249, %v6257, %v6369
    %v6378 = vsel %vm6250, %v6258, %v6370
    %v6379 = vsel %vm6251, %v6259, %v6371
    %v6380 = vsel %vm6252, %v6260, %v6372
    %v6381 = vsel %vm6253, %v6261, %v6373
    %v6382 = vld [vmem:[#allocation6] sm:$0xff]
    %v6383 = vld [vmem:[#allocation6 + $0x8] sm:$0xff]
    %v6384 = vld [vmem:[#allocation6 + $0x10] sm:$0xff]
    %v6385 = vld [vmem:[#allocation6 + $0x18] sm:$0xff]
    %v6386 = vld [vmem:[#allocation6 + $0x20] sm:$0xff]
    %v6387 = vld [vmem:[#allocation6 + $0x28] sm:$0xff]
    %v6388 = vld [vmem:[#allocation6 + $0x30] sm:$0xff]
    %v6389 = vld [vmem:[#allocation6 + $0x38] sm:$0xff]
    %v6390 = vsub.f32 1.0, %v6382
    %v6391 = vsub.f32 1.0, %v6383
    %v6392 = vsub.f32 1.0, %v6384
    %v6393 = vsub.f32 1.0, %v6385
    %v6394 = vsub.f32 1.0, %v6386
    %v6395 = vsub.f32 1.0, %v6387
    %v6396 = vsub.f32 1.0, %v6388
    %v6397 = vsub.f32 1.0, %v6389
    %v6398 = vmul.f32 %v6390, %v5606
    %v6399 = vmul.f32 %v6391, %v5611
    %v6400 = vmul.f32 %v6392, %v5616
    %v6401 = vmul.f32 %v6393, %v5621
    %v6402 = vmul.f32 %v6394, %v5626
    %v6403 = vmul.f32 %v6395, %v5631
    %v6404 = vmul.f32 %v6396, %v5636
    %v6405 = vmul.f32 %v6397, %v5641
    %v6406 = vadd.f32 %v6374, %v6398
    %v6407 = vadd.f32 %v6375, %v6399
    %v6408 = vadd.f32 %v6376, %v6400
    %v6409 = vadd.f32 %v6377, %v6401
    %v6410 = vadd.f32 %v6378, %v6402
    %v6411 = vadd.f32 %v6379, %v6403
    %v6412 = vadd.f32 %v6380, %v6404
    %v6413 = vadd.f32 %v6381, %v6405
    %6422 = vrot.lane.b32.xlu0 %v4599, 64
    %v6423 = vpop.permute.xlu0 %6422
    %6424 = vrot.lane.b32.xlu0 %v4600, 64
    %v6425 = vpop.permute.xlu0 %6424
    %6426 = vrot.lane.b32.xlu0 %v4601, 64
    %v6427 = vpop.permute.xlu0 %6426
    %6428 = vrot.lane.b32.xlu0 %v4602, 64
    %v6429 = vpop.permute.xlu0 %6428
    %6430 = vrot.lane.b32.xlu0 %v4603, 64
    %v6431 = vpop.permute.xlu0 %6430
    %6432 = vrot.lane.b32.xlu0 %v4604, 64
    %v6433 = vpop.permute.xlu0 %6432
    %6434 = vrot.lane.b32.xlu0 %v4605, 64
    %v6435 = vpop.permute.xlu0 %6434
    %6436 = vrot.lane.b32.xlu0 %v4606, 64
    %v6437 = vpop.permute.xlu0 %6436
    %6454 = vrot.lane.b32.xlu0 %v4743, 64
    %v6455 = vpop.permute.xlu0 %6454
    %6456 = vrot.lane.b32.xlu0 %v4744, 64
    %v6457 = vpop.permute.xlu0 %6456
    %6458 = vrot.lane.b32.xlu0 %v4745, 64
    %v6459 = vpop.permute.xlu0 %6458
    %6460 = vrot.lane.b32.xlu0 %v4746, 64
    %v6461 = vpop.permute.xlu0 %6460
    %6462 = vrot.lane.b32.xlu0 %v4747, 64
    %v6463 = vpop.permute.xlu0 %6462
    %6464 = vrot.lane.b32.xlu0 %v4748, 64
    %v6465 = vpop.permute.xlu0 %6464
    %6466 = vrot.lane.b32.xlu0 %v4749, 64
    %v6467 = vpop.permute.xlu0 %6466
    %6468 = vrot.lane.b32.xlu0 %v4750, 64
    %v6469 = vpop.permute.xlu0 %6468
    %6486 = vrot.lane.b32.xlu0 %v5677, 96
    %v6487 = vpop.permute.xlu0 %6486
    %6488 = vrot.lane.b32.xlu0 %v5679, 96
    %v6489 = vpop.permute.xlu0 %6488
    %6490 = vrot.lane.b32.xlu0 %v5681, 96
    %v6491 = vpop.permute.xlu0 %6490
    %6492 = vrot.lane.b32.xlu0 %v5683, 96
    %v6493 = vpop.permute.xlu0 %6492
    %6494 = vrot.lane.b32.xlu0 %v5685, 96
    %v6495 = vpop.permute.xlu0 %6494
    %6496 = vrot.lane.b32.xlu0 %v5687, 96
    %v6497 = vpop.permute.xlu0 %6496
    %6498 = vrot.lane.b32.xlu0 %v5689, 96
    %v6499 = vpop.permute.xlu0 %6498
    %6500 = vrot.lane.b32.xlu0 %v5691, 96
    %v6501 = vpop.permute.xlu0 %6500
    %6518 = vrot.lane.b32.xlu0 %v5828, 96
    %v6519 = vpop.permute.xlu0 %6518
    %6520 = vrot.lane.b32.xlu0 %v5829, 96
    %v6521 = vpop.permute.xlu0 %6520
    %6522 = vrot.lane.b32.xlu0 %v5830, 96
    %v6523 = vpop.permute.xlu0 %6522
    %6524 = vrot.lane.b32.xlu0 %v5831, 96
    %v6525 = vpop.permute.xlu0 %6524
    %6526 = vrot.lane.b32.xlu0 %v5832, 96
    %v6527 = vpop.permute.xlu0 %6526
    %6528 = vrot.lane.b32.xlu0 %v5833, 96
    %v6529 = vpop.permute.xlu0 %6528
    %6530 = vrot.lane.b32.xlu0 %v5834, 96
    %v6531 = vpop.permute.xlu0 %6530
    %6532 = vrot.lane.b32.xlu0 %v5835, 96
    %v6533 = vpop.permute.xlu0 %6532
    %vm6542 = vcmask 523264
    %v6543 = vsel %vm6542, %v6048, %v6423
    %v6544 = vsel %vm6542, %v6053, %v6425
    %v6545 = vsel %vm6542, %v6058, %v6427
    %v6546 = vsel %vm6542, %v6063, %v6429
    %v6547 = vsel %vm6542, %v6068, %v6431
    %v6548 = vsel %vm6542, %v6073, %v6433
    %v6549 = vsel %vm6542, %v6078, %v6435
    %v6550 = vsel %vm6542, %v6083, %v6437
    %vm6551 = vcmask 654336
    %v6552 = vsel %vm6551, %v6543, %v6455
    %v6553 = vsel %vm6551, %v6544, %v6457
    %v6554 = vsel %vm6551, %v6545, %v6459
    %v6555 = vsel %vm6551, %v6546, %v6461
    %v6556 = vsel %vm6551, %v6547, %v6463
    %v6557 = vsel %vm6551, %v6548, %v6465
    %v6558 = vsel %vm6551, %v6549, %v6467
    %v6559 = vsel %vm6551, %v6550, %v6469
    %vm6560 = vcmask 785408
    %v6561 = vsel %vm6560, %v6552, %v6487
    %v6562 = vsel %vm6560, %v6553, %v6489
    %v6563 = vsel %vm6560, %v6554, %v6491
    %v6564 = vsel %vm6560, %v6555, %v6493
    %v6565 = vsel %vm6560, %v6556, %v6495
    %v6566 = vsel %vm6560, %v6557, %v6497
    %v6567 = vsel %vm6560, %v6558, %v6499
    %v6568 = vsel %vm6560, %v6559, %v6501
    %vm6569 = vcmask 916480
    %v6570 = vsel %vm6569, %v6561, %v6519
    %v6571 = vsel %vm6569, %v6562, %v6521
    %v6572 = vsel %vm6569, %v6563, %v6523
    %v6573 = vsel %vm6569, %v6564, %v6525
    %v6574 = vsel %vm6569, %v6565, %v6527
    %v6575 = vsel %vm6569, %v6566, %v6529
    %v6576 = vsel %vm6569, %v6567, %v6531
    %v6577 = vsel %vm6569, %v6568, %v6533
    %6578 = vst [vmem:[#allocation45] sm:$0xff] %v6570
    %6579 = vst [vmem:[#allocation45 + $0x8] sm:$0xff] %v6571
    %6580 = vst [vmem:[#allocation45 + $0x10] sm:$0xff] %v6572
    %6581 = vst [vmem:[#allocation45 + $0x18] sm:$0xff] %v6573
    %6582 = vst [vmem:[#allocation45 + $0x20] sm:$0xff] %v6574
    %6583 = vst [vmem:[#allocation45 + $0x28] sm:$0xff] %v6575
    %6584 = vst [vmem:[#allocation45 + $0x30] sm:$0xff] %v6576
    %6585 = vst [vmem:[#allocation45 + $0x38] sm:$0xff] %v6577
    %6587 = vrot.lane.b32.xlu0 %v4575, 64
    %v6588 = vpop.permute.xlu0 %6587
    %6590 = vst.msk [vmem:[#allocation46] sm:$0xff] %vm616, %v6588
    %6599 = vrot.lane.b32.xlu0 %v6222, 112
    %v6600 = vpop.permute.xlu0 %6599
    %6601 = vrot.lane.b32.xlu0 %v6223, 112
    %v6602 = vpop.permute.xlu0 %6601
    %6603 = vrot.lane.b32.xlu0 %v6224, 112
    %v6604 = vpop.permute.xlu0 %6603
    %6605 = vrot.lane.b32.xlu0 %v6225, 112
    %v6606 = vpop.permute.xlu0 %6605
    %6607 = vrot.lane.b32.xlu0 %v6226, 112
    %v6608 = vpop.permute.xlu0 %6607
    %6609 = vrot.lane.b32.xlu0 %v6227, 112
    %v6610 = vpop.permute.xlu0 %6609
    %6611 = vrot.lane.b32.xlu0 %v6228, 112
    %v6612 = vpop.permute.xlu0 %6611
    %6613 = vrot.lane.b32.xlu0 %v6229, 112
    %v6614 = vpop.permute.xlu0 %6613
    %v6623 = vsel %vm467, %v6600, 0.0
    %v6624 = vsel %vm467, %v6602, 0.0
    %v6625 = vadd.f32 %v6623, %v6624
    %v6626 = vsel %vm467, %v6604, 0.0
    %v6627 = vadd.f32 %v6625, %v6626
    %v6628 = vsel %vm467, %v6606, 0.0
    %v6629 = vadd.f32 %v6627, %v6628
    %v6630 = vsel %vm467, %v6608, 0.0
    %v6631 = vadd.f32 %v6629, %v6630
    %v6632 = vsel %vm467, %v6610, 0.0
    %v6633 = vadd.f32 %v6631, %v6632
    %v6634 = vsel %vm467, %v6612, 0.0
    %v6635 = vadd.f32 %v6633, %v6634
    %v6636 = vsel %vm467, %v6614, 0.0
    %v6637 = vadd.f32 %v6635, %v6636
    %6638 = vadd.xlane.f32.xlu0 %v6637
    %v6639 = vpop.xlane.xlu0 %6638
    %v6640 = vrot.slane %v6639, 4
    %v6641 = vadd.f32 %v6639, %v6640
    %v6642 = vrot.slane %v6641, 2
    %v6643 = vadd.f32 %v6641, %v6642
    %v6644 = vrot.slane %v6643, 1
    %v6645 = vadd.f32 %v6643, %v6644
    %s6646 = vtos %v6645
    %v6647 = vstv %s6646
    %v6648 = vmul.f32 %v6647, 0.5
    %vm6649 = vcmask 0
    %6650 = vst.msk [vmem:[#allocation48] sm:$0x1] %vm6649, %v6648
    %v6651 = vsel %vm467, %v6406, 0.0
    %v6652 = vsel %vm467, %v6407, 0.0
    %v6653 = vadd.f32 %v6651, %v6652
    %v6654 = vsel %vm467, %v6408, 0.0
    %v6655 = vadd.f32 %v6653, %v6654
    %v6656 = vsel %vm467, %v6409, 0.0
    %v6657 = vadd.f32 %v6655, %v6656
    %v6658 = vsel %vm467, %v6410, 0.0
    %v6659 = vadd.f32 %v6657, %v6658
    %v6660 = vsel %vm467, %v6411, 0.0
    %v6661 = vadd.f32 %v6659, %v6660
    %v6662 = vsel %vm467, %v6412, 0.0
    %v6663 = vadd.f32 %v6661, %v6662
    %v6664 = vsel %vm467, %v6413, 0.0
    %v6665 = vadd.f32 %v6663, %v6664
    %6666 = vadd.xlane.f32.xlu0 %v6665
    %v6667 = vpop.xlane.xlu0 %6666
    %v6668 = vrot.slane %v6667, 4
    %v6669 = vadd.f32 %v6667, %v6668
    %v6670 = vrot.slane %v6669, 2
    %v6671 = vadd.f32 %v6669, %v6670
    %v6672 = vrot.slane %v6671, 1
    %v6673 = vadd.f32 %v6671, %v6672
    %s6674 = vtos %v6673
    %v6675 = vstv %s6674
    %6676 = vst.msk [vmem:[#allocation49] sm:$0x1] %vm6649, %v6675
    // Predicated region
    $region218: #{tpu_custom_call.1} parent=1 // pred_check
      _
    $region219: #{tpu_custom_call.1} parent=1 // pred_check_branch
      %6678 = sbr.rel (0) target = $region221
    $region220: #{tpu_custom_call.1} parent=1 // pred_region
      %s6680 = ssub.s32 1024, 1024
      %6681 = vsyncadd [#allocation8], %s6680
      %s6682 = sshll.u32 [#allocation45], 4
      %s6683 = int_to_ptr.vmem [resolvable:$true] %s6682
      %6688 = dma.vmem_to_hbm [thread:$0]  %s6683, 1024, %s59, [#allocation8], 128, 128, 8
    $region221: #{tpu_custom_call.1} parent=1 // pred_fallthru
      _
    // Predicated region
    $region222: #{tpu_custom_call.1} parent=1 // pred_check
      _
    $region223: #{tpu_custom_call.1} parent=1 // pred_check_branch
      %6690 = sbr.rel (0) target = $region225
    $region224: #{tpu_custom_call.1} parent=1 // pred_region
      %s6692 = ssub.s32 128, 128
      %6693 = vsyncadd [#allocation47], %s6692
      %s6695 = sshll.u32 [#allocation46], 4
      %s6696 = int_to_ptr.vmem [resolvable:$true] %s6695
      %6698 = dma.vmem_to_hbm [thread:$0]  %s6696, 128, %s61, [#allocation47]
    $region225: #{tpu_custom_call.1} parent=1 // pred_fallthru
      _
    // Predicated region
    $region226: #{tpu_custom_call.1} parent=1 // pred_check
      _
    $region227: #{tpu_custom_call.1} parent=1 // pred_check_branch
      %6700 = sbr.rel (0) target = $region229
    $region228: #{tpu_custom_call.1} parent=1 // pred_region
      %s6702 = ssub.s32 16, 16
      %6703 = vsyncadd [#allocation47], %s6702
      %s6705 = sshll.u32 [#allocation48], 4
      %s6706 = int_to_ptr.vmem [resolvable:$true] %s6705
      %6708 = dma.vmem_to_hbm [thread:$0]  %s6706, 16, %s63, [#allocation47]
    $region229: #{tpu_custom_call.1} parent=1 // pred_fallthru
      _
    // Predicated region
    $region230: #{tpu_custom_call.1} parent=1 // pred_check
      _
    $region231: #{tpu_custom_call.1} parent=1 // pred_check_branch
      %6710 = sbr.rel (0) target = $region233
    $region232: #{tpu_custom_call.1} parent=1 // pred_region
      %s6712 = ssub.s32 16, 16
      %6713 = vsyncadd [#allocation50], %s6712
      %s6715 = sshll.u32 [#allocation49], 4
      %s6716 = int_to_ptr.vmem [resolvable:$true] %s6715
      %6718 = dma.vmem_to_hbm [thread:$0]  %s6716, 16, %s65, [#allocation50]
    $region233: #{tpu_custom_call.1} parent=1 // pred_fallthru
      _
    // Predicated region
    $region234: #{tpu_custom_call.1} parent=1 // pred_check
      _
    $region235: #{tpu_custom_call.1} parent=1 // pred_check_branch
      %6720 = sbr.rel (0) target = $region237
    $region236: #{tpu_custom_call.1} parent=1 // pred_region
      %6721 = dma.done [#allocation8], 1024
    $region237: #{tpu_custom_call.1} parent=1 // pred_fallthru
      _
    // Predicated region
    $region238: #{tpu_custom_call.1} parent=1 // pred_check
      _
    $region239: #{tpu_custom_call.1} parent=1 // pred_check_branch
      %6723 = sbr.rel (0) target = $region241
    $region240: #{tpu_custom_call.1} parent=1 // pred_region
      %6724 = dma.done [#allocation47], 128
    $region241: #{tpu_custom_call.1} parent=1 // pred_fallthru
      _
    // Predicated region
    $region242: #{tpu_custom_call.1} parent=1 // pred_check
      _
    $region243: #{tpu_custom_call.1} parent=1 // pred_check_branch
      %6726 = sbr.rel (0) target = $region245
    $region244: #{tpu_custom_call.1} parent=1 // pred_region
      %6727 = dma.done [#allocation47], 16
    $region245: #{tpu_custom_call.1} parent=1 // pred_fallthru
      _
    // Predicated region
    $region246: #{tpu_custom_call.1} parent=1 // pred_check
      _
    $region247: #{tpu_custom_call.1} parent=1 // pred_check_branch
      %6729 = sbr.rel (0) target = $region249
    $region248: #{tpu_custom_call.1} parent=1 // pred_region
      %6730 = dma.done [#allocation50], 16
    $region249: #{tpu_custom_call.1} parent=1 // pred_fallthru
      _
    %6731 = vsyncpa [#allocation7], 1
    %6732 = vsyncpa [#allocation10], 1
    %6733 = vsyncpa [#allocation13], 1
    %6734 = vsyncpa [#allocation16], 1
    %6735 = vsyncpa [#allocation19], 1
    %6736 = vsyncpa [#allocation22], 1
    %6737 = vsyncpa [#allocation25], 1
    %6738 = vsyncpa [#allocation28], 1
    %6739 = vsyncpa [#allocation31], 1
    %6740 = vsyncpa [#allocation34], 1
    %6741 = vsyncpa [#allocation37], 1
    %6742 = vsyncpa [#allocation40], 1
    %6743 = vsyncpa [#allocation43], 1
    %6744 = vsyncpa [#allocation8], 1
    %6745 = vsyncpa [#allocation47], 1
    %6746 = vsyncpa [#allocation50], 1

</llo_original>
